<compile_context>
chip_gen: v6e
topology: v6e:2x2x1
jax: 0.10.0
libtpu: 0.0.40
codegen_flags: <defaults>
</compile_context>

<pallas_src>
import functools

import jax
import jax.numpy as jnp
from jax.experimental import pallas as pl
from jax.experimental.pallas import tpu as pltpu


# ----------------------------- Pallas kernels ------------------------------ #

def _conv_tap_kernel(x_ref, w_ref, y_ref, sum_ref, sq_ref, *,
                     offsets, out_h, out_w, fuse_relu):
    """Fused direct convolution on one batch item.

    x_ref : (1, Hp, Wp, Cin)  spatially padded NHWC input block (bf16)
    w_ref : (P, T, Cin, Cout) per-phase / per-tap sub-kernels (bf16)
    y_ref : (1, Ho*Wo, P*Cout) conv output, phase-grouped channels (bf16)
    sum_ref, sq_ref : (1, 1, P*Cout) per-column sum / sum^2 (f32, for BN)

    Each (phase, tap) contributes one small MXU matmul of a statically shifted
    (Ho*Wo, Cin) view of the input against a (Cin, Cout) sub-kernel, all
    accumulated in f32.  BatchNorm statistics are emitted from the f32
    accumulator so the activation never leaves VMEM for the stats.
    """
    P, T, cin, cout = w_ref.shape
    M = out_h * out_w
    phase_accs = []
    for p in range(P):
        acc = jnp.zeros((M, cout), jnp.float32)
        for t in range(T):
            dh, dw = offsets[p][t]
            xs = x_ref[0, dh:dh + out_h, dw:dw + out_w, :]   # (Ho, Wo, Cin)
            xs = xs.reshape(M, cin)
            acc = acc + jnp.dot(xs, w_ref[p, t],
                                preferred_element_type=jnp.float32)
        phase_accs.append(acc)
    full = phase_accs[0] if P == 1 else jnp.concatenate(phase_accs, axis=-1)
    sum_ref[0] = jnp.sum(full, axis=0, keepdims=True)
    sq_ref[0] = jnp.sum(full * full, axis=0, keepdims=True)
    if fuse_relu:
        full = jnp.maximum(full, 0.0)
    y_ref[0] = full.astype(y_ref.dtype)


def _affine_relu_kernel(y_ref, s_ref, t_ref, o_ref):
    """Fused per-channel affine (BatchNorm) + ReLU epilogue (single pass)."""
    y = y_ref[0].astype(jnp.float32)          # (M, PC)
    z = y * s_ref[...] + t_ref[...]           # broadcast (1, PC)
    o_ref[0] = jnp.maximum(z, 0.0).astype(o_ref.dtype)


def conv_taps(x_pad, w_eff, offsets, out_h, out_w, fuse_relu):
    """Run the fused conv kernel over the batch.

    Returns (y, col_sum, col_sumsq) with
      y        : (B, Ho*Wo, P*Cout) bf16
      col_sum  : (B, 1, P*Cout)     f32
      col_sumsq: (B, 1, P*Cout)     f32
    """
    B, Hp, Wp, Cin = x_pad.shape
    P, T, _, Cout = w_eff.shape
    M = out_h * out_w
    PC = P * Cout
    kern = functools.partial(_conv_tap_kernel, offsets=offsets,
                             out_h=out_h, out_w=out_w, fuse_relu=fuse_relu)
    return pl.pallas_call(
        kern,
        out_shape=(jax.ShapeDtypeStruct((B, M, PC), jnp.bfloat16),
                   jax.ShapeDtypeStruct((B, 1, PC), jnp.float32),
                   jax.ShapeDtypeStruct((B, 1, PC), jnp.float32)),
        grid=(B,),
        in_specs=[pl.BlockSpec((1, Hp, Wp, Cin), lambda b: (b, 0, 0, 0)),
                  pl.BlockSpec((P, T, Cin, Cout), lambda b: (0, 0, 0, 0))],
        out_specs=(pl.BlockSpec((1, M, PC), lambda b: (b, 0, 0)),
                   pl.BlockSpec((1, 1, PC), lambda b: (b, 0, 0)),
                   pl.BlockSpec((1, 1, PC), lambda b: (b, 0, 0))),
        compiler_params=pltpu.CompilerParams(
            dimension_semantics=("parallel",),
            vmem_limit_bytes=32 * 1024 * 1024),
    )(x_pad.astype(jnp.bfloat16), w_eff)


def affine_relu(y, scale, shift):
    """y: (B, M, PC) bf16; scale/shift: (PC,) f32 -> bf16 output."""
    B, M, PC = y.shape
    return pl.pallas_call(
        _affine_relu_kernel,
        out_shape=jax.ShapeDtypeStruct((B, M, PC), jnp.bfloat16),
        grid=(B,),
        in_specs=[pl.BlockSpec((1, M, PC), lambda b: (b, 0, 0)),
                  pl.BlockSpec((1, PC), lambda b: (0, 0)),
                  pl.BlockSpec((1, PC), lambda b: (0, 0))],
        out_specs=pl.BlockSpec((1, M, PC), lambda b: (b, 0, 0)),
        compiler_params=pltpu.CompilerParams(
            dimension_semantics=("parallel",)),
    )(y, scale.reshape(1, PC).astype(jnp.float32),
      shift.reshape(1, PC).astype(jnp.float32))


# ------------------- weight preprocessing (done once at init) -------------- #

_SUBPIX_KIDX = ((3, 1), (2, 0))   # kernel-tap indices for even / odd phase


def _subpixel_weights(w):
    """ConvTranspose2d(k=4, s=2, p=1) weight (Cin, Cout, 4, 4) -> 4-phase
    sub-pixel decomposition: (P=4, T=4, Cin, Cout) sub-kernels plus static
    tap offsets into the input padded by 1 on each spatial side."""
    subs, offs = [], []
    for ph in range(2):
        for pw in range(2):
            taps, toffs = [], []
            for dh in range(2):
                for dw in range(2):
                    taps.append(w[:, :, _SUBPIX_KIDX[ph][dh],
                                  _SUBPIX_KIDX[pw][dw]])
                    toffs.append((ph + dh, pw + dw))
            subs.append(jnp.stack(taps))
            offs.append(tuple(toffs))
    return jnp.stack(subs), tuple(offs)


def _conv3x3_weights(w):
    """Conv2d weight (Cout, Cin, 3, 3) -> (P=1, T=9, Cin, Cout) + offsets."""
    taps = [w[:, :, dh, dw].T for dh in range(3) for dw in range(3)]
    offs = tuple((dh, dw) for dh in range(3) for dw in range(3))
    return jnp.stack(taps)[None], (offs,)


def _initial_weights(w):
    """ConvTranspose2d(k=4, s=1, p=0) on a 1x1 latent is a pure matmul:
    (Cin, Cout, 4, 4) -> (P=1, T=1, Cin, 16*Cout), column = (i*4+j)*Cout+co."""
    cin, cout = w.shape[0], w.shape[1]
    wm = w.transpose(0, 2, 3, 1).reshape(cin, 16 * cout)
    return wm[None, None], (((0, 0),),)


# --------------------------- DCGAN_G2 definition ---------------------------- #

def init_dcgan_g2_params(key, isize, nz, nc, ngf, n_extra_layers=0):
    assert isize % 16 == 0, "isize has to be a multiple of 16"
    cngf, tisize = ngf // 2, 4
    while tisize != isize:
        cngf *= 2
        tisize *= 2

    layers = []
    k = key

    def nxt():
        nonlocal k
        k, sub = jax.random.split(k)
        return sub

    def bn(c):
        return (jnp.ones((c,), jnp.float32), jnp.zeros((c,), jnp.float32), 1e-5)

    def add(kind, w_raw, c_out, pad, has_bn, group):
        if kind == "initial":
            w_eff, offs = _initial_weights(w_raw)
        elif kind == "up":
            w_eff, offs = _subpixel_weights(w_raw)
        else:
            w_eff, offs = _conv3x3_weights(w_raw)
        layers.append(dict(kind=kind, w=w_eff.astype(jnp.bfloat16),
                           offsets=offs, pad=pad, C=c_out, G=group,
                           bn=bn(c_out) if has_bn else None))

    # initial: ConvT(nz, cngf, 4, 1, 0) + BN + ReLU (latent is nz x 1 x 1)
    add("initial",
        0.02 * jax.random.normal(nxt(), (nz, cngf, 4, 4), jnp.float32),
        cngf, 0, True, 16)
    csize = 4
    while csize < isize // 2:
        add("up",
            0.02 * jax.random.normal(nxt(), (cngf, cngf // 2, 4, 4),
                                     jnp.float32),
            cngf // 2, 1, True, 4)
        cngf //= 2
        csize *= 2
    for _ in range(n_extra_layers):
        add("conv",
            0.02 * jax.random.normal(nxt(), (cngf, cngf, 3, 3), jnp.float32),
            cngf, 1, True, 1)
    # final: ConvT(cngf, nc, 4, 2, 1) + ReLU (no BN; module uses ReLU here)
    add("up",
        0.02 * jax.random.normal(nxt(), (cngf, nc, 4, 4), jnp.float32),
        nc, 1, False, 4)
    return layers


def _run_layer(x, layer):
    """x: (B, H, W, Cin) NHWC bf16 -> (B, Ho, Wo, Cout) NHWC bf16."""
    B, H, W, _ = x.shape
    kind, pad, C, G = layer["kind"], layer["pad"], layer["C"], layer["G"]
    if pad:
        x = jnp.pad(x, ((0, 0), (pad, pad), (pad, pad), (0, 0)))
    if kind == "initial":
        assert H == 1 and W == 1, "initial ConvT expects a 1x1 latent"
        out_h = out_w = 1
    else:
        out_h, out_w = H, W

    fuse_relu = layer["bn"] is None
    y, s, q = conv_taps(x, layer["w"], layer["offsets"], out_h, out_w,
                        fuse_relu)

    if layer["bn"] is not None:
        # BatchNorm2d in training mode: biased batch variance, f32 stats that
        # came straight from the kernel's f32 accumulator.
        gamma, beta, eps = layer["bn"]
        cnt = B * out_h * out_w * G
        tot = jnp.sum(s.reshape(B, G, C), axis=(0, 1))
        tot2 = jnp.sum(q.reshape(B, G, C), axis=(0, 1))
        mean = tot / cnt
        var = jnp.maximum(tot2 / cnt - mean * mean, 0.0)
        scale = gamma / jnp.sqrt(var + eps)
        shift = beta - mean * scale
        y = affine_relu(y, jnp.tile(scale, G), jnp.tile(shift, G))

    # de-interleave the phase-grouped channel axis back to spatial (XLA glue)
    if kind == "initial":
        return y.reshape(B, 4, 4, C)
    if kind == "up":
        y = y.reshape(B, out_h, out_w, 2, 2, C)
        return y.transpose(0, 1, 3, 2, 4, 5).reshape(B, 2 * out_h, 2 * out_w, C)
    return y.reshape(B, out_h, out_w, C)


def dcgan_g2_forward(layers, z):
    # TODO(synk): the ngpu>1 nn.parallel.data_parallel branch has no single-
    # device Pallas equivalent; single-device path implemented.
    x = z.transpose(0, 2, 3, 1).astype(jnp.bfloat16)      # NCHW -> NHWC bf16
    for layer in layers:
        x = _run_layer(x, layer)
    return x.transpose(0, 3, 1, 2).astype(jnp.float32)    # back to NCHW


if __name__ == "__main__":
    # Small shapes consistent with the module: isize=16 (multiple of 16),
    # nz=8 latent channels, nc=3 output channels, ngf=8, batch=2,
    # one extra 3x3 conv layer to exercise every layer kind.
    isize, nz, nc, ngf, B = 16, 8, 3, 8, 2
    key = jax.random.PRNGKey(0)
    k_params, k_input = jax.random.split(key)

    layers = init_dcgan_g2_params(k_params, isize, nz, nc, ngf,
                                  n_extra_layers=1)
    z = jax.random.normal(k_input, (B, nz, 1, 1), jnp.float32)  # NCHW latent

    out = jax.jit(lambda zz: dcgan_g2_forward(layers, zz))(z)
    out = jax.block_until_ready(out)

    assert out.shape == (B, nc, isize, isize), out.shape
    assert jnp.all(jnp.isfinite(out))
    assert jnp.all(out >= 0.0)  # final activation is ReLU
    print("KERNEL_OK")
</pallas_src>

<mosaic_0001>
module attributes {stable_mosaic.version = 11 : i64} {
  func.func @_conv_tap_kernel(%arg0: i32, %arg1: memref<1x1x1x8xbf16, #tpu.memory_space<vmem>>, %arg2: memref<1x1x8x256xbf16, #tpu.memory_space<vmem>>, %arg3: memref<1x1x256xbf16, #tpu.memory_space<vmem>>, %arg4: memref<1x1x256xf32, #tpu.memory_space<vmem>>, %arg5: memref<1x1x256xf32, #tpu.memory_space<vmem>>) attributes {dimension_semantics = [#tpu.dimension_semantics<parallel>], iteration_bounds = array<i64: 2>, scalar_prefetch = 0 : i64, scratch_operands = 0 : i64, tpu.core_type = #tpu.core_type<tc>, window_params = [{transform_indices = @transform_0, window_bounds = array<i64: 1, 1, 1, 8>}, {pipeline_mode = #tpu.pipeline_mode<synchronous>, transform_indices = @transform_1, window_bounds = array<i64: 1, 1, 8, 256>}, {transform_indices = @transform_2, window_bounds = array<i64: 1, 1, 256>}, {transform_indices = @transform_3, window_bounds = array<i64: 1, 1, 256>}, {transform_indices = @transform_4, window_bounds = array<i64: 1, 1, 256>}]} {
    %cst = arith.constant 0.000000e+00 : f32
    %0 = vector.broadcast %cst : f32 to vector<1x256xf32>
    %c0 = arith.constant 0 : index
    %c0_0 = arith.constant 0 : index
    %c0_1 = arith.constant 0 : index
    %c0_2 = arith.constant 0 : index
    %1 = vector.load %arg1[%c0, %c0_0, %c0_1, %c0_2] : memref<1x1x1x8xbf16, #tpu.memory_space<vmem>>, vector<1x1x1x8xbf16>
    %2 = vector.shape_cast %1 : vector<1x1x1x8xbf16> to vector<1x1x8xbf16>
    %3 = vector.shape_cast %2 : vector<1x1x8xbf16> to vector<1x8xbf16>
    %c0_3 = arith.constant 0 : index
    %c0_4 = arith.constant 0 : index
    %c0_5 = arith.constant 0 : index
    %c0_6 = arith.constant 0 : index
    %4 = vector.load %arg2[%c0_3, %c0_4, %c0_5, %c0_6] : memref<1x1x8x256xbf16, #tpu.memory_space<vmem>>, vector<1x1x8x256xbf16>
    %5 = vector.shape_cast %4 : vector<1x1x8x256xbf16> to vector<8x256xbf16>
    %cst_7 = arith.constant dense<0.000000e+00> : vector<1x256xf32>
    %6 = tpu.matmul %3, %5, %cst_7 {dimension_numbers = #tpu.dot_dimension_numbers<[1], [0], [0], [1], [0, 0, 1, 1], [], []>} : vector<1x8xbf16>, vector<8x256xbf16>, vector<1x256xf32> -> vector<1x256xf32>
    %7 = arith.addf %0, %6 : vector<1x256xf32>
    %cst_8 = arith.constant dense<0.000000e+00> : vector<256xf32>
    %8 = vector.multi_reduction <add>, %7, %cst_8 [0] : vector<1x256xf32> to vector<256xf32>
    %9 = vector.shape_cast %8 : vector<256xf32> to vector<1x256xf32>
    %c0_9 = arith.constant 0 : index
    %c0_10 = arith.constant 0 : index
    %c0_11 = arith.constant 0 : index
    %10 = vector.load %arg4[%c0_9, %c0_10, %c0_11] : memref<1x1x256xf32, #tpu.memory_space<vmem>>, vector<1x1x256xf32>
    %11 = vector.shape_cast %10 : vector<1x1x256xf32> to vector<1x256xf32>
    %12 = vector.shape_cast %9 : vector<1x256xf32> to vector<1x1x256xf32>
    tpu.vector_store %arg4[%c0_9, %c0_10, %c0_11], %12 {strides = array<i32>} : memref<1x1x256xf32, #tpu.memory_space<vmem>>, vector<1x1x256xf32>,
    %13 = arith.mulf %7, %7 : vector<1x256xf32>
    %cst_12 = arith.constant dense<0.000000e+00> : vector<256xf32>
    %14 = vector.multi_reduction <add>, %13, %cst_12 [0] : vector<1x256xf32> to vector<256xf32>
    %15 = vector.shape_cast %14 : vector<256xf32> to vector<1x256xf32>
    %c0_13 = arith.constant 0 : index
    %c0_14 = arith.constant 0 : index
    %c0_15 = arith.constant 0 : index
    %16 = vector.load %arg5[%c0_13, %c0_14, %c0_15] : memref<1x1x256xf32, #tpu.memory_space<vmem>>, vector<1x1x256xf32>
    %17 = vector.shape_cast %16 : vector<1x1x256xf32> to vector<1x256xf32>
    %18 = vector.shape_cast %15 : vector<1x256xf32> to vector<1x1x256xf32>
    tpu.vector_store %arg5[%c0_13, %c0_14, %c0_15], %18 {strides = array<i32>} : memref<1x1x256xf32, #tpu.memory_space<vmem>>, vector<1x1x256xf32>,
    %19 = arith.truncf %7 : vector<1x256xf32> to vector<1x256xbf16>
    %c0_16 = arith.constant 0 : index
    %c0_17 = arith.constant 0 : index
    %c0_18 = arith.constant 0 : index
    %20 = vector.load %arg3[%c0_16, %c0_17, %c0_18] : memref<1x1x256xbf16, #tpu.memory_space<vmem>>, vector<1x1x256xbf16>
    %21 = vector.shape_cast %20 : vector<1x1x256xbf16> to vector<1x256xbf16>
    %22 = vector.shape_cast %19 : vector<1x256xbf16> to vector<1x1x256xbf16>
    tpu.vector_store %arg3[%c0_16, %c0_17, %c0_18], %22 {strides = array<i32>} : memref<1x1x256xbf16, #tpu.memory_space<vmem>>, vector<1x1x256xbf16>,
    return
  }
  func.func @transform_0(%arg0: i32) -> (i32, i32, i32, i32) {
    %c0_i32 = arith.constant 0 : i32
    %c0_i32_0 = arith.constant 0 : i32
    %c0_i32_1 = arith.constant 0 : i32
    %c0_i32_2 = arith.constant 0 : i32
    return %arg0, %c0_i32, %c0_i32_0, %c0_i32_1 : i32, i32, i32, i32
  }
  func.func @transform_1(%arg0: i32) -> (i32, i32, i32, i32) {
    %c0_i32 = arith.constant 0 : i32
    %c0_i32_0 = arith.constant 0 : i32
    %c0_i32_1 = arith.constant 0 : i32
    %c0_i32_2 = arith.constant 0 : i32
    %c0_i32_3 = arith.constant 0 : i32
    return %c0_i32, %c0_i32_0, %c0_i32_1, %c0_i32_2 : i32, i32, i32, i32
  }
  func.func @transform_2(%arg0: i32) -> (i32, i32, i32) {
    %c0_i32 = arith.constant 0 : i32
    %c0_i32_0 = arith.constant 0 : i32
    %c0_i32_1 = arith.constant 0 : i32
    return %arg0, %c0_i32, %c0_i32_0 : i32, i32, i32
  }
  func.func @transform_3(%arg0: i32) -> (i32, i32, i32) {
    %c0_i32 = arith.constant 0 : i32
    %c0_i32_0 = arith.constant 0 : i32
    %c0_i32_1 = arith.constant 0 : i32
    return %arg0, %c0_i32, %c0_i32_0 : i32, i32, i32
  }
  func.func @transform_4(%arg0: i32) -> (i32, i32, i32) {
    %c0_i32 = arith.constant 0 : i32
    %c0_i32_0 = arith.constant 0 : i32
    %c0_i32_1 = arith.constant 0 : i32
    return %arg0, %c0_i32, %c0_i32_0 : i32, i32, i32
  }
}

module attributes {stable_mosaic.version = 11 : i64} {
  func.func @_affine_relu_kernel(%arg0: i32, %arg1: memref<1x1x256xbf16, #tpu.memory_space<vmem>>, %arg2: memref<1x256xf32, #tpu.memory_space<vmem>>, %arg3: memref<1x256xf32, #tpu.memory_space<vmem>>, %arg4: memref<1x1x256xbf16, #tpu.memory_space<vmem>>) attributes {dimension_semantics = [#tpu.dimension_semantics<parallel>], iteration_bounds = array<i64: 2>, scalar_prefetch = 0 : i64, scratch_operands = 0 : i64, tpu.core_type = #tpu.core_type<tc>, window_params = [{transform_indices = @transform_0, window_bounds = array<i64: 1, 1, 256>}, {pipeline_mode = #tpu.pipeline_mode<synchronous>, transform_indices = @transform_1, window_bounds = array<i64: 1, 256>}, {pipeline_mode = #tpu.pipeline_mode<synchronous>, transform_indices = @transform_2, window_bounds = array<i64: 1, 256>}, {transform_indices = @transform_3, window_bounds = array<i64: 1, 1, 256>}]} {
    %c0 = arith.constant 0 : index
    %c0_0 = arith.constant 0 : index
    %c0_1 = arith.constant 0 : index
    %0 = vector.load %arg1[%c0, %c0_0, %c0_1] : memref<1x1x256xbf16, #tpu.memory_space<vmem>>, vector<1x1x256xbf16>
    %1 = vector.shape_cast %0 : vector<1x1x256xbf16> to vector<1x256xbf16>
    %2 = arith.extf %1 : vector<1x256xbf16> to vector<1x256xf32>
    %c0_2 = arith.constant 0 : index
    %c0_3 = arith.constant 0 : index
    %3 = vector.load %arg2[%c0_2, %c0_3] : memref<1x256xf32, #tpu.memory_space<vmem>>, vector<1x256xf32>
    %4 = arith.mulf %2, %3 : vector<1x256xf32>
    %c0_4 = arith.constant 0 : index
    %c0_5 = arith.constant 0 : index
    %5 = vector.load %arg3[%c0_4, %c0_5] : memref<1x256xf32, #tpu.memory_space<vmem>>, vector<1x256xf32>
    %6 = arith.addf %4, %5 : vector<1x256xf32>
    %cst = arith.constant 0.000000e+00 : f32
    %7 = vector.broadcast %cst : f32 to vector<1x256xf32>
    %8 = arith.maximumf %6, %7 : vector<1x256xf32>
    %9 = arith.truncf %8 : vector<1x256xf32> to vector<1x256xbf16>
    %c0_6 = arith.constant 0 : index
    %c0_7 = arith.constant 0 : index
    %c0_8 = arith.constant 0 : index
    %10 = vector.load %arg4[%c0_6, %c0_7, %c0_8] : memref<1x1x256xbf16, #tpu.memory_space<vmem>>, vector<1x1x256xbf16>
    %11 = vector.shape_cast %10 : vector<1x1x256xbf16> to vector<1x256xbf16>
    %12 = vector.shape_cast %9 : vector<1x256xbf16> to vector<1x1x256xbf16>
    tpu.vector_store %arg4[%c0_6, %c0_7, %c0_8], %12 {strides = array<i32>} : memref<1x1x256xbf16, #tpu.memory_space<vmem>>, vector<1x1x256xbf16>,
    return
  }
  func.func @transform_0(%arg0: i32) -> (i32, i32, i32) {
    %c0_i32 = arith.constant 0 : i32
    %c0_i32_0 = arith.constant 0 : i32
    %c0_i32_1 = arith.constant 0 : i32
    return %arg0, %c0_i32, %c0_i32_0 : i32, i32, i32
  }
  func.func @transform_1(%arg0: i32) -> (i32, i32) {
    %c0_i32 = arith.constant 0 : i32
    %c0_i32_0 = arith.constant 0 : i32
    %c0_i32_1 = arith.constant 0 : i32
    return %c0_i32, %c0_i32_0 : i32, i32
  }
  func.func @transform_2(%arg0: i32) -> (i32, i32) {
    %c0_i32 = arith.constant 0 : i32
    %c0_i32_0 = arith.constant 0 : i32
    %c0_i32_1 = arith.constant 0 : i32
    return %c0_i32, %c0_i32_0 : i32, i32
  }
  func.func @transform_3(%arg0: i32) -> (i32, i32, i32) {
    %c0_i32 = arith.constant 0 : i32
    %c0_i32_0 = arith.constant 0 : i32
    %c0_i32_1 = arith.constant 0 : i32
    return %arg0, %c0_i32, %c0_i32_0 : i32, i32, i32
  }
}

module attributes {stable_mosaic.version = 11 : i64} {
  func.func @_conv_tap_kernel(%arg0: i32, %arg1: memref<1x6x6x16xbf16, #tpu.memory_space<vmem>>, %arg2: memref<4x4x16x8xbf16, #tpu.memory_space<vmem>>, %arg3: memref<1x16x32xbf16, #tpu.memory_space<vmem>>, %arg4: memref<1x1x32xf32, #tpu.memory_space<vmem>>, %arg5: memref<1x1x32xf32, #tpu.memory_space<vmem>>) attributes {dimension_semantics = [#tpu.dimension_semantics<parallel>], iteration_bounds = array<i64: 2>, scalar_prefetch = 0 : i64, scratch_operands = 0 : i64, tpu.core_type = #tpu.core_type<tc>, window_params = [{transform_indices = @transform_0, window_bounds = array<i64: 1, 6, 6, 16>}, {pipeline_mode = #tpu.pipeline_mode<synchronous>, transform_indices = @transform_1, window_bounds = array<i64: 4, 4, 16, 8>}, {transform_indices = @transform_2, window_bounds = array<i64: 1, 16, 32>}, {transform_indices = @transform_3, window_bounds = array<i64: 1, 1, 32>}, {transform_indices = @transform_4, window_bounds = array<i64: 1, 1, 32>}]} {
    %cst = arith.constant 0.000000e+00 : f32
    %0 = vector.broadcast %cst : f32 to vector<16x8xf32>
    %c0 = arith.constant 0 : index
    %c0_0 = arith.constant 0 : index
    %c0_1 = arith.constant 0 : index
    %c0_2 = arith.constant 0 : index
    %1 = vector.load %arg1[%c0, %c0_0, %c0_1, %c0_2] : memref<1x6x6x16xbf16, #tpu.memory_space<vmem>>, vector<1x4x4x16xbf16>
    %2 = vector.shape_cast %1 : vector<1x4x4x16xbf16> to vector<4x4x16xbf16>
    %3 = vector.shape_cast %2 : vector<4x4x16xbf16> to vector<16x16xbf16>
    %c0_3 = arith.constant 0 : index
    %c0_4 = arith.constant 0 : index
    %c0_5 = arith.constant 0 : index
    %c0_6 = arith.constant 0 : index
    %4 = vector.load %arg2[%c0_3, %c0_4, %c0_5, %c0_6] : memref<4x4x16x8xbf16, #tpu.memory_space<vmem>>, vector<1x1x16x8xbf16>
    %5 = vector.shape_cast %4 : vector<1x1x16x8xbf16> to vector<16x8xbf16>
    %cst_7 = arith.constant dense<0.000000e+00> : vector<16x8xf32>
    %6 = tpu.matmul %3, %5, %cst_7 {dimension_numbers = #tpu.dot_dimension_numbers<[1], [0], [0], [1], [0, 0, 1, 1], [], []>} : vector<16x16xbf16>, vector<16x8xbf16>, vector<16x8xf32> -> vector<16x8xf32>
    %7 = arith.addf %0, %6 : vector<16x8xf32>
    %c0_8 = arith.constant 0 : index
    %c0_9 = arith.constant 0 : index
    %c1 = arith.constant 1 : index
    %c0_10 = arith.constant 0 : index
    %8 = vector.load %arg1[%c0_8, %c0_9, %c1, %c0_10] : memref<1x6x6x16xbf16, #tpu.memory_space<vmem>>, vector<1x4x4x16xbf16>
    %9 = vector.shape_cast %8 : vector<1x4x4x16xbf16> to vector<4x4x16xbf16>
    %10 = vector.shape_cast %9 : vector<4x4x16xbf16> to vector<16x16xbf16>
    %c0_11 = arith.constant 0 : index
    %c1_12 = arith.constant 1 : index
    %c0_13 = arith.constant 0 : index
    %c0_14 = arith.constant 0 : index
    %11 = vector.load %arg2[%c0_11, %c1_12, %c0_13, %c0_14] : memref<4x4x16x8xbf16, #tpu.memory_space<vmem>>, vector<1x1x16x8xbf16>
    %12 = vector.shape_cast %11 : vector<1x1x16x8xbf16> to vector<16x8xbf16>
    %cst_15 = arith.constant dense<0.000000e+00> : vector<16x8xf32>
    %13 = tpu.matmul %10, %12, %cst_15 {dimension_numbers = #tpu.dot_dimension_numbers<[1], [0], [0], [1], [0, 0, 1, 1], [], []>} : vector<16x16xbf16>, vector<16x8xbf16>, vector<16x8xf32> -> vector<16x8xf32>
    %14 = arith.addf %7, %13 : vector<16x8xf32>
    %c0_16 = arith.constant 0 : index
    %c1_17 = arith.constant 1 : index
    %c0_18 = arith.constant 0 : index
    %c0_19 = arith.constant 0 : index
    %15 = vector.load %arg1[%c0_16, %c1_17, %c0_18, %c0_19] : memref<1x6x6x16xbf16, #tpu.memory_space<vmem>>, vector<1x4x4x16xbf16>
    %16 = vector.shape_cast %15 : vector<1x4x4x16xbf16> to vector<4x4x16xbf16>
    %17 = vector.shape_cast %16 : vector<4x4x16xbf16> to vector<16x16xbf16>
    %c0_20 = arith.constant 0 : index
    %c2 = arith.constant 2 : index
    %c0_21 = arith.constant 0 : index
    %c0_22 = arith.constant 0 : index
    %18 = vector.load %arg2[%c0_20, %c2, %c0_21, %c0_22] : memref<4x4x16x8xbf16, #tpu.memory_space<vmem>>, vector<1x1x16x8xbf16>
    %19 = vector.shape_cast %18 : vector<1x1x16x8xbf16> to vector<16x8xbf16>
    %cst_23 = arith.constant dense<0.000000e+00> : vector<16x8xf32>
    %20 = tpu.matmul %17, %19, %cst_23 {dimension_numbers = #tpu.dot_dimension_numbers<[1], [0], [0], [1], [0, 0, 1, 1], [], []>} : vector<16x16xbf16>, vector<16x8xbf16>, vector<16x8xf32> -> vector<16x8xf32>
    %21 = arith.addf %14, %20 : vector<16x8xf32>
    %c0_24 = arith.constant 0 : index
    %c1_25 = arith.constant 1 : index
    %c1_26 = arith.constant 1 : index
    %c0_27 = arith.constant 0 : index
    %22 = vector.load %arg1[%c0_24, %c1_25, %c1_26, %c0_27] : memref<1x6x6x16xbf16, #tpu.memory_space<vmem>>, vector<1x4x4x16xbf16>
    %23 = vector.shape_cast %22 : vector<1x4x4x16xbf16> to vector<4x4x16xbf16>
    %24 = vector.shape_cast %23 : vector<4x4x16xbf16> to vector<16x16xbf16>
    %c0_28 = arith.constant 0 : index
    %c3 = arith.constant 3 : index
    %c0_29 = arith.constant 0 : index
    %c0_30 = arith.constant 0 : index
    %25 = vector.load %arg2[%c0_28, %c3, %c0_29, %c0_30] : memref<4x4x16x8xbf16, #tpu.memory_space<vmem>>, vector<1x1x16x8xbf16>
    %26 = vector.shape_cast %25 : vector<1x1x16x8xbf16> to vector<16x8xbf16>
    %cst_31 = arith.constant dense<0.000000e+00> : vector<16x8xf32>
    %27 = tpu.matmul %24, %26, %cst_31 {dimension_numbers = #tpu.dot_dimension_numbers<[1], [0], [0], [1], [0, 0, 1, 1], [], []>} : vector<16x16xbf16>, vector<16x8xbf16>, vector<16x8xf32> -> vector<16x8xf32>
    %28 = arith.addf %21, %27 : vector<16x8xf32>
    %cst_32 = arith.constant 0.000000e+00 : f32
    %29 = vector.broadcast %cst_32 : f32 to vector<16x8xf32>
    %c0_33 = arith.constant 0 : index
    %c0_34 = arith.constant 0 : index
    %c1_35 = arith.constant 1 : index
    %c0_36 = arith.constant 0 : index
    %30 = vector.load %arg1[%c0_33, %c0_34, %c1_35, %c0_36] : memref<1x6x6x16xbf16, #tpu.memory_space<vmem>>, vector<1x4x4x16xbf16>
    %31 = vector.shape_cast %30 : vector<1x4x4x16xbf16> to vector<4x4x16xbf16>
    %32 = vector.shape_cast %31 : vector<4x4x16xbf16> to vector<16x16xbf16>
    %c1_37 = arith.constant 1 : index
    %c0_38 = arith.constant 0 : index
    %c0_39 = arith.constant 0 : index
    %c0_40 = arith.constant 0 : index
    %33 = vector.load %arg2[%c1_37, %c0_38, %c0_39, %c0_40] : memref<4x4x16x8xbf16, #tpu.memory_space<vmem>>, vector<1x1x16x8xbf16>
    %34 = vector.shape_cast %33 : vector<1x1x16x8xbf16> to vector<16x8xbf16>
    %cst_41 = arith.constant dense<0.000000e+00> : vector<16x8xf32>
    %35 = tpu.matmul %32, %34, %cst_41 {dimension_numbers = #tpu.dot_dimension_numbers<[1], [0], [0], [1], [0, 0, 1, 1], [], []>} : vector<16x16xbf16>, vector<16x8xbf16>, vector<16x8xf32> -> vector<16x8xf32>
    %36 = arith.addf %29, %35 : vector<16x8xf32>
    %c0_42 = arith.constant 0 : index
    %c0_43 = arith.constant 0 : index
    %c2_44 = arith.constant 2 : index
    %c0_45 = arith.constant 0 : index
    %37 = vector.load %arg1[%c0_42, %c0_43, %c2_44, %c0_45] : memref<1x6x6x16xbf16, #tpu.memory_space<vmem>>, vector<1x4x4x16xbf16>
    %38 = vector.shape_cast %37 : vector<1x4x4x16xbf16> to vector<4x4x16xbf16>
    %39 = vector.shape_cast %38 : vector<4x4x16xbf16> to vector<16x16xbf16>
    %c1_46 = arith.constant 1 : index
    %c1_47 = arith.constant 1 : index
    %c0_48 = arith.constant 0 : index
    %c0_49 = arith.constant 0 : index
    %40 = vector.load %arg2[%c1_46, %c1_47, %c0_48, %c0_49] : memref<4x4x16x8xbf16, #tpu.memory_space<vmem>>, vector<1x1x16x8xbf16>
    %41 = vector.shape_cast %40 : vector<1x1x16x8xbf16> to vector<16x8xbf16>
    %cst_50 = arith.constant dense<0.000000e+00> : vector<16x8xf32>
    %42 = tpu.matmul %39, %41, %cst_50 {dimension_numbers = #tpu.dot_dimension_numbers<[1], [0], [0], [1], [0, 0, 1, 1], [], []>} : vector<16x16xbf16>, vector<16x8xbf16>, vector<16x8xf32> -> vector<16x8xf32>
    %43 = arith.addf %36, %42 : vector<16x8xf32>
    %c0_51 = arith.constant 0 : index
    %c1_52 = arith.constant 1 : index
    %c1_53 = arith.constant 1 : index
    %c0_54 = arith.constant 0 : index
    %44 = vector.load %arg1[%c0_51, %c1_52, %c1_53, %c0_54] : memref<1x6x6x16xbf16, #tpu.memory_space<vmem>>, vector<1x4x4x16xbf16>
    %45 = vector.shape_cast %44 : vector<1x4x4x16xbf16> to vector<4x4x16xbf16>
    %46 = vector.shape_cast %45 : vector<4x4x16xbf16> to vector<16x16xbf16>
    %c1_55 = arith.constant 1 : index
    %c2_56 = arith.constant 2 : index
    %c0_57 = arith.constant 0 : index
    %c0_58 = arith.constant 0 : index
    %47 = vector.load %arg2[%c1_55, %c2_56, %c0_57, %c0_58] : memref<4x4x16x8xbf16, #tpu.memory_space<vmem>>, vector<1x1x16x8xbf16>
    %48 = vector.shape_cast %47 : vector<1x1x16x8xbf16> to vector<16x8xbf16>
    %cst_59 = arith.constant dense<0.000000e+00> : vector<16x8xf32>
    %49 = tpu.matmul %46, %48, %cst_59 {dimension_numbers = #tpu.dot_dimension_numbers<[1], [0], [0], [1], [0, 0, 1, 1], [], []>} : vector<16x16xbf16>, vector<16x8xbf16>, vector<16x8xf32> -> vector<16x8xf32>
    %50 = arith.addf %43, %49 : vector<16x8xf32>
    %c0_60 = arith.constant 0 : index
    %c1_61 = arith.constant 1 : index
    %c2_62 = arith.constant 2 : index
    %c0_63 = arith.constant 0 : index
    %51 = vector.load %arg1[%c0_60, %c1_61, %c2_62, %c0_63] : memref<1x6x6x16xbf16, #tpu.memory_space<vmem>>, vector<1x4x4x16xbf16>
    %52 = vector.shape_cast %51 : vector<1x4x4x16xbf16> to vector<4x4x16xbf16>
    %53 = vector.shape_cast %52 : vector<4x4x16xbf16> to vector<16x16xbf16>
    %c1_64 = arith.constant 1 : index
    %c3_65 = arith.constant 3 : index
    %c0_66 = arith.constant 0 : index
    %c0_67 = arith.constant 0 : index
    %54 = vector.load %arg2[%c1_64, %c3_65, %c0_66, %c0_67] : memref<4x4x16x8xbf16, #tpu.memory_space<vmem>>, vector<1x1x16x8xbf16>
    %55 = vector.shape_cast %54 : vector<1x1x16x8xbf16> to vector<16x8xbf16>
    %cst_68 = arith.constant dense<0.000000e+00> : vector<16x8xf32>
    %56 = tpu.matmul %53, %55, %cst_68 {dimension_numbers = #tpu.dot_dimension_numbers<[1], [0], [0], [1], [0, 0, 1, 1], [], []>} : vector<16x16xbf16>, vector<16x8xbf16>, vector<16x8xf32> -> vector<16x8xf32>
    %57 = arith.addf %50, %56 : vector<16x8xf32>
    %cst_69 = arith.constant 0.000000e+00 : f32
    %58 = vector.broadcast %cst_69 : f32 to vector<16x8xf32>
    %c0_70 = arith.constant 0 : index
    %c1_71 = arith.constant 1 : index
    %c0_72 = arith.constant 0 : index
    %c0_73 = arith.constant 0 : index
    %59 = vector.load %arg1[%c0_70, %c1_71, %c0_72, %c0_73] : memref<1x6x6x16xbf16, #tpu.memory_space<vmem>>, vector<1x4x4x16xbf16>
    %60 = vector.shape_cast %59 : vector<1x4x4x16xbf16> to vector<4x4x16xbf16>
    %61 = vector.shape_cast %60 : vector<4x4x16xbf16> to vector<16x16xbf16>
    %c2_74 = arith.constant 2 : index
    %c0_75 = arith.constant 0 : index
    %c0_76 = arith.constant 0 : index
    %c0_77 = arith.constant 0 : index
    %62 = vector.load %arg2[%c2_74, %c0_75, %c0_76, %c0_77] : memref<4x4x16x8xbf16, #tpu.memory_space<vmem>>, vector<1x1x16x8xbf16>
    %63 = vector.shape_cast %62 : vector<1x1x16x8xbf16> to vector<16x8xbf16>
    %cst_78 = arith.constant dense<0.000000e+00> : vector<16x8xf32>
    %64 = tpu.matmul %61, %63, %cst_78 {dimension_numbers = #tpu.dot_dimension_numbers<[1], [0], [0], [1], [0, 0, 1, 1], [], []>} : vector<16x16xbf16>, vector<16x8xbf16>, vector<16x8xf32> -> vector<16x8xf32>
    %65 = arith.addf %58, %64 : vector<16x8xf32>
    %c0_79 = arith.constant 0 : index
    %c1_80 = arith.constant 1 : index
    %c1_81 = arith.constant 1 : index
    %c0_82 = arith.constant 0 : index
    %66 = vector.load %arg1[%c0_79, %c1_80, %c1_81, %c0_82] : memref<1x6x6x16xbf16, #tpu.memory_space<vmem>>, vector<1x4x4x16xbf16>
    %67 = vector.shape_cast %66 : vector<1x4x4x16xbf16> to vector<4x4x16xbf16>
    %68 = vector.shape_cast %67 : vector<4x4x16xbf16> to vector<16x16xbf16>
    %c2_83 = arith.constant 2 : index
    %c1_84 = arith.constant 1 : index
    %c0_85 = arith.constant 0 : index
    %c0_86 = arith.constant 0 : index
    %69 = vector.load %arg2[%c2_83, %c1_84, %c0_85, %c0_86] : memref<4x4x16x8xbf16, #tpu.memory_space<vmem>>, vector<1x1x16x8xbf16>
    %70 = vector.shape_cast %69 : vector<1x1x16x8xbf16> to vector<16x8xbf16>
    %cst_87 = arith.constant dense<0.000000e+00> : vector<16x8xf32>
    %71 = tpu.matmul %68, %70, %cst_87 {dimension_numbers = #tpu.dot_dimension_numbers<[1], [0], [0], [1], [0, 0, 1, 1], [], []>} : vector<16x16xbf16>, vector<16x8xbf16>, vector<16x8xf32> -> vector<16x8xf32>
    %72 = arith.addf %65, %71 : vector<16x8xf32>
    %c0_88 = arith.constant 0 : index
    %c2_89 = arith.constant 2 : index
    %c0_90 = arith.constant 0 : index
    %c0_91 = arith.constant 0 : index
    %73 = vector.load %arg1[%c0_88, %c2_89, %c0_90, %c0_91] : memref<1x6x6x16xbf16, #tpu.memory_space<vmem>>, vector<1x4x4x16xbf16>
    %74 = vector.shape_cast %73 : vector<1x4x4x16xbf16> to vector<4x4x16xbf16>
    %75 = vector.shape_cast %74 : vector<4x4x16xbf16> to vector<16x16xbf16>
    %c2_92 = arith.constant 2 : index
    %c2_93 = arith.constant 2 : index
    %c0_94 = arith.constant 0 : index
    %c0_95 = arith.constant 0 : index
    %76 = vector.load %arg2[%c2_92, %c2_93, %c0_94, %c0_95] : memref<4x4x16x8xbf16, #tpu.memory_space<vmem>>, vector<1x1x16x8xbf16>
    %77 = vector.shape_cast %76 : vector<1x1x16x8xbf16> to vector<16x8xbf16>
    %cst_96 = arith.constant dense<0.000000e+00> : vector<16x8xf32>
    %78 = tpu.matmul %75, %77, %cst_96 {dimension_numbers = #tpu.dot_dimension_numbers<[1], [0], [0], [1], [0, 0, 1, 1], [], []>} : vector<16x16xbf16>, vector<16x8xbf16>, vector<16x8xf32> -> vector<16x8xf32>
    %79 = arith.addf %72, %78 : vector<16x8xf32>
    %c0_97 = arith.constant 0 : index
    %c2_98 = arith.constant 2 : index
    %c1_99 = arith.constant 1 : index
    %c0_100 = arith.constant 0 : index
    %80 = vector.load %arg1[%c0_97, %c2_98, %c1_99, %c0_100] : memref<1x6x6x16xbf16, #tpu.memory_space<vmem>>, vector<1x4x4x16xbf16>
    %81 = vector.shape_cast %80 : vector<1x4x4x16xbf16> to vector<4x4x16xbf16>
    %82 = vector.shape_cast %81 : vector<4x4x16xbf16> to vector<16x16xbf16>
    %c2_101 = arith.constant 2 : index
    %c3_102 = arith.constant 3 : index
    %c0_103 = arith.constant 0 : index
    %c0_104 = arith.constant 0 : index
    %83 = vector.load %arg2[%c2_101, %c3_102, %c0_103, %c0_104] : memref<4x4x16x8xbf16, #tpu.memory_space<vmem>>, vector<1x1x16x8xbf16>
    %84 = vector.shape_cast %83 : vector<1x1x16x8xbf16> to vector<16x8xbf16>
    %cst_105 = arith.constant dense<0.000000e+00> : vector<16x8xf32>
    %85 = tpu.matmul %82, %84, %cst_105 {dimension_numbers = #tpu.dot_dimension_numbers<[1], [0], [0], [1], [0, 0, 1, 1], [], []>} : vector<16x16xbf16>, vector<16x8xbf16>, vector<16x8xf32> -> vector<16x8xf32>
    %86 = arith.addf %79, %85 : vector<16x8xf32>
    %cst_106 = arith.constant 0.000000e+00 : f32
    %87 = vector.broadcast %cst_106 : f32 to vector<16x8xf32>
    %c0_107 = arith.constant 0 : index
    %c1_108 = arith.constant 1 : index
    %c1_109 = arith.constant 1 : index
    %c0_110 = arith.constant 0 : index
    %88 = vector.load %arg1[%c0_107, %c1_108, %c1_109, %c0_110] : memref<1x6x6x16xbf16, #tpu.memory_space<vmem>>, vector<1x4x4x16xbf16>
    %89 = vector.shape_cast %88 : vector<1x4x4x16xbf16> to vector<4x4x16xbf16>
    %90 = vector.shape_cast %89 : vector<4x4x16xbf16> to vector<16x16xbf16>
    %c3_111 = arith.constant 3 : index
    %c0_112 = arith.constant 0 : index
    %c0_113 = arith.constant 0 : index
    %c0_114 = arith.constant 0 : index
    %91 = vector.load %arg2[%c3_111, %c0_112, %c0_113, %c0_114] : memref<4x4x16x8xbf16, #tpu.memory_space<vmem>>, vector<1x1x16x8xbf16>
    %92 = vector.shape_cast %91 : vector<1x1x16x8xbf16> to vector<16x8xbf16>
    %cst_115 = arith.constant dense<0.000000e+00> : vector<16x8xf32>
    %93 = tpu.matmul %90, %92, %cst_115 {dimension_numbers = #tpu.dot_dimension_numbers<[1], [0], [0], [1], [0, 0, 1, 1], [], []>} : vector<16x16xbf16>, vector<16x8xbf16>, vector<16x8xf32> -> vector<16x8xf32>
    %94 = arith.addf %87, %93 : vector<16x8xf32>
    %c0_116 = arith.constant 0 : index
    %c1_117 = arith.constant 1 : index
    %c2_118 = arith.constant 2 : index
    %c0_119 = arith.constant 0 : index
    %95 = vector.load %arg1[%c0_116, %c1_117, %c2_118, %c0_119] : memref<1x6x6x16xbf16, #tpu.memory_space<vmem>>, vector<1x4x4x16xbf16>
    %96 = vector.shape_cast %95 : vector<1x4x4x16xbf16> to vector<4x4x16xbf16>
    %97 = vector.shape_cast %96 : vector<4x4x16xbf16> to vector<16x16xbf16>
    %c3_120 = arith.constant 3 : index
    %c1_121 = arith.constant 1 : index
    %c0_122 = arith.constant 0 : index
    %c0_123 = arith.constant 0 : index
    %98 = vector.load %arg2[%c3_120, %c1_121, %c0_122, %c0_123] : memref<4x4x16x8xbf16, #tpu.memory_space<vmem>>, vector<1x1x16x8xbf16>
    %99 = vector.shape_cast %98 : vector<1x1x16x8xbf16> to vector<16x8xbf16>
    %cst_124 = arith.constant dense<0.000000e+00> : vector<16x8xf32>
    %100 = tpu.matmul %97, %99, %cst_124 {dimension_numbers = #tpu.dot_dimension_numbers<[1], [0], [0], [1], [0, 0, 1, 1], [], []>} : vector<16x16xbf16>, vector<16x8xbf16>, vector<16x8xf32> -> vector<16x8xf32>
    %101 = arith.addf %94, %100 : vector<16x8xf32>
    %c0_125 = arith.constant 0 : index
    %c2_126 = arith.constant 2 : index
    %c1_127 = arith.constant 1 : index
    %c0_128 = arith.constant 0 : index
    %102 = vector.load %arg1[%c0_125, %c2_126, %c1_127, %c0_128] : memref<1x6x6x16xbf16, #tpu.memory_space<vmem>>, vector<1x4x4x16xbf16>
    %103 = vector.shape_cast %102 : vector<1x4x4x16xbf16> to vector<4x4x16xbf16>
    %104 = vector.shape_cast %103 : vector<4x4x16xbf16> to vector<16x16xbf16>
    %c3_129 = arith.constant 3 : index
    %c2_130 = arith.constant 2 : index
    %c0_131 = arith.constant 0 : index
    %c0_132 = arith.constant 0 : index
    %105 = vector.load %arg2[%c3_129, %c2_130, %c0_131, %c0_132] : memref<4x4x16x8xbf16, #tpu.memory_space<vmem>>, vector<1x1x16x8xbf16>
    %106 = vector.shape_cast %105 : vector<1x1x16x8xbf16> to vector<16x8xbf16>
    %cst_133 = arith.constant dense<0.000000e+00> : vector<16x8xf32>
    %107 = tpu.matmul %104, %106, %cst_133 {dimension_numbers = #tpu.dot_dimension_numbers<[1], [0], [0], [1], [0, 0, 1, 1], [], []>} : vector<16x16xbf16>, vector<16x8xbf16>, vector<16x8xf32> -> vector<16x8xf32>
    %108 = arith.addf %101, %107 : vector<16x8xf32>
    %c0_134 = arith.constant 0 : index
    %c2_135 = arith.constant 2 : index
    %c2_136 = arith.constant 2 : index
    %c0_137 = arith.constant 0 : index
    %109 = vector.load %arg1[%c0_134, %c2_135, %c2_136, %c0_137] : memref<1x6x6x16xbf16, #tpu.memory_space<vmem>>, vector<1x4x4x16xbf16>
    %110 = vector.shape_cast %109 : vector<1x4x4x16xbf16> to vector<4x4x16xbf16>
    %111 = vector.shape_cast %110 : vector<4x4x16xbf16> to vector<16x16xbf16>
    %c3_138 = arith.constant 3 : index
    %c3_139 = arith.constant 3 : index
    %c0_140 = arith.constant 0 : index
    %c0_141 = arith.constant 0 : index
    %112 = vector.load %arg2[%c3_138, %c3_139, %c0_140, %c0_141] : memref<4x4x16x8xbf16, #tpu.memory_space<vmem>>, vector<1x1x16x8xbf16>
    %113 = vector.shape_cast %112 : vector<1x1x16x8xbf16> to vector<16x8xbf16>
    %cst_142 = arith.constant dense<0.000000e+00> : vector<16x8xf32>
    %114 = tpu.matmul %111, %113, %cst_142 {dimension_numbers = #tpu.dot_dimension_numbers<[1], [0], [0], [1], [0, 0, 1, 1], [], []>} : vector<16x16xbf16>, vector<16x8xbf16>, vector<16x8xf32> -> vector<16x8xf32>
    %115 = arith.addf %108, %114 : vector<16x8xf32>
    %116 = tpu.concatenate %28, %57, %86, %115 in 1 : vector<16x8xf32>, vector<16x8xf32>, vector<16x8xf32>, vector<16x8xf32> -> vector<16x32xf32>
    %cst_143 = arith.constant dense<0.000000e+00> : vector<32xf32>
    %117 = vector.multi_reduction <add>, %116, %cst_143 [0] : vector<16x32xf32> to vector<32xf32>
    %118 = vector.shape_cast %117 : vector<32xf32> to vector<1x32xf32>
    %c0_144 = arith.constant 0 : index
    %c0_145 = arith.constant 0 : index
    %c0_146 = arith.constant 0 : index
    %119 = vector.load %arg4[%c0_144, %c0_145, %c0_146] : memref<1x1x32xf32, #tpu.memory_space<vmem>>, vector<1x1x32xf32>
    %120 = vector.shape_cast %119 : vector<1x1x32xf32> to vector<1x32xf32>
    %121 = vector.shape_cast %118 : vector<1x32xf32> to vector<1x1x32xf32>
    tpu.vector_store %arg4[%c0_144, %c0_145, %c0_146], %121 {strides = array<i32>} : memref<1x1x32xf32, #tpu.memory_space<vmem>>, vector<1x1x32xf32>,
    %122 = arith.mulf %116, %116 : vector<16x32xf32>
    %cst_147 = arith.constant dense<0.000000e+00> : vector<32xf32>
    %123 = vector.multi_reduction <add>, %122, %cst_147 [0] : vector<16x32xf32> to vector<32xf32>
    %124 = vector.shape_cast %123 : vector<32xf32> to vector<1x32xf32>
    %c0_148 = arith.constant 0 : index
    %c0_149 = arith.constant 0 : index
    %c0_150 = arith.constant 0 : index
    %125 = vector.load %arg5[%c0_148, %c0_149, %c0_150] : memref<1x1x32xf32, #tpu.memory_space<vmem>>, vector<1x1x32xf32>
    %126 = vector.shape_cast %125 : vector<1x1x32xf32> to vector<1x32xf32>
    %127 = vector.shape_cast %124 : vector<1x32xf32> to vector<1x1x32xf32>
    tpu.vector_store %arg5[%c0_148, %c0_149, %c0_150], %127 {strides = array<i32>} : memref<1x1x32xf32, #tpu.memory_space<vmem>>, vector<1x1x32xf32>,
    %128 = arith.truncf %116 : vector<16x32xf32> to vector<16x32xbf16>
    %c0_151 = arith.constant 0 : index
    %c0_152 = arith.constant 0 : index
    %c0_153 = arith.constant 0 : index
    %129 = vector.load %arg3[%c0_151, %c0_152, %c0_153] : memref<1x16x32xbf16, #tpu.memory_space<vmem>>, vector<1x16x32xbf16>
    %130 = vector.shape_cast %129 : vector<1x16x32xbf16> to vector<16x32xbf16>
    %131 = vector.shape_cast %128 : vector<16x32xbf16> to vector<1x16x32xbf16>
    tpu.vector_store %arg3[%c0_151, %c0_152, %c0_153], %131 {strides = array<i32>} : memref<1x16x32xbf16, #tpu.memory_space<vmem>>, vector<1x16x32xbf16>,
    return
  }
  func.func @transform_0(%arg0: i32) -> (i32, i32, i32, i32) {
    %c0_i32 = arith.constant 0 : i32
    %c0_i32_0 = arith.constant 0 : i32
    %c0_i32_1 = arith.constant 0 : i32
    %c0_i32_2 = arith.constant 0 : i32
    return %arg0, %c0_i32, %c0_i32_0, %c0_i32_1 : i32, i32, i32, i32
  }
  func.func @transform_1(%arg0: i32) -> (i32, i32, i32, i32) {
    %c0_i32 = arith.constant 0 : i32
    %c0_i32_0 = arith.constant 0 : i32
    %c0_i32_1 = arith.constant 0 : i32
    %c0_i32_2 = arith.constant 0 : i32
    %c0_i32_3 = arith.constant 0 : i32
    return %c0_i32, %c0_i32_0, %c0_i32_1, %c0_i32_2 : i32, i32, i32, i32
  }
  func.func @transform_2(%arg0: i32) -> (i32, i32, i32) {
    %c0_i32 = arith.constant 0 : i32
    %c0_i32_0 = arith.constant 0 : i32
    %c0_i32_1 = arith.constant 0 : i32
    return %arg0, %c0_i32, %c0_i32_0 : i32, i32, i32
  }
  func.func @transform_3(%arg0: i32) -> (i32, i32, i32) {
    %c0_i32 = arith.constant 0 : i32
    %c0_i32_0 = arith.constant 0 : i32
    %c0_i32_1 = arith.constant 0 : i32
    return %arg0, %c0_i32, %c0_i32_0 : i32, i32, i32
  }
  func.func @transform_4(%arg0: i32) -> (i32, i32, i32) {
    %c0_i32 = arith.constant 0 : i32
    %c0_i32_0 = arith.constant 0 : i32
    %c0_i32_1 = arith.constant 0 : i32
    return %arg0, %c0_i32, %c0_i32_0 : i32, i32, i32
  }
}

module attributes {stable_mosaic.version = 11 : i64} {
  func.func @_affine_relu_kernel(%arg0: i32, %arg1: memref<1x16x32xbf16, #tpu.memory_space<vmem>>, %arg2: memref<1x32xf32, #tpu.memory_space<vmem>>, %arg3: memref<1x32xf32, #tpu.memory_space<vmem>>, %arg4: memref<1x16x32xbf16, #tpu.memory_space<vmem>>) attributes {dimension_semantics = [#tpu.dimension_semantics<parallel>], iteration_bounds = array<i64: 2>, scalar_prefetch = 0 : i64, scratch_operands = 0 : i64, tpu.core_type = #tpu.core_type<tc>, window_params = [{transform_indices = @transform_0, window_bounds = array<i64: 1, 16, 32>}, {pipeline_mode = #tpu.pipeline_mode<synchronous>, transform_indices = @transform_1, window_bounds = array<i64: 1, 32>}, {pipeline_mode = #tpu.pipeline_mode<synchronous>, transform_indices = @transform_2, window_bounds = array<i64: 1, 32>}, {transform_indices = @transform_3, window_bounds = array<i64: 1, 16, 32>}]} {
    %c0 = arith.constant 0 : index
    %c0_0 = arith.constant 0 : index
    %c0_1 = arith.constant 0 : index
    %0 = vector.load %arg1[%c0, %c0_0, %c0_1] : memref<1x16x32xbf16, #tpu.memory_space<vmem>>, vector<1x16x32xbf16>
    %1 = vector.shape_cast %0 : vector<1x16x32xbf16> to vector<16x32xbf16>
    %2 = arith.extf %1 : vector<16x32xbf16> to vector<16x32xf32>
    %c0_2 = arith.constant 0 : index
    %c0_3 = arith.constant 0 : index
    %3 = vector.load %arg2[%c0_2, %c0_3] : memref<1x32xf32, #tpu.memory_space<vmem>>, vector<1x32xf32>
    %4 = vector.broadcast %3 : vector<1x32xf32> to vector<16x32xf32>
    %5 = arith.mulf %2, %4 : vector<16x32xf32>
    %c0_4 = arith.constant 0 : index
    %c0_5 = arith.constant 0 : index
    %6 = vector.load %arg3[%c0_4, %c0_5] : memref<1x32xf32, #tpu.memory_space<vmem>>, vector<1x32xf32>
    %7 = vector.broadcast %6 : vector<1x32xf32> to vector<16x32xf32>
    %8 = arith.addf %5, %7 : vector<16x32xf32>
    %cst = arith.constant 0.000000e+00 : f32
    %9 = vector.broadcast %cst : f32 to vector<16x32xf32>
    %10 = arith.maximumf %8, %9 : vector<16x32xf32>
    %11 = arith.truncf %10 : vector<16x32xf32> to vector<16x32xbf16>
    %c0_6 = arith.constant 0 : index
    %c0_7 = arith.constant 0 : index
    %c0_8 = arith.constant 0 : index
    %12 = vector.load %arg4[%c0_6, %c0_7, %c0_8] : memref<1x16x32xbf16, #tpu.memory_space<vmem>>, vector<1x16x32xbf16>
    %13 = vector.shape_cast %12 : vector<1x16x32xbf16> to vector<16x32xbf16>
    %14 = vector.shape_cast %11 : vector<16x32xbf16> to vector<1x16x32xbf16>
    tpu.vector_store %arg4[%c0_6, %c0_7, %c0_8], %14 {strides = array<i32>} : memref<1x16x32xbf16, #tpu.memory_space<vmem>>, vector<1x16x32xbf16>,
    return
  }
  func.func @transform_0(%arg0: i32) -> (i32, i32, i32) {
    %c0_i32 = arith.constant 0 : i32
    %c0_i32_0 = arith.constant 0 : i32
    %c0_i32_1 = arith.constant 0 : i32
    return %arg0, %c0_i32, %c0_i32_0 : i32, i32, i32
  }
  func.func @transform_1(%arg0: i32) -> (i32, i32) {
    %c0_i32 = arith.constant 0 : i32
    %c0_i32_0 = arith.constant 0 : i32
    %c0_i32_1 = arith.constant 0 : i32
    return %c0_i32, %c0_i32_0 : i32, i32
  }
  func.func @transform_2(%arg0: i32) -> (i32, i32) {
    %c0_i32 = arith.constant 0 : i32
    %c0_i32_0 = arith.constant 0 : i32
    %c0_i32_1 = arith.constant 0 : i32
    return %c0_i32, %c0_i32_0 : i32, i32
  }
  func.func @transform_3(%arg0: i32) -> (i32, i32, i32) {
    %c0_i32 = arith.constant 0 : i32
    %c0_i32_0 = arith.constant 0 : i32
    %c0_i32_1 = arith.constant 0 : i32
    return %arg0, %c0_i32, %c0_i32_0 : i32, i32, i32
  }
}

module attributes {stable_mosaic.version = 11 : i64} {
  func.func @_conv_tap_kernel(%arg0: i32, %arg1: memref<1x10x10x8xbf16, #tpu.memory_space<vmem>>, %arg2: memref<1x9x8x8xbf16, #tpu.memory_space<vmem>>, %arg3: memref<1x64x8xbf16, #tpu.memory_space<vmem>>, %arg4: memref<1x1x8xf32, #tpu.memory_space<vmem>>, %arg5: memref<1x1x8xf32, #tpu.memory_space<vmem>>) attributes {dimension_semantics = [#tpu.dimension_semantics<parallel>], iteration_bounds = array<i64: 2>, scalar_prefetch = 0 : i64, scratch_operands = 0 : i64, tpu.core_type = #tpu.core_type<tc>, window_params = [{transform_indices = @transform_0, window_bounds = array<i64: 1, 10, 10, 8>}, {pipeline_mode = #tpu.pipeline_mode<synchronous>, transform_indices = @transform_1, window_bounds = array<i64: 1, 9, 8, 8>}, {transform_indices = @transform_2, window_bounds = array<i64: 1, 64, 8>}, {transform_indices = @transform_3, window_bounds = array<i64: 1, 1, 8>}, {transform_indices = @transform_4, window_bounds = array<i64: 1, 1, 8>}]} {
    %cst = arith.constant 0.000000e+00 : f32
    %0 = vector.broadcast %cst : f32 to vector<64x8xf32>
    %c0 = arith.constant 0 : index
    %c0_0 = arith.constant 0 : index
    %c0_1 = arith.constant 0 : index
    %c0_2 = arith.constant 0 : index
    %1 = vector.load %arg1[%c0, %c0_0, %c0_1, %c0_2] : memref<1x10x10x8xbf16, #tpu.memory_space<vmem>>, vector<1x8x8x8xbf16>
    %2 = vector.shape_cast %1 : vector<1x8x8x8xbf16> to vector<8x8x8xbf16>
    %3 = vector.shape_cast %2 : vector<8x8x8xbf16> to vector<64x8xbf16>
    %c0_3 = arith.constant 0 : index
    %c0_4 = arith.constant 0 : index
    %c0_5 = arith.constant 0 : index
    %c0_6 = arith.constant 0 : index
    %4 = vector.load %arg2[%c0_3, %c0_4, %c0_5, %c0_6] : memref<1x9x8x8xbf16, #tpu.memory_space<vmem>>, vector<1x1x8x8xbf16>
    %5 = vector.shape_cast %4 : vector<1x1x8x8xbf16> to vector<8x8xbf16>
    %cst_7 = arith.constant dense<0.000000e+00> : vector<64x8xf32>
    %6 = tpu.matmul %3, %5, %cst_7 {dimension_numbers = #tpu.dot_dimension_numbers<[1], [0], [0], [1], [0, 0, 1, 1], [], []>} : vector<64x8xbf16>, vector<8x8xbf16>, vector<64x8xf32> -> vector<64x8xf32>
    %7 = arith.addf %0, %6 : vector<64x8xf32>
    %c0_8 = arith.constant 0 : index
    %c0_9 = arith.constant 0 : index
    %c1 = arith.constant 1 : index
    %c0_10 = arith.constant 0 : index
    %8 = vector.load %arg1[%c0_8, %c0_9, %c1, %c0_10] : memref<1x10x10x8xbf16, #tpu.memory_space<vmem>>, vector<1x8x8x8xbf16>
    %9 = vector.shape_cast %8 : vector<1x8x8x8xbf16> to vector<8x8x8xbf16>
    %10 = vector.shape_cast %9 : vector<8x8x8xbf16> to vector<64x8xbf16>
    %c0_11 = arith.constant 0 : index
    %c1_12 = arith.constant 1 : index
    %c0_13 = arith.constant 0 : index
    %c0_14 = arith.constant 0 : index
    %11 = vector.load %arg2[%c0_11, %c1_12, %c0_13, %c0_14] : memref<1x9x8x8xbf16, #tpu.memory_space<vmem>>, vector<1x1x8x8xbf16>
    %12 = vector.shape_cast %11 : vector<1x1x8x8xbf16> to vector<8x8xbf16>
    %cst_15 = arith.constant dense<0.000000e+00> : vector<64x8xf32>
    %13 = tpu.matmul %10, %12, %cst_15 {dimension_numbers = #tpu.dot_dimension_numbers<[1], [0], [0], [1], [0, 0, 1, 1], [], []>} : vector<64x8xbf16>, vector<8x8xbf16>, vector<64x8xf32> -> vector<64x8xf32>
    %14 = arith.addf %7, %13 : vector<64x8xf32>
    %c0_16 = arith.constant 0 : index
    %c0_17 = arith.constant 0 : index
    %c2 = arith.constant 2 : index
    %c0_18 = arith.constant 0 : index
    %15 = vector.load %arg1[%c0_16, %c0_17, %c2, %c0_18] : memref<1x10x10x8xbf16, #tpu.memory_space<vmem>>, vector<1x8x8x8xbf16>
    %16 = vector.shape_cast %15 : vector<1x8x8x8xbf16> to vector<8x8x8xbf16>
    %17 = vector.shape_cast %16 : vector<8x8x8xbf16> to vector<64x8xbf16>
    %c0_19 = arith.constant 0 : index
    %c2_20 = arith.constant 2 : index
    %c0_21 = arith.constant 0 : index
    %c0_22 = arith.constant 0 : index
    %18 = vector.load %arg2[%c0_19, %c2_20, %c0_21, %c0_22] : memref<1x9x8x8xbf16, #tpu.memory_space<vmem>>, vector<1x1x8x8xbf16>
    %19 = vector.shape_cast %18 : vector<1x1x8x8xbf16> to vector<8x8xbf16>
    %cst_23 = arith.constant dense<0.000000e+00> : vector<64x8xf32>
    %20 = tpu.matmul %17, %19, %cst_23 {dimension_numbers = #tpu.dot_dimension_numbers<[1], [0], [0], [1], [0, 0, 1, 1], [], []>} : vector<64x8xbf16>, vector<8x8xbf16>, vector<64x8xf32> -> vector<64x8xf32>
    %21 = arith.addf %14, %20 : vector<64x8xf32>
    %c0_24 = arith.constant 0 : index
    %c1_25 = arith.constant 1 : index
    %c0_26 = arith.constant 0 : index
    %c0_27 = arith.constant 0 : index
    %22 = vector.load %arg1[%c0_24, %c1_25, %c0_26, %c0_27] : memref<1x10x10x8xbf16, #tpu.memory_space<vmem>>, vector<1x8x8x8xbf16>
    %23 = vector.shape_cast %22 : vector<1x8x8x8xbf16> to vector<8x8x8xbf16>
    %24 = vector.shape_cast %23 : vector<8x8x8xbf16> to vector<64x8xbf16>
    %c0_28 = arith.constant 0 : index
    %c3 = arith.constant 3 : index
    %c0_29 = arith.constant 0 : index
    %c0_30 = arith.constant 0 : index
    %25 = vector.load %arg2[%c0_28, %c3, %c0_29, %c0_30] : memref<1x9x8x8xbf16, #tpu.memory_space<vmem>>, vector<1x1x8x8xbf16>
    %26 = vector.shape_cast %25 : vector<1x1x8x8xbf16> to vector<8x8xbf16>
    %cst_31 = arith.constant dense<0.000000e+00> : vector<64x8xf32>
    %27 = tpu.matmul %24, %26, %cst_31 {dimension_numbers = #tpu.dot_dimension_numbers<[1], [0], [0], [1], [0, 0, 1, 1], [], []>} : vector<64x8xbf16>, vector<8x8xbf16>, vector<64x8xf32> -> vector<64x8xf32>
    %28 = arith.addf %21, %27 : vector<64x8xf32>
    %c0_32 = arith.constant 0 : index
    %c1_33 = arith.constant 1 : index
    %c1_34 = arith.constant 1 : index
    %c0_35 = arith.constant 0 : index
    %29 = vector.load %arg1[%c0_32, %c1_33, %c1_34, %c0_35] : memref<1x10x10x8xbf16, #tpu.memory_space<vmem>>, vector<1x8x8x8xbf16>
    %30 = vector.shape_cast %29 : vector<1x8x8x8xbf16> to vector<8x8x8xbf16>
    %31 = vector.shape_cast %30 : vector<8x8x8xbf16> to vector<64x8xbf16>
    %c0_36 = arith.constant 0 : index
    %c4 = arith.constant 4 : index
    %c0_37 = arith.constant 0 : index
    %c0_38 = arith.constant 0 : index
    %32 = vector.load %arg2[%c0_36, %c4, %c0_37, %c0_38] : memref<1x9x8x8xbf16, #tpu.memory_space<vmem>>, vector<1x1x8x8xbf16>
    %33 = vector.shape_cast %32 : vector<1x1x8x8xbf16> to vector<8x8xbf16>
    %cst_39 = arith.constant dense<0.000000e+00> : vector<64x8xf32>
    %34 = tpu.matmul %31, %33, %cst_39 {dimension_numbers = #tpu.dot_dimension_numbers<[1], [0], [0], [1], [0, 0, 1, 1], [], []>} : vector<64x8xbf16>, vector<8x8xbf16>, vector<64x8xf32> -> vector<64x8xf32>
    %35 = arith.addf %28, %34 : vector<64x8xf32>
    %c0_40 = arith.constant 0 : index
    %c1_41 = arith.constant 1 : index
    %c2_42 = arith.constant 2 : index
    %c0_43 = arith.constant 0 : index
    %36 = vector.load %arg1[%c0_40, %c1_41, %c2_42, %c0_43] : memref<1x10x10x8xbf16, #tpu.memory_space<vmem>>, vector<1x8x8x8xbf16>
    %37 = vector.shape_cast %36 : vector<1x8x8x8xbf16> to vector<8x8x8xbf16>
    %38 = vector.shape_cast %37 : vector<8x8x8xbf16> to vector<64x8xbf16>
    %c0_44 = arith.constant 0 : index
    %c5 = arith.constant 5 : index
    %c0_45 = arith.constant 0 : index
    %c0_46 = arith.constant 0 : index
    %39 = vector.load %arg2[%c0_44, %c5, %c0_45, %c0_46] : memref<1x9x8x8xbf16, #tpu.memory_space<vmem>>, vector<1x1x8x8xbf16>
    %40 = vector.shape_cast %39 : vector<1x1x8x8xbf16> to vector<8x8xbf16>
    %cst_47 = arith.constant dense<0.000000e+00> : vector<64x8xf32>
    %41 = tpu.matmul %38, %40, %cst_47 {dimension_numbers = #tpu.dot_dimension_numbers<[1], [0], [0], [1], [0, 0, 1, 1], [], []>} : vector<64x8xbf16>, vector<8x8xbf16>, vector<64x8xf32> -> vector<64x8xf32>
    %42 = arith.addf %35, %41 : vector<64x8xf32>
    %c0_48 = arith.constant 0 : index
    %c2_49 = arith.constant 2 : index
    %c0_50 = arith.constant 0 : index
    %c0_51 = arith.constant 0 : index
    %43 = vector.load %arg1[%c0_48, %c2_49, %c0_50, %c0_51] : memref<1x10x10x8xbf16, #tpu.memory_space<vmem>>, vector<1x8x8x8xbf16>
    %44 = vector.shape_cast %43 : vector<1x8x8x8xbf16> to vector<8x8x8xbf16>
    %45 = vector.shape_cast %44 : vector<8x8x8xbf16> to vector<64x8xbf16>
    %c0_52 = arith.constant 0 : index
    %c6 = arith.constant 6 : index
    %c0_53 = arith.constant 0 : index
    %c0_54 = arith.constant 0 : index
    %46 = vector.load %arg2[%c0_52, %c6, %c0_53, %c0_54] : memref<1x9x8x8xbf16, #tpu.memory_space<vmem>>, vector<1x1x8x8xbf16>
    %47 = vector.shape_cast %46 : vector<1x1x8x8xbf16> to vector<8x8xbf16>
    %cst_55 = arith.constant dense<0.000000e+00> : vector<64x8xf32>
    %48 = tpu.matmul %45, %47, %cst_55 {dimension_numbers = #tpu.dot_dimension_numbers<[1], [0], [0], [1], [0, 0, 1, 1], [], []>} : vector<64x8xbf16>, vector<8x8xbf16>, vector<64x8xf32> -> vector<64x8xf32>
    %49 = arith.addf %42, %48 : vector<64x8xf32>
    %c0_56 = arith.constant 0 : index
    %c2_57 = arith.constant 2 : index
    %c1_58 = arith.constant 1 : index
    %c0_59 = arith.constant 0 : index
    %50 = vector.load %arg1[%c0_56, %c2_57, %c1_58, %c0_59] : memref<1x10x10x8xbf16, #tpu.memory_space<vmem>>, vector<1x8x8x8xbf16>
    %51 = vector.shape_cast %50 : vector<1x8x8x8xbf16> to vector<8x8x8xbf16>
    %52 = vector.shape_cast %51 : vector<8x8x8xbf16> to vector<64x8xbf16>
    %c0_60 = arith.constant 0 : index
    %c7 = arith.constant 7 : index
    %c0_61 = arith.constant 0 : index
    %c0_62 = arith.constant 0 : index
    %53 = vector.load %arg2[%c0_60, %c7, %c0_61, %c0_62] : memref<1x9x8x8xbf16, #tpu.memory_space<vmem>>, vector<1x1x8x8xbf16>
    %54 = vector.shape_cast %53 : vector<1x1x8x8xbf16> to vector<8x8xbf16>
    %cst_63 = arith.constant dense<0.000000e+00> : vector<64x8xf32>
    %55 = tpu.matmul %52, %54, %cst_63 {dimension_numbers = #tpu.dot_dimension_numbers<[1], [0], [0], [1], [0, 0, 1, 1], [], []>} : vector<64x8xbf16>, vector<8x8xbf16>, vector<64x8xf32> -> vector<64x8xf32>
    %56 = arith.addf %49, %55 : vector<64x8xf32>
    %c0_64 = arith.constant 0 : index
    %c2_65 = arith.constant 2 : index
    %c2_66 = arith.constant 2 : index
    %c0_67 = arith.constant 0 : index
    %57 = vector.load %arg1[%c0_64, %c2_65, %c2_66, %c0_67] : memref<1x10x10x8xbf16, #tpu.memory_space<vmem>>, vector<1x8x8x8xbf16>
    %58 = vector.shape_cast %57 : vector<1x8x8x8xbf16> to vector<8x8x8xbf16>
    %59 = vector.shape_cast %58 : vector<8x8x8xbf16> to vector<64x8xbf16>
    %c0_68 = arith.constant 0 : index
    %c8 = arith.constant 8 : index
    %c0_69 = arith.constant 0 : index
    %c0_70 = arith.constant 0 : index
    %60 = vector.load %arg2[%c0_68, %c8, %c0_69, %c0_70] : memref<1x9x8x8xbf16, #tpu.memory_space<vmem>>, vector<1x1x8x8xbf16>
    %61 = vector.shape_cast %60 : vector<1x1x8x8xbf16> to vector<8x8xbf16>
    %cst_71 = arith.constant dense<0.000000e+00> : vector<64x8xf32>
    %62 = tpu.matmul %59, %61, %cst_71 {dimension_numbers = #tpu.dot_dimension_numbers<[1], [0], [0], [1], [0, 0, 1, 1], [], []>} : vector<64x8xbf16>, vector<8x8xbf16>, vector<64x8xf32> -> vector<64x8xf32>
    %63 = arith.addf %56, %62 : vector<64x8xf32>
    %cst_72 = arith.constant dense<0.000000e+00> : vector<8xf32>
    %64 = vector.multi_reduction <add>, %63, %cst_72 [0] : vector<64x8xf32> to vector<8xf32>
    %65 = vector.shape_cast %64 : vector<8xf32> to vector<1x8xf32>
    %c0_73 = arith.constant 0 : index
    %c0_74 = arith.constant 0 : index
    %c0_75 = arith.constant 0 : index
    %66 = vector.load %arg4[%c0_73, %c0_74, %c0_75] : memref<1x1x8xf32, #tpu.memory_space<vmem>>, vector<1x1x8xf32>
    %67 = vector.shape_cast %66 : vector<1x1x8xf32> to vector<1x8xf32>
    %68 = vector.shape_cast %65 : vector<1x8xf32> to vector<1x1x8xf32>
    tpu.vector_store %arg4[%c0_73, %c0_74, %c0_75], %68 {strides = array<i32>} : memref<1x1x8xf32, #tpu.memory_space<vmem>>, vector<1x1x8xf32>,
    %69 = arith.mulf %63, %63 : vector<64x8xf32>
    %cst_76 = arith.constant dense<0.000000e+00> : vector<8xf32>
    %70 = vector.multi_reduction <add>, %69, %cst_76 [0] : vector<64x8xf32> to vector<8xf32>
    %71 = vector.shape_cast %70 : vector<8xf32> to vector<1x8xf32>
    %c0_77 = arith.constant 0 : index
    %c0_78 = arith.constant 0 : index
    %c0_79 = arith.constant 0 : index
    %72 = vector.load %arg5[%c0_77, %c0_78, %c0_79] : memref<1x1x8xf32, #tpu.memory_space<vmem>>, vector<1x1x8xf32>
    %73 = vector.shape_cast %72 : vector<1x1x8xf32> to vector<1x8xf32>
    %74 = vector.shape_cast %71 : vector<1x8xf32> to vector<1x1x8xf32>
    tpu.vector_store %arg5[%c0_77, %c0_78, %c0_79], %74 {strides = array<i32>} : memref<1x1x8xf32, #tpu.memory_space<vmem>>, vector<1x1x8xf32>,
    %75 = arith.truncf %63 : vector<64x8xf32> to vector<64x8xbf16>
    %c0_80 = arith.constant 0 : index
    %c0_81 = arith.constant 0 : index
    %c0_82 = arith.constant 0 : index
    %76 = vector.load %arg3[%c0_80, %c0_81, %c0_82] : memref<1x64x8xbf16, #tpu.memory_space<vmem>>, vector<1x64x8xbf16>
    %77 = vector.shape_cast %76 : vector<1x64x8xbf16> to vector<64x8xbf16>
    %78 = vector.shape_cast %75 : vector<64x8xbf16> to vector<1x64x8xbf16>
    tpu.vector_store %arg3[%c0_80, %c0_81, %c0_82], %78 {strides = array<i32>} : memref<1x64x8xbf16, #tpu.memory_space<vmem>>, vector<1x64x8xbf16>,
    return
  }
  func.func @transform_0(%arg0: i32) -> (i32, i32, i32, i32) {
    %c0_i32 = arith.constant 0 : i32
    %c0_i32_0 = arith.constant 0 : i32
    %c0_i32_1 = arith.constant 0 : i32
    %c0_i32_2 = arith.constant 0 : i32
    return %arg0, %c0_i32, %c0_i32_0, %c0_i32_1 : i32, i32, i32, i32
  }
  func.func @transform_1(%arg0: i32) -> (i32, i32, i32, i32) {
    %c0_i32 = arith.constant 0 : i32
    %c0_i32_0 = arith.constant 0 : i32
    %c0_i32_1 = arith.constant 0 : i32
    %c0_i32_2 = arith.constant 0 : i32
    %c0_i32_3 = arith.constant 0 : i32
    return %c0_i32, %c0_i32_0, %c0_i32_1, %c0_i32_2 : i32, i32, i32, i32
  }
  func.func @transform_2(%arg0: i32) -> (i32, i32, i32) {
    %c0_i32 = arith.constant 0 : i32
    %c0_i32_0 = arith.constant 0 : i32
    %c0_i32_1 = arith.constant 0 : i32
    return %arg0, %c0_i32, %c0_i32_0 : i32, i32, i32
  }
  func.func @transform_3(%arg0: i32) -> (i32, i32, i32) {
    %c0_i32 = arith.constant 0 : i32
    %c0_i32_0 = arith.constant 0 : i32
    %c0_i32_1 = arith.constant 0 : i32
    return %arg0, %c0_i32, %c0_i32_0 : i32, i32, i32
  }
  func.func @transform_4(%arg0: i32) -> (i32, i32, i32) {
    %c0_i32 = arith.constant 0 : i32
    %c0_i32_0 = arith.constant 0 : i32
    %c0_i32_1 = arith.constant 0 : i32
    return %arg0, %c0_i32, %c0_i32_0 : i32, i32, i32
  }
}

module attributes {stable_mosaic.version = 11 : i64} {
  func.func @_affine_relu_kernel(%arg0: i32, %arg1: memref<1x64x8xbf16, #tpu.memory_space<vmem>>, %arg2: memref<1x8xf32, #tpu.memory_space<vmem>>, %arg3: memref<1x8xf32, #tpu.memory_space<vmem>>, %arg4: memref<1x64x8xbf16, #tpu.memory_space<vmem>>) attributes {dimension_semantics = [#tpu.dimension_semantics<parallel>], iteration_bounds = array<i64: 2>, scalar_prefetch = 0 : i64, scratch_operands = 0 : i64, tpu.core_type = #tpu.core_type<tc>, window_params = [{transform_indices = @transform_0, window_bounds = array<i64: 1, 64, 8>}, {pipeline_mode = #tpu.pipeline_mode<synchronous>, transform_indices = @transform_1, window_bounds = array<i64: 1, 8>}, {pipeline_mode = #tpu.pipeline_mode<synchronous>, transform_indices = @transform_2, window_bounds = array<i64: 1, 8>}, {transform_indices = @transform_3, window_bounds = array<i64: 1, 64, 8>}]} {
    %c0 = arith.constant 0 : index
    %c0_0 = arith.constant 0 : index
    %c0_1 = arith.constant 0 : index
    %0 = vector.load %arg1[%c0, %c0_0, %c0_1] : memref<1x64x8xbf16, #tpu.memory_space<vmem>>, vector<1x64x8xbf16>
    %1 = vector.shape_cast %0 : vector<1x64x8xbf16> to vector<64x8xbf16>
    %2 = arith.extf %1 : vector<64x8xbf16> to vector<64x8xf32>
    %c0_2 = arith.constant 0 : index
    %c0_3 = arith.constant 0 : index
    %3 = vector.load %arg2[%c0_2, %c0_3] : memref<1x8xf32, #tpu.memory_space<vmem>>, vector<1x8xf32>
    %4 = vector.broadcast %3 : vector<1x8xf32> to vector<64x8xf32>
    %5 = arith.mulf %2, %4 : vector<64x8xf32>
    %c0_4 = arith.constant 0 : index
    %c0_5 = arith.constant 0 : index
    %6 = vector.load %arg3[%c0_4, %c0_5] : memref<1x8xf32, #tpu.memory_space<vmem>>, vector<1x8xf32>
    %7 = vector.broadcast %6 : vector<1x8xf32> to vector<64x8xf32>
    %8 = arith.addf %5, %7 : vector<64x8xf32>
    %cst = arith.constant 0.000000e+00 : f32
    %9 = vector.broadcast %cst : f32 to vector<64x8xf32>
    %10 = arith.maximumf %8, %9 : vector<64x8xf32>
    %11 = arith.truncf %10 : vector<64x8xf32> to vector<64x8xbf16>
    %c0_6 = arith.constant 0 : index
    %c0_7 = arith.constant 0 : index
    %c0_8 = arith.constant 0 : index
    %12 = vector.load %arg4[%c0_6, %c0_7, %c0_8] : memref<1x64x8xbf16, #tpu.memory_space<vmem>>, vector<1x64x8xbf16>
    %13 = vector.shape_cast %12 : vector<1x64x8xbf16> to vector<64x8xbf16>
    %14 = vector.shape_cast %11 : vector<64x8xbf16> to vector<1x64x8xbf16>
    tpu.vector_store %arg4[%c0_6, %c0_7, %c0_8], %14 {strides = array<i32>} : memref<1x64x8xbf16, #tpu.memory_space<vmem>>, vector<1x64x8xbf16>,
    return
  }
  func.func @transform_0(%arg0: i32) -> (i32, i32, i32) {
    %c0_i32 = arith.constant 0 : i32
    %c0_i32_0 = arith.constant 0 : i32
    %c0_i32_1 = arith.constant 0 : i32
    return %arg0, %c0_i32, %c0_i32_0 : i32, i32, i32
  }
  func.func @transform_1(%arg0: i32) -> (i32, i32) {
    %c0_i32 = arith.constant 0 : i32
    %c0_i32_0 = arith.constant 0 : i32
    %c0_i32_1 = arith.constant 0 : i32
    return %c0_i32, %c0_i32_0 : i32, i32
  }
  func.func @transform_2(%arg0: i32) -> (i32, i32) {
    %c0_i32 = arith.constant 0 : i32
    %c0_i32_0 = arith.constant 0 : i32
    %c0_i32_1 = arith.constant 0 : i32
    return %c0_i32, %c0_i32_0 : i32, i32
  }
  func.func @transform_3(%arg0: i32) -> (i32, i32, i32) {
    %c0_i32 = arith.constant 0 : i32
    %c0_i32_0 = arith.constant 0 : i32
    %c0_i32_1 = arith.constant 0 : i32
    return %arg0, %c0_i32, %c0_i32_0 : i32, i32, i32
  }
}

module attributes {stable_mosaic.version = 11 : i64} {
  func.func @_conv_tap_kernel(%arg0: i32, %arg1: memref<1x10x10x8xbf16, #tpu.memory_space<vmem>>, %arg2: memref<4x4x8x3xbf16, #tpu.memory_space<vmem>>, %arg3: memref<1x64x12xbf16, #tpu.memory_space<vmem>>, %arg4: memref<1x1x12xf32, #tpu.memory_space<vmem>>, %arg5: memref<1x1x12xf32, #tpu.memory_space<vmem>>) attributes {dimension_semantics = [#tpu.dimension_semantics<parallel>], iteration_bounds = array<i64: 2>, scalar_prefetch = 0 : i64, scratch_operands = 0 : i64, tpu.core_type = #tpu.core_type<tc>, window_params = [{transform_indices = @transform_0, window_bounds = array<i64: 1, 10, 10, 8>}, {pipeline_mode = #tpu.pipeline_mode<synchronous>, transform_indices = @transform_1, window_bounds = array<i64: 4, 4, 8, 3>}, {transform_indices = @transform_2, window_bounds = array<i64: 1, 64, 12>}, {transform_indices = @transform_3, window_bounds = array<i64: 1, 1, 12>}, {transform_indices = @transform_4, window_bounds = array<i64: 1, 1, 12>}]} {
    %cst = arith.constant 0.000000e+00 : f32
    %0 = vector.broadcast %cst : f32 to vector<64x3xf32>
    %c0 = arith.constant 0 : index
    %c0_0 = arith.constant 0 : index
    %c0_1 = arith.constant 0 : index
    %c0_2 = arith.constant 0 : index
    %1 = vector.load %arg1[%c0, %c0_0, %c0_1, %c0_2] : memref<1x10x10x8xbf16, #tpu.memory_space<vmem>>, vector<1x8x8x8xbf16>
    %2 = vector.shape_cast %1 : vector<1x8x8x8xbf16> to vector<8x8x8xbf16>
    %3 = vector.shape_cast %2 : vector<8x8x8xbf16> to vector<64x8xbf16>
    %c0_3 = arith.constant 0 : index
    %c0_4 = arith.constant 0 : index
    %c0_5 = arith.constant 0 : index
    %c0_6 = arith.constant 0 : index
    %4 = vector.load %arg2[%c0_3, %c0_4, %c0_5, %c0_6] : memref<4x4x8x3xbf16, #tpu.memory_space<vmem>>, vector<1x1x8x3xbf16>
    %5 = vector.shape_cast %4 : vector<1x1x8x3xbf16> to vector<8x3xbf16>
    %cst_7 = arith.constant dense<0.000000e+00> : vector<64x3xf32>
    %6 = tpu.matmul %3, %5, %cst_7 {dimension_numbers = #tpu.dot_dimension_numbers<[1], [0], [0], [1], [0, 0, 1, 1], [], []>} : vector<64x8xbf16>, vector<8x3xbf16>, vector<64x3xf32> -> vector<64x3xf32>
    %7 = arith.addf %0, %6 : vector<64x3xf32>
    %c0_8 = arith.constant 0 : index
    %c0_9 = arith.constant 0 : index
    %c1 = arith.constant 1 : index
    %c0_10 = arith.constant 0 : index
    %8 = vector.load %arg1[%c0_8, %c0_9, %c1, %c0_10] : memref<1x10x10x8xbf16, #tpu.memory_space<vmem>>, vector<1x8x8x8xbf16>
    %9 = vector.shape_cast %8 : vector<1x8x8x8xbf16> to vector<8x8x8xbf16>
    %10 = vector.shape_cast %9 : vector<8x8x8xbf16> to vector<64x8xbf16>
    %c0_11 = arith.constant 0 : index
    %c1_12 = arith.constant 1 : index
    %c0_13 = arith.constant 0 : index
    %c0_14 = arith.constant 0 : index
    %11 = vector.load %arg2[%c0_11, %c1_12, %c0_13, %c0_14] : memref<4x4x8x3xbf16, #tpu.memory_space<vmem>>, vector<1x1x8x3xbf16>
    %12 = vector.shape_cast %11 : vector<1x1x8x3xbf16> to vector<8x3xbf16>
    %cst_15 = arith.constant dense<0.000000e+00> : vector<64x3xf32>
    %13 = tpu.matmul %10, %12, %cst_15 {dimension_numbers = #tpu.dot_dimension_numbers<[1], [0], [0], [1], [0, 0, 1, 1], [], []>} : vector<64x8xbf16>, vector<8x3xbf16>, vector<64x3xf32> -> vector<64x3xf32>
    %14 = arith.addf %7, %13 : vector<64x3xf32>
    %c0_16 = arith.constant 0 : index
    %c1_17 = arith.constant 1 : index
    %c0_18 = arith.constant 0 : index
    %c0_19 = arith.constant 0 : index
    %15 = vector.load %arg1[%c0_16, %c1_17, %c0_18, %c0_19] : memref<1x10x10x8xbf16, #tpu.memory_space<vmem>>, vector<1x8x8x8xbf16>
    %16 = vector.shape_cast %15 : vector<1x8x8x8xbf16> to vector<8x8x8xbf16>
    %17 = vector.shape_cast %16 : vector<8x8x8xbf16> to vector<64x8xbf16>
    %c0_20 = arith.constant 0 : index
    %c2 = arith.constant 2 : index
    %c0_21 = arith.constant 0 : index
    %c0_22 = arith.constant 0 : index
    %18 = vector.load %arg2[%c0_20, %c2, %c0_21, %c0_22] : memref<4x4x8x3xbf16, #tpu.memory_space<vmem>>, vector<1x1x8x3xbf16>
    %19 = vector.shape_cast %18 : vector<1x1x8x3xbf16> to vector<8x3xbf16>
    %cst_23 = arith.constant dense<0.000000e+00> : vector<64x3xf32>
    %20 = tpu.matmul %17, %19, %cst_23 {dimension_numbers = #tpu.dot_dimension_numbers<[1], [0], [0], [1], [0, 0, 1, 1], [], []>} : vector<64x8xbf16>, vector<8x3xbf16>, vector<64x3xf32> -> vector<64x3xf32>
    %21 = arith.addf %14, %20 : vector<64x3xf32>
    %c0_24 = arith.constant 0 : index
    %c1_25 = arith.constant 1 : index
    %c1_26 = arith.constant 1 : index
    %c0_27 = arith.constant 0 : index
    %22 = vector.load %arg1[%c0_24, %c1_25, %c1_26, %c0_27] : memref<1x10x10x8xbf16, #tpu.memory_space<vmem>>, vector<1x8x8x8xbf16>
    %23 = vector.shape_cast %22 : vector<1x8x8x8xbf16> to vector<8x8x8xbf16>
    %24 = vector.shape_cast %23 : vector<8x8x8xbf16> to vector<64x8xbf16>
    %c0_28 = arith.constant 0 : index
    %c3 = arith.constant 3 : index
    %c0_29 = arith.constant 0 : index
    %c0_30 = arith.constant 0 : index
    %25 = vector.load %arg2[%c0_28, %c3, %c0_29, %c0_30] : memref<4x4x8x3xbf16, #tpu.memory_space<vmem>>, vector<1x1x8x3xbf16>
    %26 = vector.shape_cast %25 : vector<1x1x8x3xbf16> to vector<8x3xbf16>
    %cst_31 = arith.constant dense<0.000000e+00> : vector<64x3xf32>
    %27 = tpu.matmul %24, %26, %cst_31 {dimension_numbers = #tpu.dot_dimension_numbers<[1], [0], [0], [1], [0, 0, 1, 1], [], []>} : vector<64x8xbf16>, vector<8x3xbf16>, vector<64x3xf32> -> vector<64x3xf32>
    %28 = arith.addf %21, %27 : vector<64x3xf32>
    %cst_32 = arith.constant 0.000000e+00 : f32
    %29 = vector.broadcast %cst_32 : f32 to vector<64x3xf32>
    %c0_33 = arith.constant 0 : index
    %c0_34 = arith.constant 0 : index
    %c1_35 = arith.constant 1 : index
    %c0_36 = arith.constant 0 : index
    %30 = vector.load %arg1[%c0_33, %c0_34, %c1_35, %c0_36] : memref<1x10x10x8xbf16, #tpu.memory_space<vmem>>, vector<1x8x8x8xbf16>
    %31 = vector.shape_cast %30 : vector<1x8x8x8xbf16> to vector<8x8x8xbf16>
    %32 = vector.shape_cast %31 : vector<8x8x8xbf16> to vector<64x8xbf16>
    %c1_37 = arith.constant 1 : index
    %c0_38 = arith.constant 0 : index
    %c0_39 = arith.constant 0 : index
    %c0_40 = arith.constant 0 : index
    %33 = vector.load %arg2[%c1_37, %c0_38, %c0_39, %c0_40] : memref<4x4x8x3xbf16, #tpu.memory_space<vmem>>, vector<1x1x8x3xbf16>
    %34 = vector.shape_cast %33 : vector<1x1x8x3xbf16> to vector<8x3xbf16>
    %cst_41 = arith.constant dense<0.000000e+00> : vector<64x3xf32>
    %35 = tpu.matmul %32, %34, %cst_41 {dimension_numbers = #tpu.dot_dimension_numbers<[1], [0], [0], [1], [0, 0, 1, 1], [], []>} : vector<64x8xbf16>, vector<8x3xbf16>, vector<64x3xf32> -> vector<64x3xf32>
    %36 = arith.addf %29, %35 : vector<64x3xf32>
    %c0_42 = arith.constant 0 : index
    %c0_43 = arith.constant 0 : index
    %c2_44 = arith.constant 2 : index
    %c0_45 = arith.constant 0 : index
    %37 = vector.load %arg1[%c0_42, %c0_43, %c2_44, %c0_45] : memref<1x10x10x8xbf16, #tpu.memory_space<vmem>>, vector<1x8x8x8xbf16>
    %38 = vector.shape_cast %37 : vector<1x8x8x8xbf16> to vector<8x8x8xbf16>
    %39 = vector.shape_cast %38 : vector<8x8x8xbf16> to vector<64x8xbf16>
    %c1_46 = arith.constant 1 : index
    %c1_47 = arith.constant 1 : index
    %c0_48 = arith.constant 0 : index
    %c0_49 = arith.constant 0 : index
    %40 = vector.load %arg2[%c1_46, %c1_47, %c0_48, %c0_49] : memref<4x4x8x3xbf16, #tpu.memory_space<vmem>>, vector<1x1x8x3xbf16>
    %41 = vector.shape_cast %40 : vector<1x1x8x3xbf16> to vector<8x3xbf16>
    %cst_50 = arith.constant dense<0.000000e+00> : vector<64x3xf32>
    %42 = tpu.matmul %39, %41, %cst_50 {dimension_numbers = #tpu.dot_dimension_numbers<[1], [0], [0], [1], [0, 0, 1, 1], [], []>} : vector<64x8xbf16>, vector<8x3xbf16>, vector<64x3xf32> -> vector<64x3xf32>
    %43 = arith.addf %36, %42 : vector<64x3xf32>
    %c0_51 = arith.constant 0 : index
    %c1_52 = arith.constant 1 : index
    %c1_53 = arith.constant 1 : index
    %c0_54 = arith.constant 0 : index
    %44 = vector.load %arg1[%c0_51, %c1_52, %c1_53, %c0_54] : memref<1x10x10x8xbf16, #tpu.memory_space<vmem>>, vector<1x8x8x8xbf16>
    %45 = vector.shape_cast %44 : vector<1x8x8x8xbf16> to vector<8x8x8xbf16>
    %46 = vector.shape_cast %45 : vector<8x8x8xbf16> to vector<64x8xbf16>
    %c1_55 = arith.constant 1 : index
    %c2_56 = arith.constant 2 : index
    %c0_57 = arith.constant 0 : index
    %c0_58 = arith.constant 0 : index
    %47 = vector.load %arg2[%c1_55, %c2_56, %c0_57, %c0_58] : memref<4x4x8x3xbf16, #tpu.memory_space<vmem>>, vector<1x1x8x3xbf16>
    %48 = vector.shape_cast %47 : vector<1x1x8x3xbf16> to vector<8x3xbf16>
    %cst_59 = arith.constant dense<0.000000e+00> : vector<64x3xf32>
    %49 = tpu.matmul %46, %48, %cst_59 {dimension_numbers = #tpu.dot_dimension_numbers<[1], [0], [0], [1], [0, 0, 1, 1], [], []>} : vector<64x8xbf16>, vector<8x3xbf16>, vector<64x3xf32> -> vector<64x3xf32>
    %50 = arith.addf %43, %49 : vector<64x3xf32>
    %c0_60 = arith.constant 0 : index
    %c1_61 = arith.constant 1 : index
    %c2_62 = arith.constant 2 : index
    %c0_63 = arith.constant 0 : index
    %51 = vector.load %arg1[%c0_60, %c1_61, %c2_62, %c0_63] : memref<1x10x10x8xbf16, #tpu.memory_space<vmem>>, vector<1x8x8x8xbf16>
    %52 = vector.shape_cast %51 : vector<1x8x8x8xbf16> to vector<8x8x8xbf16>
    %53 = vector.shape_cast %52 : vector<8x8x8xbf16> to vector<64x8xbf16>
    %c1_64 = arith.constant 1 : index
    %c3_65 = arith.constant 3 : index
    %c0_66 = arith.constant 0 : index
    %c0_67 = arith.constant 0 : index
    %54 = vector.load %arg2[%c1_64, %c3_65, %c0_66, %c0_67] : memref<4x4x8x3xbf16, #tpu.memory_space<vmem>>, vector<1x1x8x3xbf16>
    %55 = vector.shape_cast %54 : vector<1x1x8x3xbf16> to vector<8x3xbf16>
    %cst_68 = arith.constant dense<0.000000e+00> : vector<64x3xf32>
    %56 = tpu.matmul %53, %55, %cst_68 {dimension_numbers = #tpu.dot_dimension_numbers<[1], [0], [0], [1], [0, 0, 1, 1], [], []>} : vector<64x8xbf16>, vector<8x3xbf16>, vector<64x3xf32> -> vector<64x3xf32>
    %57 = arith.addf %50, %56 : vector<64x3xf32>
    %cst_69 = arith.constant 0.000000e+00 : f32
    %58 = vector.broadcast %cst_69 : f32 to vector<64x3xf32>
    %c0_70 = arith.constant 0 : index
    %c1_71 = arith.constant 1 : index
    %c0_72 = arith.constant 0 : index
    %c0_73 = arith.constant 0 : index
    %59 = vector.load %arg1[%c0_70, %c1_71, %c0_72, %c0_73] : memref<1x10x10x8xbf16, #tpu.memory_space<vmem>>, vector<1x8x8x8xbf16>
    %60 = vector.shape_cast %59 : vector<1x8x8x8xbf16> to vector<8x8x8xbf16>
    %61 = vector.shape_cast %60 : vector<8x8x8xbf16> to vector<64x8xbf16>
    %c2_74 = arith.constant 2 : index
    %c0_75 = arith.constant 0 : index
    %c0_76 = arith.constant 0 : index
    %c0_77 = arith.constant 0 : index
    %62 = vector.load %arg2[%c2_74, %c0_75, %c0_76, %c0_77] : memref<4x4x8x3xbf16, #tpu.memory_space<vmem>>, vector<1x1x8x3xbf16>
    %63 = vector.shape_cast %62 : vector<1x1x8x3xbf16> to vector<8x3xbf16>
    %cst_78 = arith.constant dense<0.000000e+00> : vector<64x3xf32>
    %64 = tpu.matmul %61, %63, %cst_78 {dimension_numbers = #tpu.dot_dimension_numbers<[1], [0], [0], [1], [0, 0, 1, 1], [], []>} : vector<64x8xbf16>, vector<8x3xbf16>, vector<64x3xf32> -> vector<64x3xf32>
    %65 = arith.addf %58, %64 : vector<64x3xf32>
    %c0_79 = arith.constant 0 : index
    %c1_80 = arith.constant 1 : index
    %c1_81 = arith.constant 1 : index
    %c0_82 = arith.constant 0 : index
    %66 = vector.load %arg1[%c0_79, %c1_80, %c1_81, %c0_82] : memref<1x10x10x8xbf16, #tpu.memory_space<vmem>>, vector<1x8x8x8xbf16>
    %67 = vector.shape_cast %66 : vector<1x8x8x8xbf16> to vector<8x8x8xbf16>
    %68 = vector.shape_cast %67 : vector<8x8x8xbf16> to vector<64x8xbf16>
    %c2_83 = arith.constant 2 : index
    %c1_84 = arith.constant 1 : index
    %c0_85 = arith.constant 0 : index
    %c0_86 = arith.constant 0 : index
    %69 = vector.load %arg2[%c2_83, %c1_84, %c0_85, %c0_86] : memref<4x4x8x3xbf16, #tpu.memory_space<vmem>>, vector<1x1x8x3xbf16>
    %70 = vector.shape_cast %69 : vector<1x1x8x3xbf16> to vector<8x3xbf16>
    %cst_87 = arith.constant dense<0.000000e+00> : vector<64x3xf32>
    %71 = tpu.matmul %68, %70, %cst_87 {dimension_numbers = #tpu.dot_dimension_numbers<[1], [0], [0], [1], [0, 0, 1, 1], [], []>} : vector<64x8xbf16>, vector<8x3xbf16>, vector<64x3xf32> -> vector<64x3xf32>
    %72 = arith.addf %65, %71 : vector<64x3xf32>
    %c0_88 = arith.constant 0 : index
    %c2_89 = arith.constant 2 : index
    %c0_90 = arith.constant 0 : index
    %c0_91 = arith.constant 0 : index
    %73 = vector.load %arg1[%c0_88, %c2_89, %c0_90, %c0_91] : memref<1x10x10x8xbf16, #tpu.memory_space<vmem>>, vector<1x8x8x8xbf16>
    %74 = vector.shape_cast %73 : vector<1x8x8x8xbf16> to vector<8x8x8xbf16>
    %75 = vector.shape_cast %74 : vector<8x8x8xbf16> to vector<64x8xbf16>
    %c2_92 = arith.constant 2 : index
    %c2_93 = arith.constant 2 : index
    %c0_94 = arith.constant 0 : index
    %c0_95 = arith.constant 0 : index
    %76 = vector.load %arg2[%c2_92, %c2_93, %c0_94, %c0_95] : memref<4x4x8x3xbf16, #tpu.memory_space<vmem>>, vector<1x1x8x3xbf16>
    %77 = vector.shape_cast %76 : vector<1x1x8x3xbf16> to vector<8x3xbf16>
    %cst_96 = arith.constant dense<0.000000e+00> : vector<64x3xf32>
    %78 = tpu.matmul %75, %77, %cst_96 {dimension_numbers = #tpu.dot_dimension_numbers<[1], [0], [0], [1], [0, 0, 1, 1], [], []>} : vector<64x8xbf16>, vector<8x3xbf16>, vector<64x3xf32> -> vector<64x3xf32>
    %79 = arith.addf %72, %78 : vector<64x3xf32>
    %c0_97 = arith.constant 0 : index
    %c2_98 = arith.constant 2 : index
    %c1_99 = arith.constant 1 : index
    %c0_100 = arith.constant 0 : index
    %80 = vector.load %arg1[%c0_97, %c2_98, %c1_99, %c0_100] : memref<1x10x10x8xbf16, #tpu.memory_space<vmem>>, vector<1x8x8x8xbf16>
    %81 = vector.shape_cast %80 : vector<1x8x8x8xbf16> to vector<8x8x8xbf16>
    %82 = vector.shape_cast %81 : vector<8x8x8xbf16> to vector<64x8xbf16>
    %c2_101 = arith.constant 2 : index
    %c3_102 = arith.constant 3 : index
    %c0_103 = arith.constant 0 : index
    %c0_104 = arith.constant 0 : index
    %83 = vector.load %arg2[%c2_101, %c3_102, %c0_103, %c0_104] : memref<4x4x8x3xbf16, #tpu.memory_space<vmem>>, vector<1x1x8x3xbf16>
    %84 = vector.shape_cast %83 : vector<1x1x8x3xbf16> to vector<8x3xbf16>
    %cst_105 = arith.constant dense<0.000000e+00> : vector<64x3xf32>
    %85 = tpu.matmul %82, %84, %cst_105 {dimension_numbers = #tpu.dot_dimension_numbers<[1], [0], [0], [1], [0, 0, 1, 1], [], []>} : vector<64x8xbf16>, vector<8x3xbf16>, vector<64x3xf32> -> vector<64x3xf32>
    %86 = arith.addf %79, %85 : vector<64x3xf32>
    %cst_106 = arith.constant 0.000000e+00 : f32
    %87 = vector.broadcast %cst_106 : f32 to vector<64x3xf32>
    %c0_107 = arith.constant 0 : index
    %c1_108 = arith.constant 1 : index
    %c1_109 = arith.constant 1 : index
    %c0_110 = arith.constant 0 : index
    %88 = vector.load %arg1[%c0_107, %c1_108, %c1_109, %c0_110] : memref<1x10x10x8xbf16, #tpu.memory_space<vmem>>, vector<1x8x8x8xbf16>
    %89 = vector.shape_cast %88 : vector<1x8x8x8xbf16> to vector<8x8x8xbf16>
    %90 = vector.shape_cast %89 : vector<8x8x8xbf16> to vector<64x8xbf16>
    %c3_111 = arith.constant 3 : index
    %c0_112 = arith.constant 0 : index
    %c0_113 = arith.constant 0 : index
    %c0_114 = arith.constant 0 : index
    %91 = vector.load %arg2[%c3_111, %c0_112, %c0_113, %c0_114] : memref<4x4x8x3xbf16, #tpu.memory_space<vmem>>, vector<1x1x8x3xbf16>
    %92 = vector.shape_cast %91 : vector<1x1x8x3xbf16> to vector<8x3xbf16>
    %cst_115 = arith.constant dense<0.000000e+00> : vector<64x3xf32>
    %93 = tpu.matmul %90, %92, %cst_115 {dimension_numbers = #tpu.dot_dimension_numbers<[1], [0], [0], [1], [0, 0, 1, 1], [], []>} : vector<64x8xbf16>, vector<8x3xbf16>, vector<64x3xf32> -> vector<64x3xf32>
    %94 = arith.addf %87, %93 : vector<64x3xf32>
    %c0_116 = arith.constant 0 : index
    %c1_117 = arith.constant 1 : index
    %c2_118 = arith.constant 2 : index
    %c0_119 = arith.constant 0 : index
    %95 = vector.load %arg1[%c0_116, %c1_117, %c2_118, %c0_119] : memref<1x10x10x8xbf16, #tpu.memory_space<vmem>>, vector<1x8x8x8xbf16>
    %96 = vector.shape_cast %95 : vector<1x8x8x8xbf16> to vector<8x8x8xbf16>
    %97 = vector.shape_cast %96 : vector<8x8x8xbf16> to vector<64x8xbf16>
    %c3_120 = arith.constant 3 : index
    %c1_121 = arith.constant 1 : index
    %c0_122 = arith.constant 0 : index
    %c0_123 = arith.constant 0 : index
    %98 = vector.load %arg2[%c3_120, %c1_121, %c0_122, %c0_123] : memref<4x4x8x3xbf16, #tpu.memory_space<vmem>>, vector<1x1x8x3xbf16>
    %99 = vector.shape_cast %98 : vector<1x1x8x3xbf16> to vector<8x3xbf16>
    %cst_124 = arith.constant dense<0.000000e+00> : vector<64x3xf32>
    %100 = tpu.matmul %97, %99, %cst_124 {dimension_numbers = #tpu.dot_dimension_numbers<[1], [0], [0], [1], [0, 0, 1, 1], [], []>} : vector<64x8xbf16>, vector<8x3xbf16>, vector<64x3xf32> -> vector<64x3xf32>
    %101 = arith.addf %94, %100 : vector<64x3xf32>
    %c0_125 = arith.constant 0 : index
    %c2_126 = arith.constant 2 : index
    %c1_127 = arith.constant 1 : index
    %c0_128 = arith.constant 0 : index
    %102 = vector.load %arg1[%c0_125, %c2_126, %c1_127, %c0_128] : memref<1x10x10x8xbf16, #tpu.memory_space<vmem>>, vector<1x8x8x8xbf16>
    %103 = vector.shape_cast %102 : vector<1x8x8x8xbf16> to vector<8x8x8xbf16>
    %104 = vector.shape_cast %103 : vector<8x8x8xbf16> to vector<64x8xbf16>
    %c3_129 = arith.constant 3 : index
    %c2_130 = arith.constant 2 : index
    %c0_131 = arith.constant 0 : index
    %c0_132 = arith.constant 0 : index
    %105 = vector.load %arg2[%c3_129, %c2_130, %c0_131, %c0_132] : memref<4x4x8x3xbf16, #tpu.memory_space<vmem>>, vector<1x1x8x3xbf16>
    %106 = vector.shape_cast %105 : vector<1x1x8x3xbf16> to vector<8x3xbf16>
    %cst_133 = arith.constant dense<0.000000e+00> : vector<64x3xf32>
    %107 = tpu.matmul %104, %106, %cst_133 {dimension_numbers = #tpu.dot_dimension_numbers<[1], [0], [0], [1], [0, 0, 1, 1], [], []>} : vector<64x8xbf16>, vector<8x3xbf16>, vector<64x3xf32> -> vector<64x3xf32>
    %108 = arith.addf %101, %107 : vector<64x3xf32>
    %c0_134 = arith.constant 0 : index
    %c2_135 = arith.constant 2 : index
    %c2_136 = arith.constant 2 : index
    %c0_137 = arith.constant 0 : index
    %109 = vector.load %arg1[%c0_134, %c2_135, %c2_136, %c0_137] : memref<1x10x10x8xbf16, #tpu.memory_space<vmem>>, vector<1x8x8x8xbf16>
    %110 = vector.shape_cast %109 : vector<1x8x8x8xbf16> to vector<8x8x8xbf16>
    %111 = vector.shape_cast %110 : vector<8x8x8xbf16> to vector<64x8xbf16>
    %c3_138 = arith.constant 3 : index
    %c3_139 = arith.constant 3 : index
    %c0_140 = arith.constant 0 : index
    %c0_141 = arith.constant 0 : index
    %112 = vector.load %arg2[%c3_138, %c3_139, %c0_140, %c0_141] : memref<4x4x8x3xbf16, #tpu.memory_space<vmem>>, vector<1x1x8x3xbf16>
    %113 = vector.shape_cast %112 : vector<1x1x8x3xbf16> to vector<8x3xbf16>
    %cst_142 = arith.constant dense<0.000000e+00> : vector<64x3xf32>
    %114 = tpu.matmul %111, %113, %cst_142 {dimension_numbers = #tpu.dot_dimension_numbers<[1], [0], [0], [1], [0, 0, 1, 1], [], []>} : vector<64x8xbf16>, vector<8x3xbf16>, vector<64x3xf32> -> vector<64x3xf32>
    %115 = arith.addf %108, %114 : vector<64x3xf32>
    %116 = tpu.concatenate %28, %57, %86, %115 in 1 : vector<64x3xf32>, vector<64x3xf32>, vector<64x3xf32>, vector<64x3xf32> -> vector<64x12xf32>
    %cst_143 = arith.constant dense<0.000000e+00> : vector<12xf32>
    %117 = vector.multi_reduction <add>, %116, %cst_143 [0] : vector<64x12xf32> to vector<12xf32>
    %118 = vector.shape_cast %117 : vector<12xf32> to vector<1x12xf32>
    %c0_144 = arith.constant 0 : index
    %c0_145 = arith.constant 0 : index
    %c0_146 = arith.constant 0 : index
    %119 = vector.load %arg4[%c0_144, %c0_145, %c0_146] : memref<1x1x12xf32, #tpu.memory_space<vmem>>, vector<1x1x12xf32>
    %120 = vector.shape_cast %119 : vector<1x1x12xf32> to vector<1x12xf32>
    %121 = vector.shape_cast %118 : vector<1x12xf32> to vector<1x1x12xf32>
    tpu.vector_store %arg4[%c0_144, %c0_145, %c0_146], %121 {strides = array<i32>} : memref<1x1x12xf32, #tpu.memory_space<vmem>>, vector<1x1x12xf32>,
    %122 = arith.mulf %116, %116 : vector<64x12xf32>
    %cst_147 = arith.constant dense<0.000000e+00> : vector<12xf32>
    %123 = vector.multi_reduction <add>, %122, %cst_147 [0] : vector<64x12xf32> to vector<12xf32>
    %124 = vector.shape_cast %123 : vector<12xf32> to vector<1x12xf32>
    %c0_148 = arith.constant 0 : index
    %c0_149 = arith.constant 0 : index
    %c0_150 = arith.constant 0 : index
    %125 = vector.load %arg5[%c0_148, %c0_149, %c0_150] : memref<1x1x12xf32, #tpu.memory_space<vmem>>, vector<1x1x12xf32>
    %126 = vector.shape_cast %125 : vector<1x1x12xf32> to vector<1x12xf32>
    %127 = vector.shape_cast %124 : vector<1x12xf32> to vector<1x1x12xf32>
    tpu.vector_store %arg5[%c0_148, %c0_149, %c0_150], %127 {strides = array<i32>} : memref<1x1x12xf32, #tpu.memory_space<vmem>>, vector<1x1x12xf32>,
    %cst_151 = arith.constant 0.000000e+00 : f32
    %128 = vector.broadcast %cst_151 : f32 to vector<64x12xf32>
    %129 = arith.maximumf %116, %128 : vector<64x12xf32>
    %130 = arith.truncf %129 : vector<64x12xf32> to vector<64x12xbf16>
    %c0_152 = arith.constant 0 : index
    %c0_153 = arith.constant 0 : index
    %c0_154 = arith.constant 0 : index
    %131 = vector.load %arg3[%c0_152, %c0_153, %c0_154] : memref<1x64x12xbf16, #tpu.memory_space<vmem>>, vector<1x64x12xbf16>
    %132 = vector.shape_cast %131 : vector<1x64x12xbf16> to vector<64x12xbf16>
    %133 = vector.shape_cast %130 : vector<64x12xbf16> to vector<1x64x12xbf16>
    tpu.vector_store %arg3[%c0_152, %c0_153, %c0_154], %133 {strides = array<i32>} : memref<1x64x12xbf16, #tpu.memory_space<vmem>>, vector<1x64x12xbf16>,
    return
  }
  func.func @transform_0(%arg0: i32) -> (i32, i32, i32, i32) {
    %c0_i32 = arith.constant 0 : i32
    %c0_i32_0 = arith.constant 0 : i32
    %c0_i32_1 = arith.constant 0 : i32
    %c0_i32_2 = arith.constant 0 : i32
    return %arg0, %c0_i32, %c0_i32_0, %c0_i32_1 : i32, i32, i32, i32
  }
  func.func @transform_1(%arg0: i32) -> (i32, i32, i32, i32) {
    %c0_i32 = arith.constant 0 : i32
    %c0_i32_0 = arith.constant 0 : i32
    %c0_i32_1 = arith.constant 0 : i32
    %c0_i32_2 = arith.constant 0 : i32
    %c0_i32_3 = arith.constant 0 : i32
    return %c0_i32, %c0_i32_0, %c0_i32_1, %c0_i32_2 : i32, i32, i32, i32
  }
  func.func @transform_2(%arg0: i32) -> (i32, i32, i32) {
    %c0_i32 = arith.constant 0 : i32
    %c0_i32_0 = arith.constant 0 : i32
    %c0_i32_1 = arith.constant 0 : i32
    return %arg0, %c0_i32, %c0_i32_0 : i32, i32, i32
  }
  func.func @transform_3(%arg0: i32) -> (i32, i32, i32) {
    %c0_i32 = arith.constant 0 : i32
    %c0_i32_0 = arith.constant 0 : i32
    %c0_i32_1 = arith.constant 0 : i32
    return %arg0, %c0_i32, %c0_i32_0 : i32, i32, i32
  }
  func.func @transform_4(%arg0: i32) -> (i32, i32, i32) {
    %c0_i32 = arith.constant 0 : i32
    %c0_i32_0 = arith.constant 0 : i32
    %c0_i32_1 = arith.constant 0 : i32
    return %arg0, %c0_i32, %c0_i32_0 : i32, i32, i32
  }
}

</mosaic_0001>

<llo_original>
// kernel: tile.29
$region0: #{tile.29}
  #allocation0 [shape = 's32[1]{0}', space=sflag, size = 0x4, scoped, tag = 'scoped memory for tile.29']
  %s0 = inlined_call_operand.vmem [shape: f32[16], index: 0, kind: input, shape index: {}]
  %s1 = inlined_call_operand.vmem [shape: f32[16,16], index: 1, kind: output, shape index: {}]
  // Predicated region
  $region2: #{tile.29} parent=0 // pred_check
    _
  $region3: #{tile.29} parent=0 // pred_check_branch
    %3 = sbr.rel (0) target = $region5
  $region4: #{tile.29} parent=0 // pred_region
    _
  $region5: #{tile.29} parent=0 // pred_fallthru
    _
  %v4 = vld [vmem:[%s0] ss:$0 sm:$0xff]
  %5 = vst [vmem:[%s1] sm:$0xff] %v4
  %s6 = scalar_lea.vmem %s1, 8
  %7 = vst [vmem:[%s6] sm:$0xff] %v4

// kernel: tile.31
$region0: #{tile.31}
  %s0 = inlined_call_operand.vmem [shape: f32[16,16], index: 0, kind: input, shape index: {}]
  %s1 = inlined_call_operand.vmem [shape: f32[1,256], index: 1, kind: output, shape index: {}]
  $region1: #{tile.31} parent=0
    #allocation0 [shape = 'u8[8192]{0}', space=vmem, size = 0x2000, scoped, tag = 'scoped mem for output reshape']
    %s2 = smov 3
    %v3 = vld [vmem:[%s0] ss:$8 sm:%s2]
    %vm4 = vcmask 130048
    %5 = vst.msk [vmem:[#allocation0] ss:$8 sm:$0x3] %vm4, %v3
    %s6 = scalar_lea.vmem %s0, 7
    %s7 = smov 3
    %v8 = vld [vmem:[%s6] ss:$8 sm:%s7]
    %9 = vrot.lane.b32.xlu0 %v8, 112
    %v10 = vpop.permute.xlu0 %9
    %vm11 = vcmask 1048448
    %12 = vst.msk [vmem:[#allocation0] ss:$8 sm:$0x3] %vm11, %v10
    %s13 = scalar_lea.vmem %s0, 6
    %s14 = smov 3
    %v15 = vld [vmem:[%s13] ss:$8 sm:%s14]
    %16 = vrot.lane.b32.xlu0 %v15, 96
    %v17 = vpop.permute.xlu0 %16
    %vm18 = vcmask 917248
    %19 = vst.msk [vmem:[#allocation0] ss:$8 sm:$0x3] %vm18, %v17
    %s20 = scalar_lea.vmem %s0, 5
    %s21 = smov 3
    %v22 = vld [vmem:[%s20] ss:$8 sm:%s21]
    %23 = vrot.lane.b32.xlu0 %v22, 80
    %v24 = vpop.permute.xlu0 %23
    %vm25 = vcmask 786048
    %26 = vst.msk [vmem:[#allocation0] ss:$8 sm:$0x3] %vm25, %v24
    %s27 = scalar_lea.vmem %s0, 4
    %s28 = smov 3
    %v29 = vld [vmem:[%s27] ss:$8 sm:%s28]
    %30 = vrot.lane.b32.xlu0 %v29, 64
    %v31 = vpop.permute.xlu0 %30
    %vm32 = vcmask 654848
    %33 = vst.msk [vmem:[#allocation0] ss:$8 sm:$0x3] %vm32, %v31
    %s34 = scalar_lea.vmem %s0, 3
    %s35 = smov 3
    %v36 = vld [vmem:[%s34] ss:$8 sm:%s35]
    %37 = vrot.lane.b32.xlu0 %v36, 48
    %v38 = vpop.permute.xlu0 %37
    %vm39 = vcmask 523648
    %40 = vst.msk [vmem:[#allocation0] ss:$8 sm:$0x3] %vm39, %v38
    %s41 = scalar_lea.vmem %s0, 2
    %s42 = smov 3
    %v43 = vld [vmem:[%s41] ss:$8 sm:%s42]
    %44 = vrot.lane.b32.xlu0 %v43, 32
    %v45 = vpop.permute.xlu0 %44
    %vm46 = vcmask 392448
    %47 = vst.msk [vmem:[#allocation0] ss:$8 sm:$0x3] %vm46, %v45
    %s48 = scalar_lea.vmem %s0, 1
    %s49 = smov 3
    %v50 = vld [vmem:[%s48] ss:$8 sm:%s49]
    %51 = vrot.lane.b32.xlu0 %v50, 16
    %v52 = vpop.permute.xlu0 %51
    %vm53 = vcmask 261248
    %54 = vst.msk [vmem:[#allocation0] ss:$8 sm:$0x3] %vm53, %v52
    %s56 = sshll.u32 1, 1
    %s57 = ssub.s32 %s56, 1
    %v59 = vld [vmem:[#allocation0] sm:%s57]
    %s60 = sshll.u32 1, 1
    %s61 = ssub.s32 %s60, 1
    %62 = vst [vmem:[%s1] sm:%s61] %v59
    %s63 = scalar_lea.vmem [#allocation0], 8
    %v64 = vld [vmem:[%s63] sm:%s57]
    %s65 = sshll.u32 1, 1
    %s66 = ssub.s32 %s65, 1
    %s67 = scalar_lea.vmem %s1, 1
    %68 = vst [vmem:[%s67] sm:%s66] %v64

// kernel: tile.39
$region0: #{tile.39}
  #allocation0 [shape = 's32[1]{0}', space=sflag, size = 0x4, scoped, tag = 'scoped memory for tile.39']
  %s0 = inlined_call_operand.vmem [shape: f32[8], index: 0, kind: input, shape index: {}]
  %s1 = inlined_call_operand.vmem [shape: f32[4,8], index: 1, kind: output, shape index: {}]
  // Predicated region
  $region2: #{tile.39} parent=0 // pred_check
    _
  $region3: #{tile.39} parent=0 // pred_check_branch
    %3 = sbr.rel (0) target = $region5
  $region4: #{tile.39} parent=0 // pred_region
    _
  $region5: #{tile.39} parent=0 // pred_fallthru
    _
  %v4 = vld [vmem:[%s0] ss:$0 sm:$0xff]
  %5 = vst [vmem:[%s1] sm:$0xf] %v4

// kernel: _lambda_.7
$region0: #{_lambda_.7}
  #allocation0 [shape = 'u32[]', space=smem, size = 0x4, offset = 0x4, fixed_abs, tag = 'smem constant byte address 0x4 - core index']
  #allocation1 [shape = 'u32[144,128]{1,0:T(1,128)}', space=vmem, size = 0x12000, scoped, tag = 'internal scratch']
  %s0 = inlined_call_operand.vmem [shape: bf16[2,1,1,8], index: 0, kind: input, shape index: {}]
  %s1 = inlined_call_operand.vmem [shape: bf16[1,1,8,256], index: 1, kind: input, shape index: {}]
  %s2 = inlined_call_operand.vmem [shape: bf16[2,1,256], index: 2, kind: output, shape index: {0}]
  %s3 = inlined_call_operand.vmem [shape: f32[2,1,256], index: 3, kind: output, shape index: {1}]
  %s4 = inlined_call_operand.vmem [shape: f32[2,1,256], index: 4, kind: output, shape index: {2}]
  %5 = xla_tuple %s2, %s3, %s4
  %s6 = sld [smem:[#allocation0]]
  $region57: #{_lambda_.7} parent=0
    _
  %s8 = ssub.s32 1, %s6
  %s9 = scalar_select 0, %s8, %s6
  loop: start=0, step=1, limit=4
  $region2: #{_lambda_.7} parent=0 // loop_pre_header
    _
  $region3: #{_lambda_.7} parent=0 // loop_header
    %s11 = sphi 0, %s15
    %p12 = scmp.ge.s32.totalorder %s11, 4
    %s21 = sphi 0, %s23
    %s24 = sphi 0, %s21
    %s25 = sphi 0, %s24
    %s41 = sphi 0, %s25
    %s45 = sphi 0, %s45
    %s47 = sphi 0, %s45
    %s48 = sphi 0, %s47
    %s62 = sphi 0, %s48
    %s68 = sphi 0, %s70
    %s71 = sphi 0, %s68
    %s72 = sphi 0, %s71
    %s88 = sphi 0, %s72
    %s94 = sphi 0, %s96
    %s97 = sphi 0, %s94
    %s98 = sphi 0, %s97
    %s114 = sphi 0, %s98
    %s120 = sphi 0, %s122
    %s123 = sphi 0, %s120
    %s124 = sphi 0, %s123
    %s140 = sphi 0, %s124
  $region4: #{_lambda_.7} parent=0 // loop_header_branch
    %14 = sbr.rel (%p12) target = $region8
  $region5: #{_lambda_.7} parent=0 // loop_body
    %s16 = ssub.s32 %s11, 1
    %s17 = ssub.s32 %s11, 2
    %s18 = sadd.s32 %s11, 1
    %s19 = ssub.s32 %s11, %s18
    %p20 = scmp.eq.s32.totalorder %s19, 0
    %s22 = sadd.s32 %s21, 1
    %s23 = scalar_select %p20, %s21, %s22
    %p26 = pneg %p20
    %p27 = scmp.eq.s32.totalorder %s11, 1
    %p28 = por %p26, %p27
    %p29 = scmp.ne.s32.totalorder %s21, %s24
    %p30 = scmp.eq.s32.totalorder %s11, 0
    %p31 = por %p29, %p30
    %p32 = scmp.ne.s32.totalorder %s21, %s24
    %p33 = scmp.eq.s32.totalorder %s16, 1
    %p34 = por %p32, %p33
    %p35 = scmp.ne.s32.totalorder %s24, %s25
    %p36 = scmp.eq.s32.totalorder %s16, 0
    %p37 = por %p35, %p36
    %p38 = scmp.ne.s32.totalorder %s24, %s25
    %p39 = scmp.eq.s32.totalorder %s17, 1
    %p40 = por %p38, %p39
    %p42 = scmp.ne.s32.totalorder %s25, %s41
    %p43 = scmp.eq.s32.totalorder %s17, 0
    %p44 = por %p42, %p43
    %s46 = sadd.s32 %s45, 1
    %p49 = scmp.eq.s32.totalorder %s11, 1
    %p50 = scmp.ne.s32.totalorder %s45, %s47
    %p51 = scmp.eq.s32.totalorder %s11, 0
    %p52 = por %p50, %p51
    %p53 = scmp.ne.s32.totalorder %s45, %s47
    %p54 = scmp.eq.s32.totalorder %s16, 1
    %p55 = por %p53, %p54
    %p56 = scmp.ne.s32.totalorder %s47, %s48
    %p57 = scmp.eq.s32.totalorder %s16, 0
    %p58 = por %p56, %p57
    %p59 = scmp.ne.s32.totalorder %s47, %s48
    %p60 = scmp.eq.s32.totalorder %s17, 1
    %p61 = por %p59, %p60
    %p63 = scmp.ne.s32.totalorder %s48, %s62
    %p64 = scmp.eq.s32.totalorder %s17, 0
    %p65 = por %p63, %p64
    %s66 = ssub.s32 %s11, %s18
    %p67 = scmp.eq.s32.totalorder %s66, 0
    %s69 = sadd.s32 %s68, 1
    %s70 = scalar_select %p67, %s68, %s69
    %p73 = pneg %p67
    %p74 = scmp.eq.s32.totalorder %s11, 1
    %p75 = por %p73, %p74
    %p76 = scmp.ne.s32.totalorder %s68, %s71
    %p77 = scmp.eq.s32.totalorder %s11, 0
    %p78 = por %p76, %p77
    %p79 = scmp.ne.s32.totalorder %s68, %s71
    %p80 = scmp.eq.s32.totalorder %s16, 1
    %p81 = por %p79, %p80
    %p82 = scmp.ne.s32.totalorder %s71, %s72
    %p83 = scmp.eq.s32.totalorder %s16, 0
    %p84 = por %p82, %p83
    %p85 = scmp.ne.s32.totalorder %s71, %s72
    %p86 = scmp.eq.s32.totalorder %s17, 1
    %p87 = por %p85, %p86
    %p89 = scmp.ne.s32.totalorder %s72, %s88
    %p90 = scmp.eq.s32.totalorder %s17, 0
    %p91 = por %p89, %p90
    %s92 = ssub.s32 %s11, %s18
    %p93 = scmp.eq.s32.totalorder %s92, 0
    %s95 = sadd.s32 %s94, 1
    %s96 = scalar_select %p93, %s94, %s95
    %p99 = pneg %p93
    %p100 = scmp.eq.s32.totalorder %s11, 1
    %p101 = por %p99, %p100
    %p102 = scmp.ne.s32.totalorder %s94, %s97
    %p103 = scmp.eq.s32.totalorder %s11, 0
    %p104 = por %p102, %p103
    %p105 = scmp.ne.s32.totalorder %s94, %s97
    %p106 = scmp.eq.s32.totalorder %s16, 1
    %p107 = por %p105, %p106
    %p108 = scmp.ne.s32.totalorder %s97, %s98
    %p109 = scmp.eq.s32.totalorder %s16, 0
    %p110 = por %p108, %p109
    %p111 = scmp.ne.s32.totalorder %s97, %s98
    %p112 = scmp.eq.s32.totalorder %s17, 1
    %p113 = por %p111, %p112
    %p115 = scmp.ne.s32.totalorder %s98, %s114
    %p116 = scmp.eq.s32.totalorder %s17, 0
    %p117 = por %p115, %p116
    %s118 = ssub.s32 %s11, %s18
    %p119 = scmp.eq.s32.totalorder %s118, 0
    %s121 = sadd.s32 %s120, 1
    %s122 = scalar_select %p119, %s120, %s121
    %p125 = pneg %p119
    %p126 = scmp.eq.s32.totalorder %s11, 1
    %p127 = por %p125, %p126
    %p128 = scmp.ne.s32.totalorder %s120, %s123
    %p129 = scmp.eq.s32.totalorder %s11, 0
    %p130 = por %p128, %p129
    %p131 = scmp.ne.s32.totalorder %s120, %s123
    %p132 = scmp.eq.s32.totalorder %s16, 1
    %p133 = por %p131, %p132
    %p134 = scmp.ne.s32.totalorder %s123, %s124
    %p135 = scmp.eq.s32.totalorder %s16, 0
    %p136 = por %p134, %p135
    %p137 = scmp.ne.s32.totalorder %s123, %s124
    %p138 = scmp.eq.s32.totalorder %s17, 1
    %p139 = por %p137, %p138
    %p141 = scmp.ne.s32.totalorder %s124, %s140
    %p142 = scmp.eq.s32.totalorder %s17, 0
    %p143 = por %p141, %p142
    %p144 = scmp.le.s32.totalorder 1, %s11
    %p145 = scmp.lt.s32.totalorder %s11, 3
    %p146 = pnand %p144, %p145
    %p147 = pneg %p146
    // Predicated region
    $region9: #{_lambda_.7} parent=5 // pred_check
      _
    $region10: #{_lambda_.7} parent=5 // pred_check_branch
      %149 = sbr.rel (%p146) target = $region12
    $region11: #{_lambda_.7} parent=5 // pred_region
      %s150 = ssub.s32 %s11, 1
      // Predicated region
      $region13: #{_lambda_.7} parent=11 // pred_check
        %p151 = pneg %p58
      $region14: #{_lambda_.7} parent=11 // pred_check_branch
        %153 = sbr.rel (%p151) target = $region16
      $region15: #{_lambda_.7} parent=11 // pred_region
        _
      $region16: #{_lambda_.7} parent=11 // pred_fallthru
        _
    $region12: #{_lambda_.7} parent=5 // pred_fallthru
      _
    %p154 = scmp.lt.s32.totalorder %s11, 2
    // Predicated region
    $region17: #{_lambda_.7} parent=5 // pred_check
      %p155 = pneg %p154
    $region18: #{_lambda_.7} parent=5 // pred_check_branch
      %157 = sbr.rel (%p155) target = $region20
    $region19: #{_lambda_.7} parent=5 // pred_region
      // Predicated region
      $region21: #{_lambda_.7} parent=19 // pred_check
        %p158 = pneg %p31
      $region22: #{_lambda_.7} parent=19 // pred_check_branch
        %160 = sbr.rel (%p158) target = $region24
      $region23: #{_lambda_.7} parent=19 // pred_region
        %p161 = scmp.lt.s32.totalorder %s11, 1
        %s162 = scalar_select %p161, %s11, 1
        %s163 = scalar_lea.vmem %s0, %s162
      $region24: #{_lambda_.7} parent=19 // pred_fallthru
        _
    $region20: #{_lambda_.7} parent=5 // pred_fallthru
      _
    %p164 = scmp.le.s32.totalorder 1, %s11
    %p165 = scmp.lt.s32.totalorder %s11, 3
    %p166 = pnand %p164, %p165
    %p167 = pneg %p166
    // Predicated region
    $region25: #{_lambda_.7} parent=5 // pred_check
      _
    $region26: #{_lambda_.7} parent=5 // pred_check_branch
      %169 = sbr.rel (%p166) target = $region28
    $region27: #{_lambda_.7} parent=5 // pred_region
      %s170 = ssub.s32 %s11, 1
      %p171 = scmp.lt.s32.totalorder %s16, 1
      %s172 = scalar_select %p171, %s16, 1
      %s173 = scalar_lea.vmem %s0, %s172
      %p174 = pneg %p37
      %p175 = pneg %p34
      %p176 = pneg %p58
      %p177 = pneg %p55
      %p178 = pneg %p84
      %p179 = pneg %p81
      %p180 = scmp.lt.s32.totalorder %s16, 1
      %s181 = scalar_select %p180, %s16, 1
      %s182 = smul.addr %s181, 2
      %s183 = scalar_lea.vmem %s2, %s182
      %p184 = pneg %p110
      %p185 = pneg %p107
      %p186 = scmp.lt.s32.totalorder %s16, 1
      %s187 = scalar_select %p186, %s16, 1
      %s188 = smul.addr %s187, 2
      %s189 = scalar_lea.vmem %s3, %s188
      %p190 = pneg %p136
      %p191 = pneg %p133
      %p192 = scmp.lt.s32.totalorder %s16, 1
      %s193 = scalar_select %p192, %s16, 1
      %s194 = smul.addr %s193, 2
      %s195 = scalar_lea.vmem %s4, %s194
      %p196 = scmp.lt.s32.totalorder %s16, 1
      %s197 = scalar_select %p196, %s16, 1
      %s198 = scalar_lea.vmem %s0, %s197
      %p199 = scmp.lt.s32.totalorder %s16, 1
      %s200 = scalar_select %p199, %s16, 1
      %s201 = smul.addr %s200, 2
      %s202 = scalar_lea.vmem %s2, %s201
      %p203 = scmp.lt.s32.totalorder %s16, 1
      %s204 = scalar_select %p203, %s16, 1
      %s205 = smul.addr %s204, 2
      %s206 = scalar_lea.vmem %s3, %s205
      %p207 = scmp.lt.s32.totalorder %s16, 1
      %s208 = scalar_select %p207, %s16, 1
      %s209 = smul.addr %s208, 2
      %s210 = scalar_lea.vmem %s4, %s209
      %v212 = vld [vmem:[%s198] sm:$0x1]
      %v213 = vld [vmem:[%s1] sm:$0xff]
      %v215 = vunpack.c.l.b16 %v213
      %v216 = vunpack.c.h.b16 %v213
      %v217 = vpack.c.b16 %v215, %v215
      %v218 = vpack.c.b16 %v216, %v216
      %vm219 = vcmask 64512
      %v221 = vsel %vm219, %v212, 0
      %vm223 = vcmask 1043456
      %v225 = vsel %vm223, %v217, 0
      %v228 = vsel %vm223, %v218, 0
      %230 = vmatprep.subr.bf16.mxu0 0
      %231 = vmatpush1.bf16.msra.mxu0 0
      %232 = vmatprep.subr.bf16.mxu0 0
      %233 = vmatpush1.bf16.msra.mxu0 0
      %234 = vmatprep.subr.bf16.mxu0 0
      %235 = vmatpush1.bf16.msra.mxu0 0
      %236 = vmatprep.subr.bf16.mxu0 0
      %237 = vmatpush1.bf16.msra.mxu0 0
      %238 = vmatprep.subr.bf16.mxu0 0
      %239 = vmatpush1.bf16.msra.mxu0 0
      %240 = vmatprep.subr.bf16.mxu0 0
      %241 = vmatpush1.bf16.msra.mxu0 0
      %242 = vmatprep.subr.bf16.mxu0 0
      %243 = vmatpush1.bf16.msra.mxu0 0
      %244 = vmatprep.subr.bf16.mxu0 %v228
      %245 = vmatpush1.bf16.msra.mxu0 %v225
      %246 = vmatprep.subr.bf16.mxu0 0
      %247 = vmatpush2.bf16.msra.mxu0 0
      %248 = vmatprep.subr.bf16.mxu0 0
      %249 = vmatpush2.bf16.msra.mxu0 0
      %250 = vmatprep.subr.bf16.mxu0 0
      %251 = vmatpush2.bf16.msra.mxu0 0
      %252 = vmatprep.subr.bf16.mxu0 0
      %253 = vmatpush2.bf16.msra.mxu0 0
      %254 = vmatprep.subr.bf16.mxu0 0
      %255 = vmatpush2.bf16.msra.mxu0 0
      %256 = vmatprep.subr.bf16.mxu0 0
      %257 = vmatpush2.bf16.msra.mxu0 0
      %258 = vmatprep.subr.bf16.mxu0 0
      %259 = vmatpush2.bf16.msra.mxu0 0
      %260 = vmatprep.subr.bf16.mxu0 0
      %261 = vmatpush2.bf16.msra.mxu0 0
      %262 = vmatprep.mubr.bf16.mxu0 0
      %263 = vmatmul.mubr.bf16.gmra.mxu0 %v221
      %v264 = vpop.f32.mrf.mxu0
      %v265 = vadd.f32 0.0, %v264
      %v266 = vpop.f32.mrf.mxu0
      %v267 = vadd.f32 0.0, %v266
      %v268 = vpop.f32.mrf.mxu0
      %v269 = vpop.f32.mrf.mxu0
      %270 = vdwg.mxu0
      %v271 = vadd.f32 %v265, 0.0
      %v272 = vadd.f32 %v267, 0.0
      %v275 = vcombine.low %v271, %v272
      %v277 = vunpack.c.l.s4 1966171168
      %v278 = vunpack.c.0.s8 %v277
      %v279 = vlaneseq
      %v280 = vshrl.u32 %v279, 7
      %v281 = vsub.s32 %v278, %v280
      %v282 = vrot.slane %v275, %v281
      %v284 = vunpack.c.l.s4 1966171168
      %v285 = vunpack.c.0.s8 %v284
      %v286 = vlaneseq
      %v287 = vshrl.u32 %v286, 7
      %v288 = vsub.s32 %v285, %v287
      %v289 = vrot.slane %v282, %v288
      %v291 = vlaneseq
      %vm292 = vcmp.ge.s32.totalorder %v291, 0
      %vm293 = vcmp.lt.s32.totalorder %v291, 256
      %vm294 = vmand %vm292, %vm293
      %295 = vst.msk [vmem:[%s206] sm:$0x3] %vm294, %v289
      %v296 = vmul.f32 %v265, %v265
      %v297 = vmul.f32 %v267, %v267
      %v298 = vadd.f32 %v296, 0.0
      %v299 = vadd.f32 %v297, 0.0
      %v302 = vcombine.low %v298, %v299
      %v304 = vunpack.c.l.s4 1966171168
      %v305 = vunpack.c.0.s8 %v304
      %v306 = vlaneseq
      %v307 = vshrl.u32 %v306, 7
      %v308 = vsub.s32 %v305, %v307
      %v309 = vrot.slane %v302, %v308
      %v311 = vunpack.c.l.s4 1966171168
      %v312 = vunpack.c.0.s8 %v311
      %v313 = vlaneseq
      %v314 = vshrl.u32 %v313, 7
      %v315 = vsub.s32 %v312, %v314
      %v316 = vrot.slane %v309, %v315
      %318 = vst.msk [vmem:[%s210] sm:$0x3] %vm294, %v316
      %v319 = vpack.c.bf16 %v265, %v265
      %v320 = vpack.c.bf16 %v267, %v267
      %v323 = vcombine.low %v319, %v320
      %v325 = vunpack.c.l.s4 1966171168
      %v326 = vunpack.c.0.s8 %v325
      %v327 = vlaneseq
      %v328 = vshrl.u32 %v327, 7
      %v329 = vsub.s32 %v326, %v328
      %v330 = vrot.slane %v323, %v329
      %v332 = vunpack.c.l.s4 1966171168
      %v333 = vunpack.c.0.s8 %v332
      %v334 = vlaneseq
      %v335 = vshrl.u32 %v334, 7
      %v336 = vsub.s32 %v333, %v335
      %v337 = vrot.slane %v330, %v336
      %vm339 = vcmask 1040384
      %vm340 = vsmask.f32 256
      %vm341 = vmand %vm339, %vm340
      %vm342 = vcmask 1041409
      %vm343 = vsmask.f32 1280
      %vm344 = vmand %vm342, %vm343
      %vm345 = vmor %vm344, %vm341
      %v346 = vld [vmem:[%s202] sm:$0x3]
      %v347 = vsel %vm345, %v337, %v346
      %348 = vst [vmem:[%s202] sm:$0x3] %v347
      %p349 = scmp.lt.s32.totalorder %s16, 1
      %s350 = scalar_select %p349, %s16, 1
      %s351 = smul.addr %s350, 2
      %s352 = scalar_lea.vmem %s2, %s351
      %p353 = scmp.lt.s32.totalorder %s16, 1
      %s354 = scalar_select %p353, %s16, 1
      %s355 = smul.addr %s354, 2
      %s356 = scalar_lea.vmem %s3, %s355
      %p357 = scmp.lt.s32.totalorder %s16, 1
      %s358 = scalar_select %p357, %s16, 1
      %s359 = smul.addr %s358, 2
      %s360 = scalar_lea.vmem %s4, %s359
      // Predicated region
      $region29: #{_lambda_.7} parent=27 // pred_check
        %p361 = pneg %p81
      $region30: #{_lambda_.7} parent=27 // pred_check_branch
        %363 = sbr.rel (%p361) target = $region32
      $region31: #{_lambda_.7} parent=27 // pred_region
        _
      $region32: #{_lambda_.7} parent=27 // pred_fallthru
        _
      // Predicated region
      $region33: #{_lambda_.7} parent=27 // pred_check
        %p364 = pneg %p107
      $region34: #{_lambda_.7} parent=27 // pred_check_branch
        %366 = sbr.rel (%p364) target = $region36
      $region35: #{_lambda_.7} parent=27 // pred_region
        _
      $region36: #{_lambda_.7} parent=27 // pred_fallthru
        _
      // Predicated region
      $region37: #{_lambda_.7} parent=27 // pred_check
        %p367 = pneg %p133
      $region38: #{_lambda_.7} parent=27 // pred_check_branch
        %369 = sbr.rel (%p367) target = $region40
      $region39: #{_lambda_.7} parent=27 // pred_region
        _
      $region40: #{_lambda_.7} parent=27 // pred_fallthru
        _
    $region28: #{_lambda_.7} parent=5 // pred_fallthru
      _
    %p370 = scmp.le.s32.totalorder 2, %s11
    // Predicated region
    $region41: #{_lambda_.7} parent=5 // pred_check
      %p371 = pneg %p370
    $region42: #{_lambda_.7} parent=5 // pred_check_branch
      %373 = sbr.rel (%p371) target = $region44
    $region43: #{_lambda_.7} parent=5 // pred_region
      %s374 = ssub.s32 %s11, 2
      // Predicated region
      $region45: #{_lambda_.7} parent=43 // pred_check
        %p375 = pneg %p87
      $region46: #{_lambda_.7} parent=43 // pred_check_branch
        %377 = sbr.rel (%p375) target = $region48
      $region47: #{_lambda_.7} parent=43 // pred_region
        %p378 = scmp.lt.s32.totalorder %s17, 1
        %s379 = scalar_select %p378, %s17, 1
        %s380 = smul.addr %s379, 2
        %s381 = scalar_lea.vmem %s2, %s380
      $region48: #{_lambda_.7} parent=43 // pred_fallthru
        _
      // Predicated region
      $region49: #{_lambda_.7} parent=43 // pred_check
        %p382 = pneg %p113
      $region50: #{_lambda_.7} parent=43 // pred_check_branch
        %384 = sbr.rel (%p382) target = $region52
      $region51: #{_lambda_.7} parent=43 // pred_region
        %p385 = scmp.lt.s32.totalorder %s17, 1
        %s386 = scalar_select %p385, %s17, 1
        %s387 = smul.addr %s386, 2
        %s388 = scalar_lea.vmem %s3, %s387
      $region52: #{_lambda_.7} parent=43 // pred_fallthru
        _
      // Predicated region
      $region53: #{_lambda_.7} parent=43 // pred_check
        %p389 = pneg %p139
      $region54: #{_lambda_.7} parent=43 // pred_check_branch
        %391 = sbr.rel (%p389) target = $region56
      $region55: #{_lambda_.7} parent=43 // pred_region
        %p392 = scmp.lt.s32.totalorder %s17, 1
        %s393 = scalar_select %p392, %s17, 1
        %s394 = smul.addr %s393, 2
        %s395 = scalar_lea.vmem %s4, %s394
      $region56: #{_lambda_.7} parent=43 // pred_fallthru
        _
    $region44: #{_lambda_.7} parent=5 // pred_fallthru
      _
  $region6: #{_lambda_.7} parent=0 // loop_footer
    %s15 = sadd.s32 1, %s11
  $region7: #{_lambda_.7} parent=0 // loop_footer_branch
    %10 = sbr.rel target = $region3
  $region8: #{_lambda_.7} parent=0 // loop_exit
    _

// kernel: tile.41
$region0: #{tile.41}
  %s0 = inlined_call_operand.vmem [shape: f32[4,8], index: 0, kind: input, shape index: {}]
  %s1 = inlined_call_operand.vmem [shape: f32[1,32], index: 1, kind: output, shape index: {}]
  $region1: #{tile.41} parent=0
    #allocation0 [shape = 'u8[4096]{0}', space=vmem, size = 0x1000, scoped, tag = 'scoped mem for output reshape']
    #allocation1 [shape = 'u8[4096]{0}', space=vmem, size = 0x1000, scoped, tag = 'scoped mem for input reshape']
    %s3 = sshll.u32 1, 4
    %s4 = ssub.s32 %s3, 1
    %v5 = vld [vmem:[%s0] sm:%s4]
    %6 = vst [vmem:[#allocation1] sm:%s4] %v5
    %v7 = vld [vmem:[#allocation1] sm:$0x1]
    %vm8 = vcmask 64512
    %9 = vst.msk [vmem:[#allocation0] sm:$0x1] %vm8, %v7
    %s10 = scalar_lea.vmem [#allocation1], 3
    %v11 = vld [vmem:[%s10] sm:$0x1]
    %12 = vrot.lane.b32.xlu0 %v11, 24
    %v13 = vpop.permute.xlu0 %12
    %vm14 = vcmask 261312
    %15 = vst.msk [vmem:[#allocation0] sm:$0x1] %vm14, %v13
    %s16 = scalar_lea.vmem [#allocation1], 2
    %v17 = vld [vmem:[%s16] sm:$0x1]
    %18 = vrot.lane.b32.xlu0 %v17, 16
    %v19 = vpop.permute.xlu0 %18
    %vm20 = vcmask 195712
    %21 = vst.msk [vmem:[#allocation0] sm:$0x1] %vm20, %v19
    %s22 = scalar_lea.vmem [#allocation1], 1
    %v23 = vld [vmem:[%s22] sm:$0x1]
    %24 = vrot.lane.b32.xlu0 %v23, 8
    %v25 = vpop.permute.xlu0 %24
    %vm26 = vcmask 130112
    %27 = vst.msk [vmem:[#allocation0] sm:$0x1] %vm26, %v25
    %s29 = sshll.u32 1, 1
    %s30 = ssub.s32 %s29, 1
    %v32 = vld [vmem:[#allocation0] sm:%s30]
    %s33 = sshll.u32 1, 1
    %s34 = ssub.s32 %s33, 1
    %35 = vst [vmem:[%s1] sm:%s34] %v32

// kernel: _lambda_.8
$region0: #{_lambda_.8}
  #allocation0 [shape = 'u32[]', space=smem, size = 0x4, offset = 0x4, fixed_abs, tag = 'smem constant byte address 0x4 - core index']
  #allocation1 [shape = 'u32[144,128]{1,0:T(1,128)}', space=vmem, size = 0x12000, scoped, tag = 'internal scratch']
  %s0 = inlined_call_operand.vmem [shape: bf16[2,1,256], index: 0, kind: input, shape index: {}]
  %s1 = inlined_call_operand.vmem [shape: f32[1,256], index: 1, kind: input, shape index: {}]
  %s2 = inlined_call_operand.vmem [shape: f32[1,256], index: 2, kind: input, shape index: {}]
  %s3 = inlined_call_operand.vmem [shape: bf16[2,1,256], index: 3, kind: output, shape index: {}]
  %s4 = sld [smem:[#allocation0]]
  $region45: #{_lambda_.8} parent=0
    _
  %s6 = ssub.s32 1, %s4
  %s7 = scalar_select 0, %s6, %s4
  loop: start=0, step=1, limit=4
  $region2: #{_lambda_.8} parent=0 // loop_pre_header
    _
  $region3: #{_lambda_.8} parent=0 // loop_header
    %s9 = sphi 0, %s13
    %p10 = scmp.ge.s32.totalorder %s9, 4
    %s19 = sphi 0, %s21
    %s22 = sphi 0, %s19
    %s23 = sphi 0, %s22
    %s39 = sphi 0, %s23
    %s43 = sphi 0, %s43
    %s45 = sphi 0, %s43
    %s46 = sphi 0, %s45
    %s60 = sphi 0, %s46
    %s64 = sphi 0, %s64
    %s66 = sphi 0, %s64
    %s67 = sphi 0, %s66
    %s81 = sphi 0, %s67
    %s87 = sphi 0, %s89
    %s90 = sphi 0, %s87
    %s91 = sphi 0, %s90
    %s107 = sphi 0, %s91
  $region4: #{_lambda_.8} parent=0 // loop_header_branch
    %12 = sbr.rel (%p10) target = $region8
  $region5: #{_lambda_.8} parent=0 // loop_body
    %s14 = ssub.s32 %s9, 1
    %s15 = ssub.s32 %s9, 2
    %s16 = sadd.s32 %s9, 1
    %s17 = ssub.s32 %s9, %s16
    %p18 = scmp.eq.s32.totalorder %s17, 0
    %s20 = sadd.s32 %s19, 1
    %s21 = scalar_select %p18, %s19, %s20
    %p24 = pneg %p18
    %p25 = scmp.eq.s32.totalorder %s9, 1
    %p26 = por %p24, %p25
    %p27 = scmp.ne.s32.totalorder %s19, %s22
    %p28 = scmp.eq.s32.totalorder %s9, 0
    %p29 = por %p27, %p28
    %p30 = scmp.ne.s32.totalorder %s19, %s22
    %p31 = scmp.eq.s32.totalorder %s14, 1
    %p32 = por %p30, %p31
    %p33 = scmp.ne.s32.totalorder %s22, %s23
    %p34 = scmp.eq.s32.totalorder %s14, 0
    %p35 = por %p33, %p34
    %p36 = scmp.ne.s32.totalorder %s22, %s23
    %p37 = scmp.eq.s32.totalorder %s15, 1
    %p38 = por %p36, %p37
    %p40 = scmp.ne.s32.totalorder %s23, %s39
    %p41 = scmp.eq.s32.totalorder %s15, 0
    %p42 = por %p40, %p41
    %s44 = sadd.s32 %s43, 1
    %p47 = scmp.eq.s32.totalorder %s9, 1
    %p48 = scmp.ne.s32.totalorder %s43, %s45
    %p49 = scmp.eq.s32.totalorder %s9, 0
    %p50 = por %p48, %p49
    %p51 = scmp.ne.s32.totalorder %s43, %s45
    %p52 = scmp.eq.s32.totalorder %s14, 1
    %p53 = por %p51, %p52
    %p54 = scmp.ne.s32.totalorder %s45, %s46
    %p55 = scmp.eq.s32.totalorder %s14, 0
    %p56 = por %p54, %p55
    %p57 = scmp.ne.s32.totalorder %s45, %s46
    %p58 = scmp.eq.s32.totalorder %s15, 1
    %p59 = por %p57, %p58
    %p61 = scmp.ne.s32.totalorder %s46, %s60
    %p62 = scmp.eq.s32.totalorder %s15, 0
    %p63 = por %p61, %p62
    %s65 = sadd.s32 %s64, 1
    %p68 = scmp.eq.s32.totalorder %s9, 1
    %p69 = scmp.ne.s32.totalorder %s64, %s66
    %p70 = scmp.eq.s32.totalorder %s9, 0
    %p71 = por %p69, %p70
    %p72 = scmp.ne.s32.totalorder %s64, %s66
    %p73 = scmp.eq.s32.totalorder %s14, 1
    %p74 = por %p72, %p73
    %p75 = scmp.ne.s32.totalorder %s66, %s67
    %p76 = scmp.eq.s32.totalorder %s14, 0
    %p77 = por %p75, %p76
    %p78 = scmp.ne.s32.totalorder %s66, %s67
    %p79 = scmp.eq.s32.totalorder %s15, 1
    %p80 = por %p78, %p79
    %p82 = scmp.ne.s32.totalorder %s67, %s81
    %p83 = scmp.eq.s32.totalorder %s15, 0
    %p84 = por %p82, %p83
    %s85 = ssub.s32 %s9, %s16
    %p86 = scmp.eq.s32.totalorder %s85, 0
    %s88 = sadd.s32 %s87, 1
    %s89 = scalar_select %p86, %s87, %s88
    %p92 = pneg %p86
    %p93 = scmp.eq.s32.totalorder %s9, 1
    %p94 = por %p92, %p93
    %p95 = scmp.ne.s32.totalorder %s87, %s90
    %p96 = scmp.eq.s32.totalorder %s9, 0
    %p97 = por %p95, %p96
    %p98 = scmp.ne.s32.totalorder %s87, %s90
    %p99 = scmp.eq.s32.totalorder %s14, 1
    %p100 = por %p98, %p99
    %p101 = scmp.ne.s32.totalorder %s90, %s91
    %p102 = scmp.eq.s32.totalorder %s14, 0
    %p103 = por %p101, %p102
    %p104 = scmp.ne.s32.totalorder %s90, %s91
    %p105 = scmp.eq.s32.totalorder %s15, 1
    %p106 = por %p104, %p105
    %p108 = scmp.ne.s32.totalorder %s91, %s107
    %p109 = scmp.eq.s32.totalorder %s15, 0
    %p110 = por %p108, %p109
    %p111 = scmp.le.s32.totalorder 1, %s9
    %p112 = scmp.lt.s32.totalorder %s9, 3
    %p113 = pnand %p111, %p112
    %p114 = pneg %p113
    // Predicated region
    $region9: #{_lambda_.8} parent=5 // pred_check
      _
    $region10: #{_lambda_.8} parent=5 // pred_check_branch
      %116 = sbr.rel (%p113) target = $region12
    $region11: #{_lambda_.8} parent=5 // pred_region
      %s117 = ssub.s32 %s9, 1
      // Predicated region
      $region13: #{_lambda_.8} parent=11 // pred_check
        %p118 = pneg %p56
      $region14: #{_lambda_.8} parent=11 // pred_check_branch
        %120 = sbr.rel (%p118) target = $region16
      $region15: #{_lambda_.8} parent=11 // pred_region
        _
      $region16: #{_lambda_.8} parent=11 // pred_fallthru
        _
      // Predicated region
      $region17: #{_lambda_.8} parent=11 // pred_check
        %p121 = pneg %p77
      $region18: #{_lambda_.8} parent=11 // pred_check_branch
        %123 = sbr.rel (%p121) target = $region20
      $region19: #{_lambda_.8} parent=11 // pred_region
        _
      $region20: #{_lambda_.8} parent=11 // pred_fallthru
        _
    $region12: #{_lambda_.8} parent=5 // pred_fallthru
      _
    %p124 = scmp.lt.s32.totalorder %s9, 2
    // Predicated region
    $region21: #{_lambda_.8} parent=5 // pred_check
      %p125 = pneg %p124
    $region22: #{_lambda_.8} parent=5 // pred_check_branch
      %127 = sbr.rel (%p125) target = $region24
    $region23: #{_lambda_.8} parent=5 // pred_region
      // Predicated region
      $region25: #{_lambda_.8} parent=23 // pred_check
        %p128 = pneg %p29
      $region26: #{_lambda_.8} parent=23 // pred_check_branch
        %130 = sbr.rel (%p128) target = $region28
      $region27: #{_lambda_.8} parent=23 // pred_region
        %p131 = scmp.lt.s32.totalorder %s9, 1
        %s132 = scalar_select %p131, %s9, 1
        %s133 = smul.addr %s132, 2
        %s134 = scalar_lea.vmem %s0, %s133
      $region28: #{_lambda_.8} parent=23 // pred_fallthru
        _
    $region24: #{_lambda_.8} parent=5 // pred_fallthru
      _
    %p135 = scmp.le.s32.totalorder 1, %s9
    %p136 = scmp.lt.s32.totalorder %s9, 3
    %p137 = pnand %p135, %p136
    %p138 = pneg %p137
    // Predicated region
    $region29: #{_lambda_.8} parent=5 // pred_check
      _
    $region30: #{_lambda_.8} parent=5 // pred_check_branch
      %140 = sbr.rel (%p137) target = $region32
    $region31: #{_lambda_.8} parent=5 // pred_region
      %s141 = ssub.s32 %s9, 1
      %p142 = scmp.lt.s32.totalorder %s14, 1
      %s143 = scalar_select %p142, %s14, 1
      %s144 = smul.addr %s143, 2
      %s145 = scalar_lea.vmem %s0, %s144
      %p146 = pneg %p35
      %p147 = pneg %p32
      %p148 = pneg %p56
      %p149 = pneg %p53
      %p150 = pneg %p77
      %p151 = pneg %p74
      %p152 = pneg %p103
      %p153 = pneg %p100
      %p154 = scmp.lt.s32.totalorder %s14, 1
      %s155 = scalar_select %p154, %s14, 1
      %s156 = smul.addr %s155, 2
      %s157 = scalar_lea.vmem %s3, %s156
      %p158 = scmp.lt.s32.totalorder %s14, 1
      %s159 = scalar_select %p158, %s14, 1
      %s160 = smul.addr %s159, 2
      %s161 = scalar_lea.vmem %s0, %s160
      %p162 = scmp.lt.s32.totalorder %s14, 1
      %s163 = scalar_select %p162, %s14, 1
      %s164 = smul.addr %s163, 2
      %s165 = scalar_lea.vmem %s3, %s164
      %v166 = vld [vmem:[%s161] sm:$0x3]
      %v167 = vunpack.c.l.bf16 %v166
      %v168 = vld [vmem:[%s1] sm:$0x3]
      %v171 = vunpack.c.l.s4 857870592
      %v172 = vunpack.c.0.s8 %v171
      %v173 = vlaneseq
      %v174 = vshrl.u32 %v173, 7
      %v175 = vsub.s32 %v172, %v174
      %v176 = vrot.slane %v168, %v175
      %v178 = vmul.f32 %v167, %v176
      %v179 = vld [vmem:[%s2] sm:$0x3]
      %v182 = vunpack.c.l.s4 857870592
      %v183 = vunpack.c.0.s8 %v182
      %v184 = vlaneseq
      %v185 = vshrl.u32 %v184, 7
      %v186 = vsub.s32 %v183, %v185
      %v187 = vrot.slane %v179, %v186
      %v189 = vadd.f32 %v178, %v187
      %v190 = vmax.f32 %v189, 0.0
      %v192 = vlaneseq
      %v193 = vshrl.u32 %v192, 7
      %v194 = vsub.s32 0, %v193
      %v195 = vrot.slane %v190, %v194
      %v196 = vlaneseq
      %v197 = vshrl.u32 %v196, 7
      %v198 = vsub.s32 2, %v197
      %v199 = vrot.slane %v190, %v198
      %v202 = vpack.c.bf16 %v195, %v195
      %v203 = vpack.c.bf16 %v199, %v199
      %v206 = vcombine.low %v202, %v203
      %v208 = vunpack.c.l.s4 1966171168
      %v209 = vunpack.c.0.s8 %v208
      %v210 = vlaneseq
      %v211 = vshrl.u32 %v210, 7
      %v212 = vsub.s32 %v209, %v211
      %v213 = vrot.slane %v206, %v212
      %v215 = vunpack.c.l.s4 1966171168
      %v216 = vunpack.c.0.s8 %v215
      %v217 = vlaneseq
      %v218 = vshrl.u32 %v217, 7
      %v219 = vsub.s32 %v216, %v218
      %v220 = vrot.slane %v213, %v219
      %vm222 = vcmask 1040384
      %vm223 = vsmask.f32 256
      %vm224 = vmand %vm222, %vm223
      %vm225 = vcmask 1041409
      %vm226 = vsmask.f32 1280
      %vm227 = vmand %vm225, %vm226
      %vm228 = vmor %vm227, %vm224
      %v229 = vld [vmem:[%s165] sm:$0x3]
      %v230 = vsel %vm228, %v220, %v229
      %231 = vst [vmem:[%s165] sm:$0x3] %v230
      %p232 = scmp.lt.s32.totalorder %s14, 1
      %s233 = scalar_select %p232, %s14, 1
      %s234 = smul.addr %s233, 2
      %s235 = scalar_lea.vmem %s3, %s234
      // Predicated region
      $region33: #{_lambda_.8} parent=31 // pred_check
        %p236 = pneg %p100
      $region34: #{_lambda_.8} parent=31 // pred_check_branch
        %238 = sbr.rel (%p236) target = $region36
      $region35: #{_lambda_.8} parent=31 // pred_region
        _
      $region36: #{_lambda_.8} parent=31 // pred_fallthru
        _
    $region32: #{_lambda_.8} parent=5 // pred_fallthru
      _
    %p239 = scmp.le.s32.totalorder 2, %s9
    // Predicated region
    $region37: #{_lambda_.8} parent=5 // pred_check
      %p240 = pneg %p239
    $region38: #{_lambda_.8} parent=5 // pred_check_branch
      %242 = sbr.rel (%p240) target = $region40
    $region39: #{_lambda_.8} parent=5 // pred_region
      %s243 = ssub.s32 %s9, 2
      // Predicated region
      $region41: #{_lambda_.8} parent=39 // pred_check
        %p244 = pneg %p106
      $region42: #{_lambda_.8} parent=39 // pred_check_branch
        %246 = sbr.rel (%p244) target = $region44
      $region43: #{_lambda_.8} parent=39 // pred_region
        %p247 = scmp.lt.s32.totalorder %s15, 1
        %s248 = scalar_select %p247, %s15, 1
        %s249 = smul.addr %s248, 2
        %s250 = scalar_lea.vmem %s3, %s249
      $region44: #{_lambda_.8} parent=39 // pred_fallthru
        _
    $region40: #{_lambda_.8} parent=5 // pred_fallthru
      _
  $region6: #{_lambda_.8} parent=0 // loop_footer
    %s13 = sadd.s32 1, %s9
  $region7: #{_lambda_.8} parent=0 // loop_footer_branch
    %8 = sbr.rel target = $region3
  $region8: #{_lambda_.8} parent=0 // loop_exit
    _

// kernel: _lambda_.10
$region0: #{_lambda_.10}
  #allocation0 [shape = 'u32[]', space=smem, size = 0x4, offset = 0x4, fixed_abs, tag = 'smem constant byte address 0x4 - core index']
  #allocation1 [shape = 'u32[144,128]{1,0:T(1,128)}', space=vmem, size = 0x12000, scoped, tag = 'internal scratch']
  %s0 = inlined_call_operand.vmem [shape: bf16[2,16,32], index: 0, kind: input, shape index: {}]
  %s1 = inlined_call_operand.vmem [shape: f32[1,32], index: 1, kind: input, shape index: {}]
  %s2 = inlined_call_operand.vmem [shape: f32[1,32], index: 2, kind: input, shape index: {}]
  %s3 = inlined_call_operand.vmem [shape: bf16[2,16,32], index: 3, kind: output, shape index: {}]
  %s4 = sld [smem:[#allocation0]]
  $region45: #{_lambda_.10} parent=0
    _
  %s6 = ssub.s32 1, %s4
  %s7 = scalar_select 0, %s6, %s4
  loop: start=0, step=1, limit=4
  $region2: #{_lambda_.10} parent=0 // loop_pre_header
    _
  $region3: #{_lambda_.10} parent=0 // loop_header
    %s9 = sphi 0, %s13
    %p10 = scmp.ge.s32.totalorder %s9, 4
    %s19 = sphi 0, %s21
    %s22 = sphi 0, %s19
    %s23 = sphi 0, %s22
    %s39 = sphi 0, %s23
    %s43 = sphi 0, %s43
    %s45 = sphi 0, %s43
    %s46 = sphi 0, %s45
    %s60 = sphi 0, %s46
    %s64 = sphi 0, %s64
    %s66 = sphi 0, %s64
    %s67 = sphi 0, %s66
    %s81 = sphi 0, %s67
    %s87 = sphi 0, %s89
    %s90 = sphi 0, %s87
    %s91 = sphi 0, %s90
    %s107 = sphi 0, %s91
  $region4: #{_lambda_.10} parent=0 // loop_header_branch
    %12 = sbr.rel (%p10) target = $region8
  $region5: #{_lambda_.10} parent=0 // loop_body
    %s14 = ssub.s32 %s9, 1
    %s15 = ssub.s32 %s9, 2
    %s16 = sadd.s32 %s9, 1
    %s17 = ssub.s32 %s9, %s16
    %p18 = scmp.eq.s32.totalorder %s17, 0
    %s20 = sadd.s32 %s19, 1
    %s21 = scalar_select %p18, %s19, %s20
    %p24 = pneg %p18
    %p25 = scmp.eq.s32.totalorder %s9, 1
    %p26 = por %p24, %p25
    %p27 = scmp.ne.s32.totalorder %s19, %s22
    %p28 = scmp.eq.s32.totalorder %s9, 0
    %p29 = por %p27, %p28
    %p30 = scmp.ne.s32.totalorder %s19, %s22
    %p31 = scmp.eq.s32.totalorder %s14, 1
    %p32 = por %p30, %p31
    %p33 = scmp.ne.s32.totalorder %s22, %s23
    %p34 = scmp.eq.s32.totalorder %s14, 0
    %p35 = por %p33, %p34
    %p36 = scmp.ne.s32.totalorder %s22, %s23
    %p37 = scmp.eq.s32.totalorder %s15, 1
    %p38 = por %p36, %p37
    %p40 = scmp.ne.s32.totalorder %s23, %s39
    %p41 = scmp.eq.s32.totalorder %s15, 0
    %p42 = por %p40, %p41
    %s44 = sadd.s32 %s43, 1
    %p47 = scmp.eq.s32.totalorder %s9, 1
    %p48 = scmp.ne.s32.totalorder %s43, %s45
    %p49 = scmp.eq.s32.totalorder %s9, 0
    %p50 = por %p48, %p49
    %p51 = scmp.ne.s32.totalorder %s43, %s45
    %p52 = scmp.eq.s32.totalorder %s14, 1
    %p53 = por %p51, %p52
    %p54 = scmp.ne.s32.totalorder %s45, %s46
    %p55 = scmp.eq.s32.totalorder %s14, 0
    %p56 = por %p54, %p55
    %p57 = scmp.ne.s32.totalorder %s45, %s46
    %p58 = scmp.eq.s32.totalorder %s15, 1
    %p59 = por %p57, %p58
    %p61 = scmp.ne.s32.totalorder %s46, %s60
    %p62 = scmp.eq.s32.totalorder %s15, 0
    %p63 = por %p61, %p62
    %s65 = sadd.s32 %s64, 1
    %p68 = scmp.eq.s32.totalorder %s9, 1
    %p69 = scmp.ne.s32.totalorder %s64, %s66
    %p70 = scmp.eq.s32.totalorder %s9, 0
    %p71 = por %p69, %p70
    %p72 = scmp.ne.s32.totalorder %s64, %s66
    %p73 = scmp.eq.s32.totalorder %s14, 1
    %p74 = por %p72, %p73
    %p75 = scmp.ne.s32.totalorder %s66, %s67
    %p76 = scmp.eq.s32.totalorder %s14, 0
    %p77 = por %p75, %p76
    %p78 = scmp.ne.s32.totalorder %s66, %s67
    %p79 = scmp.eq.s32.totalorder %s15, 1
    %p80 = por %p78, %p79
    %p82 = scmp.ne.s32.totalorder %s67, %s81
    %p83 = scmp.eq.s32.totalorder %s15, 0
    %p84 = por %p82, %p83
    %s85 = ssub.s32 %s9, %s16
    %p86 = scmp.eq.s32.totalorder %s85, 0
    %s88 = sadd.s32 %s87, 1
    %s89 = scalar_select %p86, %s87, %s88
    %p92 = pneg %p86
    %p93 = scmp.eq.s32.totalorder %s9, 1
    %p94 = por %p92, %p93
    %p95 = scmp.ne.s32.totalorder %s87, %s90
    %p96 = scmp.eq.s32.totalorder %s9, 0
    %p97 = por %p95, %p96
    %p98 = scmp.ne.s32.totalorder %s87, %s90
    %p99 = scmp.eq.s32.totalorder %s14, 1
    %p100 = por %p98, %p99
    %p101 = scmp.ne.s32.totalorder %s90, %s91
    %p102 = scmp.eq.s32.totalorder %s14, 0
    %p103 = por %p101, %p102
    %p104 = scmp.ne.s32.totalorder %s90, %s91
    %p105 = scmp.eq.s32.totalorder %s15, 1
    %p106 = por %p104, %p105
    %p108 = scmp.ne.s32.totalorder %s91, %s107
    %p109 = scmp.eq.s32.totalorder %s15, 0
    %p110 = por %p108, %p109
    %p111 = scmp.le.s32.totalorder 1, %s9
    %p112 = scmp.lt.s32.totalorder %s9, 3
    %p113 = pnand %p111, %p112
    %p114 = pneg %p113
    // Predicated region
    $region9: #{_lambda_.10} parent=5 // pred_check
      _
    $region10: #{_lambda_.10} parent=5 // pred_check_branch
      %116 = sbr.rel (%p113) target = $region12
    $region11: #{_lambda_.10} parent=5 // pred_region
      %s117 = ssub.s32 %s9, 1
      // Predicated region
      $region13: #{_lambda_.10} parent=11 // pred_check
        %p118 = pneg %p56
      $region14: #{_lambda_.10} parent=11 // pred_check_branch
        %120 = sbr.rel (%p118) target = $region16
      $region15: #{_lambda_.10} parent=11 // pred_region
        _
      $region16: #{_lambda_.10} parent=11 // pred_fallthru
        _
      // Predicated region
      $region17: #{_lambda_.10} parent=11 // pred_check
        %p121 = pneg %p77
      $region18: #{_lambda_.10} parent=11 // pred_check_branch
        %123 = sbr.rel (%p121) target = $region20
      $region19: #{_lambda_.10} parent=11 // pred_region
        _
      $region20: #{_lambda_.10} parent=11 // pred_fallthru
        _
    $region12: #{_lambda_.10} parent=5 // pred_fallthru
      _
    %p124 = scmp.lt.s32.totalorder %s9, 2
    // Predicated region
    $region21: #{_lambda_.10} parent=5 // pred_check
      %p125 = pneg %p124
    $region22: #{_lambda_.10} parent=5 // pred_check_branch
      %127 = sbr.rel (%p125) target = $region24
    $region23: #{_lambda_.10} parent=5 // pred_region
      // Predicated region
      $region25: #{_lambda_.10} parent=23 // pred_check
        %p128 = pneg %p29
      $region26: #{_lambda_.10} parent=23 // pred_check_branch
        %130 = sbr.rel (%p128) target = $region28
      $region27: #{_lambda_.10} parent=23 // pred_region
        %p131 = scmp.lt.s32.totalorder %s9, 1
        %s132 = scalar_select %p131, %s9, 1
        %s133 = smul.addr %s132, 2
        %s134 = smul.addr %s133, 4
        %s135 = scalar_lea.vmem %s0, %s134
      $region28: #{_lambda_.10} parent=23 // pred_fallthru
        _
    $region24: #{_lambda_.10} parent=5 // pred_fallthru
      _
    %p136 = scmp.le.s32.totalorder 1, %s9
    %p137 = scmp.lt.s32.totalorder %s9, 3
    %p138 = pnand %p136, %p137
    %p139 = pneg %p138
    // Predicated region
    $region29: #{_lambda_.10} parent=5 // pred_check
      _
    $region30: #{_lambda_.10} parent=5 // pred_check_branch
      %141 = sbr.rel (%p138) target = $region32
    $region31: #{_lambda_.10} parent=5 // pred_region
      %s142 = ssub.s32 %s9, 1
      %p143 = scmp.lt.s32.totalorder %s14, 1
      %s144 = scalar_select %p143, %s14, 1
      %s145 = smul.addr %s144, 2
      %s146 = smul.addr %s145, 4
      %s147 = scalar_lea.vmem %s0, %s146
      %p148 = pneg %p35
      %p149 = pneg %p32
      %p150 = pneg %p56
      %p151 = pneg %p53
      %p152 = pneg %p77
      %p153 = pneg %p74
      %p154 = pneg %p103
      %p155 = pneg %p100
      %p156 = scmp.lt.s32.totalorder %s14, 1
      %s157 = scalar_select %p156, %s14, 1
      %s158 = smul.addr %s157, 2
      %s159 = smul.addr %s158, 4
      %s160 = scalar_lea.vmem %s3, %s159
      %p161 = scmp.lt.s32.totalorder %s14, 1
      %s162 = scalar_select %p161, %s14, 1
      %s163 = smul.addr %s162, 2
      %s164 = smul.addr %s163, 4
      %s165 = scalar_lea.vmem %s0, %s164
      %p166 = scmp.lt.s32.totalorder %s14, 1
      %s167 = scalar_select %p166, %s14, 1
      %s168 = smul.addr %s167, 2
      %s169 = smul.addr %s168, 4
      %s170 = scalar_lea.vmem %s3, %s169
      %v171 = vld [vmem:[%s165] sm:$0xf]
      %v172 = vld [vmem:[%s165 + $0x4] sm:$0xf]
      %v173 = vunpack.c.l.bf16 %v171
      %v174 = vunpack.c.l.bf16 %v172
      %v175 = vld [vmem:[%s1] sm:$0x1]
      %v177 = vlaneseq
      %v178 = vshrl.u32 %v177, 7
      %v179 = vsub.s32 0, %v178
      %v180 = vrot.slane %v175, %v179
      %v182 = vmul.f32 %v173, %v180
      %v183 = vmul.f32 %v174, %v180
      %v184 = vld [vmem:[%s2] sm:$0x1]
      %v186 = vlaneseq
      %v187 = vshrl.u32 %v186, 7
      %v188 = vsub.s32 0, %v187
      %v189 = vrot.slane %v184, %v188
      %v191 = vadd.f32 %v182, %v189
      %v192 = vadd.f32 %v183, %v189
      %v193 = vmax.f32 %v191, 0.0
      %v194 = vmax.f32 %v192, 0.0
      %v195 = vpack.c.bf16 %v194, %v193
      %v197 = vunpack.c.l.b16 %v195
      %v198 = vunpack.c.h.b16 %v195
      %v199 = vpack.c.b16 %v197, %v197
      %v200 = vpack.c.b16 %v198, %v198
      %vm203 = vcmask 257024
      %204 = vst.msk [vmem:[%s170] sm:$0xf] %vm203, %v199
      %205 = vst.msk [vmem:[%s170 + $0x4] sm:$0xf] %vm203, %v200
      %p206 = scmp.lt.s32.totalorder %s14, 1
      %s207 = scalar_select %p206, %s14, 1
      %s208 = smul.addr %s207, 2
      %s209 = smul.addr %s208, 4
      %s210 = scalar_lea.vmem %s3, %s209
      // Predicated region
      $region33: #{_lambda_.10} parent=31 // pred_check
        %p211 = pneg %p100
      $region34: #{_lambda_.10} parent=31 // pred_check_branch
        %213 = sbr.rel (%p211) target = $region36
      $region35: #{_lambda_.10} parent=31 // pred_region
        _
      $region36: #{_lambda_.10} parent=31 // pred_fallthru
        _
    $region32: #{_lambda_.10} parent=5 // pred_fallthru
      _
    %p214 = scmp.le.s32.totalorder 2, %s9
    // Predicated region
    $region37: #{_lambda_.10} parent=5 // pred_check
      %p215 = pneg %p214
    $region38: #{_lambda_.10} parent=5 // pred_check_branch
      %217 = sbr.rel (%p215) target = $region40
    $region39: #{_lambda_.10} parent=5 // pred_region
      %s218 = ssub.s32 %s9, 2
      // Predicated region
      $region41: #{_lambda_.10} parent=39 // pred_check
        %p219 = pneg %p106
      $region42: #{_lambda_.10} parent=39 // pred_check_branch
        %221 = sbr.rel (%p219) target = $region44
      $region43: #{_lambda_.10} parent=39 // pred_region
        %p222 = scmp.lt.s32.totalorder %s15, 1
        %s223 = scalar_select %p222, %s15, 1
        %s224 = smul.addr %s223, 2
        %s225 = smul.addr %s224, 4
        %s226 = scalar_lea.vmem %s3, %s225
      $region44: #{_lambda_.10} parent=39 // pred_fallthru
        _
    $region40: #{_lambda_.10} parent=5 // pred_fallthru
      _
  $region6: #{_lambda_.10} parent=0 // loop_footer
    %s13 = sadd.s32 1, %s9
  $region7: #{_lambda_.10} parent=0 // loop_footer_branch
    %8 = sbr.rel target = $region3
  $region8: #{_lambda_.10} parent=0 // loop_exit
    _

// kernel: _lambda_.9
$region0: #{_lambda_.9}
  #allocation0 [shape = 'u32[]', space=smem, size = 0x4, offset = 0x4, fixed_abs, tag = 'smem constant byte address 0x4 - core index']
  #allocation1 [shape = 'u32[144,128]{1,0:T(1,128)}', space=vmem, size = 0x12000, scoped, tag = 'internal scratch']
  %s0 = inlined_call_operand.vmem [shape: bf16[2,6,6,16], index: 0, kind: input, shape index: {}]
  %s1 = inlined_call_operand.vmem [shape: bf16[4,4,16,8], index: 1, kind: input, shape index: {}]
  %s2 = inlined_call_operand.vmem [shape: bf16[2,16,32], index: 2, kind: output, shape index: {0}]
  %s3 = inlined_call_operand.vmem [shape: f32[2,1,32], index: 3, kind: output, shape index: {1}]
  %s4 = inlined_call_operand.vmem [shape: f32[2,1,32], index: 4, kind: output, shape index: {2}]
  %5 = xla_tuple %s2, %s3, %s4
  %s6 = sld [smem:[#allocation0]]
  $region57: #{_lambda_.9} parent=0
    _
  %s8 = ssub.s32 1, %s6
  %s9 = scalar_select 0, %s8, %s6
  loop: start=0, step=1, limit=4
  $region2: #{_lambda_.9} parent=0 // loop_pre_header
    _
  $region3: #{_lambda_.9} parent=0 // loop_header
    %s11 = sphi 0, %s15
    %p12 = scmp.ge.s32.totalorder %s11, 4
    %s21 = sphi 0, %s23
    %s24 = sphi 0, %s21
    %s25 = sphi 0, %s24
    %s41 = sphi 0, %s25
    %s45 = sphi 0, %s45
    %s47 = sphi 0, %s45
    %s48 = sphi 0, %s47
    %s62 = sphi 0, %s48
    %s68 = sphi 0, %s70
    %s71 = sphi 0, %s68
    %s72 = sphi 0, %s71
    %s88 = sphi 0, %s72
    %s94 = sphi 0, %s96
    %s97 = sphi 0, %s94
    %s98 = sphi 0, %s97
    %s114 = sphi 0, %s98
    %s120 = sphi 0, %s122
    %s123 = sphi 0, %s120
    %s124 = sphi 0, %s123
    %s140 = sphi 0, %s124
  $region4: #{_lambda_.9} parent=0 // loop_header_branch
    %14 = sbr.rel (%p12) target = $region8
  $region5: #{_lambda_.9} parent=0 // loop_body
    %s16 = ssub.s32 %s11, 1
    %s17 = ssub.s32 %s11, 2
    %s18 = sadd.s32 %s11, 1
    %s19 = ssub.s32 %s11, %s18
    %p20 = scmp.eq.s32.totalorder %s19, 0
    %s22 = sadd.s32 %s21, 1
    %s23 = scalar_select %p20, %s21, %s22
    %p26 = pneg %p20
    %p27 = scmp.eq.s32.totalorder %s11, 1
    %p28 = por %p26, %p27
    %p29 = scmp.ne.s32.totalorder %s21, %s24
    %p30 = scmp.eq.s32.totalorder %s11, 0
    %p31 = por %p29, %p30
    %p32 = scmp.ne.s32.totalorder %s21, %s24
    %p33 = scmp.eq.s32.totalorder %s16, 1
    %p34 = por %p32, %p33
    %p35 = scmp.ne.s32.totalorder %s24, %s25
    %p36 = scmp.eq.s32.totalorder %s16, 0
    %p37 = por %p35, %p36
    %p38 = scmp.ne.s32.totalorder %s24, %s25
    %p39 = scmp.eq.s32.totalorder %s17, 1
    %p40 = por %p38, %p39
    %p42 = scmp.ne.s32.totalorder %s25, %s41
    %p43 = scmp.eq.s32.totalorder %s17, 0
    %p44 = por %p42, %p43
    %s46 = sadd.s32 %s45, 1
    %p49 = scmp.eq.s32.totalorder %s11, 1
    %p50 = scmp.ne.s32.totalorder %s45, %s47
    %p51 = scmp.eq.s32.totalorder %s11, 0
    %p52 = por %p50, %p51
    %p53 = scmp.ne.s32.totalorder %s45, %s47
    %p54 = scmp.eq.s32.totalorder %s16, 1
    %p55 = por %p53, %p54
    %p56 = scmp.ne.s32.totalorder %s47, %s48
    %p57 = scmp.eq.s32.totalorder %s16, 0
    %p58 = por %p56, %p57
    %p59 = scmp.ne.s32.totalorder %s47, %s48
    %p60 = scmp.eq.s32.totalorder %s17, 1
    %p61 = por %p59, %p60
    %p63 = scmp.ne.s32.totalorder %s48, %s62
    %p64 = scmp.eq.s32.totalorder %s17, 0
    %p65 = por %p63, %p64
    %s66 = ssub.s32 %s11, %s18
    %p67 = scmp.eq.s32.totalorder %s66, 0
    %s69 = sadd.s32 %s68, 1
    %s70 = scalar_select %p67, %s68, %s69
    %p73 = pneg %p67
    %p74 = scmp.eq.s32.totalorder %s11, 1
    %p75 = por %p73, %p74
    %p76 = scmp.ne.s32.totalorder %s68, %s71
    %p77 = scmp.eq.s32.totalorder %s11, 0
    %p78 = por %p76, %p77
    %p79 = scmp.ne.s32.totalorder %s68, %s71
    %p80 = scmp.eq.s32.totalorder %s16, 1
    %p81 = por %p79, %p80
    %p82 = scmp.ne.s32.totalorder %s71, %s72
    %p83 = scmp.eq.s32.totalorder %s16, 0
    %p84 = por %p82, %p83
    %p85 = scmp.ne.s32.totalorder %s71, %s72
    %p86 = scmp.eq.s32.totalorder %s17, 1
    %p87 = por %p85, %p86
    %p89 = scmp.ne.s32.totalorder %s72, %s88
    %p90 = scmp.eq.s32.totalorder %s17, 0
    %p91 = por %p89, %p90
    %s92 = ssub.s32 %s11, %s18
    %p93 = scmp.eq.s32.totalorder %s92, 0
    %s95 = sadd.s32 %s94, 1
    %s96 = scalar_select %p93, %s94, %s95
    %p99 = pneg %p93
    %p100 = scmp.eq.s32.totalorder %s11, 1
    %p101 = por %p99, %p100
    %p102 = scmp.ne.s32.totalorder %s94, %s97
    %p103 = scmp.eq.s32.totalorder %s11, 0
    %p104 = por %p102, %p103
    %p105 = scmp.ne.s32.totalorder %s94, %s97
    %p106 = scmp.eq.s32.totalorder %s16, 1
    %p107 = por %p105, %p106
    %p108 = scmp.ne.s32.totalorder %s97, %s98
    %p109 = scmp.eq.s32.totalorder %s16, 0
    %p110 = por %p108, %p109
    %p111 = scmp.ne.s32.totalorder %s97, %s98
    %p112 = scmp.eq.s32.totalorder %s17, 1
    %p113 = por %p111, %p112
    %p115 = scmp.ne.s32.totalorder %s98, %s114
    %p116 = scmp.eq.s32.totalorder %s17, 0
    %p117 = por %p115, %p116
    %s118 = ssub.s32 %s11, %s18
    %p119 = scmp.eq.s32.totalorder %s118, 0
    %s121 = sadd.s32 %s120, 1
    %s122 = scalar_select %p119, %s120, %s121
    %p125 = pneg %p119
    %p126 = scmp.eq.s32.totalorder %s11, 1
    %p127 = por %p125, %p126
    %p128 = scmp.ne.s32.totalorder %s120, %s123
    %p129 = scmp.eq.s32.totalorder %s11, 0
    %p130 = por %p128, %p129
    %p131 = scmp.ne.s32.totalorder %s120, %s123
    %p132 = scmp.eq.s32.totalorder %s16, 1
    %p133 = por %p131, %p132
    %p134 = scmp.ne.s32.totalorder %s123, %s124
    %p135 = scmp.eq.s32.totalorder %s16, 0
    %p136 = por %p134, %p135
    %p137 = scmp.ne.s32.totalorder %s123, %s124
    %p138 = scmp.eq.s32.totalorder %s17, 1
    %p139 = por %p137, %p138
    %p141 = scmp.ne.s32.totalorder %s124, %s140
    %p142 = scmp.eq.s32.totalorder %s17, 0
    %p143 = por %p141, %p142
    %p144 = scmp.le.s32.totalorder 1, %s11
    %p145 = scmp.lt.s32.totalorder %s11, 3
    %p146 = pnand %p144, %p145
    %p147 = pneg %p146
    // Predicated region
    $region9: #{_lambda_.9} parent=5 // pred_check
      _
    $region10: #{_lambda_.9} parent=5 // pred_check_branch
      %149 = sbr.rel (%p146) target = $region12
    $region11: #{_lambda_.9} parent=5 // pred_region
      %s150 = ssub.s32 %s11, 1
      // Predicated region
      $region13: #{_lambda_.9} parent=11 // pred_check
        %p151 = pneg %p58
      $region14: #{_lambda_.9} parent=11 // pred_check_branch
        %153 = sbr.rel (%p151) target = $region16
      $region15: #{_lambda_.9} parent=11 // pred_region
        _
      $region16: #{_lambda_.9} parent=11 // pred_fallthru
        _
    $region12: #{_lambda_.9} parent=5 // pred_fallthru
      _
    %p154 = scmp.lt.s32.totalorder %s11, 2
    // Predicated region
    $region17: #{_lambda_.9} parent=5 // pred_check
      %p155 = pneg %p154
    $region18: #{_lambda_.9} parent=5 // pred_check_branch
      %157 = sbr.rel (%p155) target = $region20
    $region19: #{_lambda_.9} parent=5 // pred_region
      // Predicated region
      $region21: #{_lambda_.9} parent=19 // pred_check
        %p158 = pneg %p31
      $region22: #{_lambda_.9} parent=19 // pred_check_branch
        %160 = sbr.rel (%p158) target = $region24
      $region23: #{_lambda_.9} parent=19 // pred_region
        %p161 = scmp.lt.s32.totalorder %s11, 1
        %s162 = scalar_select %p161, %s11, 1
        %s163 = smul.addr %s162, 6
        %s164 = smul.addr %s163, 4
        %s165 = scalar_lea.vmem %s0, %s164
      $region24: #{_lambda_.9} parent=19 // pred_fallthru
        _
    $region20: #{_lambda_.9} parent=5 // pred_fallthru
      _
    %p166 = scmp.le.s32.totalorder 1, %s11
    %p167 = scmp.lt.s32.totalorder %s11, 3
    %p168 = pnand %p166, %p167
    %p169 = pneg %p168
    // Predicated region
    $region25: #{_lambda_.9} parent=5 // pred_check
      _
    $region26: #{_lambda_.9} parent=5 // pred_check_branch
      %171 = sbr.rel (%p168) target = $region28
    $region27: #{_lambda_.9} parent=5 // pred_region
      %s172 = ssub.s32 %s11, 1
      %p173 = scmp.lt.s32.totalorder %s16, 1
      %s174 = scalar_select %p173, %s16, 1
      %s175 = smul.addr %s174, 6
      %s176 = smul.addr %s175, 4
      %s177 = scalar_lea.vmem %s0, %s176
      %p178 = pneg %p37
      %p179 = pneg %p34
      %p180 = pneg %p58
      %p181 = pneg %p55
      %p182 = pneg %p84
      %p183 = pneg %p81
      %p184 = scmp.lt.s32.totalorder %s16, 1
      %s185 = scalar_select %p184, %s16, 1
      %s186 = smul.addr %s185, 2
      %s187 = smul.addr %s186, 4
      %s188 = scalar_lea.vmem %s2, %s187
      %p189 = pneg %p110
      %p190 = pneg %p107
      %p191 = scmp.lt.s32.totalorder %s16, 1
      %s192 = scalar_select %p191, %s16, 1
      %s193 = scalar_lea.vmem %s3, %s192
      %p194 = pneg %p136
      %p195 = pneg %p133
      %p196 = scmp.lt.s32.totalorder %s16, 1
      %s197 = scalar_select %p196, %s16, 1
      %s198 = scalar_lea.vmem %s4, %s197
      %p199 = scmp.lt.s32.totalorder %s16, 1
      %s200 = scalar_select %p199, %s16, 1
      %s201 = smul.addr %s200, 6
      %s202 = smul.addr %s201, 4
      %s203 = scalar_lea.vmem %s0, %s202
      %p204 = scmp.lt.s32.totalorder %s16, 1
      %s205 = scalar_select %p204, %s16, 1
      %s206 = smul.addr %s205, 2
      %s207 = smul.addr %s206, 4
      %s208 = scalar_lea.vmem %s2, %s207
      %p209 = scmp.lt.s32.totalorder %s16, 1
      %s210 = scalar_select %p209, %s16, 1
      %s211 = scalar_lea.vmem %s3, %s210
      %p212 = scmp.lt.s32.totalorder %s16, 1
      %s213 = scalar_select %p212, %s16, 1
      %s214 = scalar_lea.vmem %s4, %s213
      %v216 = vld [vmem:[%s203] sm:$0x3]
      %v217 = vld [vmem:[%s203 + $0x4] sm:$0x3]
      %v218 = vld [vmem:[%s203 + $0x8] sm:$0x3]
      %v219 = vld [vmem:[%s203 + $0xc] sm:$0x3]
      %v220 = vld [vmem:[%s1] sm:$0xf]
      %v221 = vld [vmem:[%s1 + $0x4] sm:$0xf]
      %v222 = vld [vmem:[%s203] sm:$0x7]
      %v223 = vld [vmem:[%s203 + $0x4] sm:$0x7]
      %v224 = vld [vmem:[%s203 + $0x8] sm:$0x7]
      %v225 = vld [vmem:[%s203 + $0xc] sm:$0x7]
      %v231 = vunpack.c.l.s4 1983009808
      %v232 = vunpack.c.0.s8 %v231
      %v233 = vlaneseq
      %v234 = vshrl.u32 %v233, 7
      %v235 = vsub.s32 %v232, %v234
      %v236 = vrot.slane %v222, %v235
      %v237 = vcombine.high %v236, %v236
      %v239 = vunpack.c.l.s4 1983009808
      %v240 = vunpack.c.0.s8 %v239
      %v241 = vlaneseq
      %v242 = vshrl.u32 %v241, 7
      %v243 = vsub.s32 %v240, %v242
      %v244 = vrot.slane %v223, %v243
      %v245 = vcombine.high %v244, %v244
      %v247 = vunpack.c.l.s4 1983009808
      %v248 = vunpack.c.0.s8 %v247
      %v249 = vlaneseq
      %v250 = vshrl.u32 %v249, 7
      %v251 = vsub.s32 %v248, %v250
      %v252 = vrot.slane %v224, %v251
      %v253 = vcombine.high %v252, %v252
      %v255 = vunpack.c.l.s4 1983009808
      %v256 = vunpack.c.0.s8 %v255
      %v257 = vlaneseq
      %v258 = vshrl.u32 %v257, 7
      %v259 = vsub.s32 %v256, %v258
      %v260 = vrot.slane %v225, %v259
      %v261 = vcombine.high %v260, %v260
      %vm262 = vsmask.f32 1280
      %vm263 = vsmask.f32 3336
      %vm264 = vmor %vm262, %vm263
      %vm265 = vsmask.f32 5392
      %vm266 = vmor %vm264, %vm265
      %vm267 = vsmask.f32 7448
      %vm268 = vmor %vm266, %vm267
      %v270 = vshrl.u32 %v236, 16
      %v272 = vrot.slane %v270, 6
      %v273 = vshll.u32 %v236, 16
      %v275 = vrot.slane %v273, 7
      %v276 = vor.u32 %v272, %v275
      %v277 = vrot.slane %v276, 2
      %v279 = vshll.u32 %v237, 16
      %v281 = vrot.slane %v279, 7
      %v282 = vsel %vm268, %v277, %v281
      %v284 = vshrl.u32 %v244, 16
      %v286 = vrot.slane %v284, 6
      %v287 = vshll.u32 %v244, 16
      %v289 = vrot.slane %v287, 7
      %v290 = vor.u32 %v286, %v289
      %v291 = vrot.slane %v290, 2
      %v293 = vshll.u32 %v245, 16
      %v295 = vrot.slane %v293, 7
      %v296 = vsel %vm268, %v291, %v295
      %v298 = vshrl.u32 %v252, 16
      %v300 = vrot.slane %v298, 6
      %v301 = vshll.u32 %v252, 16
      %v303 = vrot.slane %v301, 7
      %v304 = vor.u32 %v300, %v303
      %v305 = vrot.slane %v304, 2
      %v307 = vshll.u32 %v253, 16
      %v309 = vrot.slane %v307, 7
      %v310 = vsel %vm268, %v305, %v309
      %v312 = vshrl.u32 %v260, 16
      %v314 = vrot.slane %v312, 6
      %v315 = vshll.u32 %v260, 16
      %v317 = vrot.slane %v315, 7
      %v318 = vor.u32 %v314, %v317
      %v319 = vrot.slane %v318, 2
      %v321 = vshll.u32 %v261, 16
      %v323 = vrot.slane %v321, 7
      %v324 = vsel %vm268, %v319, %v323
      %s325 = scalar_lea.vmem %s1, 8
      %v326 = vld [vmem:[%s325] sm:$0xf]
      %v327 = vld [vmem:[%s325 + $0x4] sm:$0xf]
      %v328 = vcombine.low %v282, %v296
      %v329 = vcombine.low %v310, %v324
      %v331 = vunpack.c.l.s4 1983009808
      %v332 = vunpack.c.0.s8 %v331
      %v333 = vlaneseq
      %v334 = vshrl.u32 %v333, 7
      %v335 = vsub.s32 %v332, %v334
      %v336 = vrot.slane %v328, %v335
      %v338 = vunpack.c.l.s4 1983009808
      %v339 = vunpack.c.0.s8 %v338
      %v340 = vlaneseq
      %v341 = vshrl.u32 %v340, 7
      %v342 = vsub.s32 %v339, %v341
      %v343 = vrot.slane %v329, %v342
      %v344 = vcombine.low %v336, %v343
      %v347 = vunpack.c.l.b16 %v326
      %v348 = vunpack.c.l.b16 %v327
      %v349 = vpack.c.b16 %v348, %v347
      %vm351 = vcmask 130048
      %v353 = vsel %vm351, %v344, 0
      %355 = vmatprep.subr.bf16.mxu0 0
      %356 = vmatpush1.bf16.msra.mxu0 0
      %357 = vmatprep.subr.bf16.mxu0 0
      %358 = vmatpush1.bf16.msra.mxu0 0
      %359 = vmatprep.subr.bf16.mxu0 0
      %360 = vmatpush1.bf16.msra.mxu0 0
      %361 = vmatprep.subr.bf16.mxu0 0
      %362 = vmatpush1.bf16.msra.mxu0 0
      %363 = vmatprep.subr.bf16.mxu0 0
      %364 = vmatpush1.bf16.msra.mxu0 0
      %365 = vmatprep.subr.bf16.mxu0 0
      %366 = vmatpush1.bf16.msra.mxu0 0
      %367 = vmatprep.subr.bf16.mxu0 0
      %368 = vmatpush1.bf16.msra.mxu0 0
      %369 = vmatprep.subr.bf16.mxu0 0
      %370 = vmatpush1.bf16.msra.mxu0 %v349
      %371 = vmatprep.subr.bf16.mxu0 0
      %372 = vmatpush2.bf16.msra.mxu0 0
      %373 = vmatprep.subr.bf16.mxu0 0
      %374 = vmatpush2.bf16.msra.mxu0 0
      %375 = vmatprep.subr.bf16.mxu0 0
      %376 = vmatpush2.bf16.msra.mxu0 0
      %377 = vmatprep.subr.bf16.mxu0 0
      %378 = vmatpush2.bf16.msra.mxu0 0
      %379 = vmatprep.subr.bf16.mxu0 0
      %380 = vmatpush2.bf16.msra.mxu0 0
      %381 = vmatprep.subr.bf16.mxu0 0
      %382 = vmatpush2.bf16.msra.mxu0 0
      %383 = vmatprep.subr.bf16.mxu0 0
      %384 = vmatpush2.bf16.msra.mxu0 0
      %385 = vmatprep.subr.bf16.mxu0 0
      %386 = vmatpush2.bf16.msra.mxu0 0
      %387 = vmatprep.mubr.bf16.mxu0 0
      %388 = vmatmul.mubr.bf16.gmra.mxu0 %v353
      %v389 = vpop.f32.mrf.mxu0
      %v390 = vadd.f32 0.0, %v389
      %v391 = vpop.f32.mrf.mxu0
      %v392 = vpop.f32.mrf.mxu0
      %v393 = vadd.f32 0.0, %v392
      %v394 = vpop.f32.mrf.mxu0
      %395 = vdwg.mxu0
      %v400 = vcombine.low %v216, %v217
      %v401 = vcombine.low %v218, %v219
      %v403 = vunpack.c.l.s4 1983009808
      %v404 = vunpack.c.0.s8 %v403
      %v405 = vlaneseq
      %v406 = vshrl.u32 %v405, 7
      %v407 = vsub.s32 %v404, %v406
      %v408 = vrot.slane %v400, %v407
      %v410 = vunpack.c.l.s4 1983009808
      %v411 = vunpack.c.0.s8 %v410
      %v412 = vlaneseq
      %v413 = vshrl.u32 %v412, 7
      %v414 = vsub.s32 %v411, %v413
      %v415 = vrot.slane %v401, %v414
      %v416 = vcombine.low %v408, %v415
      %v419 = vunpack.c.l.b16 %v220
      %v420 = vunpack.c.l.b16 %v221
      %v421 = vpack.c.b16 %v420, %v419
      %v424 = vsel %vm351, %v416, 0
      %426 = vmatprep.subr.bf16.mxu0 0
      %427 = vmatpush1.bf16.msra.mxu0 0
      %428 = vmatprep.subr.bf16.mxu0 0
      %429 = vmatpush1.bf16.msra.mxu0 0
      %430 = vmatprep.subr.bf16.mxu0 0
      %431 = vmatpush1.bf16.msra.mxu0 0
      %432 = vmatprep.subr.bf16.mxu0 0
      %433 = vmatpush1.bf16.msra.mxu0 0
      %434 = vmatprep.subr.bf16.mxu0 0
      %435 = vmatpush1.bf16.msra.mxu0 0
      %436 = vmatprep.subr.bf16.mxu0 0
      %437 = vmatpush1.bf16.msra.mxu0 0
      %438 = vmatprep.subr.bf16.mxu0 0
      %439 = vmatpush1.bf16.msra.mxu0 0
      %440 = vmatprep.subr.bf16.mxu0 0
      %441 = vmatpush1.bf16.msra.mxu0 %v421
      %442 = vmatprep.subr.bf16.mxu0 0
      %443 = vmatpush2.bf16.msra.mxu0 0
      %444 = vmatprep.subr.bf16.mxu0 0
      %445 = vmatpush2.bf16.msra.mxu0 0
      %446 = vmatprep.subr.bf16.mxu0 0
      %447 = vmatpush2.bf16.msra.mxu0 0
      %448 = vmatprep.subr.bf16.mxu0 0
      %449 = vmatpush2.bf16.msra.mxu0 0
      %450 = vmatprep.subr.bf16.mxu0 0
      %451 = vmatpush2.bf16.msra.mxu0 0
      %452 = vmatprep.subr.bf16.mxu0 0
      %453 = vmatpush2.bf16.msra.mxu0 0
      %454 = vmatprep.subr.bf16.mxu0 0
      %455 = vmatpush2.bf16.msra.mxu0 0
      %456 = vmatprep.subr.bf16.mxu0 0
      %457 = vmatpush2.bf16.msra.mxu0 0
      %458 = vmatprep.mubr.bf16.mxu0 0
      %459 = vmatmul.mubr.bf16.gmra.mxu0 %v424
      %v460 = vpop.f32.mrf.mxu0
      %v461 = vadd.f32 %v390, %v460
      %v462 = vpop.f32.mrf.mxu0
      %v463 = vpop.f32.mrf.mxu0
      %v464 = vadd.f32 %v393, %v463
      %v465 = vpop.f32.mrf.mxu0
      %466 = vdwg.mxu0
      %s467 = scalar_lea.vmem %s203, 4
      %v468 = vld [vmem:[%s467] sm:$0x3]
      %v469 = vld [vmem:[%s467 + $0x4] sm:$0x3]
      %v470 = vld [vmem:[%s467 + $0x8] sm:$0x3]
      %v471 = vld [vmem:[%s467 + $0xc] sm:$0x3]
      %s472 = scalar_lea.vmem %s1, 16
      %v473 = vld [vmem:[%s472] sm:$0xf]
      %v474 = vld [vmem:[%s472 + $0x4] sm:$0xf]
      %v479 = vcombine.low %v468, %v469
      %v480 = vcombine.low %v470, %v471
      %v482 = vunpack.c.l.s4 1983009808
      %v483 = vunpack.c.0.s8 %v482
      %v484 = vlaneseq
      %v485 = vshrl.u32 %v484, 7
      %v486 = vsub.s32 %v483, %v485
      %v487 = vrot.slane %v479, %v486
      %v489 = vunpack.c.l.s4 1983009808
      %v490 = vunpack.c.0.s8 %v489
      %v491 = vlaneseq
      %v492 = vshrl.u32 %v491, 7
      %v493 = vsub.s32 %v490, %v492
      %v494 = vrot.slane %v480, %v493
      %v495 = vcombine.low %v487, %v494
      %v498 = vunpack.c.l.b16 %v473
      %v499 = vunpack.c.l.b16 %v474
      %v500 = vpack.c.b16 %v499, %v498
      %v503 = vsel %vm351, %v495, 0
      %505 = vmatprep.subr.bf16.mxu0 0
      %506 = vmatpush1.bf16.msra.mxu0 0
      %507 = vmatprep.subr.bf16.mxu0 0
      %508 = vmatpush1.bf16.msra.mxu0 0
      %509 = vmatprep.subr.bf16.mxu0 0
      %510 = vmatpush1.bf16.msra.mxu0 0
      %511 = vmatprep.subr.bf16.mxu0 0
      %512 = vmatpush1.bf16.msra.mxu0 0
      %513 = vmatprep.subr.bf16.mxu0 0
      %514 = vmatpush1.bf16.msra.mxu0 0
      %515 = vmatprep.subr.bf16.mxu0 0
      %516 = vmatpush1.bf16.msra.mxu0 0
      %517 = vmatprep.subr.bf16.mxu0 0
      %518 = vmatpush1.bf16.msra.mxu0 0
      %519 = vmatprep.subr.bf16.mxu0 0
      %520 = vmatpush1.bf16.msra.mxu0 %v500
      %521 = vmatprep.subr.bf16.mxu0 0
      %522 = vmatpush2.bf16.msra.mxu0 0
      %523 = vmatprep.subr.bf16.mxu0 0
      %524 = vmatpush2.bf16.msra.mxu0 0
      %525 = vmatprep.subr.bf16.mxu0 0
      %526 = vmatpush2.bf16.msra.mxu0 0
      %527 = vmatprep.subr.bf16.mxu0 0
      %528 = vmatpush2.bf16.msra.mxu0 0
      %529 = vmatprep.subr.bf16.mxu0 0
      %530 = vmatpush2.bf16.msra.mxu0 0
      %531 = vmatprep.subr.bf16.mxu0 0
      %532 = vmatpush2.bf16.msra.mxu0 0
      %533 = vmatprep.subr.bf16.mxu0 0
      %534 = vmatpush2.bf16.msra.mxu0 0
      %535 = vmatprep.subr.bf16.mxu0 0
      %536 = vmatpush2.bf16.msra.mxu0 0
      %537 = vmatprep.mubr.bf16.mxu0 0
      %538 = vmatmul.mubr.bf16.gmra.mxu0 %v503
      %v539 = vpop.f32.mrf.mxu0
      %v540 = vadd.f32 0.0, %v539
      %v541 = vpop.f32.mrf.mxu0
      %v542 = vpop.f32.mrf.mxu0
      %v543 = vadd.f32 0.0, %v542
      %v544 = vpop.f32.mrf.mxu0
      %545 = vdwg.mxu0
      %v546 = vadd.f32 %v461, %v540
      %v547 = vadd.f32 %v464, %v543
      %v548 = vld [vmem:[%s467] sm:$0x7]
      %v549 = vld [vmem:[%s467 + $0x4] sm:$0x7]
      %v550 = vld [vmem:[%s467 + $0x8] sm:$0x7]
      %v551 = vld [vmem:[%s467 + $0xc] sm:$0x7]
      %v557 = vunpack.c.l.s4 1983009808
      %v558 = vunpack.c.0.s8 %v557
      %v559 = vlaneseq
      %v560 = vshrl.u32 %v559, 7
      %v561 = vsub.s32 %v558, %v560
      %v562 = vrot.slane %v548, %v561
      %v563 = vcombine.high %v562, %v562
      %v565 = vunpack.c.l.s4 1983009808
      %v566 = vunpack.c.0.s8 %v565
      %v567 = vlaneseq
      %v568 = vshrl.u32 %v567, 7
      %v569 = vsub.s32 %v566, %v568
      %v570 = vrot.slane %v549, %v569
      %v571 = vcombine.high %v570, %v570
      %v573 = vunpack.c.l.s4 1983009808
      %v574 = vunpack.c.0.s8 %v573
      %v575 = vlaneseq
      %v576 = vshrl.u32 %v575, 7
      %v577 = vsub.s32 %v574, %v576
      %v578 = vrot.slane %v550, %v577
      %v579 = vcombine.high %v578, %v578
      %v581 = vunpack.c.l.s4 1983009808
      %v582 = vunpack.c.0.s8 %v581
      %v583 = vlaneseq
      %v584 = vshrl.u32 %v583, 7
      %v585 = vsub.s32 %v582, %v584
      %v586 = vrot.slane %v551, %v585
      %v587 = vcombine.high %v586, %v586
      %v589 = vshrl.u32 %v562, 16
      %v591 = vrot.slane %v589, 6
      %v592 = vshll.u32 %v562, 16
      %v594 = vrot.slane %v592, 7
      %v595 = vor.u32 %v591, %v594
      %v596 = vrot.slane %v595, 2
      %v598 = vshll.u32 %v563, 16
      %v600 = vrot.slane %v598, 7
      %v601 = vsel %vm268, %v596, %v600
      %v603 = vshrl.u32 %v570, 16
      %v605 = vrot.slane %v603, 6
      %v606 = vshll.u32 %v570, 16
      %v608 = vrot.slane %v606, 7
      %v609 = vor.u32 %v605, %v608
      %v610 = vrot.slane %v609, 2
      %v612 = vshll.u32 %v571, 16
      %v614 = vrot.slane %v612, 7
      %v615 = vsel %vm268, %v610, %v614
      %v617 = vshrl.u32 %v578, 16
      %v619 = vrot.slane %v617, 6
      %v620 = vshll.u32 %v578, 16
      %v622 = vrot.slane %v620, 7
      %v623 = vor.u32 %v619, %v622
      %v624 = vrot.slane %v623, 2
      %v626 = vshll.u32 %v579, 16
      %v628 = vrot.slane %v626, 7
      %v629 = vsel %vm268, %v624, %v628
      %v631 = vshrl.u32 %v586, 16
      %v633 = vrot.slane %v631, 6
      %v634 = vshll.u32 %v586, 16
      %v636 = vrot.slane %v634, 7
      %v637 = vor.u32 %v633, %v636
      %v638 = vrot.slane %v637, 2
      %v640 = vshll.u32 %v587, 16
      %v642 = vrot.slane %v640, 7
      %v643 = vsel %vm268, %v638, %v642
      %s644 = scalar_lea.vmem %s1, 24
      %v645 = vld [vmem:[%s644] sm:$0xf]
      %v646 = vld [vmem:[%s644 + $0x4] sm:$0xf]
      %v647 = vcombine.low %v601, %v615
      %v648 = vcombine.low %v629, %v643
      %v650 = vunpack.c.l.s4 1983009808
      %v651 = vunpack.c.0.s8 %v650
      %v652 = vlaneseq
      %v653 = vshrl.u32 %v652, 7
      %v654 = vsub.s32 %v651, %v653
      %v655 = vrot.slane %v647, %v654
      %v657 = vunpack.c.l.s4 1983009808
      %v658 = vunpack.c.0.s8 %v657
      %v659 = vlaneseq
      %v660 = vshrl.u32 %v659, 7
      %v661 = vsub.s32 %v658, %v660
      %v662 = vrot.slane %v648, %v661
      %v663 = vcombine.low %v655, %v662
      %v666 = vunpack.c.l.b16 %v645
      %v667 = vunpack.c.l.b16 %v646
      %v668 = vpack.c.b16 %v667, %v666
      %v671 = vsel %vm351, %v663, 0
      %673 = vmatprep.subr.bf16.mxu0 0
      %674 = vmatpush1.bf16.msra.mxu0 0
      %675 = vmatprep.subr.bf16.mxu0 0
      %676 = vmatpush1.bf16.msra.mxu0 0
      %677 = vmatprep.subr.bf16.mxu0 0
      %678 = vmatpush1.bf16.msra.mxu0 0
      %679 = vmatprep.subr.bf16.mxu0 0
      %680 = vmatpush1.bf16.msra.mxu0 0
      %681 = vmatprep.subr.bf16.mxu0 0
      %682 = vmatpush1.bf16.msra.mxu0 0
      %683 = vmatprep.subr.bf16.mxu0 0
      %684 = vmatpush1.bf16.msra.mxu0 0
      %685 = vmatprep.subr.bf16.mxu0 0
      %686 = vmatpush1.bf16.msra.mxu0 0
      %687 = vmatprep.subr.bf16.mxu0 0
      %688 = vmatpush1.bf16.msra.mxu0 %v668
      %689 = vmatprep.subr.bf16.mxu0 0
      %690 = vmatpush2.bf16.msra.mxu0 0
      %691 = vmatprep.subr.bf16.mxu0 0
      %692 = vmatpush2.bf16.msra.mxu0 0
      %693 = vmatprep.subr.bf16.mxu0 0
      %694 = vmatpush2.bf16.msra.mxu0 0
      %695 = vmatprep.subr.bf16.mxu0 0
      %696 = vmatpush2.bf16.msra.mxu0 0
      %697 = vmatprep.subr.bf16.mxu0 0
      %698 = vmatpush2.bf16.msra.mxu0 0
      %699 = vmatprep.subr.bf16.mxu0 0
      %700 = vmatpush2.bf16.msra.mxu0 0
      %701 = vmatprep.subr.bf16.mxu0 0
      %702 = vmatpush2.bf16.msra.mxu0 0
      %703 = vmatprep.subr.bf16.mxu0 0
      %704 = vmatpush2.bf16.msra.mxu0 0
      %705 = vmatprep.mubr.bf16.mxu0 0
      %706 = vmatmul.mubr.bf16.gmra.mxu0 %v671
      %v707 = vpop.f32.mrf.mxu0
      %v708 = vadd.f32 0.0, %v707
      %v709 = vpop.f32.mrf.mxu0
      %v710 = vpop.f32.mrf.mxu0
      %v711 = vadd.f32 0.0, %v710
      %v712 = vpop.f32.mrf.mxu0
      %713 = vdwg.mxu0
      %v714 = vadd.f32 %v546, %v708
      %v715 = vadd.f32 %v547, %v711
      %s716 = scalar_lea.vmem %s1, 32
      %v717 = vld [vmem:[%s716] sm:$0xf]
      %v718 = vld [vmem:[%s716 + $0x4] sm:$0xf]
      %v719 = vld [vmem:[%s203] sm:$0x6]
      %v720 = vld [vmem:[%s203 + $0x4] sm:$0x6]
      %v721 = vld [vmem:[%s203 + $0x8] sm:$0x6]
      %v722 = vld [vmem:[%s203 + $0xc] sm:$0x6]
      %v728 = vunpack.c.l.s4 1983009808
      %v729 = vunpack.c.0.s8 %v728
      %v730 = vlaneseq
      %v731 = vshrl.u32 %v730, 7
      %v732 = vsub.s32 %v729, %v731
      %v733 = vrot.slane %v719, %v732
      %v734 = vcombine.high %v733, %v733
      %v736 = vunpack.c.l.s4 1983009808
      %v737 = vunpack.c.0.s8 %v736
      %v738 = vlaneseq
      %v739 = vshrl.u32 %v738, 7
      %v740 = vsub.s32 %v737, %v739
      %v741 = vrot.slane %v720, %v740
      %v742 = vcombine.high %v741, %v741
      %v744 = vunpack.c.l.s4 1983009808
      %v745 = vunpack.c.0.s8 %v744
      %v746 = vlaneseq
      %v747 = vshrl.u32 %v746, 7
      %v748 = vsub.s32 %v745, %v747
      %v749 = vrot.slane %v721, %v748
      %v750 = vcombine.high %v749, %v749
      %v752 = vunpack.c.l.s4 1983009808
      %v753 = vunpack.c.0.s8 %v752
      %v754 = vlaneseq
      %v755 = vshrl.u32 %v754, 7
      %v756 = vsub.s32 %v753, %v755
      %v757 = vrot.slane %v722, %v756
      %v758 = vcombine.high %v757, %v757
      %vm759 = vcmask 1040384
      %vm760 = vcmask 1042434
      %vm761 = vmor %vm759, %vm760
      %vm762 = vcmask 1044484
      %vm763 = vmor %vm761, %vm762
      %vm764 = vcmask 1046534
      %vm765 = vmor %vm763, %vm764
      %v766 = vrot.slane %v733, 7
      %v767 = vrot.slane %v766, 2
      %v768 = vrot.slane %v734, 7
      %v769 = vsel %vm765, %v767, %v768
      %v770 = vrot.slane %v741, 7
      %v771 = vrot.slane %v770, 2
      %v772 = vrot.slane %v742, 7
      %v773 = vsel %vm765, %v771, %v772
      %v774 = vrot.slane %v749, 7
      %v775 = vrot.slane %v774, 2
      %v776 = vrot.slane %v750, 7
      %v777 = vsel %vm765, %v775, %v776
      %v778 = vrot.slane %v757, 7
      %v779 = vrot.slane %v778, 2
      %v780 = vrot.slane %v758, 7
      %v781 = vsel %vm765, %v779, %v780
      %s782 = scalar_lea.vmem %s1, 40
      %v783 = vld [vmem:[%s782] sm:$0xf]
      %v784 = vld [vmem:[%s782 + $0x4] sm:$0xf]
      %v785 = vcombine.low %v769, %v773
      %v786 = vcombine.low %v777, %v781
      %v788 = vunpack.c.l.s4 1983009808
      %v789 = vunpack.c.0.s8 %v788
      %v790 = vlaneseq
      %v791 = vshrl.u32 %v790, 7
      %v792 = vsub.s32 %v789, %v791
      %v793 = vrot.slane %v785, %v792
      %v795 = vunpack.c.l.s4 1983009808
      %v796 = vunpack.c.0.s8 %v795
      %v797 = vlaneseq
      %v798 = vshrl.u32 %v797, 7
      %v799 = vsub.s32 %v796, %v798
      %v800 = vrot.slane %v786, %v799
      %v801 = vcombine.low %v793, %v800
      %v804 = vunpack.c.l.b16 %v783
      %v805 = vunpack.c.l.b16 %v784
      %v806 = vpack.c.b16 %v805, %v804
      %v809 = vsel %vm351, %v801, 0
      %811 = vmatprep.subr.bf16.mxu0 0
      %812 = vmatpush1.bf16.msra.mxu0 0
      %813 = vmatprep.subr.bf16.mxu0 0
      %814 = vmatpush1.bf16.msra.mxu0 0
      %815 = vmatprep.subr.bf16.mxu0 0
      %816 = vmatpush1.bf16.msra.mxu0 0
      %817 = vmatprep.subr.bf16.mxu0 0
      %818 = vmatpush1.bf16.msra.mxu0 0
      %819 = vmatprep.subr.bf16.mxu0 0
      %820 = vmatpush1.bf16.msra.mxu0 0
      %821 = vmatprep.subr.bf16.mxu0 0
      %822 = vmatpush1.bf16.msra.mxu0 0
      %823 = vmatprep.subr.bf16.mxu0 0
      %824 = vmatpush1.bf16.msra.mxu0 0
      %825 = vmatprep.subr.bf16.mxu0 0
      %826 = vmatpush1.bf16.msra.mxu0 %v806
      %827 = vmatprep.subr.bf16.mxu0 0
      %828 = vmatpush2.bf16.msra.mxu0 0
      %829 = vmatprep.subr.bf16.mxu0 0
      %830 = vmatpush2.bf16.msra.mxu0 0
      %831 = vmatprep.subr.bf16.mxu0 0
      %832 = vmatpush2.bf16.msra.mxu0 0
      %833 = vmatprep.subr.bf16.mxu0 0
      %834 = vmatpush2.bf16.msra.mxu0 0
      %835 = vmatprep.subr.bf16.mxu0 0
      %836 = vmatpush2.bf16.msra.mxu0 0
      %837 = vmatprep.subr.bf16.mxu0 0
      %838 = vmatpush2.bf16.msra.mxu0 0
      %839 = vmatprep.subr.bf16.mxu0 0
      %840 = vmatpush2.bf16.msra.mxu0 0
      %841 = vmatprep.subr.bf16.mxu0 0
      %842 = vmatpush2.bf16.msra.mxu0 0
      %843 = vmatprep.mubr.bf16.mxu0 0
      %844 = vmatmul.mubr.bf16.gmra.mxu0 %v809
      %v845 = vpop.f32.mrf.mxu0
      %v846 = vadd.f32 0.0, %v845
      %v847 = vpop.f32.mrf.mxu0
      %v848 = vpop.f32.mrf.mxu0
      %v849 = vadd.f32 0.0, %v848
      %v850 = vpop.f32.mrf.mxu0
      %851 = vdwg.mxu0
      %v854 = vunpack.c.l.b16 %v717
      %v855 = vunpack.c.l.b16 %v718
      %v856 = vpack.c.b16 %v855, %v854
      %858 = vmatprep.subr.bf16.mxu0 0
      %859 = vmatpush1.bf16.msra.mxu0 0
      %860 = vmatprep.subr.bf16.mxu0 0
      %861 = vmatpush1.bf16.msra.mxu0 0
      %862 = vmatprep.subr.bf16.mxu0 0
      %863 = vmatpush1.bf16.msra.mxu0 0
      %864 = vmatprep.subr.bf16.mxu0 0
      %865 = vmatpush1.bf16.msra.mxu0 0
      %866 = vmatprep.subr.bf16.mxu0 0
      %867 = vmatpush1.bf16.msra.mxu0 0
      %868 = vmatprep.subr.bf16.mxu0 0
      %869 = vmatpush1.bf16.msra.mxu0 0
      %870 = vmatprep.subr.bf16.mxu0 0
      %871 = vmatpush1.bf16.msra.mxu0 0
      %872 = vmatprep.subr.bf16.mxu0 0
      %873 = vmatpush1.bf16.msra.mxu0 %v856
      %874 = vmatprep.subr.bf16.mxu0 0
      %875 = vmatpush2.bf16.msra.mxu0 0
      %876 = vmatprep.subr.bf16.mxu0 0
      %877 = vmatpush2.bf16.msra.mxu0 0
      %878 = vmatprep.subr.bf16.mxu0 0
      %879 = vmatpush2.bf16.msra.mxu0 0
      %880 = vmatprep.subr.bf16.mxu0 0
      %881 = vmatpush2.bf16.msra.mxu0 0
      %882 = vmatprep.subr.bf16.mxu0 0
      %883 = vmatpush2.bf16.msra.mxu0 0
      %884 = vmatprep.subr.bf16.mxu0 0
      %885 = vmatpush2.bf16.msra.mxu0 0
      %886 = vmatprep.subr.bf16.mxu0 0
      %887 = vmatpush2.bf16.msra.mxu0 0
      %888 = vmatprep.subr.bf16.mxu0 0
      %889 = vmatpush2.bf16.msra.mxu0 0
      %890 = vmatprep.mubr.bf16.mxu0 0
      %891 = vmatmul.mubr.bf16.gmra.mxu0 %v353
      %v892 = vpop.f32.mrf.mxu0
      %v893 = vadd.f32 %v846, %v892
      %v894 = vpop.f32.mrf.mxu0
      %v895 = vpop.f32.mrf.mxu0
      %v896 = vadd.f32 %v849, %v895
      %v897 = vpop.f32.mrf.mxu0
      %898 = vdwg.mxu0
      %s899 = scalar_lea.vmem %s1, 48
      %v900 = vld [vmem:[%s899] sm:$0xf]
      %v901 = vld [vmem:[%s899 + $0x4] sm:$0xf]
      %v904 = vunpack.c.l.b16 %v900
      %v905 = vunpack.c.l.b16 %v901
      %v906 = vpack.c.b16 %v905, %v904
      %908 = vmatprep.subr.bf16.mxu0 0
      %909 = vmatpush1.bf16.msra.mxu0 0
      %910 = vmatprep.subr.bf16.mxu0 0
      %911 = vmatpush1.bf16.msra.mxu0 0
      %912 = vmatprep.subr.bf16.mxu0 0
      %913 = vmatpush1.bf16.msra.mxu0 0
      %914 = vmatprep.subr.bf16.mxu0 0
      %915 = vmatpush1.bf16.msra.mxu0 0
      %916 = vmatprep.subr.bf16.mxu0 0
      %917 = vmatpush1.bf16.msra.mxu0 0
      %918 = vmatprep.subr.bf16.mxu0 0
      %919 = vmatpush1.bf16.msra.mxu0 0
      %920 = vmatprep.subr.bf16.mxu0 0
      %921 = vmatpush1.bf16.msra.mxu0 0
      %922 = vmatprep.subr.bf16.mxu0 0
      %923 = vmatpush1.bf16.msra.mxu0 %v906
      %924 = vmatprep.subr.bf16.mxu0 0
      %925 = vmatpush2.bf16.msra.mxu0 0
      %926 = vmatprep.subr.bf16.mxu0 0
      %927 = vmatpush2.bf16.msra.mxu0 0
      %928 = vmatprep.subr.bf16.mxu0 0
      %929 = vmatpush2.bf16.msra.mxu0 0
      %930 = vmatprep.subr.bf16.mxu0 0
      %931 = vmatpush2.bf16.msra.mxu0 0
      %932 = vmatprep.subr.bf16.mxu0 0
      %933 = vmatpush2.bf16.msra.mxu0 0
      %934 = vmatprep.subr.bf16.mxu0 0
      %935 = vmatpush2.bf16.msra.mxu0 0
      %936 = vmatprep.subr.bf16.mxu0 0
      %937 = vmatpush2.bf16.msra.mxu0 0
      %938 = vmatprep.subr.bf16.mxu0 0
      %939 = vmatpush2.bf16.msra.mxu0 0
      %940 = vmatprep.mubr.bf16.mxu0 0
      %941 = vmatmul.mubr.bf16.gmra.mxu0 %v671
      %v942 = vpop.f32.mrf.mxu0
      %v943 = vadd.f32 0.0, %v942
      %v944 = vpop.f32.mrf.mxu0
      %v945 = vpop.f32.mrf.mxu0
      %v946 = vadd.f32 0.0, %v945
      %v947 = vpop.f32.mrf.mxu0
      %948 = vdwg.mxu0
      %v949 = vadd.f32 %v893, %v943
      %v950 = vadd.f32 %v896, %v946
      %v951 = vld [vmem:[%s467] sm:$0x6]
      %v952 = vld [vmem:[%s467 + $0x4] sm:$0x6]
      %v953 = vld [vmem:[%s467 + $0x8] sm:$0x6]
      %v954 = vld [vmem:[%s467 + $0xc] sm:$0x6]
      %v960 = vunpack.c.l.s4 1983009808
      %v961 = vunpack.c.0.s8 %v960
      %v962 = vlaneseq
      %v963 = vshrl.u32 %v962, 7
      %v964 = vsub.s32 %v961, %v963
      %v965 = vrot.slane %v951, %v964
      %v966 = vcombine.high %v965, %v965
      %v968 = vunpack.c.l.s4 1983009808
      %v969 = vunpack.c.0.s8 %v968
      %v970 = vlaneseq
      %v971 = vshrl.u32 %v970, 7
      %v972 = vsub.s32 %v969, %v971
      %v973 = vrot.slane %v952, %v972
      %v974 = vcombine.high %v973, %v973
      %v976 = vunpack.c.l.s4 1983009808
      %v977 = vunpack.c.0.s8 %v976
      %v978 = vlaneseq
      %v979 = vshrl.u32 %v978, 7
      %v980 = vsub.s32 %v977, %v979
      %v981 = vrot.slane %v953, %v980
      %v982 = vcombine.high %v981, %v981
      %v984 = vunpack.c.l.s4 1983009808
      %v985 = vunpack.c.0.s8 %v984
      %v986 = vlaneseq
      %v987 = vshrl.u32 %v986, 7
      %v988 = vsub.s32 %v985, %v987
      %v989 = vrot.slane %v954, %v988
      %v990 = vcombine.high %v989, %v989
      %v991 = vrot.slane %v965, 7
      %v992 = vrot.slane %v991, 2
      %v993 = vrot.slane %v966, 7
      %v994 = vsel %vm765, %v992, %v993
      %v995 = vrot.slane %v973, 7
      %v996 = vrot.slane %v995, 2
      %v997 = vrot.slane %v974, 7
      %v998 = vsel %vm765, %v996, %v997
      %v999 = vrot.slane %v981, 7
      %v1000 = vrot.slane %v999, 2
      %v1001 = vrot.slane %v982, 7
      %v1002 = vsel %vm765, %v1000, %v1001
      %v1003 = vrot.slane %v989, 7
      %v1004 = vrot.slane %v1003, 2
      %v1005 = vrot.slane %v990, 7
      %v1006 = vsel %vm765, %v1004, %v1005
      %s1007 = scalar_lea.vmem %s1, 56
      %v1008 = vld [vmem:[%s1007] sm:$0xf]
      %v1009 = vld [vmem:[%s1007 + $0x4] sm:$0xf]
      %v1010 = vcombine.low %v994, %v998
      %v1011 = vcombine.low %v1002, %v1006
      %v1013 = vunpack.c.l.s4 1983009808
      %v1014 = vunpack.c.0.s8 %v1013
      %v1015 = vlaneseq
      %v1016 = vshrl.u32 %v1015, 7
      %v1017 = vsub.s32 %v1014, %v1016
      %v1018 = vrot.slane %v1010, %v1017
      %v1020 = vunpack.c.l.s4 1983009808
      %v1021 = vunpack.c.0.s8 %v1020
      %v1022 = vlaneseq
      %v1023 = vshrl.u32 %v1022, 7
      %v1024 = vsub.s32 %v1021, %v1023
      %v1025 = vrot.slane %v1011, %v1024
      %v1026 = vcombine.low %v1018, %v1025
      %v1029 = vunpack.c.l.b16 %v1008
      %v1030 = vunpack.c.l.b16 %v1009
      %v1031 = vpack.c.b16 %v1030, %v1029
      %v1034 = vsel %vm351, %v1026, 0
      %1036 = vmatprep.subr.bf16.mxu0 0
      %1037 = vmatpush1.bf16.msra.mxu0 0
      %1038 = vmatprep.subr.bf16.mxu0 0
      %1039 = vmatpush1.bf16.msra.mxu0 0
      %1040 = vmatprep.subr.bf16.mxu0 0
      %1041 = vmatpush1.bf16.msra.mxu0 0
      %1042 = vmatprep.subr.bf16.mxu0 0
      %1043 = vmatpush1.bf16.msra.mxu0 0
      %1044 = vmatprep.subr.bf16.mxu0 0
      %1045 = vmatpush1.bf16.msra.mxu0 0
      %1046 = vmatprep.subr.bf16.mxu0 0
      %1047 = vmatpush1.bf16.msra.mxu0 0
      %1048 = vmatprep.subr.bf16.mxu0 0
      %1049 = vmatpush1.bf16.msra.mxu0 0
      %1050 = vmatprep.subr.bf16.mxu0 0
      %1051 = vmatpush1.bf16.msra.mxu0 %v1031
      %1052 = vmatprep.subr.bf16.mxu0 0
      %1053 = vmatpush2.bf16.msra.mxu0 0
      %1054 = vmatprep.subr.bf16.mxu0 0
      %1055 = vmatpush2.bf16.msra.mxu0 0
      %1056 = vmatprep.subr.bf16.mxu0 0
      %1057 = vmatpush2.bf16.msra.mxu0 0
      %1058 = vmatprep.subr.bf16.mxu0 0
      %1059 = vmatpush2.bf16.msra.mxu0 0
      %1060 = vmatprep.subr.bf16.mxu0 0
      %1061 = vmatpush2.bf16.msra.mxu0 0
      %1062 = vmatprep.subr.bf16.mxu0 0
      %1063 = vmatpush2.bf16.msra.mxu0 0
      %1064 = vmatprep.subr.bf16.mxu0 0
      %1065 = vmatpush2.bf16.msra.mxu0 0
      %1066 = vmatprep.subr.bf16.mxu0 0
      %1067 = vmatpush2.bf16.msra.mxu0 0
      %1068 = vmatprep.mubr.bf16.mxu0 0
      %1069 = vmatmul.mubr.bf16.gmra.mxu0 %v1034
      %v1070 = vpop.f32.mrf.mxu0
      %v1071 = vadd.f32 0.0, %v1070
      %v1072 = vpop.f32.mrf.mxu0
      %v1073 = vpop.f32.mrf.mxu0
      %v1074 = vadd.f32 0.0, %v1073
      %v1075 = vpop.f32.mrf.mxu0
      %1076 = vdwg.mxu0
      %v1077 = vadd.f32 %v949, %v1071
      %v1078 = vadd.f32 %v950, %v1074
      %s1079 = scalar_lea.vmem %s1, 64
      %v1080 = vld [vmem:[%s1079] sm:$0xf]
      %v1081 = vld [vmem:[%s1079 + $0x4] sm:$0xf]
      %s1082 = scalar_lea.vmem %s1, 72
      %v1083 = vld [vmem:[%s1082] sm:$0xf]
      %v1084 = vld [vmem:[%s1082 + $0x4] sm:$0xf]
      %v1087 = vunpack.c.l.b16 %v1083
      %v1088 = vunpack.c.l.b16 %v1084
      %v1089 = vpack.c.b16 %v1088, %v1087
      %1091 = vmatprep.subr.bf16.mxu0 0
      %1092 = vmatpush1.bf16.msra.mxu0 0
      %1093 = vmatprep.subr.bf16.mxu0 0
      %1094 = vmatpush1.bf16.msra.mxu0 0
      %1095 = vmatprep.subr.bf16.mxu0 0
      %1096 = vmatpush1.bf16.msra.mxu0 0
      %1097 = vmatprep.subr.bf16.mxu0 0
      %1098 = vmatpush1.bf16.msra.mxu0 0
      %1099 = vmatprep.subr.bf16.mxu0 0
      %1100 = vmatpush1.bf16.msra.mxu0 0
      %1101 = vmatprep.subr.bf16.mxu0 0
      %1102 = vmatpush1.bf16.msra.mxu0 0
      %1103 = vmatprep.subr.bf16.mxu0 0
      %1104 = vmatpush1.bf16.msra.mxu0 0
      %1105 = vmatprep.subr.bf16.mxu0 0
      %1106 = vmatpush1.bf16.msra.mxu0 %v1089
      %1107 = vmatprep.subr.bf16.mxu0 0
      %1108 = vmatpush2.bf16.msra.mxu0 0
      %1109 = vmatprep.subr.bf16.mxu0 0
      %1110 = vmatpush2.bf16.msra.mxu0 0
      %1111 = vmatprep.subr.bf16.mxu0 0
      %1112 = vmatpush2.bf16.msra.mxu0 0
      %1113 = vmatprep.subr.bf16.mxu0 0
      %1114 = vmatpush2.bf16.msra.mxu0 0
      %1115 = vmatprep.subr.bf16.mxu0 0
      %1116 = vmatpush2.bf16.msra.mxu0 0
      %1117 = vmatprep.subr.bf16.mxu0 0
      %1118 = vmatpush2.bf16.msra.mxu0 0
      %1119 = vmatprep.subr.bf16.mxu0 0
      %1120 = vmatpush2.bf16.msra.mxu0 0
      %1121 = vmatprep.subr.bf16.mxu0 0
      %1122 = vmatpush2.bf16.msra.mxu0 0
      %1123 = vmatprep.mubr.bf16.mxu0 0
      %1124 = vmatmul.mubr.bf16.gmra.mxu0 %v671
      %v1125 = vpop.f32.mrf.mxu0
      %v1126 = vadd.f32 0.0, %v1125
      %v1127 = vpop.f32.mrf.mxu0
      %v1128 = vpop.f32.mrf.mxu0
      %v1129 = vadd.f32 0.0, %v1128
      %v1130 = vpop.f32.mrf.mxu0
      %1131 = vdwg.mxu0
      %v1134 = vunpack.c.l.b16 %v1080
      %v1135 = vunpack.c.l.b16 %v1081
      %v1136 = vpack.c.b16 %v1135, %v1134
      %1138 = vmatprep.subr.bf16.mxu0 0
      %1139 = vmatpush1.bf16.msra.mxu0 0
      %1140 = vmatprep.subr.bf16.mxu0 0
      %1141 = vmatpush1.bf16.msra.mxu0 0
      %1142 = vmatprep.subr.bf16.mxu0 0
      %1143 = vmatpush1.bf16.msra.mxu0 0
      %1144 = vmatprep.subr.bf16.mxu0 0
      %1145 = vmatpush1.bf16.msra.mxu0 0
      %1146 = vmatprep.subr.bf16.mxu0 0
      %1147 = vmatpush1.bf16.msra.mxu0 0
      %1148 = vmatprep.subr.bf16.mxu0 0
      %1149 = vmatpush1.bf16.msra.mxu0 0
      %1150 = vmatprep.subr.bf16.mxu0 0
      %1151 = vmatpush1.bf16.msra.mxu0 0
      %1152 = vmatprep.subr.bf16.mxu0 0
      %1153 = vmatpush1.bf16.msra.mxu0 %v1136
      %1154 = vmatprep.subr.bf16.mxu0 0
      %1155 = vmatpush2.bf16.msra.mxu0 0
      %1156 = vmatprep.subr.bf16.mxu0 0
      %1157 = vmatpush2.bf16.msra.mxu0 0
      %1158 = vmatprep.subr.bf16.mxu0 0
      %1159 = vmatpush2.bf16.msra.mxu0 0
      %1160 = vmatprep.subr.bf16.mxu0 0
      %1161 = vmatpush2.bf16.msra.mxu0 0
      %1162 = vmatprep.subr.bf16.mxu0 0
      %1163 = vmatpush2.bf16.msra.mxu0 0
      %1164 = vmatprep.subr.bf16.mxu0 0
      %1165 = vmatpush2.bf16.msra.mxu0 0
      %1166 = vmatprep.subr.bf16.mxu0 0
      %1167 = vmatpush2.bf16.msra.mxu0 0
      %1168 = vmatprep.subr.bf16.mxu0 0
      %1169 = vmatpush2.bf16.msra.mxu0 0
      %1170 = vmatprep.mubr.bf16.mxu0 0
      %1171 = vmatmul.mubr.bf16.gmra.mxu0 %v503
      %v1172 = vpop.f32.mrf.mxu0
      %v1173 = vadd.f32 %v1126, %v1172
      %v1174 = vpop.f32.mrf.mxu0
      %v1175 = vpop.f32.mrf.mxu0
      %v1176 = vadd.f32 %v1129, %v1175
      %v1177 = vpop.f32.mrf.mxu0
      %1178 = vdwg.mxu0
      %s1179 = scalar_lea.vmem %s203, 8
      %v1180 = vld [vmem:[%s1179] sm:$0x3]
      %v1181 = vld [vmem:[%s1179 + $0x4] sm:$0x3]
      %v1182 = vld [vmem:[%s1179 + $0x8] sm:$0x3]
      %v1183 = vld [vmem:[%s1179 + $0xc] sm:$0x3]
      %s1184 = scalar_lea.vmem %s1, 80
      %v1185 = vld [vmem:[%s1184] sm:$0xf]
      %v1186 = vld [vmem:[%s1184 + $0x4] sm:$0xf]
      %v1191 = vcombine.low %v1180, %v1181
      %v1192 = vcombine.low %v1182, %v1183
      %v1194 = vunpack.c.l.s4 1983009808
      %v1195 = vunpack.c.0.s8 %v1194
      %v1196 = vlaneseq
      %v1197 = vshrl.u32 %v1196, 7
      %v1198 = vsub.s32 %v1195, %v1197
      %v1199 = vrot.slane %v1191, %v1198
      %v1201 = vunpack.c.l.s4 1983009808
      %v1202 = vunpack.c.0.s8 %v1201
      %v1203 = vlaneseq
      %v1204 = vshrl.u32 %v1203, 7
      %v1205 = vsub.s32 %v1202, %v1204
      %v1206 = vrot.slane %v1192, %v1205
      %v1207 = vcombine.low %v1199, %v1206
      %v1210 = vunpack.c.l.b16 %v1185
      %v1211 = vunpack.c.l.b16 %v1186
      %v1212 = vpack.c.b16 %v1211, %v1210
      %v1215 = vsel %vm351, %v1207, 0
      %1217 = vmatprep.subr.bf16.mxu0 0
      %1218 = vmatpush1.bf16.msra.mxu0 0
      %1219 = vmatprep.subr.bf16.mxu0 0
      %1220 = vmatpush1.bf16.msra.mxu0 0
      %1221 = vmatprep.subr.bf16.mxu0 0
      %1222 = vmatpush1.bf16.msra.mxu0 0
      %1223 = vmatprep.subr.bf16.mxu0 0
      %1224 = vmatpush1.bf16.msra.mxu0 0
      %1225 = vmatprep.subr.bf16.mxu0 0
      %1226 = vmatpush1.bf16.msra.mxu0 0
      %1227 = vmatprep.subr.bf16.mxu0 0
      %1228 = vmatpush1.bf16.msra.mxu0 0
      %1229 = vmatprep.subr.bf16.mxu0 0
      %1230 = vmatpush1.bf16.msra.mxu0 0
      %1231 = vmatprep.subr.bf16.mxu0 0
      %1232 = vmatpush1.bf16.msra.mxu0 %v1212
      %1233 = vmatprep.subr.bf16.mxu0 0
      %1234 = vmatpush2.bf16.msra.mxu0 0
      %1235 = vmatprep.subr.bf16.mxu0 0
      %1236 = vmatpush2.bf16.msra.mxu0 0
      %1237 = vmatprep.subr.bf16.mxu0 0
      %1238 = vmatpush2.bf16.msra.mxu0 0
      %1239 = vmatprep.subr.bf16.mxu0 0
      %1240 = vmatpush2.bf16.msra.mxu0 0
      %1241 = vmatprep.subr.bf16.mxu0 0
      %1242 = vmatpush2.bf16.msra.mxu0 0
      %1243 = vmatprep.subr.bf16.mxu0 0
      %1244 = vmatpush2.bf16.msra.mxu0 0
      %1245 = vmatprep.subr.bf16.mxu0 0
      %1246 = vmatpush2.bf16.msra.mxu0 0
      %1247 = vmatprep.subr.bf16.mxu0 0
      %1248 = vmatpush2.bf16.msra.mxu0 0
      %1249 = vmatprep.mubr.bf16.mxu0 0
      %1250 = vmatmul.mubr.bf16.gmra.mxu0 %v1215
      %v1251 = vpop.f32.mrf.mxu0
      %v1252 = vadd.f32 0.0, %v1251
      %v1253 = vpop.f32.mrf.mxu0
      %v1254 = vpop.f32.mrf.mxu0
      %v1255 = vadd.f32 0.0, %v1254
      %v1256 = vpop.f32.mrf.mxu0
      %1257 = vdwg.mxu0
      %v1258 = vadd.f32 %v1173, %v1252
      %v1259 = vadd.f32 %v1176, %v1255
      %v1260 = vld [vmem:[%s1179] sm:$0x7]
      %v1261 = vld [vmem:[%s1179 + $0x4] sm:$0x7]
      %v1262 = vld [vmem:[%s1179 + $0x8] sm:$0x7]
      %v1263 = vld [vmem:[%s1179 + $0xc] sm:$0x7]
      %v1269 = vunpack.c.l.s4 1983009808
      %v1270 = vunpack.c.0.s8 %v1269
      %v1271 = vlaneseq
      %v1272 = vshrl.u32 %v1271, 7
      %v1273 = vsub.s32 %v1270, %v1272
      %v1274 = vrot.slane %v1260, %v1273
      %v1275 = vcombine.high %v1274, %v1274
      %v1277 = vunpack.c.l.s4 1983009808
      %v1278 = vunpack.c.0.s8 %v1277
      %v1279 = vlaneseq
      %v1280 = vshrl.u32 %v1279, 7
      %v1281 = vsub.s32 %v1278, %v1280
      %v1282 = vrot.slane %v1261, %v1281
      %v1283 = vcombine.high %v1282, %v1282
      %v1285 = vunpack.c.l.s4 1983009808
      %v1286 = vunpack.c.0.s8 %v1285
      %v1287 = vlaneseq
      %v1288 = vshrl.u32 %v1287, 7
      %v1289 = vsub.s32 %v1286, %v1288
      %v1290 = vrot.slane %v1262, %v1289
      %v1291 = vcombine.high %v1290, %v1290
      %v1293 = vunpack.c.l.s4 1983009808
      %v1294 = vunpack.c.0.s8 %v1293
      %v1295 = vlaneseq
      %v1296 = vshrl.u32 %v1295, 7
      %v1297 = vsub.s32 %v1294, %v1296
      %v1298 = vrot.slane %v1263, %v1297
      %v1299 = vcombine.high %v1298, %v1298
      %v1301 = vshrl.u32 %v1274, 16
      %v1303 = vrot.slane %v1301, 6
      %v1304 = vshll.u32 %v1274, 16
      %v1306 = vrot.slane %v1304, 7
      %v1307 = vor.u32 %v1303, %v1306
      %v1308 = vrot.slane %v1307, 2
      %v1310 = vshll.u32 %v1275, 16
      %v1312 = vrot.slane %v1310, 7
      %v1313 = vsel %vm268, %v1308, %v1312
      %v1315 = vshrl.u32 %v1282, 16
      %v1317 = vrot.slane %v1315, 6
      %v1318 = vshll.u32 %v1282, 16
      %v1320 = vrot.slane %v1318, 7
      %v1321 = vor.u32 %v1317, %v1320
      %v1322 = vrot.slane %v1321, 2
      %v1324 = vshll.u32 %v1283, 16
      %v1326 = vrot.slane %v1324, 7
      %v1327 = vsel %vm268, %v1322, %v1326
      %v1329 = vshrl.u32 %v1290, 16
      %v1331 = vrot.slane %v1329, 6
      %v1332 = vshll.u32 %v1290, 16
      %v1334 = vrot.slane %v1332, 7
      %v1335 = vor.u32 %v1331, %v1334
      %v1336 = vrot.slane %v1335, 2
      %v1338 = vshll.u32 %v1291, 16
      %v1340 = vrot.slane %v1338, 7
      %v1341 = vsel %vm268, %v1336, %v1340
      %v1343 = vshrl.u32 %v1298, 16
      %v1345 = vrot.slane %v1343, 6
      %v1346 = vshll.u32 %v1298, 16
      %v1348 = vrot.slane %v1346, 7
      %v1349 = vor.u32 %v1345, %v1348
      %v1350 = vrot.slane %v1349, 2
      %v1352 = vshll.u32 %v1299, 16
      %v1354 = vrot.slane %v1352, 7
      %v1355 = vsel %vm268, %v1350, %v1354
      %s1356 = scalar_lea.vmem %s1, 88
      %v1357 = vld [vmem:[%s1356] sm:$0xf]
      %v1358 = vld [vmem:[%s1356 + $0x4] sm:$0xf]
      %v1359 = vcombine.low %v1313, %v1327
      %v1360 = vcombine.low %v1341, %v1355
      %v1362 = vunpack.c.l.s4 1983009808
      %v1363 = vunpack.c.0.s8 %v1362
      %v1364 = vlaneseq
      %v1365 = vshrl.u32 %v1364, 7
      %v1366 = vsub.s32 %v1363, %v1365
      %v1367 = vrot.slane %v1359, %v1366
      %v1369 = vunpack.c.l.s4 1983009808
      %v1370 = vunpack.c.0.s8 %v1369
      %v1371 = vlaneseq
      %v1372 = vshrl.u32 %v1371, 7
      %v1373 = vsub.s32 %v1370, %v1372
      %v1374 = vrot.slane %v1360, %v1373
      %v1375 = vcombine.low %v1367, %v1374
      %v1378 = vunpack.c.l.b16 %v1357
      %v1379 = vunpack.c.l.b16 %v1358
      %v1380 = vpack.c.b16 %v1379, %v1378
      %v1383 = vsel %vm351, %v1375, 0
      %1385 = vmatprep.subr.bf16.mxu0 0
      %1386 = vmatpush1.bf16.msra.mxu0 0
      %1387 = vmatprep.subr.bf16.mxu0 0
      %1388 = vmatpush1.bf16.msra.mxu0 0
      %1389 = vmatprep.subr.bf16.mxu0 0
      %1390 = vmatpush1.bf16.msra.mxu0 0
      %1391 = vmatprep.subr.bf16.mxu0 0
      %1392 = vmatpush1.bf16.msra.mxu0 0
      %1393 = vmatprep.subr.bf16.mxu0 0
      %1394 = vmatpush1.bf16.msra.mxu0 0
      %1395 = vmatprep.subr.bf16.mxu0 0
      %1396 = vmatpush1.bf16.msra.mxu0 0
      %1397 = vmatprep.subr.bf16.mxu0 0
      %1398 = vmatpush1.bf16.msra.mxu0 0
      %1399 = vmatprep.subr.bf16.mxu0 0
      %1400 = vmatpush1.bf16.msra.mxu0 %v1380
      %1401 = vmatprep.subr.bf16.mxu0 0
      %1402 = vmatpush2.bf16.msra.mxu0 0
      %1403 = vmatprep.subr.bf16.mxu0 0
      %1404 = vmatpush2.bf16.msra.mxu0 0
      %1405 = vmatprep.subr.bf16.mxu0 0
      %1406 = vmatpush2.bf16.msra.mxu0 0
      %1407 = vmatprep.subr.bf16.mxu0 0
      %1408 = vmatpush2.bf16.msra.mxu0 0
      %1409 = vmatprep.subr.bf16.mxu0 0
      %1410 = vmatpush2.bf16.msra.mxu0 0
      %1411 = vmatprep.subr.bf16.mxu0 0
      %1412 = vmatpush2.bf16.msra.mxu0 0
      %1413 = vmatprep.subr.bf16.mxu0 0
      %1414 = vmatpush2.bf16.msra.mxu0 0
      %1415 = vmatprep.subr.bf16.mxu0 0
      %1416 = vmatpush2.bf16.msra.mxu0 0
      %1417 = vmatprep.mubr.bf16.mxu0 0
      %1418 = vmatmul.mubr.bf16.gmra.mxu0 %v1383
      %v1419 = vpop.f32.mrf.mxu0
      %v1420 = vadd.f32 0.0, %v1419
      %v1421 = vpop.f32.mrf.mxu0
      %v1422 = vpop.f32.mrf.mxu0
      %v1423 = vadd.f32 0.0, %v1422
      %v1424 = vpop.f32.mrf.mxu0
      %1425 = vdwg.mxu0
      %v1426 = vadd.f32 %v1258, %v1420
      %v1427 = vadd.f32 %v1259, %v1423
      %s1428 = scalar_lea.vmem %s1, 96
      %v1429 = vld [vmem:[%s1428] sm:$0xf]
      %v1430 = vld [vmem:[%s1428 + $0x4] sm:$0xf]
      %s1431 = scalar_lea.vmem %s1, 104
      %v1432 = vld [vmem:[%s1431] sm:$0xf]
      %v1433 = vld [vmem:[%s1431 + $0x4] sm:$0xf]
      %v1436 = vunpack.c.l.b16 %v1432
      %v1437 = vunpack.c.l.b16 %v1433
      %v1438 = vpack.c.b16 %v1437, %v1436
      %1440 = vmatprep.subr.bf16.mxu0 0
      %1441 = vmatpush1.bf16.msra.mxu0 0
      %1442 = vmatprep.subr.bf16.mxu0 0
      %1443 = vmatpush1.bf16.msra.mxu0 0
      %1444 = vmatprep.subr.bf16.mxu0 0
      %1445 = vmatpush1.bf16.msra.mxu0 0
      %1446 = vmatprep.subr.bf16.mxu0 0
      %1447 = vmatpush1.bf16.msra.mxu0 0
      %1448 = vmatprep.subr.bf16.mxu0 0
      %1449 = vmatpush1.bf16.msra.mxu0 0
      %1450 = vmatprep.subr.bf16.mxu0 0
      %1451 = vmatpush1.bf16.msra.mxu0 0
      %1452 = vmatprep.subr.bf16.mxu0 0
      %1453 = vmatpush1.bf16.msra.mxu0 0
      %1454 = vmatprep.subr.bf16.mxu0 0
      %1455 = vmatpush1.bf16.msra.mxu0 %v1438
      %1456 = vmatprep.subr.bf16.mxu0 0
      %1457 = vmatpush2.bf16.msra.mxu0 0
      %1458 = vmatprep.subr.bf16.mxu0 0
      %1459 = vmatpush2.bf16.msra.mxu0 0
      %1460 = vmatprep.subr.bf16.mxu0 0
      %1461 = vmatpush2.bf16.msra.mxu0 0
      %1462 = vmatprep.subr.bf16.mxu0 0
      %1463 = vmatpush2.bf16.msra.mxu0 0
      %1464 = vmatprep.subr.bf16.mxu0 0
      %1465 = vmatpush2.bf16.msra.mxu0 0
      %1466 = vmatprep.subr.bf16.mxu0 0
      %1467 = vmatpush2.bf16.msra.mxu0 0
      %1468 = vmatprep.subr.bf16.mxu0 0
      %1469 = vmatpush2.bf16.msra.mxu0 0
      %1470 = vmatprep.subr.bf16.mxu0 0
      %1471 = vmatpush2.bf16.msra.mxu0 0
      %1472 = vmatprep.mubr.bf16.mxu0 0
      %1473 = vmatmul.mubr.bf16.gmra.mxu0 %v1034
      %v1474 = vpop.f32.mrf.mxu0
      %v1475 = vadd.f32 0.0, %v1474
      %v1476 = vpop.f32.mrf.mxu0
      %v1477 = vpop.f32.mrf.mxu0
      %v1478 = vadd.f32 0.0, %v1477
      %v1479 = vpop.f32.mrf.mxu0
      %1480 = vdwg.mxu0
      %v1483 = vunpack.c.l.b16 %v1429
      %v1484 = vunpack.c.l.b16 %v1430
      %v1485 = vpack.c.b16 %v1484, %v1483
      %1487 = vmatprep.subr.bf16.mxu0 0
      %1488 = vmatpush1.bf16.msra.mxu0 0
      %1489 = vmatprep.subr.bf16.mxu0 0
      %1490 = vmatpush1.bf16.msra.mxu0 0
      %1491 = vmatprep.subr.bf16.mxu0 0
      %1492 = vmatpush1.bf16.msra.mxu0 0
      %1493 = vmatprep.subr.bf16.mxu0 0
      %1494 = vmatpush1.bf16.msra.mxu0 0
      %1495 = vmatprep.subr.bf16.mxu0 0
      %1496 = vmatpush1.bf16.msra.mxu0 0
      %1497 = vmatprep.subr.bf16.mxu0 0
      %1498 = vmatpush1.bf16.msra.mxu0 0
      %1499 = vmatprep.subr.bf16.mxu0 0
      %1500 = vmatpush1.bf16.msra.mxu0 0
      %1501 = vmatprep.subr.bf16.mxu0 0
      %1502 = vmatpush1.bf16.msra.mxu0 %v1485
      %1503 = vmatprep.subr.bf16.mxu0 0
      %1504 = vmatpush2.bf16.msra.mxu0 0
      %1505 = vmatprep.subr.bf16.mxu0 0
      %1506 = vmatpush2.bf16.msra.mxu0 0
      %1507 = vmatprep.subr.bf16.mxu0 0
      %1508 = vmatpush2.bf16.msra.mxu0 0
      %1509 = vmatprep.subr.bf16.mxu0 0
      %1510 = vmatpush2.bf16.msra.mxu0 0
      %1511 = vmatprep.subr.bf16.mxu0 0
      %1512 = vmatpush2.bf16.msra.mxu0 0
      %1513 = vmatprep.subr.bf16.mxu0 0
      %1514 = vmatpush2.bf16.msra.mxu0 0
      %1515 = vmatprep.subr.bf16.mxu0 0
      %1516 = vmatpush2.bf16.msra.mxu0 0
      %1517 = vmatprep.subr.bf16.mxu0 0
      %1518 = vmatpush2.bf16.msra.mxu0 0
      %1519 = vmatprep.mubr.bf16.mxu0 0
      %1520 = vmatmul.mubr.bf16.gmra.mxu0 %v671
      %v1521 = vpop.f32.mrf.mxu0
      %v1522 = vadd.f32 %v1475, %v1521
      %v1523 = vpop.f32.mrf.mxu0
      %v1524 = vpop.f32.mrf.mxu0
      %v1525 = vadd.f32 %v1478, %v1524
      %v1526 = vpop.f32.mrf.mxu0
      %1527 = vdwg.mxu0
      %s1528 = scalar_lea.vmem %s1, 112
      %v1529 = vld [vmem:[%s1528] sm:$0xf]
      %v1530 = vld [vmem:[%s1528 + $0x4] sm:$0xf]
      %v1533 = vunpack.c.l.b16 %v1529
      %v1534 = vunpack.c.l.b16 %v1530
      %v1535 = vpack.c.b16 %v1534, %v1533
      %1537 = vmatprep.subr.bf16.mxu0 0
      %1538 = vmatpush1.bf16.msra.mxu0 0
      %1539 = vmatprep.subr.bf16.mxu0 0
      %1540 = vmatpush1.bf16.msra.mxu0 0
      %1541 = vmatprep.subr.bf16.mxu0 0
      %1542 = vmatpush1.bf16.msra.mxu0 0
      %1543 = vmatprep.subr.bf16.mxu0 0
      %1544 = vmatpush1.bf16.msra.mxu0 0
      %1545 = vmatprep.subr.bf16.mxu0 0
      %1546 = vmatpush1.bf16.msra.mxu0 0
      %1547 = vmatprep.subr.bf16.mxu0 0
      %1548 = vmatpush1.bf16.msra.mxu0 0
      %1549 = vmatprep.subr.bf16.mxu0 0
      %1550 = vmatpush1.bf16.msra.mxu0 0
      %1551 = vmatprep.subr.bf16.mxu0 0
      %1552 = vmatpush1.bf16.msra.mxu0 %v1535
      %1553 = vmatprep.subr.bf16.mxu0 0
      %1554 = vmatpush2.bf16.msra.mxu0 0
      %1555 = vmatprep.subr.bf16.mxu0 0
      %1556 = vmatpush2.bf16.msra.mxu0 0
      %1557 = vmatprep.subr.bf16.mxu0 0
      %1558 = vmatpush2.bf16.msra.mxu0 0
      %1559 = vmatprep.subr.bf16.mxu0 0
      %1560 = vmatpush2.bf16.msra.mxu0 0
      %1561 = vmatprep.subr.bf16.mxu0 0
      %1562 = vmatpush2.bf16.msra.mxu0 0
      %1563 = vmatprep.subr.bf16.mxu0 0
      %1564 = vmatpush2.bf16.msra.mxu0 0
      %1565 = vmatprep.subr.bf16.mxu0 0
      %1566 = vmatpush2.bf16.msra.mxu0 0
      %1567 = vmatprep.subr.bf16.mxu0 0
      %1568 = vmatpush2.bf16.msra.mxu0 0
      %1569 = vmatprep.mubr.bf16.mxu0 0
      %1570 = vmatmul.mubr.bf16.gmra.mxu0 %v1383
      %v1571 = vpop.f32.mrf.mxu0
      %v1572 = vadd.f32 0.0, %v1571
      %v1573 = vpop.f32.mrf.mxu0
      %v1574 = vpop.f32.mrf.mxu0
      %v1575 = vadd.f32 0.0, %v1574
      %v1576 = vpop.f32.mrf.mxu0
      %1577 = vdwg.mxu0
      %v1578 = vadd.f32 %v1522, %v1572
      %v1579 = vadd.f32 %v1525, %v1575
      %v1580 = vld [vmem:[%s1179] sm:$0x6]
      %v1581 = vld [vmem:[%s1179 + $0x4] sm:$0x6]
      %v1582 = vld [vmem:[%s1179 + $0x8] sm:$0x6]
      %v1583 = vld [vmem:[%s1179 + $0xc] sm:$0x6]
      %v1589 = vunpack.c.l.s4 1983009808
      %v1590 = vunpack.c.0.s8 %v1589
      %v1591 = vlaneseq
      %v1592 = vshrl.u32 %v1591, 7
      %v1593 = vsub.s32 %v1590, %v1592
      %v1594 = vrot.slane %v1580, %v1593
      %v1595 = vcombine.high %v1594, %v1594
      %v1597 = vunpack.c.l.s4 1983009808
      %v1598 = vunpack.c.0.s8 %v1597
      %v1599 = vlaneseq
      %v1600 = vshrl.u32 %v1599, 7
      %v1601 = vsub.s32 %v1598, %v1600
      %v1602 = vrot.slane %v1581, %v1601
      %v1603 = vcombine.high %v1602, %v1602
      %v1605 = vunpack.c.l.s4 1983009808
      %v1606 = vunpack.c.0.s8 %v1605
      %v1607 = vlaneseq
      %v1608 = vshrl.u32 %v1607, 7
      %v1609 = vsub.s32 %v1606, %v1608
      %v1610 = vrot.slane %v1582, %v1609
      %v1611 = vcombine.high %v1610, %v1610
      %v1613 = vunpack.c.l.s4 1983009808
      %v1614 = vunpack.c.0.s8 %v1613
      %v1615 = vlaneseq
      %v1616 = vshrl.u32 %v1615, 7
      %v1617 = vsub.s32 %v1614, %v1616
      %v1618 = vrot.slane %v1583, %v1617
      %v1619 = vcombine.high %v1618, %v1618
      %v1620 = vrot.slane %v1594, 7
      %v1621 = vrot.slane %v1620, 2
      %v1622 = vrot.slane %v1595, 7
      %v1623 = vsel %vm765, %v1621, %v1622
      %v1624 = vrot.slane %v1602, 7
      %v1625 = vrot.slane %v1624, 2
      %v1626 = vrot.slane %v1603, 7
      %v1627 = vsel %vm765, %v1625, %v1626
      %v1628 = vrot.slane %v1610, 7
      %v1629 = vrot.slane %v1628, 2
      %v1630 = vrot.slane %v1611, 7
      %v1631 = vsel %vm765, %v1629, %v1630
      %v1632 = vrot.slane %v1618, 7
      %v1633 = vrot.slane %v1632, 2
      %v1634 = vrot.slane %v1619, 7
      %v1635 = vsel %vm765, %v1633, %v1634
      %s1636 = scalar_lea.vmem %s1, 120
      %v1637 = vld [vmem:[%s1636] sm:$0xf]
      %v1638 = vld [vmem:[%s1636 + $0x4] sm:$0xf]
      %v1639 = vcombine.low %v1623, %v1627
      %v1640 = vcombine.low %v1631, %v1635
      %v1642 = vunpack.c.l.s4 1983009808
      %v1643 = vunpack.c.0.s8 %v1642
      %v1644 = vlaneseq
      %v1645 = vshrl.u32 %v1644, 7
      %v1646 = vsub.s32 %v1643, %v1645
      %v1647 = vrot.slane %v1639, %v1646
      %v1649 = vunpack.c.l.s4 1983009808
      %v1650 = vunpack.c.0.s8 %v1649
      %v1651 = vlaneseq
      %v1652 = vshrl.u32 %v1651, 7
      %v1653 = vsub.s32 %v1650, %v1652
      %v1654 = vrot.slane %v1640, %v1653
      %v1655 = vcombine.low %v1647, %v1654
      %v1658 = vunpack.c.l.b16 %v1637
      %v1659 = vunpack.c.l.b16 %v1638
      %v1660 = vpack.c.b16 %v1659, %v1658
      %v1663 = vsel %vm351, %v1655, 0
      %1665 = vmatprep.subr.bf16.mxu0 0
      %1666 = vmatpush1.bf16.msra.mxu0 0
      %1667 = vmatprep.subr.bf16.mxu0 0
      %1668 = vmatpush1.bf16.msra.mxu0 0
      %1669 = vmatprep.subr.bf16.mxu0 0
      %1670 = vmatpush1.bf16.msra.mxu0 0
      %1671 = vmatprep.subr.bf16.mxu0 0
      %1672 = vmatpush1.bf16.msra.mxu0 0
      %1673 = vmatprep.subr.bf16.mxu0 0
      %1674 = vmatpush1.bf16.msra.mxu0 0
      %1675 = vmatprep.subr.bf16.mxu0 0
      %1676 = vmatpush1.bf16.msra.mxu0 0
      %1677 = vmatprep.subr.bf16.mxu0 0
      %1678 = vmatpush1.bf16.msra.mxu0 0
      %1679 = vmatprep.subr.bf16.mxu0 0
      %1680 = vmatpush1.bf16.msra.mxu0 %v1660
      %1681 = vmatprep.subr.bf16.mxu0 0
      %1682 = vmatpush2.bf16.msra.mxu0 0
      %1683 = vmatprep.subr.bf16.mxu0 0
      %1684 = vmatpush2.bf16.msra.mxu0 0
      %1685 = vmatprep.subr.bf16.mxu0 0
      %1686 = vmatpush2.bf16.msra.mxu0 0
      %1687 = vmatprep.subr.bf16.mxu0 0
      %1688 = vmatpush2.bf16.msra.mxu0 0
      %1689 = vmatprep.subr.bf16.mxu0 0
      %1690 = vmatpush2.bf16.msra.mxu0 0
      %1691 = vmatprep.subr.bf16.mxu0 0
      %1692 = vmatpush2.bf16.msra.mxu0 0
      %1693 = vmatprep.subr.bf16.mxu0 0
      %1694 = vmatpush2.bf16.msra.mxu0 0
      %1695 = vmatprep.subr.bf16.mxu0 0
      %1696 = vmatpush2.bf16.msra.mxu0 0
      %1697 = vmatprep.mubr.bf16.mxu0 0
      %1698 = vmatmul.mubr.bf16.gmra.mxu0 %v1663
      %v1699 = vpop.f32.mrf.mxu0
      %v1700 = vadd.f32 0.0, %v1699
      %v1701 = vpop.f32.mrf.mxu0
      %v1702 = vpop.f32.mrf.mxu0
      %v1703 = vadd.f32 0.0, %v1702
      %v1704 = vpop.f32.mrf.mxu0
      %1705 = vdwg.mxu0
      %v1706 = vadd.f32 %v1578, %v1700
      %v1707 = vadd.f32 %v1579, %v1703
      %1710 = vrot.lane.b32.xlu0 %v1077, 8
      %v1711 = vpop.permute.xlu0 %1710
      %1712 = vrot.lane.b32.xlu0 %v1078, 8
      %v1713 = vpop.permute.xlu0 %1712
      %1718 = vrot.lane.b32.xlu0 %v1426, 16
      %v1719 = vpop.permute.xlu0 %1718
      %1720 = vrot.lane.b32.xlu0 %v1427, 16
      %v1721 = vpop.permute.xlu0 %1720
      %1726 = vrot.lane.b32.xlu0 %v1706, 24
      %v1727 = vpop.permute.xlu0 %1726
      %1728 = vrot.lane.b32.xlu0 %v1707, 24
      %v1729 = vpop.permute.xlu0 %1728
      %vm1732 = vcmask 64512
      %v1733 = vsel %vm1732, %v714, %v1711
      %v1734 = vsel %vm1732, %v715, %v1713
      %v1735 = vsel %vm351, %v1733, %v1719
      %v1736 = vsel %vm351, %v1734, %v1721
      %vm1737 = vcmask 195584
      %v1738 = vsel %vm1737, %v1735, %v1727
      %v1739 = vsel %vm1737, %v1736, %v1729
      %vm1740 = vcmask 261120
      %v1741 = vsel %vm1740, %v1738, 0.0
      %v1742 = vsel %vm1740, %v1739, 0.0
      %v1743 = vadd.f32 %v1741, %v1742
      %v1744 = vrot.slane %v1743, 4
      %v1745 = vadd.f32 %v1743, %v1744
      %v1746 = vrot.slane %v1745, 2
      %v1747 = vadd.f32 %v1745, %v1746
      %v1748 = vrot.slane %v1747, 1
      %v1749 = vadd.f32 %v1747, %v1748
      %vm1750 = vcmask 253952
      %1751 = vst.msk [vmem:[%s211] sm:$0x1] %vm1750, %v1749
      %v1752 = vmul.f32 %v1738, %v1738
      %v1753 = vmul.f32 %v1739, %v1739
      %v1754 = vsel %vm1740, %v1752, 0.0
      %v1755 = vsel %vm1740, %v1753, 0.0
      %v1756 = vadd.f32 %v1754, %v1755
      %v1757 = vrot.slane %v1756, 4
      %v1758 = vadd.f32 %v1756, %v1757
      %v1759 = vrot.slane %v1758, 2
      %v1760 = vadd.f32 %v1758, %v1759
      %v1761 = vrot.slane %v1760, 1
      %v1762 = vadd.f32 %v1760, %v1761
      %1763 = vst.msk [vmem:[%s214] sm:$0x1] %vm1750, %v1762
      %v1764 = vpack.c.bf16 %v1739, %v1738
      %v1766 = vunpack.c.l.b16 %v1764
      %v1767 = vunpack.c.h.b16 %v1764
      %v1768 = vpack.c.b16 %v1766, %v1766
      %v1769 = vpack.c.b16 %v1767, %v1767
      %vm1772 = vcmask 257024
      %1773 = vst.msk [vmem:[%s208] sm:$0xf] %vm1772, %v1768
      %1774 = vst.msk [vmem:[%s208 + $0x4] sm:$0xf] %vm1772, %v1769
      %p1775 = scmp.lt.s32.totalorder %s16, 1
      %s1776 = scalar_select %p1775, %s16, 1
      %s1777 = smul.addr %s1776, 2
      %s1778 = smul.addr %s1777, 4
      %s1779 = scalar_lea.vmem %s2, %s1778
      %p1780 = scmp.lt.s32.totalorder %s16, 1
      %s1781 = scalar_select %p1780, %s16, 1
      %s1782 = scalar_lea.vmem %s3, %s1781
      %p1783 = scmp.lt.s32.totalorder %s16, 1
      %s1784 = scalar_select %p1783, %s16, 1
      %s1785 = scalar_lea.vmem %s4, %s1784
      // Predicated region
      $region29: #{_lambda_.9} parent=27 // pred_check
        %p1786 = pneg %p81
      $region30: #{_lambda_.9} parent=27 // pred_check_branch
        %1788 = sbr.rel (%p1786) target = $region32
      $region31: #{_lambda_.9} parent=27 // pred_region
        _
      $region32: #{_lambda_.9} parent=27 // pred_fallthru
        _
      // Predicated region
      $region33: #{_lambda_.9} parent=27 // pred_check
        %p1789 = pneg %p107
      $region34: #{_lambda_.9} parent=27 // pred_check_branch
        %1791 = sbr.rel (%p1789) target = $region36
      $region35: #{_lambda_.9} parent=27 // pred_region
        _
      $region36: #{_lambda_.9} parent=27 // pred_fallthru
        _
      // Predicated region
      $region37: #{_lambda_.9} parent=27 // pred_check
        %p1792 = pneg %p133
      $region38: #{_lambda_.9} parent=27 // pred_check_branch
        %1794 = sbr.rel (%p1792) target = $region40
      $region39: #{_lambda_.9} parent=27 // pred_region
        _
      $region40: #{_lambda_.9} parent=27 // pred_fallthru
        _
    $region28: #{_lambda_.9} parent=5 // pred_fallthru
      _
    %p1795 = scmp.le.s32.totalorder 2, %s11
    // Predicated region
    $region41: #{_lambda_.9} parent=5 // pred_check
      %p1796 = pneg %p1795
    $region42: #{_lambda_.9} parent=5 // pred_check_branch
      %1798 = sbr.rel (%p1796) target = $region44
    $region43: #{_lambda_.9} parent=5 // pred_region
      %s1799 = ssub.s32 %s11, 2
      // Predicated region
      $region45: #{_lambda_.9} parent=43 // pred_check
        %p1800 = pneg %p87
      $region46: #{_lambda_.9} parent=43 // pred_check_branch
        %1802 = sbr.rel (%p1800) target = $region48
      $region47: #{_lambda_.9} parent=43 // pred_region
        %p1803 = scmp.lt.s32.totalorder %s17, 1
        %s1804 = scalar_select %p1803, %s17, 1
        %s1805 = smul.addr %s1804, 2
        %s1806 = smul.addr %s1805, 4
        %s1807 = scalar_lea.vmem %s2, %s1806
      $region48: #{_lambda_.9} parent=43 // pred_fallthru
        _
      // Predicated region
      $region49: #{_lambda_.9} parent=43 // pred_check
        %p1808 = pneg %p113
      $region50: #{_lambda_.9} parent=43 // pred_check_branch
        %1810 = sbr.rel (%p1808) target = $region52
      $region51: #{_lambda_.9} parent=43 // pred_region
        %p1811 = scmp.lt.s32.totalorder %s17, 1
        %s1812 = scalar_select %p1811, %s17, 1
        %s1813 = scalar_lea.vmem %s3, %s1812
      $region52: #{_lambda_.9} parent=43 // pred_fallthru
        _
      // Predicated region
      $region53: #{_lambda_.9} parent=43 // pred_check
        %p1814 = pneg %p139
      $region54: #{_lambda_.9} parent=43 // pred_check_branch
        %1816 = sbr.rel (%p1814) target = $region56
      $region55: #{_lambda_.9} parent=43 // pred_region
        %p1817 = scmp.lt.s32.totalorder %s17, 1
        %s1818 = scalar_select %p1817, %s17, 1
        %s1819 = scalar_lea.vmem %s4, %s1818
      $region56: #{_lambda_.9} parent=43 // pred_fallthru
        _
    $region44: #{_lambda_.9} parent=5 // pred_fallthru
      _
  $region6: #{_lambda_.9} parent=0 // loop_footer
    %s15 = sadd.s32 1, %s11
  $region7: #{_lambda_.9} parent=0 // loop_footer_branch
    %10 = sbr.rel target = $region3
  $region8: #{_lambda_.9} parent=0 // loop_exit
    _

// kernel: _lambda_.12
$region0: #{_lambda_.12}
  #allocation0 [shape = 'u32[]', space=smem, size = 0x4, offset = 0x4, fixed_abs, tag = 'smem constant byte address 0x4 - core index']
  #allocation1 [shape = 'u32[144,128]{1,0:T(1,128)}', space=vmem, size = 0x12000, scoped, tag = 'internal scratch']
  %s0 = inlined_call_operand.vmem [shape: bf16[2,64,8], index: 0, kind: input, shape index: {}]
  %s1 = inlined_call_operand.vmem [shape: f32[1,8], index: 1, kind: input, shape index: {}]
  %s2 = inlined_call_operand.vmem [shape: f32[1,8], index: 2, kind: input, shape index: {}]
  %s3 = inlined_call_operand.vmem [shape: bf16[2,64,8], index: 3, kind: output, shape index: {}]
  %s4 = sld [smem:[#allocation0]]
  $region45: #{_lambda_.12} parent=0
    _
  %s6 = ssub.s32 1, %s4
  %s7 = scalar_select 0, %s6, %s4
  loop: start=0, step=1, limit=4
  $region2: #{_lambda_.12} parent=0 // loop_pre_header
    _
  $region3: #{_lambda_.12} parent=0 // loop_header
    %s9 = sphi 0, %s13
    %p10 = scmp.ge.s32.totalorder %s9, 4
    %s19 = sphi 0, %s21
    %s22 = sphi 0, %s19
    %s23 = sphi 0, %s22
    %s39 = sphi 0, %s23
    %s43 = sphi 0, %s43
    %s45 = sphi 0, %s43
    %s46 = sphi 0, %s45
    %s60 = sphi 0, %s46
    %s64 = sphi 0, %s64
    %s66 = sphi 0, %s64
    %s67 = sphi 0, %s66
    %s81 = sphi 0, %s67
    %s87 = sphi 0, %s89
    %s90 = sphi 0, %s87
    %s91 = sphi 0, %s90
    %s107 = sphi 0, %s91
  $region4: #{_lambda_.12} parent=0 // loop_header_branch
    %12 = sbr.rel (%p10) target = $region8
  $region5: #{_lambda_.12} parent=0 // loop_body
    %s14 = ssub.s32 %s9, 1
    %s15 = ssub.s32 %s9, 2
    %s16 = sadd.s32 %s9, 1
    %s17 = ssub.s32 %s9, %s16
    %p18 = scmp.eq.s32.totalorder %s17, 0
    %s20 = sadd.s32 %s19, 1
    %s21 = scalar_select %p18, %s19, %s20
    %p24 = pneg %p18
    %p25 = scmp.eq.s32.totalorder %s9, 1
    %p26 = por %p24, %p25
    %p27 = scmp.ne.s32.totalorder %s19, %s22
    %p28 = scmp.eq.s32.totalorder %s9, 0
    %p29 = por %p27, %p28
    %p30 = scmp.ne.s32.totalorder %s19, %s22
    %p31 = scmp.eq.s32.totalorder %s14, 1
    %p32 = por %p30, %p31
    %p33 = scmp.ne.s32.totalorder %s22, %s23
    %p34 = scmp.eq.s32.totalorder %s14, 0
    %p35 = por %p33, %p34
    %p36 = scmp.ne.s32.totalorder %s22, %s23
    %p37 = scmp.eq.s32.totalorder %s15, 1
    %p38 = por %p36, %p37
    %p40 = scmp.ne.s32.totalorder %s23, %s39
    %p41 = scmp.eq.s32.totalorder %s15, 0
    %p42 = por %p40, %p41
    %s44 = sadd.s32 %s43, 1
    %p47 = scmp.eq.s32.totalorder %s9, 1
    %p48 = scmp.ne.s32.totalorder %s43, %s45
    %p49 = scmp.eq.s32.totalorder %s9, 0
    %p50 = por %p48, %p49
    %p51 = scmp.ne.s32.totalorder %s43, %s45
    %p52 = scmp.eq.s32.totalorder %s14, 1
    %p53 = por %p51, %p52
    %p54 = scmp.ne.s32.totalorder %s45, %s46
    %p55 = scmp.eq.s32.totalorder %s14, 0
    %p56 = por %p54, %p55
    %p57 = scmp.ne.s32.totalorder %s45, %s46
    %p58 = scmp.eq.s32.totalorder %s15, 1
    %p59 = por %p57, %p58
    %p61 = scmp.ne.s32.totalorder %s46, %s60
    %p62 = scmp.eq.s32.totalorder %s15, 0
    %p63 = por %p61, %p62
    %s65 = sadd.s32 %s64, 1
    %p68 = scmp.eq.s32.totalorder %s9, 1
    %p69 = scmp.ne.s32.totalorder %s64, %s66
    %p70 = scmp.eq.s32.totalorder %s9, 0
    %p71 = por %p69, %p70
    %p72 = scmp.ne.s32.totalorder %s64, %s66
    %p73 = scmp.eq.s32.totalorder %s14, 1
    %p74 = por %p72, %p73
    %p75 = scmp.ne.s32.totalorder %s66, %s67
    %p76 = scmp.eq.s32.totalorder %s14, 0
    %p77 = por %p75, %p76
    %p78 = scmp.ne.s32.totalorder %s66, %s67
    %p79 = scmp.eq.s32.totalorder %s15, 1
    %p80 = por %p78, %p79
    %p82 = scmp.ne.s32.totalorder %s67, %s81
    %p83 = scmp.eq.s32.totalorder %s15, 0
    %p84 = por %p82, %p83
    %s85 = ssub.s32 %s9, %s16
    %p86 = scmp.eq.s32.totalorder %s85, 0
    %s88 = sadd.s32 %s87, 1
    %s89 = scalar_select %p86, %s87, %s88
    %p92 = pneg %p86
    %p93 = scmp.eq.s32.totalorder %s9, 1
    %p94 = por %p92, %p93
    %p95 = scmp.ne.s32.totalorder %s87, %s90
    %p96 = scmp.eq.s32.totalorder %s9, 0
    %p97 = por %p95, %p96
    %p98 = scmp.ne.s32.totalorder %s87, %s90
    %p99 = scmp.eq.s32.totalorder %s14, 1
    %p100 = por %p98, %p99
    %p101 = scmp.ne.s32.totalorder %s90, %s91
    %p102 = scmp.eq.s32.totalorder %s14, 0
    %p103 = por %p101, %p102
    %p104 = scmp.ne.s32.totalorder %s90, %s91
    %p105 = scmp.eq.s32.totalorder %s15, 1
    %p106 = por %p104, %p105
    %p108 = scmp.ne.s32.totalorder %s91, %s107
    %p109 = scmp.eq.s32.totalorder %s15, 0
    %p110 = por %p108, %p109
    %p111 = scmp.le.s32.totalorder 1, %s9
    %p112 = scmp.lt.s32.totalorder %s9, 3
    %p113 = pnand %p111, %p112
    %p114 = pneg %p113
    // Predicated region
    $region9: #{_lambda_.12} parent=5 // pred_check
      _
    $region10: #{_lambda_.12} parent=5 // pred_check_branch
      %116 = sbr.rel (%p113) target = $region12
    $region11: #{_lambda_.12} parent=5 // pred_region
      %s117 = ssub.s32 %s9, 1
      // Predicated region
      $region13: #{_lambda_.12} parent=11 // pred_check
        %p118 = pneg %p56
      $region14: #{_lambda_.12} parent=11 // pred_check_branch
        %120 = sbr.rel (%p118) target = $region16
      $region15: #{_lambda_.12} parent=11 // pred_region
        _
      $region16: #{_lambda_.12} parent=11 // pred_fallthru
        _
      // Predicated region
      $region17: #{_lambda_.12} parent=11 // pred_check
        %p121 = pneg %p77
      $region18: #{_lambda_.12} parent=11 // pred_check_branch
        %123 = sbr.rel (%p121) target = $region20
      $region19: #{_lambda_.12} parent=11 // pred_region
        _
      $region20: #{_lambda_.12} parent=11 // pred_fallthru
        _
    $region12: #{_lambda_.12} parent=5 // pred_fallthru
      _
    %p124 = scmp.lt.s32.totalorder %s9, 2
    // Predicated region
    $region21: #{_lambda_.12} parent=5 // pred_check
      %p125 = pneg %p124
    $region22: #{_lambda_.12} parent=5 // pred_check_branch
      %127 = sbr.rel (%p125) target = $region24
    $region23: #{_lambda_.12} parent=5 // pred_region
      // Predicated region
      $region25: #{_lambda_.12} parent=23 // pred_check
        %p128 = pneg %p29
      $region26: #{_lambda_.12} parent=23 // pred_check_branch
        %130 = sbr.rel (%p128) target = $region28
      $region27: #{_lambda_.12} parent=23 // pred_region
        %p131 = scmp.lt.s32.totalorder %s9, 1
        %s132 = scalar_select %p131, %s9, 1
        %s133 = smul.addr %s132, 8
        %s134 = smul.addr %s133, 4
        %s135 = scalar_lea.vmem %s0, %s134
      $region28: #{_lambda_.12} parent=23 // pred_fallthru
        _
    $region24: #{_lambda_.12} parent=5 // pred_fallthru
      _
    %p136 = scmp.le.s32.totalorder 1, %s9
    %p137 = scmp.lt.s32.totalorder %s9, 3
    %p138 = pnand %p136, %p137
    %p139 = pneg %p138
    // Predicated region
    $region29: #{_lambda_.12} parent=5 // pred_check
      _
    $region30: #{_lambda_.12} parent=5 // pred_check_branch
      %141 = sbr.rel (%p138) target = $region32
    $region31: #{_lambda_.12} parent=5 // pred_region
      %s142 = ssub.s32 %s9, 1
      %p143 = scmp.lt.s32.totalorder %s14, 1
      %s144 = scalar_select %p143, %s14, 1
      %s145 = smul.addr %s144, 8
      %s146 = smul.addr %s145, 4
      %s147 = scalar_lea.vmem %s0, %s146
      %p148 = pneg %p35
      %p149 = pneg %p32
      %p150 = pneg %p56
      %p151 = pneg %p53
      %p152 = pneg %p77
      %p153 = pneg %p74
      %p154 = pneg %p103
      %p155 = pneg %p100
      %p156 = scmp.lt.s32.totalorder %s14, 1
      %s157 = scalar_select %p156, %s14, 1
      %s158 = smul.addr %s157, 8
      %s159 = smul.addr %s158, 4
      %s160 = scalar_lea.vmem %s3, %s159
      %p161 = scmp.lt.s32.totalorder %s14, 1
      %s162 = scalar_select %p161, %s14, 1
      %s163 = smul.addr %s162, 8
      %s164 = smul.addr %s163, 4
      %s165 = scalar_lea.vmem %s0, %s164
      %p166 = scmp.lt.s32.totalorder %s14, 1
      %s167 = scalar_select %p166, %s14, 1
      %s168 = smul.addr %s167, 8
      %s169 = smul.addr %s168, 4
      %s170 = scalar_lea.vmem %s3, %s169
      %v171 = vld [vmem:[%s165] sm:$0xf]
      %v172 = vld [vmem:[%s165 + $0x4] sm:$0xf]
      %v173 = vld [vmem:[%s165 + $0x8] sm:$0xf]
      %v174 = vld [vmem:[%s165 + $0xc] sm:$0xf]
      %v175 = vld [vmem:[%s165 + $0x10] sm:$0xf]
      %v176 = vld [vmem:[%s165 + $0x14] sm:$0xf]
      %v177 = vld [vmem:[%s165 + $0x18] sm:$0xf]
      %v178 = vld [vmem:[%s165 + $0x1c] sm:$0xf]
      %v179 = vunpack.c.l.bf16 %v171
      %v180 = vunpack.c.l.bf16 %v172
      %v181 = vunpack.c.l.bf16 %v173
      %v182 = vunpack.c.l.bf16 %v174
      %v183 = vunpack.c.l.bf16 %v175
      %v184 = vunpack.c.l.bf16 %v176
      %v185 = vunpack.c.l.bf16 %v177
      %v186 = vunpack.c.l.bf16 %v178
      %v187 = vld [vmem:[%s1] sm:$0x1]
      %v189 = vlaneseq
      %v190 = vshrl.u32 %v189, 7
      %v191 = vsub.s32 0, %v190
      %v192 = vrot.slane %v187, %v191
      %v194 = vmul.f32 %v179, %v192
      %v195 = vmul.f32 %v180, %v192
      %v196 = vmul.f32 %v181, %v192
      %v197 = vmul.f32 %v182, %v192
      %v198 = vmul.f32 %v183, %v192
      %v199 = vmul.f32 %v184, %v192
      %v200 = vmul.f32 %v185, %v192
      %v201 = vmul.f32 %v186, %v192
      %v202 = vld [vmem:[%s2] sm:$0x1]
      %v204 = vlaneseq
      %v205 = vshrl.u32 %v204, 7
      %v206 = vsub.s32 0, %v205
      %v207 = vrot.slane %v202, %v206
      %v209 = vadd.f32 %v194, %v207
      %v210 = vadd.f32 %v195, %v207
      %v211 = vadd.f32 %v196, %v207
      %v212 = vadd.f32 %v197, %v207
      %v213 = vadd.f32 %v198, %v207
      %v214 = vadd.f32 %v199, %v207
      %v215 = vadd.f32 %v200, %v207
      %v216 = vadd.f32 %v201, %v207
      %v217 = vmax.f32 %v209, 0.0
      %v218 = vmax.f32 %v210, 0.0
      %v219 = vmax.f32 %v211, 0.0
      %v220 = vmax.f32 %v212, 0.0
      %v221 = vmax.f32 %v213, 0.0
      %v222 = vmax.f32 %v214, 0.0
      %v223 = vmax.f32 %v215, 0.0
      %v224 = vmax.f32 %v216, 0.0
      %v225 = vpack.c.bf16 %v218, %v217
      %v226 = vpack.c.bf16 %v220, %v219
      %v227 = vpack.c.bf16 %v222, %v221
      %v228 = vpack.c.bf16 %v224, %v223
      %v233 = vunpack.c.l.b16 %v225
      %v234 = vunpack.c.h.b16 %v225
      %v235 = vunpack.c.l.b16 %v226
      %v236 = vunpack.c.h.b16 %v226
      %v237 = vunpack.c.l.b16 %v227
      %v238 = vunpack.c.h.b16 %v227
      %v239 = vunpack.c.l.b16 %v228
      %v240 = vunpack.c.h.b16 %v228
      %v241 = vpack.c.b16 %v233, %v233
      %v242 = vpack.c.b16 %v234, %v234
      %v243 = vpack.c.b16 %v235, %v235
      %v244 = vpack.c.b16 %v236, %v236
      %v245 = vpack.c.b16 %v237, %v237
      %v246 = vpack.c.b16 %v238, %v238
      %v247 = vpack.c.b16 %v239, %v239
      %v248 = vpack.c.b16 %v240, %v240
      %vm257 = vcmask 60416
      %258 = vst.msk [vmem:[%s170] sm:$0xf] %vm257, %v241
      %259 = vst.msk [vmem:[%s170 + $0x4] sm:$0xf] %vm257, %v242
      %260 = vst.msk [vmem:[%s170 + $0x8] sm:$0xf] %vm257, %v243
      %261 = vst.msk [vmem:[%s170 + $0xc] sm:$0xf] %vm257, %v244
      %262 = vst.msk [vmem:[%s170 + $0x10] sm:$0xf] %vm257, %v245
      %263 = vst.msk [vmem:[%s170 + $0x14] sm:$0xf] %vm257, %v246
      %264 = vst.msk [vmem:[%s170 + $0x18] sm:$0xf] %vm257, %v247
      %265 = vst.msk [vmem:[%s170 + $0x1c] sm:$0xf] %vm257, %v248
      %p266 = scmp.lt.s32.totalorder %s14, 1
      %s267 = scalar_select %p266, %s14, 1
      %s268 = smul.addr %s267, 8
      %s269 = smul.addr %s268, 4
      %s270 = scalar_lea.vmem %s3, %s269
      // Predicated region
      $region33: #{_lambda_.12} parent=31 // pred_check
        %p271 = pneg %p100
      $region34: #{_lambda_.12} parent=31 // pred_check_branch
        %273 = sbr.rel (%p271) target = $region36
      $region35: #{_lambda_.12} parent=31 // pred_region
        _
      $region36: #{_lambda_.12} parent=31 // pred_fallthru
        _
    $region32: #{_lambda_.12} parent=5 // pred_fallthru
      _
    %p274 = scmp.le.s32.totalorder 2, %s9
    // Predicated region
    $region37: #{_lambda_.12} parent=5 // pred_check
      %p275 = pneg %p274
    $region38: #{_lambda_.12} parent=5 // pred_check_branch
      %277 = sbr.rel (%p275) target = $region40
    $region39: #{_lambda_.12} parent=5 // pred_region
      %s278 = ssub.s32 %s9, 2
      // Predicated region
      $region41: #{_lambda_.12} parent=39 // pred_check
        %p279 = pneg %p106
      $region42: #{_lambda_.12} parent=39 // pred_check_branch
        %281 = sbr.rel (%p279) target = $region44
      $region43: #{_lambda_.12} parent=39 // pred_region
        %p282 = scmp.lt.s32.totalorder %s15, 1
        %s283 = scalar_select %p282, %s15, 1
        %s284 = smul.addr %s283, 8
        %s285 = smul.addr %s284, 4
        %s286 = scalar_lea.vmem %s3, %s285
      $region44: #{_lambda_.12} parent=39 // pred_fallthru
        _
    $region40: #{_lambda_.12} parent=5 // pred_fallthru
      _
  $region6: #{_lambda_.12} parent=0 // loop_footer
    %s13 = sadd.s32 1, %s9
  $region7: #{_lambda_.12} parent=0 // loop_footer_branch
    %8 = sbr.rel target = $region3
  $region8: #{_lambda_.12} parent=0 // loop_exit
    _

// kernel: _lambda_.11
$region0: #{_lambda_.11}
  #allocation0 [shape = 'u32[]', space=smem, size = 0x4, offset = 0x4, fixed_abs, tag = 'smem constant byte address 0x4 - core index']
  #allocation1 [shape = 'u32[144,128]{1,0:T(1,128)}', space=vmem, size = 0x12000, scoped, tag = 'internal scratch']
  %s0 = inlined_call_operand.vmem [shape: bf16[2,10,10,8], index: 0, kind: input, shape index: {}]
  %s1 = inlined_call_operand.vmem [shape: bf16[1,9,8,8], index: 1, kind: input, shape index: {}]
  %s2 = inlined_call_operand.vmem [shape: bf16[2,64,8], index: 2, kind: output, shape index: {0}]
  %s3 = inlined_call_operand.vmem [shape: f32[2,1,8], index: 3, kind: output, shape index: {1}]
  %s4 = inlined_call_operand.vmem [shape: f32[2,1,8], index: 4, kind: output, shape index: {2}]
  %5 = xla_tuple %s2, %s3, %s4
  %s6 = sld [smem:[#allocation0]]
  $region57: #{_lambda_.11} parent=0
    _
  %s8 = ssub.s32 1, %s6
  %s9 = scalar_select 0, %s8, %s6
  loop: start=0, step=1, limit=4
  $region2: #{_lambda_.11} parent=0 // loop_pre_header
    _
  $region3: #{_lambda_.11} parent=0 // loop_header
    %s11 = sphi 0, %s15
    %p12 = scmp.ge.s32.totalorder %s11, 4
    %s21 = sphi 0, %s23
    %s24 = sphi 0, %s21
    %s25 = sphi 0, %s24
    %s41 = sphi 0, %s25
    %s45 = sphi 0, %s45
    %s47 = sphi 0, %s45
    %s48 = sphi 0, %s47
    %s62 = sphi 0, %s48
    %s68 = sphi 0, %s70
    %s71 = sphi 0, %s68
    %s72 = sphi 0, %s71
    %s88 = sphi 0, %s72
    %s94 = sphi 0, %s96
    %s97 = sphi 0, %s94
    %s98 = sphi 0, %s97
    %s114 = sphi 0, %s98
    %s120 = sphi 0, %s122
    %s123 = sphi 0, %s120
    %s124 = sphi 0, %s123
    %s140 = sphi 0, %s124
  $region4: #{_lambda_.11} parent=0 // loop_header_branch
    %14 = sbr.rel (%p12) target = $region8
  $region5: #{_lambda_.11} parent=0 // loop_body
    %s16 = ssub.s32 %s11, 1
    %s17 = ssub.s32 %s11, 2
    %s18 = sadd.s32 %s11, 1
    %s19 = ssub.s32 %s11, %s18
    %p20 = scmp.eq.s32.totalorder %s19, 0
    %s22 = sadd.s32 %s21, 1
    %s23 = scalar_select %p20, %s21, %s22
    %p26 = pneg %p20
    %p27 = scmp.eq.s32.totalorder %s11, 1
    %p28 = por %p26, %p27
    %p29 = scmp.ne.s32.totalorder %s21, %s24
    %p30 = scmp.eq.s32.totalorder %s11, 0
    %p31 = por %p29, %p30
    %p32 = scmp.ne.s32.totalorder %s21, %s24
    %p33 = scmp.eq.s32.totalorder %s16, 1
    %p34 = por %p32, %p33
    %p35 = scmp.ne.s32.totalorder %s24, %s25
    %p36 = scmp.eq.s32.totalorder %s16, 0
    %p37 = por %p35, %p36
    %p38 = scmp.ne.s32.totalorder %s24, %s25
    %p39 = scmp.eq.s32.totalorder %s17, 1
    %p40 = por %p38, %p39
    %p42 = scmp.ne.s32.totalorder %s25, %s41
    %p43 = scmp.eq.s32.totalorder %s17, 0
    %p44 = por %p42, %p43
    %s46 = sadd.s32 %s45, 1
    %p49 = scmp.eq.s32.totalorder %s11, 1
    %p50 = scmp.ne.s32.totalorder %s45, %s47
    %p51 = scmp.eq.s32.totalorder %s11, 0
    %p52 = por %p50, %p51
    %p53 = scmp.ne.s32.totalorder %s45, %s47
    %p54 = scmp.eq.s32.totalorder %s16, 1
    %p55 = por %p53, %p54
    %p56 = scmp.ne.s32.totalorder %s47, %s48
    %p57 = scmp.eq.s32.totalorder %s16, 0
    %p58 = por %p56, %p57
    %p59 = scmp.ne.s32.totalorder %s47, %s48
    %p60 = scmp.eq.s32.totalorder %s17, 1
    %p61 = por %p59, %p60
    %p63 = scmp.ne.s32.totalorder %s48, %s62
    %p64 = scmp.eq.s32.totalorder %s17, 0
    %p65 = por %p63, %p64
    %s66 = ssub.s32 %s11, %s18
    %p67 = scmp.eq.s32.totalorder %s66, 0
    %s69 = sadd.s32 %s68, 1
    %s70 = scalar_select %p67, %s68, %s69
    %p73 = pneg %p67
    %p74 = scmp.eq.s32.totalorder %s11, 1
    %p75 = por %p73, %p74
    %p76 = scmp.ne.s32.totalorder %s68, %s71
    %p77 = scmp.eq.s32.totalorder %s11, 0
    %p78 = por %p76, %p77
    %p79 = scmp.ne.s32.totalorder %s68, %s71
    %p80 = scmp.eq.s32.totalorder %s16, 1
    %p81 = por %p79, %p80
    %p82 = scmp.ne.s32.totalorder %s71, %s72
    %p83 = scmp.eq.s32.totalorder %s16, 0
    %p84 = por %p82, %p83
    %p85 = scmp.ne.s32.totalorder %s71, %s72
    %p86 = scmp.eq.s32.totalorder %s17, 1
    %p87 = por %p85, %p86
    %p89 = scmp.ne.s32.totalorder %s72, %s88
    %p90 = scmp.eq.s32.totalorder %s17, 0
    %p91 = por %p89, %p90
    %s92 = ssub.s32 %s11, %s18
    %p93 = scmp.eq.s32.totalorder %s92, 0
    %s95 = sadd.s32 %s94, 1
    %s96 = scalar_select %p93, %s94, %s95
    %p99 = pneg %p93
    %p100 = scmp.eq.s32.totalorder %s11, 1
    %p101 = por %p99, %p100
    %p102 = scmp.ne.s32.totalorder %s94, %s97
    %p103 = scmp.eq.s32.totalorder %s11, 0
    %p104 = por %p102, %p103
    %p105 = scmp.ne.s32.totalorder %s94, %s97
    %p106 = scmp.eq.s32.totalorder %s16, 1
    %p107 = por %p105, %p106
    %p108 = scmp.ne.s32.totalorder %s97, %s98
    %p109 = scmp.eq.s32.totalorder %s16, 0
    %p110 = por %p108, %p109
    %p111 = scmp.ne.s32.totalorder %s97, %s98
    %p112 = scmp.eq.s32.totalorder %s17, 1
    %p113 = por %p111, %p112
    %p115 = scmp.ne.s32.totalorder %s98, %s114
    %p116 = scmp.eq.s32.totalorder %s17, 0
    %p117 = por %p115, %p116
    %s118 = ssub.s32 %s11, %s18
    %p119 = scmp.eq.s32.totalorder %s118, 0
    %s121 = sadd.s32 %s120, 1
    %s122 = scalar_select %p119, %s120, %s121
    %p125 = pneg %p119
    %p126 = scmp.eq.s32.totalorder %s11, 1
    %p127 = por %p125, %p126
    %p128 = scmp.ne.s32.totalorder %s120, %s123
    %p129 = scmp.eq.s32.totalorder %s11, 0
    %p130 = por %p128, %p129
    %p131 = scmp.ne.s32.totalorder %s120, %s123
    %p132 = scmp.eq.s32.totalorder %s16, 1
    %p133 = por %p131, %p132
    %p134 = scmp.ne.s32.totalorder %s123, %s124
    %p135 = scmp.eq.s32.totalorder %s16, 0
    %p136 = por %p134, %p135
    %p137 = scmp.ne.s32.totalorder %s123, %s124
    %p138 = scmp.eq.s32.totalorder %s17, 1
    %p139 = por %p137, %p138
    %p141 = scmp.ne.s32.totalorder %s124, %s140
    %p142 = scmp.eq.s32.totalorder %s17, 0
    %p143 = por %p141, %p142
    %p144 = scmp.le.s32.totalorder 1, %s11
    %p145 = scmp.lt.s32.totalorder %s11, 3
    %p146 = pnand %p144, %p145
    %p147 = pneg %p146
    // Predicated region
    $region9: #{_lambda_.11} parent=5 // pred_check
      _
    $region10: #{_lambda_.11} parent=5 // pred_check_branch
      %149 = sbr.rel (%p146) target = $region12
    $region11: #{_lambda_.11} parent=5 // pred_region
      %s150 = ssub.s32 %s11, 1
      // Predicated region
      $region13: #{_lambda_.11} parent=11 // pred_check
        %p151 = pneg %p58
      $region14: #{_lambda_.11} parent=11 // pred_check_branch
        %153 = sbr.rel (%p151) target = $region16
      $region15: #{_lambda_.11} parent=11 // pred_region
        _
      $region16: #{_lambda_.11} parent=11 // pred_fallthru
        _
    $region12: #{_lambda_.11} parent=5 // pred_fallthru
      _
    %p154 = scmp.lt.s32.totalorder %s11, 2
    // Predicated region
    $region17: #{_lambda_.11} parent=5 // pred_check
      %p155 = pneg %p154
    $region18: #{_lambda_.11} parent=5 // pred_check_branch
      %157 = sbr.rel (%p155) target = $region20
    $region19: #{_lambda_.11} parent=5 // pred_region
      // Predicated region
      $region21: #{_lambda_.11} parent=19 // pred_check
        %p158 = pneg %p31
      $region22: #{_lambda_.11} parent=19 // pred_check_branch
        %160 = sbr.rel (%p158) target = $region24
      $region23: #{_lambda_.11} parent=19 // pred_region
        %p161 = scmp.lt.s32.totalorder %s11, 1
        %s162 = scalar_select %p161, %s11, 1
        %s163 = smul.addr %s162, 20
        %s164 = smul.addr %s163, 4
        %s165 = scalar_lea.vmem %s0, %s164
      $region24: #{_lambda_.11} parent=19 // pred_fallthru
        _
    $region20: #{_lambda_.11} parent=5 // pred_fallthru
      _
    %p166 = scmp.le.s32.totalorder 1, %s11
    %p167 = scmp.lt.s32.totalorder %s11, 3
    %p168 = pnand %p166, %p167
    %p169 = pneg %p168
    // Predicated region
    $region25: #{_lambda_.11} parent=5 // pred_check
      _
    $region26: #{_lambda_.11} parent=5 // pred_check_branch
      %171 = sbr.rel (%p168) target = $region28
    $region27: #{_lambda_.11} parent=5 // pred_region
      %s172 = ssub.s32 %s11, 1
      %p173 = scmp.lt.s32.totalorder %s16, 1
      %s174 = scalar_select %p173, %s16, 1
      %s175 = smul.addr %s174, 20
      %s176 = smul.addr %s175, 4
      %s177 = scalar_lea.vmem %s0, %s176
      %p178 = pneg %p37
      %p179 = pneg %p34
      %p180 = pneg %p58
      %p181 = pneg %p55
      %p182 = pneg %p84
      %p183 = pneg %p81
      %p184 = scmp.lt.s32.totalorder %s16, 1
      %s185 = scalar_select %p184, %s16, 1
      %s186 = smul.addr %s185, 8
      %s187 = smul.addr %s186, 4
      %s188 = scalar_lea.vmem %s2, %s187
      %p189 = pneg %p110
      %p190 = pneg %p107
      %p191 = scmp.lt.s32.totalorder %s16, 1
      %s192 = scalar_select %p191, %s16, 1
      %s193 = scalar_lea.vmem %s3, %s192
      %p194 = pneg %p136
      %p195 = pneg %p133
      %p196 = scmp.lt.s32.totalorder %s16, 1
      %s197 = scalar_select %p196, %s16, 1
      %s198 = scalar_lea.vmem %s4, %s197
      %p199 = scmp.lt.s32.totalorder %s16, 1
      %s200 = scalar_select %p199, %s16, 1
      %s201 = smul.addr %s200, 20
      %s202 = smul.addr %s201, 4
      %s203 = scalar_lea.vmem %s0, %s202
      %p204 = scmp.lt.s32.totalorder %s16, 1
      %s205 = scalar_select %p204, %s16, 1
      %s206 = smul.addr %s205, 8
      %s207 = smul.addr %s206, 4
      %s208 = scalar_lea.vmem %s2, %s207
      %p209 = scmp.lt.s32.totalorder %s16, 1
      %s210 = scalar_select %p209, %s16, 1
      %s211 = scalar_lea.vmem %s3, %s210
      %p212 = scmp.lt.s32.totalorder %s16, 1
      %s213 = scalar_select %p212, %s16, 1
      %s214 = scalar_lea.vmem %s4, %s213
      %v216 = vld [vmem:[%s203] sm:$0xf]
      %v217 = vld [vmem:[%s203 + $0x8] sm:$0xf]
      %v218 = vld [vmem:[%s203 + $0x10] sm:$0xf]
      %v219 = vld [vmem:[%s203 + $0x18] sm:$0xf]
      %v220 = vld [vmem:[%s203 + $0x20] sm:$0xf]
      %v221 = vld [vmem:[%s203 + $0x28] sm:$0xf]
      %v222 = vld [vmem:[%s203 + $0x30] sm:$0xf]
      %v223 = vld [vmem:[%s203 + $0x38] sm:$0xf]
      %v224 = vld [vmem:[%s1] sm:$0xf]
      %v225 = vld [vmem:[%s203 + $0x4] sm:$0x1]
      %v226 = vld [vmem:[%s203 + $0xc] sm:$0x1]
      %v227 = vld [vmem:[%s203 + $0x14] sm:$0x1]
      %v228 = vld [vmem:[%s203 + $0x1c] sm:$0x1]
      %v229 = vld [vmem:[%s203 + $0x24] sm:$0x1]
      %v230 = vld [vmem:[%s203 + $0x2c] sm:$0x1]
      %v231 = vld [vmem:[%s203 + $0x34] sm:$0x1]
      %v232 = vld [vmem:[%s203 + $0x3c] sm:$0x1]
      %vm233 = vsmask.f32 3328
      %vm234 = vsmask.f32 7440
      %vm235 = vmor %vm233, %vm234
      %v237 = vshrl.u32 %v216, 16
      %v239 = vrot.slane %v237, 4
      %v240 = vshll.u32 %v216, 16
      %v242 = vrot.slane %v240, 5
      %v243 = vor.u32 %v239, %v242
      %v244 = vrot.slane %v243, 4
      %v246 = vshll.u32 %v225, 16
      %v248 = vrot.slane %v246, 5
      %v249 = vsel %vm235, %v244, %v248
      %v251 = vshrl.u32 %v217, 16
      %v253 = vrot.slane %v251, 4
      %v254 = vshll.u32 %v217, 16
      %v256 = vrot.slane %v254, 5
      %v257 = vor.u32 %v253, %v256
      %v258 = vrot.slane %v257, 4
      %v260 = vshll.u32 %v226, 16
      %v262 = vrot.slane %v260, 5
      %v263 = vsel %vm235, %v258, %v262
      %v265 = vshrl.u32 %v218, 16
      %v267 = vrot.slane %v265, 4
      %v268 = vshll.u32 %v218, 16
      %v270 = vrot.slane %v268, 5
      %v271 = vor.u32 %v267, %v270
      %v272 = vrot.slane %v271, 4
      %v274 = vshll.u32 %v227, 16
      %v276 = vrot.slane %v274, 5
      %v277 = vsel %vm235, %v272, %v276
      %v279 = vshrl.u32 %v219, 16
      %v281 = vrot.slane %v279, 4
      %v282 = vshll.u32 %v219, 16
      %v284 = vrot.slane %v282, 5
      %v285 = vor.u32 %v281, %v284
      %v286 = vrot.slane %v285, 4
      %v288 = vshll.u32 %v228, 16
      %v290 = vrot.slane %v288, 5
      %v291 = vsel %vm235, %v286, %v290
      %v293 = vshrl.u32 %v220, 16
      %v295 = vrot.slane %v293, 4
      %v296 = vshll.u32 %v220, 16
      %v298 = vrot.slane %v296, 5
      %v299 = vor.u32 %v295, %v298
      %v300 = vrot.slane %v299, 4
      %v302 = vshll.u32 %v229, 16
      %v304 = vrot.slane %v302, 5
      %v305 = vsel %vm235, %v300, %v304
      %v307 = vshrl.u32 %v221, 16
      %v309 = vrot.slane %v307, 4
      %v310 = vshll.u32 %v221, 16
      %v312 = vrot.slane %v310, 5
      %v313 = vor.u32 %v309, %v312
      %v314 = vrot.slane %v313, 4
      %v316 = vshll.u32 %v230, 16
      %v318 = vrot.slane %v316, 5
      %v319 = vsel %vm235, %v314, %v318
      %v321 = vshrl.u32 %v222, 16
      %v323 = vrot.slane %v321, 4
      %v324 = vshll.u32 %v222, 16
      %v326 = vrot.slane %v324, 5
      %v327 = vor.u32 %v323, %v326
      %v328 = vrot.slane %v327, 4
      %v330 = vshll.u32 %v231, 16
      %v332 = vrot.slane %v330, 5
      %v333 = vsel %vm235, %v328, %v332
      %v335 = vshrl.u32 %v223, 16
      %v337 = vrot.slane %v335, 4
      %v338 = vshll.u32 %v223, 16
      %v340 = vrot.slane %v338, 5
      %v341 = vor.u32 %v337, %v340
      %v342 = vrot.slane %v341, 4
      %v344 = vshll.u32 %v232, 16
      %v346 = vrot.slane %v344, 5
      %v347 = vsel %vm235, %v342, %v346
      %s348 = scalar_lea.vmem %s1, 4
      %v349 = vld [vmem:[%s348] sm:$0xf]
      %v350 = vunpack.c.l.b16 %v249
      %v351 = vunpack.c.l.b16 %v263
      %v352 = vunpack.c.l.b16 %v277
      %v353 = vunpack.c.l.b16 %v291
      %v354 = vunpack.c.l.b16 %v305
      %v355 = vunpack.c.l.b16 %v319
      %v356 = vunpack.c.l.b16 %v333
      %v357 = vunpack.c.l.b16 %v347
      %v358 = vpack.c.b16 %v351, %v350
      %v359 = vpack.c.b16 %v353, %v352
      %v360 = vpack.c.b16 %v355, %v354
      %v361 = vpack.c.b16 %v357, %v356
      %vm362 = vcmask 64512
      %v364 = vsel %vm362, %v358, 0
      %v367 = vsel %vm362, %v359, 0
      %v370 = vsel %vm362, %v360, 0
      %v373 = vsel %vm362, %v361, 0
      %vm375 = vcmask 1043456
      %v377 = vsel %vm375, %v349, 0
      %379 = vmatprep.subr.bf16.mxu0 0
      %380 = vmatpush1.bf16.msra.mxu0 0
      %381 = vmatprep.subr.bf16.mxu0 0
      %382 = vmatpush1.bf16.msra.mxu0 0
      %383 = vmatprep.subr.bf16.mxu0 0
      %384 = vmatpush1.bf16.msra.mxu0 0
      %385 = vmatprep.subr.bf16.mxu0 0
      %386 = vmatpush1.bf16.msra.mxu0 0
      %387 = vmatprep.subr.bf16.mxu0 0
      %388 = vmatpush1.bf16.msra.mxu0 0
      %389 = vmatprep.subr.bf16.mxu0 0
      %390 = vmatpush1.bf16.msra.mxu0 0
      %391 = vmatprep.subr.bf16.mxu0 0
      %392 = vmatpush1.bf16.msra.mxu0 0
      %393 = vmatprep.subr.bf16.mxu0 0
      %394 = vmatpush1.bf16.msra.mxu0 %v377
      %395 = vmatprep.subr.bf16.mxu0 0
      %396 = vmatpush2.bf16.msra.mxu0 0
      %397 = vmatprep.subr.bf16.mxu0 0
      %398 = vmatpush2.bf16.msra.mxu0 0
      %399 = vmatprep.subr.bf16.mxu0 0
      %400 = vmatpush2.bf16.msra.mxu0 0
      %401 = vmatprep.subr.bf16.mxu0 0
      %402 = vmatpush2.bf16.msra.mxu0 0
      %403 = vmatprep.subr.bf16.mxu0 0
      %404 = vmatpush2.bf16.msra.mxu0 0
      %405 = vmatprep.subr.bf16.mxu0 0
      %406 = vmatpush2.bf16.msra.mxu0 0
      %407 = vmatprep.subr.bf16.mxu0 0
      %408 = vmatpush2.bf16.msra.mxu0 0
      %409 = vmatprep.subr.bf16.mxu0 0
      %410 = vmatpush2.bf16.msra.mxu0 0
      %411 = vmatprep.mubr.bf16.mxu0 0
      %412 = vmatmul.mubr.bf16.gmra.mxu0 %v364
      %v413 = vpop.f32.mrf.mxu0
      %v414 = vadd.f32 0.0, %v413
      %v415 = vpop.f32.mrf.mxu0
      %v416 = vpop.f32.mrf.mxu0
      %v417 = vadd.f32 0.0, %v416
      %v418 = vpop.f32.mrf.mxu0
      %419 = vmatprep.mubr.bf16.mxu0 0
      %420 = vmatmul.mubr.bf16.gmra.mxu0 %v367
      %v421 = vpop.f32.mrf.mxu0
      %v422 = vadd.f32 0.0, %v421
      %v423 = vpop.f32.mrf.mxu0
      %v424 = vpop.f32.mrf.mxu0
      %v425 = vadd.f32 0.0, %v424
      %v426 = vpop.f32.mrf.mxu0
      %427 = vmatprep.mubr.bf16.mxu0 0
      %428 = vmatmul.mubr.bf16.gmra.mxu0 %v370
      %v429 = vpop.f32.mrf.mxu0
      %v430 = vadd.f32 0.0, %v429
      %v431 = vpop.f32.mrf.mxu0
      %v432 = vpop.f32.mrf.mxu0
      %v433 = vadd.f32 0.0, %v432
      %v434 = vpop.f32.mrf.mxu0
      %435 = vmatprep.mubr.bf16.mxu0 0
      %436 = vmatmul.mubr.bf16.gmra.mxu0 %v373
      %v437 = vpop.f32.mrf.mxu0
      %v438 = vadd.f32 0.0, %v437
      %v439 = vpop.f32.mrf.mxu0
      %v440 = vpop.f32.mrf.mxu0
      %v441 = vadd.f32 0.0, %v440
      %v442 = vpop.f32.mrf.mxu0
      %443 = vdwg.mxu0
      %v452 = vunpack.c.l.b16 %v216
      %v453 = vunpack.c.l.b16 %v217
      %v454 = vunpack.c.l.b16 %v218
      %v455 = vunpack.c.l.b16 %v219
      %v456 = vunpack.c.l.b16 %v220
      %v457 = vunpack.c.l.b16 %v221
      %v458 = vunpack.c.l.b16 %v222
      %v459 = vunpack.c.l.b16 %v223
      %v460 = vpack.c.b16 %v453, %v452
      %v461 = vpack.c.b16 %v455, %v454
      %v462 = vpack.c.b16 %v457, %v456
      %v463 = vpack.c.b16 %v459, %v458
      %v465 = vsel %vm362, %v460, 0
      %v468 = vsel %vm362, %v461, 0
      %v471 = vsel %vm362, %v462, 0
      %v474 = vsel %vm362, %v463, 0
      %v477 = vsel %vm375, %v224, 0
      %479 = vmatprep.subr.bf16.mxu0 0
      %480 = vmatpush1.bf16.msra.mxu0 0
      %481 = vmatprep.subr.bf16.mxu0 0
      %482 = vmatpush1.bf16.msra.mxu0 0
      %483 = vmatprep.subr.bf16.mxu0 0
      %484 = vmatpush1.bf16.msra.mxu0 0
      %485 = vmatprep.subr.bf16.mxu0 0
      %486 = vmatpush1.bf16.msra.mxu0 0
      %487 = vmatprep.subr.bf16.mxu0 0
      %488 = vmatpush1.bf16.msra.mxu0 0
      %489 = vmatprep.subr.bf16.mxu0 0
      %490 = vmatpush1.bf16.msra.mxu0 0
      %491 = vmatprep.subr.bf16.mxu0 0
      %492 = vmatpush1.bf16.msra.mxu0 0
      %493 = vmatprep.subr.bf16.mxu0 0
      %494 = vmatpush1.bf16.msra.mxu0 %v477
      %495 = vmatprep.subr.bf16.mxu0 0
      %496 = vmatpush2.bf16.msra.mxu0 0
      %497 = vmatprep.subr.bf16.mxu0 0
      %498 = vmatpush2.bf16.msra.mxu0 0
      %499 = vmatprep.subr.bf16.mxu0 0
      %500 = vmatpush2.bf16.msra.mxu0 0
      %501 = vmatprep.subr.bf16.mxu0 0
      %502 = vmatpush2.bf16.msra.mxu0 0
      %503 = vmatprep.subr.bf16.mxu0 0
      %504 = vmatpush2.bf16.msra.mxu0 0
      %505 = vmatprep.subr.bf16.mxu0 0
      %506 = vmatpush2.bf16.msra.mxu0 0
      %507 = vmatprep.subr.bf16.mxu0 0
      %508 = vmatpush2.bf16.msra.mxu0 0
      %509 = vmatprep.subr.bf16.mxu0 0
      %510 = vmatpush2.bf16.msra.mxu0 0
      %511 = vmatprep.mubr.bf16.mxu0 0
      %512 = vmatmul.mubr.bf16.gmra.mxu0 %v465
      %v513 = vpop.f32.mrf.mxu0
      %v514 = vadd.f32 %v414, %v513
      %v515 = vpop.f32.mrf.mxu0
      %v516 = vpop.f32.mrf.mxu0
      %v517 = vadd.f32 %v417, %v516
      %v518 = vpop.f32.mrf.mxu0
      %519 = vmatprep.mubr.bf16.mxu0 0
      %520 = vmatmul.mubr.bf16.gmra.mxu0 %v468
      %v521 = vpop.f32.mrf.mxu0
      %v522 = vadd.f32 %v422, %v521
      %v523 = vpop.f32.mrf.mxu0
      %v524 = vpop.f32.mrf.mxu0
      %v525 = vadd.f32 %v425, %v524
      %v526 = vpop.f32.mrf.mxu0
      %527 = vmatprep.mubr.bf16.mxu0 0
      %528 = vmatmul.mubr.bf16.gmra.mxu0 %v471
      %v529 = vpop.f32.mrf.mxu0
      %v530 = vadd.f32 %v430, %v529
      %v531 = vpop.f32.mrf.mxu0
      %v532 = vpop.f32.mrf.mxu0
      %v533 = vadd.f32 %v433, %v532
      %v534 = vpop.f32.mrf.mxu0
      %535 = vmatprep.mubr.bf16.mxu0 0
      %536 = vmatmul.mubr.bf16.gmra.mxu0 %v474
      %v537 = vpop.f32.mrf.mxu0
      %v538 = vadd.f32 %v438, %v537
      %v539 = vpop.f32.mrf.mxu0
      %v540 = vpop.f32.mrf.mxu0
      %v541 = vadd.f32 %v441, %v540
      %v542 = vpop.f32.mrf.mxu0
      %543 = vdwg.mxu0
      %v544 = vld [vmem:[%s203] sm:$0xe]
      %v545 = vld [vmem:[%s203 + $0x8] sm:$0xe]
      %v546 = vld [vmem:[%s203 + $0x10] sm:$0xe]
      %v547 = vld [vmem:[%s203 + $0x18] sm:$0xe]
      %v548 = vld [vmem:[%s203 + $0x20] sm:$0xe]
      %v549 = vld [vmem:[%s203 + $0x28] sm:$0xe]
      %v550 = vld [vmem:[%s203 + $0x30] sm:$0xe]
      %v551 = vld [vmem:[%s203 + $0x38] sm:$0xe]
      %vm568 = vcmask 1042432
      %vm569 = vcmask 1046532
      %vm570 = vmor %vm568, %vm569
      %v571 = vrot.slane %v544, 5
      %v572 = vrot.slane %v571, 4
      %v573 = vrot.slane %v225, 5
      %v574 = vsel %vm570, %v572, %v573
      %v575 = vrot.slane %v545, 5
      %v576 = vrot.slane %v575, 4
      %v577 = vrot.slane %v226, 5
      %v578 = vsel %vm570, %v576, %v577
      %v579 = vrot.slane %v546, 5
      %v580 = vrot.slane %v579, 4
      %v581 = vrot.slane %v227, 5
      %v582 = vsel %vm570, %v580, %v581
      %v583 = vrot.slane %v547, 5
      %v584 = vrot.slane %v583, 4
      %v585 = vrot.slane %v228, 5
      %v586 = vsel %vm570, %v584, %v585
      %v587 = vrot.slane %v548, 5
      %v588 = vrot.slane %v587, 4
      %v589 = vrot.slane %v229, 5
      %v590 = vsel %vm570, %v588, %v589
      %v591 = vrot.slane %v549, 5
      %v592 = vrot.slane %v591, 4
      %v593 = vrot.slane %v230, 5
      %v594 = vsel %vm570, %v592, %v593
      %v595 = vrot.slane %v550, 5
      %v596 = vrot.slane %v595, 4
      %v597 = vrot.slane %v231, 5
      %v598 = vsel %vm570, %v596, %v597
      %v599 = vrot.slane %v551, 5
      %v600 = vrot.slane %v599, 4
      %v601 = vrot.slane %v232, 5
      %v602 = vsel %vm570, %v600, %v601
      %s603 = scalar_lea.vmem %s1, 8
      %v604 = vld [vmem:[%s603] sm:$0xf]
      %v605 = vunpack.c.l.b16 %v574
      %v606 = vunpack.c.l.b16 %v578
      %v607 = vunpack.c.l.b16 %v582
      %v608 = vunpack.c.l.b16 %v586
      %v609 = vunpack.c.l.b16 %v590
      %v610 = vunpack.c.l.b16 %v594
      %v611 = vunpack.c.l.b16 %v598
      %v612 = vunpack.c.l.b16 %v602
      %v613 = vpack.c.b16 %v606, %v605
      %v614 = vpack.c.b16 %v608, %v607
      %v615 = vpack.c.b16 %v610, %v609
      %v616 = vpack.c.b16 %v612, %v611
      %v618 = vsel %vm362, %v613, 0
      %v621 = vsel %vm362, %v614, 0
      %v624 = vsel %vm362, %v615, 0
      %v627 = vsel %vm362, %v616, 0
      %v630 = vsel %vm375, %v604, 0
      %632 = vmatprep.subr.bf16.mxu0 0
      %633 = vmatpush1.bf16.msra.mxu0 0
      %634 = vmatprep.subr.bf16.mxu0 0
      %635 = vmatpush1.bf16.msra.mxu0 0
      %636 = vmatprep.subr.bf16.mxu0 0
      %637 = vmatpush1.bf16.msra.mxu0 0
      %638 = vmatprep.subr.bf16.mxu0 0
      %639 = vmatpush1.bf16.msra.mxu0 0
      %640 = vmatprep.subr.bf16.mxu0 0
      %641 = vmatpush1.bf16.msra.mxu0 0
      %642 = vmatprep.subr.bf16.mxu0 0
      %643 = vmatpush1.bf16.msra.mxu0 0
      %644 = vmatprep.subr.bf16.mxu0 0
      %645 = vmatpush1.bf16.msra.mxu0 0
      %646 = vmatprep.subr.bf16.mxu0 0
      %647 = vmatpush1.bf16.msra.mxu0 %v630
      %648 = vmatprep.subr.bf16.mxu0 0
      %649 = vmatpush2.bf16.msra.mxu0 0
      %650 = vmatprep.subr.bf16.mxu0 0
      %651 = vmatpush2.bf16.msra.mxu0 0
      %652 = vmatprep.subr.bf16.mxu0 0
      %653 = vmatpush2.bf16.msra.mxu0 0
      %654 = vmatprep.subr.bf16.mxu0 0
      %655 = vmatpush2.bf16.msra.mxu0 0
      %656 = vmatprep.subr.bf16.mxu0 0
      %657 = vmatpush2.bf16.msra.mxu0 0
      %658 = vmatprep.subr.bf16.mxu0 0
      %659 = vmatpush2.bf16.msra.mxu0 0
      %660 = vmatprep.subr.bf16.mxu0 0
      %661 = vmatpush2.bf16.msra.mxu0 0
      %662 = vmatprep.subr.bf16.mxu0 0
      %663 = vmatpush2.bf16.msra.mxu0 0
      %664 = vmatprep.mubr.bf16.mxu0 0
      %665 = vmatmul.mubr.bf16.gmra.mxu0 %v618
      %v666 = vpop.f32.mrf.mxu0
      %v667 = vadd.f32 0.0, %v666
      %v668 = vpop.f32.mrf.mxu0
      %v669 = vpop.f32.mrf.mxu0
      %v670 = vadd.f32 0.0, %v669
      %v671 = vpop.f32.mrf.mxu0
      %672 = vmatprep.mubr.bf16.mxu0 0
      %673 = vmatmul.mubr.bf16.gmra.mxu0 %v621
      %v674 = vpop.f32.mrf.mxu0
      %v675 = vadd.f32 0.0, %v674
      %v676 = vpop.f32.mrf.mxu0
      %v677 = vpop.f32.mrf.mxu0
      %v678 = vadd.f32 0.0, %v677
      %v679 = vpop.f32.mrf.mxu0
      %680 = vmatprep.mubr.bf16.mxu0 0
      %681 = vmatmul.mubr.bf16.gmra.mxu0 %v624
      %v682 = vpop.f32.mrf.mxu0
      %v683 = vadd.f32 0.0, %v682
      %v684 = vpop.f32.mrf.mxu0
      %v685 = vpop.f32.mrf.mxu0
      %v686 = vadd.f32 0.0, %v685
      %v687 = vpop.f32.mrf.mxu0
      %688 = vmatprep.mubr.bf16.mxu0 0
      %689 = vmatmul.mubr.bf16.gmra.mxu0 %v627
      %v690 = vpop.f32.mrf.mxu0
      %v691 = vadd.f32 0.0, %v690
      %v692 = vpop.f32.mrf.mxu0
      %v693 = vpop.f32.mrf.mxu0
      %v694 = vadd.f32 0.0, %v693
      %v695 = vpop.f32.mrf.mxu0
      %696 = vdwg.mxu0
      %v697 = vadd.f32 %v514, %v667
      %v698 = vadd.f32 %v517, %v670
      %v699 = vadd.f32 %v522, %v675
      %v700 = vadd.f32 %v525, %v678
      %v701 = vadd.f32 %v530, %v683
      %v702 = vadd.f32 %v533, %v686
      %v703 = vadd.f32 %v538, %v691
      %v704 = vadd.f32 %v541, %v694
      %s705 = scalar_lea.vmem %s203, 8
      %v706 = vld [vmem:[%s705] sm:$0xf]
      %v707 = vld [vmem:[%s705 + $0x8] sm:$0xf]
      %v708 = vld [vmem:[%s705 + $0x10] sm:$0xf]
      %v709 = vld [vmem:[%s705 + $0x18] sm:$0xf]
      %v710 = vld [vmem:[%s705 + $0x20] sm:$0xf]
      %v711 = vld [vmem:[%s705 + $0x28] sm:$0xf]
      %v712 = vld [vmem:[%s705 + $0x30] sm:$0xf]
      %v713 = vld [vmem:[%s705 + $0x38] sm:$0xf]
      %s714 = scalar_lea.vmem %s1, 12
      %v715 = vld [vmem:[%s714] sm:$0xf]
      %v724 = vunpack.c.l.b16 %v706
      %v725 = vunpack.c.l.b16 %v707
      %v726 = vunpack.c.l.b16 %v708
      %v727 = vunpack.c.l.b16 %v709
      %v728 = vunpack.c.l.b16 %v710
      %v729 = vunpack.c.l.b16 %v711
      %v730 = vunpack.c.l.b16 %v712
      %v731 = vunpack.c.l.b16 %v713
      %v732 = vpack.c.b16 %v725, %v724
      %v733 = vpack.c.b16 %v727, %v726
      %v734 = vpack.c.b16 %v729, %v728
      %v735 = vpack.c.b16 %v731, %v730
      %v737 = vsel %vm362, %v732, 0
      %v740 = vsel %vm362, %v733, 0
      %v743 = vsel %vm362, %v734, 0
      %v746 = vsel %vm362, %v735, 0
      %v749 = vsel %vm375, %v715, 0
      %751 = vmatprep.subr.bf16.mxu0 0
      %752 = vmatpush1.bf16.msra.mxu0 0
      %753 = vmatprep.subr.bf16.mxu0 0
      %754 = vmatpush1.bf16.msra.mxu0 0
      %755 = vmatprep.subr.bf16.mxu0 0
      %756 = vmatpush1.bf16.msra.mxu0 0
      %757 = vmatprep.subr.bf16.mxu0 0
      %758 = vmatpush1.bf16.msra.mxu0 0
      %759 = vmatprep.subr.bf16.mxu0 0
      %760 = vmatpush1.bf16.msra.mxu0 0
      %761 = vmatprep.subr.bf16.mxu0 0
      %762 = vmatpush1.bf16.msra.mxu0 0
      %763 = vmatprep.subr.bf16.mxu0 0
      %764 = vmatpush1.bf16.msra.mxu0 0
      %765 = vmatprep.subr.bf16.mxu0 0
      %766 = vmatpush1.bf16.msra.mxu0 %v749
      %767 = vmatprep.subr.bf16.mxu0 0
      %768 = vmatpush2.bf16.msra.mxu0 0
      %769 = vmatprep.subr.bf16.mxu0 0
      %770 = vmatpush2.bf16.msra.mxu0 0
      %771 = vmatprep.subr.bf16.mxu0 0
      %772 = vmatpush2.bf16.msra.mxu0 0
      %773 = vmatprep.subr.bf16.mxu0 0
      %774 = vmatpush2.bf16.msra.mxu0 0
      %775 = vmatprep.subr.bf16.mxu0 0
      %776 = vmatpush2.bf16.msra.mxu0 0
      %777 = vmatprep.subr.bf16.mxu0 0
      %778 = vmatpush2.bf16.msra.mxu0 0
      %779 = vmatprep.subr.bf16.mxu0 0
      %780 = vmatpush2.bf16.msra.mxu0 0
      %781 = vmatprep.subr.bf16.mxu0 0
      %782 = vmatpush2.bf16.msra.mxu0 0
      %783 = vmatprep.mubr.bf16.mxu0 0
      %784 = vmatmul.mubr.bf16.gmra.mxu0 %v737
      %v785 = vpop.f32.mrf.mxu0
      %v786 = vadd.f32 0.0, %v785
      %v787 = vpop.f32.mrf.mxu0
      %v788 = vpop.f32.mrf.mxu0
      %v789 = vadd.f32 0.0, %v788
      %v790 = vpop.f32.mrf.mxu0
      %791 = vmatprep.mubr.bf16.mxu0 0
      %792 = vmatmul.mubr.bf16.gmra.mxu0 %v740
      %v793 = vpop.f32.mrf.mxu0
      %v794 = vadd.f32 0.0, %v793
      %v795 = vpop.f32.mrf.mxu0
      %v796 = vpop.f32.mrf.mxu0
      %v797 = vadd.f32 0.0, %v796
      %v798 = vpop.f32.mrf.mxu0
      %799 = vmatprep.mubr.bf16.mxu0 0
      %800 = vmatmul.mubr.bf16.gmra.mxu0 %v743
      %v801 = vpop.f32.mrf.mxu0
      %v802 = vadd.f32 0.0, %v801
      %v803 = vpop.f32.mrf.mxu0
      %v804 = vpop.f32.mrf.mxu0
      %v805 = vadd.f32 0.0, %v804
      %v806 = vpop.f32.mrf.mxu0
      %807 = vmatprep.mubr.bf16.mxu0 0
      %808 = vmatmul.mubr.bf16.gmra.mxu0 %v746
      %v809 = vpop.f32.mrf.mxu0
      %v810 = vadd.f32 0.0, %v809
      %v811 = vpop.f32.mrf.mxu0
      %v812 = vpop.f32.mrf.mxu0
      %v813 = vadd.f32 0.0, %v812
      %v814 = vpop.f32.mrf.mxu0
      %815 = vdwg.mxu0
      %v816 = vadd.f32 %v697, %v786
      %v817 = vadd.f32 %v698, %v789
      %v818 = vadd.f32 %v699, %v794
      %v819 = vadd.f32 %v700, %v797
      %v820 = vadd.f32 %v701, %v802
      %v821 = vadd.f32 %v702, %v805
      %v822 = vadd.f32 %v703, %v810
      %v823 = vadd.f32 %v704, %v813
      %v824 = vld [vmem:[%s705] sm:$0xf]
      %v825 = vld [vmem:[%s705 + $0x4] sm:$0x1]
      %v826 = vld [vmem:[%s705 + $0x8] sm:$0xf]
      %v827 = vld [vmem:[%s705 + $0xc] sm:$0x1]
      %v828 = vld [vmem:[%s705 + $0x10] sm:$0xf]
      %v829 = vld [vmem:[%s705 + $0x14] sm:$0x1]
      %v830 = vld [vmem:[%s705 + $0x18] sm:$0xf]
      %v831 = vld [vmem:[%s705 + $0x1c] sm:$0x1]
      %v832 = vld [vmem:[%s705 + $0x20] sm:$0xf]
      %v833 = vld [vmem:[%s705 + $0x24] sm:$0x1]
      %v834 = vld [vmem:[%s705 + $0x28] sm:$0xf]
      %v835 = vld [vmem:[%s705 + $0x2c] sm:$0x1]
      %v836 = vld [vmem:[%s705 + $0x30] sm:$0xf]
      %v837 = vld [vmem:[%s705 + $0x34] sm:$0x1]
      %v838 = vld [vmem:[%s705 + $0x38] sm:$0xf]
      %v839 = vld [vmem:[%s705 + $0x3c] sm:$0x1]
      %v841 = vshrl.u32 %v824, 16
      %v843 = vrot.slane %v841, 4
      %v844 = vshll.u32 %v824, 16
      %v846 = vrot.slane %v844, 5
      %v847 = vor.u32 %v843, %v846
      %v848 = vrot.slane %v847, 4
      %v850 = vshll.u32 %v825, 16
      %v852 = vrot.slane %v850, 5
      %v853 = vsel %vm235, %v848, %v852
      %v855 = vshrl.u32 %v826, 16
      %v857 = vrot.slane %v855, 4
      %v858 = vshll.u32 %v826, 16
      %v860 = vrot.slane %v858, 5
      %v861 = vor.u32 %v857, %v860
      %v862 = vrot.slane %v861, 4
      %v864 = vshll.u32 %v827, 16
      %v866 = vrot.slane %v864, 5
      %v867 = vsel %vm235, %v862, %v866
      %v869 = vshrl.u32 %v828, 16
      %v871 = vrot.slane %v869, 4
      %v872 = vshll.u32 %v828, 16
      %v874 = vrot.slane %v872, 5
      %v875 = vor.u32 %v871, %v874
      %v876 = vrot.slane %v875, 4
      %v878 = vshll.u32 %v829, 16
      %v880 = vrot.slane %v878, 5
      %v881 = vsel %vm235, %v876, %v880
      %v883 = vshrl.u32 %v830, 16
      %v885 = vrot.slane %v883, 4
      %v886 = vshll.u32 %v830, 16
      %v888 = vrot.slane %v886, 5
      %v889 = vor.u32 %v885, %v888
      %v890 = vrot.slane %v889, 4
      %v892 = vshll.u32 %v831, 16
      %v894 = vrot.slane %v892, 5
      %v895 = vsel %vm235, %v890, %v894
      %v897 = vshrl.u32 %v832, 16
      %v899 = vrot.slane %v897, 4
      %v900 = vshll.u32 %v832, 16
      %v902 = vrot.slane %v900, 5
      %v903 = vor.u32 %v899, %v902
      %v904 = vrot.slane %v903, 4
      %v906 = vshll.u32 %v833, 16
      %v908 = vrot.slane %v906, 5
      %v909 = vsel %vm235, %v904, %v908
      %v911 = vshrl.u32 %v834, 16
      %v913 = vrot.slane %v911, 4
      %v914 = vshll.u32 %v834, 16
      %v916 = vrot.slane %v914, 5
      %v917 = vor.u32 %v913, %v916
      %v918 = vrot.slane %v917, 4
      %v920 = vshll.u32 %v835, 16
      %v922 = vrot.slane %v920, 5
      %v923 = vsel %vm235, %v918, %v922
      %v925 = vshrl.u32 %v836, 16
      %v927 = vrot.slane %v925, 4
      %v928 = vshll.u32 %v836, 16
      %v930 = vrot.slane %v928, 5
      %v931 = vor.u32 %v927, %v930
      %v932 = vrot.slane %v931, 4
      %v934 = vshll.u32 %v837, 16
      %v936 = vrot.slane %v934, 5
      %v937 = vsel %vm235, %v932, %v936
      %v939 = vshrl.u32 %v838, 16
      %v941 = vrot.slane %v939, 4
      %v942 = vshll.u32 %v838, 16
      %v944 = vrot.slane %v942, 5
      %v945 = vor.u32 %v941, %v944
      %v946 = vrot.slane %v945, 4
      %v948 = vshll.u32 %v839, 16
      %v950 = vrot.slane %v948, 5
      %v951 = vsel %vm235, %v946, %v950
      %s952 = scalar_lea.vmem %s1, 16
      %v953 = vld [vmem:[%s952] sm:$0xf]
      %v954 = vunpack.c.l.b16 %v853
      %v955 = vunpack.c.l.b16 %v867
      %v956 = vunpack.c.l.b16 %v881
      %v957 = vunpack.c.l.b16 %v895
      %v958 = vunpack.c.l.b16 %v909
      %v959 = vunpack.c.l.b16 %v923
      %v960 = vunpack.c.l.b16 %v937
      %v961 = vunpack.c.l.b16 %v951
      %v962 = vpack.c.b16 %v955, %v954
      %v963 = vpack.c.b16 %v957, %v956
      %v964 = vpack.c.b16 %v959, %v958
      %v965 = vpack.c.b16 %v961, %v960
      %v967 = vsel %vm362, %v962, 0
      %v970 = vsel %vm362, %v963, 0
      %v973 = vsel %vm362, %v964, 0
      %v976 = vsel %vm362, %v965, 0
      %v979 = vsel %vm375, %v953, 0
      %981 = vmatprep.subr.bf16.mxu0 0
      %982 = vmatpush1.bf16.msra.mxu0 0
      %983 = vmatprep.subr.bf16.mxu0 0
      %984 = vmatpush1.bf16.msra.mxu0 0
      %985 = vmatprep.subr.bf16.mxu0 0
      %986 = vmatpush1.bf16.msra.mxu0 0
      %987 = vmatprep.subr.bf16.mxu0 0
      %988 = vmatpush1.bf16.msra.mxu0 0
      %989 = vmatprep.subr.bf16.mxu0 0
      %990 = vmatpush1.bf16.msra.mxu0 0
      %991 = vmatprep.subr.bf16.mxu0 0
      %992 = vmatpush1.bf16.msra.mxu0 0
      %993 = vmatprep.subr.bf16.mxu0 0
      %994 = vmatpush1.bf16.msra.mxu0 0
      %995 = vmatprep.subr.bf16.mxu0 0
      %996 = vmatpush1.bf16.msra.mxu0 %v979
      %997 = vmatprep.subr.bf16.mxu0 0
      %998 = vmatpush2.bf16.msra.mxu0 0
      %999 = vmatprep.subr.bf16.mxu0 0
      %1000 = vmatpush2.bf16.msra.mxu0 0
      %1001 = vmatprep.subr.bf16.mxu0 0
      %1002 = vmatpush2.bf16.msra.mxu0 0
      %1003 = vmatprep.subr.bf16.mxu0 0
      %1004 = vmatpush2.bf16.msra.mxu0 0
      %1005 = vmatprep.subr.bf16.mxu0 0
      %1006 = vmatpush2.bf16.msra.mxu0 0
      %1007 = vmatprep.subr.bf16.mxu0 0
      %1008 = vmatpush2.bf16.msra.mxu0 0
      %1009 = vmatprep.subr.bf16.mxu0 0
      %1010 = vmatpush2.bf16.msra.mxu0 0
      %1011 = vmatprep.subr.bf16.mxu0 0
      %1012 = vmatpush2.bf16.msra.mxu0 0
      %1013 = vmatprep.mubr.bf16.mxu0 0
      %1014 = vmatmul.mubr.bf16.gmra.mxu0 %v967
      %v1015 = vpop.f32.mrf.mxu0
      %v1016 = vadd.f32 0.0, %v1015
      %v1017 = vpop.f32.mrf.mxu0
      %v1018 = vpop.f32.mrf.mxu0
      %v1019 = vadd.f32 0.0, %v1018
      %v1020 = vpop.f32.mrf.mxu0
      %1021 = vmatprep.mubr.bf16.mxu0 0
      %1022 = vmatmul.mubr.bf16.gmra.mxu0 %v970
      %v1023 = vpop.f32.mrf.mxu0
      %v1024 = vadd.f32 0.0, %v1023
      %v1025 = vpop.f32.mrf.mxu0
      %v1026 = vpop.f32.mrf.mxu0
      %v1027 = vadd.f32 0.0, %v1026
      %v1028 = vpop.f32.mrf.mxu0
      %1029 = vmatprep.mubr.bf16.mxu0 0
      %1030 = vmatmul.mubr.bf16.gmra.mxu0 %v973
      %v1031 = vpop.f32.mrf.mxu0
      %v1032 = vadd.f32 0.0, %v1031
      %v1033 = vpop.f32.mrf.mxu0
      %v1034 = vpop.f32.mrf.mxu0
      %v1035 = vadd.f32 0.0, %v1034
      %v1036 = vpop.f32.mrf.mxu0
      %1037 = vmatprep.mubr.bf16.mxu0 0
      %1038 = vmatmul.mubr.bf16.gmra.mxu0 %v976
      %v1039 = vpop.f32.mrf.mxu0
      %v1040 = vadd.f32 0.0, %v1039
      %v1041 = vpop.f32.mrf.mxu0
      %v1042 = vpop.f32.mrf.mxu0
      %v1043 = vadd.f32 0.0, %v1042
      %v1044 = vpop.f32.mrf.mxu0
      %1045 = vdwg.mxu0
      %v1046 = vadd.f32 %v816, %v1016
      %v1047 = vadd.f32 %v817, %v1019
      %v1048 = vadd.f32 %v818, %v1024
      %v1049 = vadd.f32 %v819, %v1027
      %v1050 = vadd.f32 %v820, %v1032
      %v1051 = vadd.f32 %v821, %v1035
      %v1052 = vadd.f32 %v822, %v1040
      %v1053 = vadd.f32 %v823, %v1043
      %v1054 = vld [vmem:[%s705] sm:$0xe]
      %v1055 = vld [vmem:[%s705 + $0x8] sm:$0xe]
      %v1056 = vld [vmem:[%s705 + $0x10] sm:$0xe]
      %v1057 = vld [vmem:[%s705 + $0x18] sm:$0xe]
      %v1058 = vld [vmem:[%s705 + $0x20] sm:$0xe]
      %v1059 = vld [vmem:[%s705 + $0x28] sm:$0xe]
      %v1060 = vld [vmem:[%s705 + $0x30] sm:$0xe]
      %v1061 = vld [vmem:[%s705 + $0x38] sm:$0xe]
      %v1078 = vrot.slane %v1054, 5
      %v1079 = vrot.slane %v1078, 4
      %v1080 = vrot.slane %v825, 5
      %v1081 = vsel %vm570, %v1079, %v1080
      %v1082 = vrot.slane %v1055, 5
      %v1083 = vrot.slane %v1082, 4
      %v1084 = vrot.slane %v827, 5
      %v1085 = vsel %vm570, %v1083, %v1084
      %v1086 = vrot.slane %v1056, 5
      %v1087 = vrot.slane %v1086, 4
      %v1088 = vrot.slane %v829, 5
      %v1089 = vsel %vm570, %v1087, %v1088
      %v1090 = vrot.slane %v1057, 5
      %v1091 = vrot.slane %v1090, 4
      %v1092 = vrot.slane %v831, 5
      %v1093 = vsel %vm570, %v1091, %v1092
      %v1094 = vrot.slane %v1058, 5
      %v1095 = vrot.slane %v1094, 4
      %v1096 = vrot.slane %v833, 5
      %v1097 = vsel %vm570, %v1095, %v1096
      %v1098 = vrot.slane %v1059, 5
      %v1099 = vrot.slane %v1098, 4
      %v1100 = vrot.slane %v835, 5
      %v1101 = vsel %vm570, %v1099, %v1100
      %v1102 = vrot.slane %v1060, 5
      %v1103 = vrot.slane %v1102, 4
      %v1104 = vrot.slane %v837, 5
      %v1105 = vsel %vm570, %v1103, %v1104
      %v1106 = vrot.slane %v1061, 5
      %v1107 = vrot.slane %v1106, 4
      %v1108 = vrot.slane %v839, 5
      %v1109 = vsel %vm570, %v1107, %v1108
      %s1110 = scalar_lea.vmem %s1, 20
      %v1111 = vld [vmem:[%s1110] sm:$0xf]
      %v1112 = vunpack.c.l.b16 %v1081
      %v1113 = vunpack.c.l.b16 %v1085
      %v1114 = vunpack.c.l.b16 %v1089
      %v1115 = vunpack.c.l.b16 %v1093
      %v1116 = vunpack.c.l.b16 %v1097
      %v1117 = vunpack.c.l.b16 %v1101
      %v1118 = vunpack.c.l.b16 %v1105
      %v1119 = vunpack.c.l.b16 %v1109
      %v1120 = vpack.c.b16 %v1113, %v1112
      %v1121 = vpack.c.b16 %v1115, %v1114
      %v1122 = vpack.c.b16 %v1117, %v1116
      %v1123 = vpack.c.b16 %v1119, %v1118
      %v1125 = vsel %vm362, %v1120, 0
      %v1128 = vsel %vm362, %v1121, 0
      %v1131 = vsel %vm362, %v1122, 0
      %v1134 = vsel %vm362, %v1123, 0
      %v1137 = vsel %vm375, %v1111, 0
      %1139 = vmatprep.subr.bf16.mxu0 0
      %1140 = vmatpush1.bf16.msra.mxu0 0
      %1141 = vmatprep.subr.bf16.mxu0 0
      %1142 = vmatpush1.bf16.msra.mxu0 0
      %1143 = vmatprep.subr.bf16.mxu0 0
      %1144 = vmatpush1.bf16.msra.mxu0 0
      %1145 = vmatprep.subr.bf16.mxu0 0
      %1146 = vmatpush1.bf16.msra.mxu0 0
      %1147 = vmatprep.subr.bf16.mxu0 0
      %1148 = vmatpush1.bf16.msra.mxu0 0
      %1149 = vmatprep.subr.bf16.mxu0 0
      %1150 = vmatpush1.bf16.msra.mxu0 0
      %1151 = vmatprep.subr.bf16.mxu0 0
      %1152 = vmatpush1.bf16.msra.mxu0 0
      %1153 = vmatprep.subr.bf16.mxu0 0
      %1154 = vmatpush1.bf16.msra.mxu0 %v1137
      %1155 = vmatprep.subr.bf16.mxu0 0
      %1156 = vmatpush2.bf16.msra.mxu0 0
      %1157 = vmatprep.subr.bf16.mxu0 0
      %1158 = vmatpush2.bf16.msra.mxu0 0
      %1159 = vmatprep.subr.bf16.mxu0 0
      %1160 = vmatpush2.bf16.msra.mxu0 0
      %1161 = vmatprep.subr.bf16.mxu0 0
      %1162 = vmatpush2.bf16.msra.mxu0 0
      %1163 = vmatprep.subr.bf16.mxu0 0
      %1164 = vmatpush2.bf16.msra.mxu0 0
      %1165 = vmatprep.subr.bf16.mxu0 0
      %1166 = vmatpush2.bf16.msra.mxu0 0
      %1167 = vmatprep.subr.bf16.mxu0 0
      %1168 = vmatpush2.bf16.msra.mxu0 0
      %1169 = vmatprep.subr.bf16.mxu0 0
      %1170 = vmatpush2.bf16.msra.mxu0 0
      %1171 = vmatprep.mubr.bf16.mxu0 0
      %1172 = vmatmul.mubr.bf16.gmra.mxu0 %v1125
      %v1173 = vpop.f32.mrf.mxu0
      %v1174 = vadd.f32 0.0, %v1173
      %v1175 = vpop.f32.mrf.mxu0
      %v1176 = vpop.f32.mrf.mxu0
      %v1177 = vadd.f32 0.0, %v1176
      %v1178 = vpop.f32.mrf.mxu0
      %1179 = vmatprep.mubr.bf16.mxu0 0
      %1180 = vmatmul.mubr.bf16.gmra.mxu0 %v1128
      %v1181 = vpop.f32.mrf.mxu0
      %v1182 = vadd.f32 0.0, %v1181
      %v1183 = vpop.f32.mrf.mxu0
      %v1184 = vpop.f32.mrf.mxu0
      %v1185 = vadd.f32 0.0, %v1184
      %v1186 = vpop.f32.mrf.mxu0
      %1187 = vmatprep.mubr.bf16.mxu0 0
      %1188 = vmatmul.mubr.bf16.gmra.mxu0 %v1131
      %v1189 = vpop.f32.mrf.mxu0
      %v1190 = vadd.f32 0.0, %v1189
      %v1191 = vpop.f32.mrf.mxu0
      %v1192 = vpop.f32.mrf.mxu0
      %v1193 = vadd.f32 0.0, %v1192
      %v1194 = vpop.f32.mrf.mxu0
      %1195 = vmatprep.mubr.bf16.mxu0 0
      %1196 = vmatmul.mubr.bf16.gmra.mxu0 %v1134
      %v1197 = vpop.f32.mrf.mxu0
      %v1198 = vadd.f32 0.0, %v1197
      %v1199 = vpop.f32.mrf.mxu0
      %v1200 = vpop.f32.mrf.mxu0
      %v1201 = vadd.f32 0.0, %v1200
      %v1202 = vpop.f32.mrf.mxu0
      %1203 = vdwg.mxu0
      %v1204 = vadd.f32 %v1046, %v1174
      %v1205 = vadd.f32 %v1047, %v1177
      %v1206 = vadd.f32 %v1048, %v1182
      %v1207 = vadd.f32 %v1049, %v1185
      %v1208 = vadd.f32 %v1050, %v1190
      %v1209 = vadd.f32 %v1051, %v1193
      %v1210 = vadd.f32 %v1052, %v1198
      %v1211 = vadd.f32 %v1053, %v1201
      %s1212 = scalar_lea.vmem %s203, 16
      %v1213 = vld [vmem:[%s1212] sm:$0xf]
      %v1214 = vld [vmem:[%s1212 + $0x8] sm:$0xf]
      %v1215 = vld [vmem:[%s1212 + $0x10] sm:$0xf]
      %v1216 = vld [vmem:[%s1212 + $0x18] sm:$0xf]
      %v1217 = vld [vmem:[%s1212 + $0x20] sm:$0xf]
      %v1218 = vld [vmem:[%s1212 + $0x28] sm:$0xf]
      %v1219 = vld [vmem:[%s1212 + $0x30] sm:$0xf]
      %v1220 = vld [vmem:[%s1212 + $0x38] sm:$0xf]
      %s1221 = scalar_lea.vmem %s1, 24
      %v1222 = vld [vmem:[%s1221] sm:$0xf]
      %v1231 = vunpack.c.l.b16 %v1213
      %v1232 = vunpack.c.l.b16 %v1214
      %v1233 = vunpack.c.l.b16 %v1215
      %v1234 = vunpack.c.l.b16 %v1216
      %v1235 = vunpack.c.l.b16 %v1217
      %v1236 = vunpack.c.l.b16 %v1218
      %v1237 = vunpack.c.l.b16 %v1219
      %v1238 = vunpack.c.l.b16 %v1220
      %v1239 = vpack.c.b16 %v1232, %v1231
      %v1240 = vpack.c.b16 %v1234, %v1233
      %v1241 = vpack.c.b16 %v1236, %v1235
      %v1242 = vpack.c.b16 %v1238, %v1237
      %v1244 = vsel %vm362, %v1239, 0
      %v1247 = vsel %vm362, %v1240, 0
      %v1250 = vsel %vm362, %v1241, 0
      %v1253 = vsel %vm362, %v1242, 0
      %v1256 = vsel %vm375, %v1222, 0
      %1258 = vmatprep.subr.bf16.mxu0 0
      %1259 = vmatpush1.bf16.msra.mxu0 0
      %1260 = vmatprep.subr.bf16.mxu0 0
      %1261 = vmatpush1.bf16.msra.mxu0 0
      %1262 = vmatprep.subr.bf16.mxu0 0
      %1263 = vmatpush1.bf16.msra.mxu0 0
      %1264 = vmatprep.subr.bf16.mxu0 0
      %1265 = vmatpush1.bf16.msra.mxu0 0
      %1266 = vmatprep.subr.bf16.mxu0 0
      %1267 = vmatpush1.bf16.msra.mxu0 0
      %1268 = vmatprep.subr.bf16.mxu0 0
      %1269 = vmatpush1.bf16.msra.mxu0 0
      %1270 = vmatprep.subr.bf16.mxu0 0
      %1271 = vmatpush1.bf16.msra.mxu0 0
      %1272 = vmatprep.subr.bf16.mxu0 0
      %1273 = vmatpush1.bf16.msra.mxu0 %v1256
      %1274 = vmatprep.subr.bf16.mxu0 0
      %1275 = vmatpush2.bf16.msra.mxu0 0
      %1276 = vmatprep.subr.bf16.mxu0 0
      %1277 = vmatpush2.bf16.msra.mxu0 0
      %1278 = vmatprep.subr.bf16.mxu0 0
      %1279 = vmatpush2.bf16.msra.mxu0 0
      %1280 = vmatprep.subr.bf16.mxu0 0
      %1281 = vmatpush2.bf16.msra.mxu0 0
      %1282 = vmatprep.subr.bf16.mxu0 0
      %1283 = vmatpush2.bf16.msra.mxu0 0
      %1284 = vmatprep.subr.bf16.mxu0 0
      %1285 = vmatpush2.bf16.msra.mxu0 0
      %1286 = vmatprep.subr.bf16.mxu0 0
      %1287 = vmatpush2.bf16.msra.mxu0 0
      %1288 = vmatprep.subr.bf16.mxu0 0
      %1289 = vmatpush2.bf16.msra.mxu0 0
      %1290 = vmatprep.mubr.bf16.mxu0 0
      %1291 = vmatmul.mubr.bf16.gmra.mxu0 %v1244
      %v1292 = vpop.f32.mrf.mxu0
      %v1293 = vadd.f32 0.0, %v1292
      %v1294 = vpop.f32.mrf.mxu0
      %v1295 = vpop.f32.mrf.mxu0
      %v1296 = vadd.f32 0.0, %v1295
      %v1297 = vpop.f32.mrf.mxu0
      %1298 = vmatprep.mubr.bf16.mxu0 0
      %1299 = vmatmul.mubr.bf16.gmra.mxu0 %v1247
      %v1300 = vpop.f32.mrf.mxu0
      %v1301 = vadd.f32 0.0, %v1300
      %v1302 = vpop.f32.mrf.mxu0
      %v1303 = vpop.f32.mrf.mxu0
      %v1304 = vadd.f32 0.0, %v1303
      %v1305 = vpop.f32.mrf.mxu0
      %1306 = vmatprep.mubr.bf16.mxu0 0
      %1307 = vmatmul.mubr.bf16.gmra.mxu0 %v1250
      %v1308 = vpop.f32.mrf.mxu0
      %v1309 = vadd.f32 0.0, %v1308
      %v1310 = vpop.f32.mrf.mxu0
      %v1311 = vpop.f32.mrf.mxu0
      %v1312 = vadd.f32 0.0, %v1311
      %v1313 = vpop.f32.mrf.mxu0
      %1314 = vmatprep.mubr.bf16.mxu0 0
      %1315 = vmatmul.mubr.bf16.gmra.mxu0 %v1253
      %v1316 = vpop.f32.mrf.mxu0
      %v1317 = vadd.f32 0.0, %v1316
      %v1318 = vpop.f32.mrf.mxu0
      %v1319 = vpop.f32.mrf.mxu0
      %v1320 = vadd.f32 0.0, %v1319
      %v1321 = vpop.f32.mrf.mxu0
      %1322 = vdwg.mxu0
      %v1323 = vadd.f32 %v1204, %v1293
      %v1324 = vadd.f32 %v1205, %v1296
      %v1325 = vadd.f32 %v1206, %v1301
      %v1326 = vadd.f32 %v1207, %v1304
      %v1327 = vadd.f32 %v1208, %v1309
      %v1328 = vadd.f32 %v1209, %v1312
      %v1329 = vadd.f32 %v1210, %v1317
      %v1330 = vadd.f32 %v1211, %v1320
      %v1331 = vld [vmem:[%s1212] sm:$0xf]
      %v1332 = vld [vmem:[%s1212 + $0x4] sm:$0x1]
      %v1333 = vld [vmem:[%s1212 + $0x8] sm:$0xf]
      %v1334 = vld [vmem:[%s1212 + $0xc] sm:$0x1]
      %v1335 = vld [vmem:[%s1212 + $0x10] sm:$0xf]
      %v1336 = vld [vmem:[%s1212 + $0x14] sm:$0x1]
      %v1337 = vld [vmem:[%s1212 + $0x18] sm:$0xf]
      %v1338 = vld [vmem:[%s1212 + $0x1c] sm:$0x1]
      %v1339 = vld [vmem:[%s1212 + $0x20] sm:$0xf]
      %v1340 = vld [vmem:[%s1212 + $0x24] sm:$0x1]
      %v1341 = vld [vmem:[%s1212 + $0x28] sm:$0xf]
      %v1342 = vld [vmem:[%s1212 + $0x2c] sm:$0x1]
      %v1343 = vld [vmem:[%s1212 + $0x30] sm:$0xf]
      %v1344 = vld [vmem:[%s1212 + $0x34] sm:$0x1]
      %v1345 = vld [vmem:[%s1212 + $0x38] sm:$0xf]
      %v1346 = vld [vmem:[%s1212 + $0x3c] sm:$0x1]
      %v1348 = vshrl.u32 %v1331, 16
      %v1350 = vrot.slane %v1348, 4
      %v1351 = vshll.u32 %v1331, 16
      %v1353 = vrot.slane %v1351, 5
      %v1354 = vor.u32 %v1350, %v1353
      %v1355 = vrot.slane %v1354, 4
      %v1357 = vshll.u32 %v1332, 16
      %v1359 = vrot.slane %v1357, 5
      %v1360 = vsel %vm235, %v1355, %v1359
      %v1362 = vshrl.u32 %v1333, 16
      %v1364 = vrot.slane %v1362, 4
      %v1365 = vshll.u32 %v1333, 16
      %v1367 = vrot.slane %v1365, 5
      %v1368 = vor.u32 %v1364, %v1367
      %v1369 = vrot.slane %v1368, 4
      %v1371 = vshll.u32 %v1334, 16
      %v1373 = vrot.slane %v1371, 5
      %v1374 = vsel %vm235, %v1369, %v1373
      %v1376 = vshrl.u32 %v1335, 16
      %v1378 = vrot.slane %v1376, 4
      %v1379 = vshll.u32 %v1335, 16
      %v1381 = vrot.slane %v1379, 5
      %v1382 = vor.u32 %v1378, %v1381
      %v1383 = vrot.slane %v1382, 4
      %v1385 = vshll.u32 %v1336, 16
      %v1387 = vrot.slane %v1385, 5
      %v1388 = vsel %vm235, %v1383, %v1387
      %v1390 = vshrl.u32 %v1337, 16
      %v1392 = vrot.slane %v1390, 4
      %v1393 = vshll.u32 %v1337, 16
      %v1395 = vrot.slane %v1393, 5
      %v1396 = vor.u32 %v1392, %v1395
      %v1397 = vrot.slane %v1396, 4
      %v1399 = vshll.u32 %v1338, 16
      %v1401 = vrot.slane %v1399, 5
      %v1402 = vsel %vm235, %v1397, %v1401
      %v1404 = vshrl.u32 %v1339, 16
      %v1406 = vrot.slane %v1404, 4
      %v1407 = vshll.u32 %v1339, 16
      %v1409 = vrot.slane %v1407, 5
      %v1410 = vor.u32 %v1406, %v1409
      %v1411 = vrot.slane %v1410, 4
      %v1413 = vshll.u32 %v1340, 16
      %v1415 = vrot.slane %v1413, 5
      %v1416 = vsel %vm235, %v1411, %v1415
      %v1418 = vshrl.u32 %v1341, 16
      %v1420 = vrot.slane %v1418, 4
      %v1421 = vshll.u32 %v1341, 16
      %v1423 = vrot.slane %v1421, 5
      %v1424 = vor.u32 %v1420, %v1423
      %v1425 = vrot.slane %v1424, 4
      %v1427 = vshll.u32 %v1342, 16
      %v1429 = vrot.slane %v1427, 5
      %v1430 = vsel %vm235, %v1425, %v1429
      %v1432 = vshrl.u32 %v1343, 16
      %v1434 = vrot.slane %v1432, 4
      %v1435 = vshll.u32 %v1343, 16
      %v1437 = vrot.slane %v1435, 5
      %v1438 = vor.u32 %v1434, %v1437
      %v1439 = vrot.slane %v1438, 4
      %v1441 = vshll.u32 %v1344, 16
      %v1443 = vrot.slane %v1441, 5
      %v1444 = vsel %vm235, %v1439, %v1443
      %v1446 = vshrl.u32 %v1345, 16
      %v1448 = vrot.slane %v1446, 4
      %v1449 = vshll.u32 %v1345, 16
      %v1451 = vrot.slane %v1449, 5
      %v1452 = vor.u32 %v1448, %v1451
      %v1453 = vrot.slane %v1452, 4
      %v1455 = vshll.u32 %v1346, 16
      %v1457 = vrot.slane %v1455, 5
      %v1458 = vsel %vm235, %v1453, %v1457
      %s1459 = scalar_lea.vmem %s1, 28
      %v1460 = vld [vmem:[%s1459] sm:$0xf]
      %v1461 = vunpack.c.l.b16 %v1360
      %v1462 = vunpack.c.l.b16 %v1374
      %v1463 = vunpack.c.l.b16 %v1388
      %v1464 = vunpack.c.l.b16 %v1402
      %v1465 = vunpack.c.l.b16 %v1416
      %v1466 = vunpack.c.l.b16 %v1430
      %v1467 = vunpack.c.l.b16 %v1444
      %v1468 = vunpack.c.l.b16 %v1458
      %v1469 = vpack.c.b16 %v1462, %v1461
      %v1470 = vpack.c.b16 %v1464, %v1463
      %v1471 = vpack.c.b16 %v1466, %v1465
      %v1472 = vpack.c.b16 %v1468, %v1467
      %v1474 = vsel %vm362, %v1469, 0
      %v1477 = vsel %vm362, %v1470, 0
      %v1480 = vsel %vm362, %v1471, 0
      %v1483 = vsel %vm362, %v1472, 0
      %v1486 = vsel %vm375, %v1460, 0
      %1488 = vmatprep.subr.bf16.mxu0 0
      %1489 = vmatpush1.bf16.msra.mxu0 0
      %1490 = vmatprep.subr.bf16.mxu0 0
      %1491 = vmatpush1.bf16.msra.mxu0 0
      %1492 = vmatprep.subr.bf16.mxu0 0
      %1493 = vmatpush1.bf16.msra.mxu0 0
      %1494 = vmatprep.subr.bf16.mxu0 0
      %1495 = vmatpush1.bf16.msra.mxu0 0
      %1496 = vmatprep.subr.bf16.mxu0 0
      %1497 = vmatpush1.bf16.msra.mxu0 0
      %1498 = vmatprep.subr.bf16.mxu0 0
      %1499 = vmatpush1.bf16.msra.mxu0 0
      %1500 = vmatprep.subr.bf16.mxu0 0
      %1501 = vmatpush1.bf16.msra.mxu0 0
      %1502 = vmatprep.subr.bf16.mxu0 0
      %1503 = vmatpush1.bf16.msra.mxu0 %v1486
      %1504 = vmatprep.subr.bf16.mxu0 0
      %1505 = vmatpush2.bf16.msra.mxu0 0
      %1506 = vmatprep.subr.bf16.mxu0 0
      %1507 = vmatpush2.bf16.msra.mxu0 0
      %1508 = vmatprep.subr.bf16.mxu0 0
      %1509 = vmatpush2.bf16.msra.mxu0 0
      %1510 = vmatprep.subr.bf16.mxu0 0
      %1511 = vmatpush2.bf16.msra.mxu0 0
      %1512 = vmatprep.subr.bf16.mxu0 0
      %1513 = vmatpush2.bf16.msra.mxu0 0
      %1514 = vmatprep.subr.bf16.mxu0 0
      %1515 = vmatpush2.bf16.msra.mxu0 0
      %1516 = vmatprep.subr.bf16.mxu0 0
      %1517 = vmatpush2.bf16.msra.mxu0 0
      %1518 = vmatprep.subr.bf16.mxu0 0
      %1519 = vmatpush2.bf16.msra.mxu0 0
      %1520 = vmatprep.mubr.bf16.mxu0 0
      %1521 = vmatmul.mubr.bf16.gmra.mxu0 %v1474
      %v1522 = vpop.f32.mrf.mxu0
      %v1523 = vadd.f32 0.0, %v1522
      %v1524 = vpop.f32.mrf.mxu0
      %v1525 = vpop.f32.mrf.mxu0
      %v1526 = vadd.f32 0.0, %v1525
      %v1527 = vpop.f32.mrf.mxu0
      %1528 = vmatprep.mubr.bf16.mxu0 0
      %1529 = vmatmul.mubr.bf16.gmra.mxu0 %v1477
      %v1530 = vpop.f32.mrf.mxu0
      %v1531 = vadd.f32 0.0, %v1530
      %v1532 = vpop.f32.mrf.mxu0
      %v1533 = vpop.f32.mrf.mxu0
      %v1534 = vadd.f32 0.0, %v1533
      %v1535 = vpop.f32.mrf.mxu0
      %1536 = vmatprep.mubr.bf16.mxu0 0
      %1537 = vmatmul.mubr.bf16.gmra.mxu0 %v1480
      %v1538 = vpop.f32.mrf.mxu0
      %v1539 = vadd.f32 0.0, %v1538
      %v1540 = vpop.f32.mrf.mxu0
      %v1541 = vpop.f32.mrf.mxu0
      %v1542 = vadd.f32 0.0, %v1541
      %v1543 = vpop.f32.mrf.mxu0
      %1544 = vmatprep.mubr.bf16.mxu0 0
      %1545 = vmatmul.mubr.bf16.gmra.mxu0 %v1483
      %v1546 = vpop.f32.mrf.mxu0
      %v1547 = vadd.f32 0.0, %v1546
      %v1548 = vpop.f32.mrf.mxu0
      %v1549 = vpop.f32.mrf.mxu0
      %v1550 = vadd.f32 0.0, %v1549
      %v1551 = vpop.f32.mrf.mxu0
      %1552 = vdwg.mxu0
      %v1553 = vadd.f32 %v1323, %v1523
      %v1554 = vadd.f32 %v1324, %v1526
      %v1555 = vadd.f32 %v1325, %v1531
      %v1556 = vadd.f32 %v1326, %v1534
      %v1557 = vadd.f32 %v1327, %v1539
      %v1558 = vadd.f32 %v1328, %v1542
      %v1559 = vadd.f32 %v1329, %v1547
      %v1560 = vadd.f32 %v1330, %v1550
      %v1561 = vld [vmem:[%s1212] sm:$0xe]
      %v1562 = vld [vmem:[%s1212 + $0x8] sm:$0xe]
      %v1563 = vld [vmem:[%s1212 + $0x10] sm:$0xe]
      %v1564 = vld [vmem:[%s1212 + $0x18] sm:$0xe]
      %v1565 = vld [vmem:[%s1212 + $0x20] sm:$0xe]
      %v1566 = vld [vmem:[%s1212 + $0x28] sm:$0xe]
      %v1567 = vld [vmem:[%s1212 + $0x30] sm:$0xe]
      %v1568 = vld [vmem:[%s1212 + $0x38] sm:$0xe]
      %v1585 = vrot.slane %v1561, 5
      %v1586 = vrot.slane %v1585, 4
      %v1587 = vrot.slane %v1332, 5
      %v1588 = vsel %vm570, %v1586, %v1587
      %v1589 = vrot.slane %v1562, 5
      %v1590 = vrot.slane %v1589, 4
      %v1591 = vrot.slane %v1334, 5
      %v1592 = vsel %vm570, %v1590, %v1591
      %v1593 = vrot.slane %v1563, 5
      %v1594 = vrot.slane %v1593, 4
      %v1595 = vrot.slane %v1336, 5
      %v1596 = vsel %vm570, %v1594, %v1595
      %v1597 = vrot.slane %v1564, 5
      %v1598 = vrot.slane %v1597, 4
      %v1599 = vrot.slane %v1338, 5
      %v1600 = vsel %vm570, %v1598, %v1599
      %v1601 = vrot.slane %v1565, 5
      %v1602 = vrot.slane %v1601, 4
      %v1603 = vrot.slane %v1340, 5
      %v1604 = vsel %vm570, %v1602, %v1603
      %v1605 = vrot.slane %v1566, 5
      %v1606 = vrot.slane %v1605, 4
      %v1607 = vrot.slane %v1342, 5
      %v1608 = vsel %vm570, %v1606, %v1607
      %v1609 = vrot.slane %v1567, 5
      %v1610 = vrot.slane %v1609, 4
      %v1611 = vrot.slane %v1344, 5
      %v1612 = vsel %vm570, %v1610, %v1611
      %v1613 = vrot.slane %v1568, 5
      %v1614 = vrot.slane %v1613, 4
      %v1615 = vrot.slane %v1346, 5
      %v1616 = vsel %vm570, %v1614, %v1615
      %s1617 = scalar_lea.vmem %s1, 32
      %v1618 = vld [vmem:[%s1617] sm:$0xf]
      %v1619 = vunpack.c.l.b16 %v1588
      %v1620 = vunpack.c.l.b16 %v1592
      %v1621 = vunpack.c.l.b16 %v1596
      %v1622 = vunpack.c.l.b16 %v1600
      %v1623 = vunpack.c.l.b16 %v1604
      %v1624 = vunpack.c.l.b16 %v1608
      %v1625 = vunpack.c.l.b16 %v1612
      %v1626 = vunpack.c.l.b16 %v1616
      %v1627 = vpack.c.b16 %v1620, %v1619
      %v1628 = vpack.c.b16 %v1622, %v1621
      %v1629 = vpack.c.b16 %v1624, %v1623
      %v1630 = vpack.c.b16 %v1626, %v1625
      %v1632 = vsel %vm362, %v1627, 0
      %v1635 = vsel %vm362, %v1628, 0
      %v1638 = vsel %vm362, %v1629, 0
      %v1641 = vsel %vm362, %v1630, 0
      %v1644 = vsel %vm375, %v1618, 0
      %1646 = vmatprep.subr.bf16.mxu0 0
      %1647 = vmatpush1.bf16.msra.mxu0 0
      %1648 = vmatprep.subr.bf16.mxu0 0
      %1649 = vmatpush1.bf16.msra.mxu0 0
      %1650 = vmatprep.subr.bf16.mxu0 0
      %1651 = vmatpush1.bf16.msra.mxu0 0
      %1652 = vmatprep.subr.bf16.mxu0 0
      %1653 = vmatpush1.bf16.msra.mxu0 0
      %1654 = vmatprep.subr.bf16.mxu0 0
      %1655 = vmatpush1.bf16.msra.mxu0 0
      %1656 = vmatprep.subr.bf16.mxu0 0
      %1657 = vmatpush1.bf16.msra.mxu0 0
      %1658 = vmatprep.subr.bf16.mxu0 0
      %1659 = vmatpush1.bf16.msra.mxu0 0
      %1660 = vmatprep.subr.bf16.mxu0 0
      %1661 = vmatpush1.bf16.msra.mxu0 %v1644
      %1662 = vmatprep.subr.bf16.mxu0 0
      %1663 = vmatpush2.bf16.msra.mxu0 0
      %1664 = vmatprep.subr.bf16.mxu0 0
      %1665 = vmatpush2.bf16.msra.mxu0 0
      %1666 = vmatprep.subr.bf16.mxu0 0
      %1667 = vmatpush2.bf16.msra.mxu0 0
      %1668 = vmatprep.subr.bf16.mxu0 0
      %1669 = vmatpush2.bf16.msra.mxu0 0
      %1670 = vmatprep.subr.bf16.mxu0 0
      %1671 = vmatpush2.bf16.msra.mxu0 0
      %1672 = vmatprep.subr.bf16.mxu0 0
      %1673 = vmatpush2.bf16.msra.mxu0 0
      %1674 = vmatprep.subr.bf16.mxu0 0
      %1675 = vmatpush2.bf16.msra.mxu0 0
      %1676 = vmatprep.subr.bf16.mxu0 0
      %1677 = vmatpush2.bf16.msra.mxu0 0
      %1678 = vmatprep.mubr.bf16.mxu0 0
      %1679 = vmatmul.mubr.bf16.gmra.mxu0 %v1632
      %v1680 = vpop.f32.mrf.mxu0
      %v1681 = vadd.f32 0.0, %v1680
      %v1682 = vpop.f32.mrf.mxu0
      %v1683 = vpop.f32.mrf.mxu0
      %v1684 = vadd.f32 0.0, %v1683
      %v1685 = vpop.f32.mrf.mxu0
      %1686 = vmatprep.mubr.bf16.mxu0 0
      %1687 = vmatmul.mubr.bf16.gmra.mxu0 %v1635
      %v1688 = vpop.f32.mrf.mxu0
      %v1689 = vadd.f32 0.0, %v1688
      %v1690 = vpop.f32.mrf.mxu0
      %v1691 = vpop.f32.mrf.mxu0
      %v1692 = vadd.f32 0.0, %v1691
      %v1693 = vpop.f32.mrf.mxu0
      %1694 = vmatprep.mubr.bf16.mxu0 0
      %1695 = vmatmul.mubr.bf16.gmra.mxu0 %v1638
      %v1696 = vpop.f32.mrf.mxu0
      %v1697 = vadd.f32 0.0, %v1696
      %v1698 = vpop.f32.mrf.mxu0
      %v1699 = vpop.f32.mrf.mxu0
      %v1700 = vadd.f32 0.0, %v1699
      %v1701 = vpop.f32.mrf.mxu0
      %1702 = vmatprep.mubr.bf16.mxu0 0
      %1703 = vmatmul.mubr.bf16.gmra.mxu0 %v1641
      %v1704 = vpop.f32.mrf.mxu0
      %v1705 = vadd.f32 0.0, %v1704
      %v1706 = vpop.f32.mrf.mxu0
      %v1707 = vpop.f32.mrf.mxu0
      %v1708 = vadd.f32 0.0, %v1707
      %v1709 = vpop.f32.mrf.mxu0
      %1710 = vdwg.mxu0
      %v1711 = vadd.f32 %v1553, %v1681
      %v1712 = vadd.f32 %v1554, %v1684
      %v1713 = vadd.f32 %v1555, %v1689
      %v1714 = vadd.f32 %v1556, %v1692
      %v1715 = vadd.f32 %v1557, %v1697
      %v1716 = vadd.f32 %v1558, %v1700
      %v1717 = vadd.f32 %v1559, %v1705
      %v1718 = vadd.f32 %v1560, %v1708
      %v1719 = vsel %vm362, %v1711, 0.0
      %v1720 = vsel %vm362, %v1712, 0.0
      %v1721 = vadd.f32 %v1719, %v1720
      %v1722 = vsel %vm362, %v1713, 0.0
      %v1723 = vadd.f32 %v1721, %v1722
      %v1724 = vsel %vm362, %v1714, 0.0
      %v1725 = vadd.f32 %v1723, %v1724
      %v1726 = vsel %vm362, %v1715, 0.0
      %v1727 = vadd.f32 %v1725, %v1726
      %v1728 = vsel %vm362, %v1716, 0.0
      %v1729 = vadd.f32 %v1727, %v1728
      %v1730 = vsel %vm362, %v1717, 0.0
      %v1731 = vadd.f32 %v1729, %v1730
      %v1732 = vsel %vm362, %v1718, 0.0
      %v1733 = vadd.f32 %v1731, %v1732
      %v1734 = vrot.slane %v1733, 4
      %v1735 = vadd.f32 %v1733, %v1734
      %v1736 = vrot.slane %v1735, 2
      %v1737 = vadd.f32 %v1735, %v1736
      %v1738 = vrot.slane %v1737, 1
      %v1739 = vadd.f32 %v1737, %v1738
      %vm1740 = vcmask 57344
      %1741 = vst.msk [vmem:[%s211] sm:$0x1] %vm1740, %v1739
      %v1742 = vmul.f32 %v1711, %v1711
      %v1743 = vmul.f32 %v1712, %v1712
      %v1744 = vmul.f32 %v1713, %v1713
      %v1745 = vmul.f32 %v1714, %v1714
      %v1746 = vmul.f32 %v1715, %v1715
      %v1747 = vmul.f32 %v1716, %v1716
      %v1748 = vmul.f32 %v1717, %v1717
      %v1749 = vmul.f32 %v1718, %v1718
      %v1750 = vsel %vm362, %v1742, 0.0
      %v1751 = vsel %vm362, %v1743, 0.0
      %v1752 = vadd.f32 %v1750, %v1751
      %v1753 = vsel %vm362, %v1744, 0.0
      %v1754 = vadd.f32 %v1752, %v1753
      %v1755 = vsel %vm362, %v1745, 0.0
      %v1756 = vadd.f32 %v1754, %v1755
      %v1757 = vsel %vm362, %v1746, 0.0
      %v1758 = vadd.f32 %v1756, %v1757
      %v1759 = vsel %vm362, %v1747, 0.0
      %v1760 = vadd.f32 %v1758, %v1759
      %v1761 = vsel %vm362, %v1748, 0.0
      %v1762 = vadd.f32 %v1760, %v1761
      %v1763 = vsel %vm362, %v1749, 0.0
      %v1764 = vadd.f32 %v1762, %v1763
      %v1765 = vrot.slane %v1764, 4
      %v1766 = vadd.f32 %v1764, %v1765
      %v1767 = vrot.slane %v1766, 2
      %v1768 = vadd.f32 %v1766, %v1767
      %v1769 = vrot.slane %v1768, 1
      %v1770 = vadd.f32 %v1768, %v1769
      %1771 = vst.msk [vmem:[%s214] sm:$0x1] %vm1740, %v1770
      %v1772 = vpack.c.bf16 %v1712, %v1711
      %v1773 = vpack.c.bf16 %v1714, %v1713
      %v1774 = vpack.c.bf16 %v1716, %v1715
      %v1775 = vpack.c.bf16 %v1718, %v1717
      %v1780 = vunpack.c.l.b16 %v1772
      %v1781 = vunpack.c.h.b16 %v1772
      %v1782 = vunpack.c.l.b16 %v1773
      %v1783 = vunpack.c.h.b16 %v1773
      %v1784 = vunpack.c.l.b16 %v1774
      %v1785 = vunpack.c.h.b16 %v1774
      %v1786 = vunpack.c.l.b16 %v1775
      %v1787 = vunpack.c.h.b16 %v1775
      %v1788 = vpack.c.b16 %v1780, %v1780
      %v1789 = vpack.c.b16 %v1781, %v1781
      %v1790 = vpack.c.b16 %v1782, %v1782
      %v1791 = vpack.c.b16 %v1783, %v1783
      %v1792 = vpack.c.b16 %v1784, %v1784
      %v1793 = vpack.c.b16 %v1785, %v1785
      %v1794 = vpack.c.b16 %v1786, %v1786
      %v1795 = vpack.c.b16 %v1787, %v1787
      %vm1804 = vcmask 60416
      %1805 = vst.msk [vmem:[%s208] sm:$0xf] %vm1804, %v1788
      %1806 = vst.msk [vmem:[%s208 + $0x4] sm:$0xf] %vm1804, %v1789
      %1807 = vst.msk [vmem:[%s208 + $0x8] sm:$0xf] %vm1804, %v1790
      %1808 = vst.msk [vmem:[%s208 + $0xc] sm:$0xf] %vm1804, %v1791
      %1809 = vst.msk [vmem:[%s208 + $0x10] sm:$0xf] %vm1804, %v1792
      %1810 = vst.msk [vmem:[%s208 + $0x14] sm:$0xf] %vm1804, %v1793
      %1811 = vst.msk [vmem:[%s208 + $0x18] sm:$0xf] %vm1804, %v1794
      %1812 = vst.msk [vmem:[%s208 + $0x1c] sm:$0xf] %vm1804, %v1795
      %p1813 = scmp.lt.s32.totalorder %s16, 1
      %s1814 = scalar_select %p1813, %s16, 1
      %s1815 = smul.addr %s1814, 8
      %s1816 = smul.addr %s1815, 4
      %s1817 = scalar_lea.vmem %s2, %s1816
      %p1818 = scmp.lt.s32.totalorder %s16, 1
      %s1819 = scalar_select %p1818, %s16, 1
      %s1820 = scalar_lea.vmem %s3, %s1819
      %p1821 = scmp.lt.s32.totalorder %s16, 1
      %s1822 = scalar_select %p1821, %s16, 1
      %s1823 = scalar_lea.vmem %s4, %s1822
      // Predicated region
      $region29: #{_lambda_.11} parent=27 // pred_check
        %p1824 = pneg %p81
      $region30: #{_lambda_.11} parent=27 // pred_check_branch
        %1826 = sbr.rel (%p1824) target = $region32
      $region31: #{_lambda_.11} parent=27 // pred_region
        _
      $region32: #{_lambda_.11} parent=27 // pred_fallthru
        _
      // Predicated region
      $region33: #{_lambda_.11} parent=27 // pred_check
        %p1827 = pneg %p107
      $region34: #{_lambda_.11} parent=27 // pred_check_branch
        %1829 = sbr.rel (%p1827) target = $region36
      $region35: #{_lambda_.11} parent=27 // pred_region
        _
      $region36: #{_lambda_.11} parent=27 // pred_fallthru
        _
      // Predicated region
      $region37: #{_lambda_.11} parent=27 // pred_check
        %p1830 = pneg %p133
      $region38: #{_lambda_.11} parent=27 // pred_check_branch
        %1832 = sbr.rel (%p1830) target = $region40
      $region39: #{_lambda_.11} parent=27 // pred_region
        _
      $region40: #{_lambda_.11} parent=27 // pred_fallthru
        _
    $region28: #{_lambda_.11} parent=5 // pred_fallthru
      _
    %p1833 = scmp.le.s32.totalorder 2, %s11
    // Predicated region
    $region41: #{_lambda_.11} parent=5 // pred_check
      %p1834 = pneg %p1833
    $region42: #{_lambda_.11} parent=5 // pred_check_branch
      %1836 = sbr.rel (%p1834) target = $region44
    $region43: #{_lambda_.11} parent=5 // pred_region
      %s1837 = ssub.s32 %s11, 2
      // Predicated region
      $region45: #{_lambda_.11} parent=43 // pred_check
        %p1838 = pneg %p87
      $region46: #{_lambda_.11} parent=43 // pred_check_branch
        %1840 = sbr.rel (%p1838) target = $region48
      $region47: #{_lambda_.11} parent=43 // pred_region
        %p1841 = scmp.lt.s32.totalorder %s17, 1
        %s1842 = scalar_select %p1841, %s17, 1
        %s1843 = smul.addr %s1842, 8
        %s1844 = smul.addr %s1843, 4
        %s1845 = scalar_lea.vmem %s2, %s1844
      $region48: #{_lambda_.11} parent=43 // pred_fallthru
        _
      // Predicated region
      $region49: #{_lambda_.11} parent=43 // pred_check
        %p1846 = pneg %p113
      $region50: #{_lambda_.11} parent=43 // pred_check_branch
        %1848 = sbr.rel (%p1846) target = $region52
      $region51: #{_lambda_.11} parent=43 // pred_region
        %p1849 = scmp.lt.s32.totalorder %s17, 1
        %s1850 = scalar_select %p1849, %s17, 1
        %s1851 = scalar_lea.vmem %s3, %s1850
      $region52: #{_lambda_.11} parent=43 // pred_fallthru
        _
      // Predicated region
      $region53: #{_lambda_.11} parent=43 // pred_check
        %p1852 = pneg %p139
      $region54: #{_lambda_.11} parent=43 // pred_check_branch
        %1854 = sbr.rel (%p1852) target = $region56
      $region55: #{_lambda_.11} parent=43 // pred_region
        %p1855 = scmp.lt.s32.totalorder %s17, 1
        %s1856 = scalar_select %p1855, %s17, 1
        %s1857 = scalar_lea.vmem %s4, %s1856
      $region56: #{_lambda_.11} parent=43 // pred_fallthru
        _
    $region44: #{_lambda_.11} parent=5 // pred_fallthru
      _
  $region6: #{_lambda_.11} parent=0 // loop_footer
    %s15 = sadd.s32 1, %s11
  $region7: #{_lambda_.11} parent=0 // loop_footer_branch
    %10 = sbr.rel target = $region3
  $region8: #{_lambda_.11} parent=0 // loop_exit
    _

// kernel: _lambda_.13
$region0: #{_lambda_.13}
  #allocation0 [shape = 'u32[]', space=smem, size = 0x4, offset = 0x4, fixed_abs, tag = 'smem constant byte address 0x4 - core index']
  #allocation1 [shape = 'u32[144,128]{1,0:T(1,128)}', space=vmem, size = 0x12000, scoped, tag = 'internal scratch']
  %s0 = inlined_call_operand.vmem [shape: bf16[2,10,10,8], index: 0, kind: input, shape index: {}]
  %s1 = inlined_call_operand.vmem [shape: bf16[4,4,8,3], index: 1, kind: input, shape index: {}]
  %s2 = inlined_call_operand.vmem [shape: bf16[2,64,12], index: 2, kind: output, shape index: {0}]
  %s3 = inlined_call_operand.hbm [shape: f32[2,1,12], index: 3, kind: output, shape index: {1}]
  %s4 = inlined_call_operand.hbm [shape: f32[2,1,12], index: 4, kind: output, shape index: {2}]
  %5 = xla_tuple %s2, %s3, %s4
  %s6 = sld [smem:[#allocation0]]
  $region57: #{_lambda_.13} parent=0
    _
  %s8 = ssub.s32 1, %s6
  %s9 = scalar_select 0, %s8, %s6
  $region1: #{_lambda_.13} parent=0
    #allocation2 [shape = 'u8[1024]{0}', space=vmem, size = 0x400, scoped, tag = 'output window, operand 1']
    #allocation3 [shape = 's32[2]{0}', space=sflag, size = 0x8, scoped, tag = 'scoped memory for _lambda_.13']
    #allocation4 [shape = 'u8[1024]{0}', space=vmem, size = 0x400, scoped, tag = 'output window, operand 2']
    #allocation5 [shape = 's32[2]{0}', space=sflag, size = 0x8, scoped, tag = 'scoped memory for _lambda_.13']
    %10 = vsyncpa [#allocation3], 0
    %s11 = scalar_lea.sflag [#allocation3], 1
    %12 = vsyncpa %s11, 0
    %13 = vsyncpa [#allocation5], 0
    %s14 = scalar_lea.sflag [#allocation5], 1
    %15 = vsyncpa %s14, 0
    loop: start=0, step=1, limit=4
    $region2: #{_lambda_.13} parent=1 // loop_pre_header
      _
    $region3: #{_lambda_.13} parent=1 // loop_header
      %s17 = sphi 0, %s21
      %p18 = scmp.ge.s32.totalorder %s17, 4
      %s27 = sphi 0, %s29
      %s30 = sphi 0, %s27
      %s31 = sphi 0, %s30
      %s47 = sphi 0, %s31
      %s51 = sphi 0, %s51
      %s53 = sphi 0, %s51
      %s54 = sphi 0, %s53
      %s68 = sphi 0, %s54
      %s74 = sphi 0, %s76
      %s77 = sphi 0, %s74
      %s78 = sphi 0, %s77
      %s94 = sphi 0, %s78
      %s100 = sphi 0, %s102
      %s103 = sphi 0, %s100
      %s104 = sphi 0, %s103
      %s120 = sphi 0, %s104
      %s126 = sphi 0, %s128
      %s129 = sphi 0, %s126
      %s130 = sphi 0, %s129
      %s146 = sphi 0, %s130
    $region4: #{_lambda_.13} parent=1 // loop_header_branch
      %20 = sbr.rel (%p18) target = $region8
    $region5: #{_lambda_.13} parent=1 // loop_body
      %s22 = ssub.s32 %s17, 1
      %s23 = ssub.s32 %s17, 2
      %s24 = sadd.s32 %s17, 1
      %s25 = ssub.s32 %s17, %s24
      %p26 = scmp.eq.s32.totalorder %s25, 0
      %s28 = sadd.s32 %s27, 1
      %s29 = scalar_select %p26, %s27, %s28
      %p32 = pneg %p26
      %p33 = scmp.eq.s32.totalorder %s17, 1
      %p34 = por %p32, %p33
      %p35 = scmp.ne.s32.totalorder %s27, %s30
      %p36 = scmp.eq.s32.totalorder %s17, 0
      %p37 = por %p35, %p36
      %p38 = scmp.ne.s32.totalorder %s27, %s30
      %p39 = scmp.eq.s32.totalorder %s22, 1
      %p40 = por %p38, %p39
      %p41 = scmp.ne.s32.totalorder %s30, %s31
      %p42 = scmp.eq.s32.totalorder %s22, 0
      %p43 = por %p41, %p42
      %p44 = scmp.ne.s32.totalorder %s30, %s31
      %p45 = scmp.eq.s32.totalorder %s23, 1
      %p46 = por %p44, %p45
      %p48 = scmp.ne.s32.totalorder %s31, %s47
      %p49 = scmp.eq.s32.totalorder %s23, 0
      %p50 = por %p48, %p49
      %s52 = sadd.s32 %s51, 1
      %p55 = scmp.eq.s32.totalorder %s17, 1
      %p56 = scmp.ne.s32.totalorder %s51, %s53
      %p57 = scmp.eq.s32.totalorder %s17, 0
      %p58 = por %p56, %p57
      %p59 = scmp.ne.s32.totalorder %s51, %s53
      %p60 = scmp.eq.s32.totalorder %s22, 1
      %p61 = por %p59, %p60
      %p62 = scmp.ne.s32.totalorder %s53, %s54
      %p63 = scmp.eq.s32.totalorder %s22, 0
      %p64 = por %p62, %p63
      %p65 = scmp.ne.s32.totalorder %s53, %s54
      %p66 = scmp.eq.s32.totalorder %s23, 1
      %p67 = por %p65, %p66
      %p69 = scmp.ne.s32.totalorder %s54, %s68
      %p70 = scmp.eq.s32.totalorder %s23, 0
      %p71 = por %p69, %p70
      %s72 = ssub.s32 %s17, %s24
      %p73 = scmp.eq.s32.totalorder %s72, 0
      %s75 = sadd.s32 %s74, 1
      %s76 = scalar_select %p73, %s74, %s75
      %p79 = pneg %p73
      %p80 = scmp.eq.s32.totalorder %s17, 1
      %p81 = por %p79, %p80
      %p82 = scmp.ne.s32.totalorder %s74, %s77
      %p83 = scmp.eq.s32.totalorder %s17, 0
      %p84 = por %p82, %p83
      %p85 = scmp.ne.s32.totalorder %s74, %s77
      %p86 = scmp.eq.s32.totalorder %s22, 1
      %p87 = por %p85, %p86
      %p88 = scmp.ne.s32.totalorder %s77, %s78
      %p89 = scmp.eq.s32.totalorder %s22, 0
      %p90 = por %p88, %p89
      %p91 = scmp.ne.s32.totalorder %s77, %s78
      %p92 = scmp.eq.s32.totalorder %s23, 1
      %p93 = por %p91, %p92
      %p95 = scmp.ne.s32.totalorder %s78, %s94
      %p96 = scmp.eq.s32.totalorder %s23, 0
      %p97 = por %p95, %p96
      %s98 = ssub.s32 %s17, %s24
      %p99 = scmp.eq.s32.totalorder %s98, 0
      %s101 = sadd.s32 %s100, 1
      %s102 = scalar_select %p99, %s100, %s101
      %p105 = pneg %p99
      %p106 = scmp.eq.s32.totalorder %s17, 1
      %p107 = por %p105, %p106
      %p108 = scmp.ne.s32.totalorder %s100, %s103
      %p109 = scmp.eq.s32.totalorder %s17, 0
      %p110 = por %p108, %p109
      %p111 = scmp.ne.s32.totalorder %s100, %s103
      %p112 = scmp.eq.s32.totalorder %s22, 1
      %p113 = por %p111, %p112
      %p114 = scmp.ne.s32.totalorder %s103, %s104
      %p115 = scmp.eq.s32.totalorder %s22, 0
      %p116 = por %p114, %p115
      %p117 = scmp.ne.s32.totalorder %s103, %s104
      %p118 = scmp.eq.s32.totalorder %s23, 1
      %p119 = por %p117, %p118
      %p121 = scmp.ne.s32.totalorder %s104, %s120
      %p122 = scmp.eq.s32.totalorder %s23, 0
      %p123 = por %p121, %p122
      %s124 = ssub.s32 %s17, %s24
      %p125 = scmp.eq.s32.totalorder %s124, 0
      %s127 = sadd.s32 %s126, 1
      %s128 = scalar_select %p125, %s126, %s127
      %p131 = pneg %p125
      %p132 = scmp.eq.s32.totalorder %s17, 1
      %p133 = por %p131, %p132
      %p134 = scmp.ne.s32.totalorder %s126, %s129
      %p135 = scmp.eq.s32.totalorder %s17, 0
      %p136 = por %p134, %p135
      %p137 = scmp.ne.s32.totalorder %s126, %s129
      %p138 = scmp.eq.s32.totalorder %s22, 1
      %p139 = por %p137, %p138
      %p140 = scmp.ne.s32.totalorder %s129, %s130
      %p141 = scmp.eq.s32.totalorder %s22, 0
      %p142 = por %p140, %p141
      %p143 = scmp.ne.s32.totalorder %s129, %s130
      %p144 = scmp.eq.s32.totalorder %s23, 1
      %p145 = por %p143, %p144
      %p147 = scmp.ne.s32.totalorder %s130, %s146
      %p148 = scmp.eq.s32.totalorder %s23, 0
      %p149 = por %p147, %p148
      %p150 = scmp.le.s32.totalorder 1, %s17
      %p151 = scmp.lt.s32.totalorder %s17, 3
      %p152 = pnand %p150, %p151
      %p153 = pneg %p152
      // Predicated region
      $region9: #{_lambda_.13} parent=5 // pred_check
        _
      $region10: #{_lambda_.13} parent=5 // pred_check_branch
        %155 = sbr.rel (%p152) target = $region12
      $region11: #{_lambda_.13} parent=5 // pred_region
        %s156 = ssub.s32 %s17, 1
        // Predicated region
        $region13: #{_lambda_.13} parent=11 // pred_check
          %p157 = pneg %p64
        $region14: #{_lambda_.13} parent=11 // pred_check_branch
          %159 = sbr.rel (%p157) target = $region16
        $region15: #{_lambda_.13} parent=11 // pred_region
          _
        $region16: #{_lambda_.13} parent=11 // pred_fallthru
          _
      $region12: #{_lambda_.13} parent=5 // pred_fallthru
        _
      %p160 = scmp.lt.s32.totalorder %s17, 2
      // Predicated region
      $region17: #{_lambda_.13} parent=5 // pred_check
        %p161 = pneg %p160
      $region18: #{_lambda_.13} parent=5 // pred_check_branch
        %163 = sbr.rel (%p161) target = $region20
      $region19: #{_lambda_.13} parent=5 // pred_region
        // Predicated region
        $region21: #{_lambda_.13} parent=19 // pred_check
          %p164 = pneg %p37
        $region22: #{_lambda_.13} parent=19 // pred_check_branch
          %166 = sbr.rel (%p164) target = $region24
        $region23: #{_lambda_.13} parent=19 // pred_region
          %p167 = scmp.lt.s32.totalorder %s17, 1
          %s168 = scalar_select %p167, %s17, 1
          %s169 = smul.addr %s168, 20
          %s170 = smul.addr %s169, 4
          %s171 = scalar_lea.vmem %s0, %s170
        $region24: #{_lambda_.13} parent=19 // pred_fallthru
          _
      $region20: #{_lambda_.13} parent=5 // pred_fallthru
        _
      %p172 = scmp.le.s32.totalorder 1, %s17
      %p173 = scmp.lt.s32.totalorder %s17, 3
      %p174 = pnand %p172, %p173
      %p175 = pneg %p174
      // Predicated region
      $region25: #{_lambda_.13} parent=5 // pred_check
        _
      $region26: #{_lambda_.13} parent=5 // pred_check_branch
        %177 = sbr.rel (%p174) target = $region28
      $region27: #{_lambda_.13} parent=5 // pred_region
        %s178 = ssub.s32 %s17, 1
        %p179 = scmp.lt.s32.totalorder %s22, 1
        %s180 = scalar_select %p179, %s22, 1
        %s181 = smul.addr %s180, 20
        %s182 = smul.addr %s181, 4
        %s183 = scalar_lea.vmem %s0, %s182
        %p184 = pneg %p43
        %p185 = pneg %p40
        %p186 = pneg %p64
        %p187 = pneg %p61
        %p188 = pneg %p90
        %p189 = pneg %p87
        %p190 = scmp.lt.s32.totalorder %s22, 1
        %s191 = scalar_select %p190, %s22, 1
        %s192 = smul.addr %s191, 8
        %s193 = smul.addr %s192, 4
        %s194 = scalar_lea.vmem %s2, %s193
        %p195 = pneg %p116
        %p196 = pneg %p113
        %s197 = sand.u32 %s103, 1
        %s198 = scalar_lea.sflag [#allocation3], %s197
        %s199 = sand.u32 %s103, 1
        %s200 = scalar_lea.vmem [#allocation2], %s199
        %p201 = pneg %p142
        %p202 = pneg %p139
        %s203 = sand.u32 %s129, 1
        %s204 = scalar_lea.sflag [#allocation5], %s203
        %s205 = sand.u32 %s129, 1
        %s206 = scalar_lea.vmem [#allocation4], %s205
        %p207 = scmp.lt.s32.totalorder %s22, 1
        %s208 = scalar_select %p207, %s22, 1
        %s209 = smul.addr %s208, 20
        %s210 = smul.addr %s209, 4
        %s211 = scalar_lea.vmem %s0, %s210
        %p212 = scmp.lt.s32.totalorder %s22, 1
        %s213 = scalar_select %p212, %s22, 1
        %s214 = smul.addr %s213, 8
        %s215 = smul.addr %s214, 4
        %s216 = scalar_lea.vmem %s2, %s215
        %v218 = vld [vmem:[%s211] sm:$0xf]
        %v219 = vld [vmem:[%s211 + $0x8] sm:$0xf]
        %v220 = vld [vmem:[%s211 + $0x10] sm:$0xf]
        %v221 = vld [vmem:[%s211 + $0x18] sm:$0xf]
        %v222 = vld [vmem:[%s211 + $0x20] sm:$0xf]
        %v223 = vld [vmem:[%s211 + $0x28] sm:$0xf]
        %v224 = vld [vmem:[%s211 + $0x30] sm:$0xf]
        %v225 = vld [vmem:[%s211 + $0x38] sm:$0xf]
        %v226 = vld [vmem:[%s1] sm:$0xf]
        %v227 = vld [vmem:[%s211 + $0x4] sm:$0x1]
        %v228 = vld [vmem:[%s211 + $0xc] sm:$0x1]
        %v229 = vld [vmem:[%s211 + $0x14] sm:$0x1]
        %v230 = vld [vmem:[%s211 + $0x1c] sm:$0x1]
        %v231 = vld [vmem:[%s211 + $0x24] sm:$0x1]
        %v232 = vld [vmem:[%s211 + $0x2c] sm:$0x1]
        %v233 = vld [vmem:[%s211 + $0x34] sm:$0x1]
        %v234 = vld [vmem:[%s211 + $0x3c] sm:$0x1]
        %vm235 = vsmask.f32 3328
        %vm236 = vsmask.f32 7440
        %vm237 = vmor %vm235, %vm236
        %v239 = vshrl.u32 %v218, 16
        %v241 = vrot.slane %v239, 4
        %v242 = vshll.u32 %v218, 16
        %v244 = vrot.slane %v242, 5
        %v245 = vor.u32 %v241, %v244
        %v246 = vrot.slane %v245, 4
        %v248 = vshll.u32 %v227, 16
        %v250 = vrot.slane %v248, 5
        %v251 = vsel %vm237, %v246, %v250
        %v253 = vshrl.u32 %v219, 16
        %v255 = vrot.slane %v253, 4
        %v256 = vshll.u32 %v219, 16
        %v258 = vrot.slane %v256, 5
        %v259 = vor.u32 %v255, %v258
        %v260 = vrot.slane %v259, 4
        %v262 = vshll.u32 %v228, 16
        %v264 = vrot.slane %v262, 5
        %v265 = vsel %vm237, %v260, %v264
        %v267 = vshrl.u32 %v220, 16
        %v269 = vrot.slane %v267, 4
        %v270 = vshll.u32 %v220, 16
        %v272 = vrot.slane %v270, 5
        %v273 = vor.u32 %v269, %v272
        %v274 = vrot.slane %v273, 4
        %v276 = vshll.u32 %v229, 16
        %v278 = vrot.slane %v276, 5
        %v279 = vsel %vm237, %v274, %v278
        %v281 = vshrl.u32 %v221, 16
        %v283 = vrot.slane %v281, 4
        %v284 = vshll.u32 %v221, 16
        %v286 = vrot.slane %v284, 5
        %v287 = vor.u32 %v283, %v286
        %v288 = vrot.slane %v287, 4
        %v290 = vshll.u32 %v230, 16
        %v292 = vrot.slane %v290, 5
        %v293 = vsel %vm237, %v288, %v292
        %v295 = vshrl.u32 %v222, 16
        %v297 = vrot.slane %v295, 4
        %v298 = vshll.u32 %v222, 16
        %v300 = vrot.slane %v298, 5
        %v301 = vor.u32 %v297, %v300
        %v302 = vrot.slane %v301, 4
        %v304 = vshll.u32 %v231, 16
        %v306 = vrot.slane %v304, 5
        %v307 = vsel %vm237, %v302, %v306
        %v309 = vshrl.u32 %v223, 16
        %v311 = vrot.slane %v309, 4
        %v312 = vshll.u32 %v223, 16
        %v314 = vrot.slane %v312, 5
        %v315 = vor.u32 %v311, %v314
        %v316 = vrot.slane %v315, 4
        %v318 = vshll.u32 %v232, 16
        %v320 = vrot.slane %v318, 5
        %v321 = vsel %vm237, %v316, %v320
        %v323 = vshrl.u32 %v224, 16
        %v325 = vrot.slane %v323, 4
        %v326 = vshll.u32 %v224, 16
        %v328 = vrot.slane %v326, 5
        %v329 = vor.u32 %v325, %v328
        %v330 = vrot.slane %v329, 4
        %v332 = vshll.u32 %v233, 16
        %v334 = vrot.slane %v332, 5
        %v335 = vsel %vm237, %v330, %v334
        %v337 = vshrl.u32 %v225, 16
        %v339 = vrot.slane %v337, 4
        %v340 = vshll.u32 %v225, 16
        %v342 = vrot.slane %v340, 5
        %v343 = vor.u32 %v339, %v342
        %v344 = vrot.slane %v343, 4
        %v346 = vshll.u32 %v234, 16
        %v348 = vrot.slane %v346, 5
        %v349 = vsel %vm237, %v344, %v348
        %s350 = scalar_lea.vmem %s1, 4
        %v351 = vld [vmem:[%s350] sm:$0xf]
        %v352 = vunpack.c.l.b16 %v251
        %v353 = vunpack.c.l.b16 %v265
        %v354 = vunpack.c.l.b16 %v279
        %v355 = vunpack.c.l.b16 %v293
        %v356 = vunpack.c.l.b16 %v307
        %v357 = vunpack.c.l.b16 %v321
        %v358 = vunpack.c.l.b16 %v335
        %v359 = vunpack.c.l.b16 %v349
        %v360 = vpack.c.b16 %v353, %v352
        %v361 = vpack.c.b16 %v355, %v354
        %v362 = vpack.c.b16 %v357, %v356
        %v363 = vpack.c.b16 %v359, %v358
        %vm364 = vcmask 64512
        %v366 = vsel %vm364, %v360, 0
        %v369 = vsel %vm364, %v361, 0
        %v372 = vsel %vm364, %v362, 0
        %v375 = vsel %vm364, %v363, 0
        %vm377 = vcmask 1043456
        %v379 = vsel %vm377, %v351, 0
        %381 = vmatprep.subr.bf16.mxu0 0
        %382 = vmatpush1.bf16.msra.mxu0 0
        %383 = vmatprep.subr.bf16.mxu0 0
        %384 = vmatpush1.bf16.msra.mxu0 0
        %385 = vmatprep.subr.bf16.mxu0 0
        %386 = vmatpush1.bf16.msra.mxu0 0
        %387 = vmatprep.subr.bf16.mxu0 0
        %388 = vmatpush1.bf16.msra.mxu0 0
        %389 = vmatprep.subr.bf16.mxu0 0
        %390 = vmatpush1.bf16.msra.mxu0 0
        %391 = vmatprep.subr.bf16.mxu0 0
        %392 = vmatpush1.bf16.msra.mxu0 0
        %393 = vmatprep.subr.bf16.mxu0 0
        %394 = vmatpush1.bf16.msra.mxu0 0
        %395 = vmatprep.subr.bf16.mxu0 0
        %396 = vmatpush1.bf16.msra.mxu0 %v379
        %397 = vmatprep.subr.bf16.mxu0 0
        %398 = vmatpush2.bf16.msra.mxu0 0
        %399 = vmatprep.subr.bf16.mxu0 0
        %400 = vmatpush2.bf16.msra.mxu0 0
        %401 = vmatprep.subr.bf16.mxu0 0
        %402 = vmatpush2.bf16.msra.mxu0 0
        %403 = vmatprep.subr.bf16.mxu0 0
        %404 = vmatpush2.bf16.msra.mxu0 0
        %405 = vmatprep.subr.bf16.mxu0 0
        %406 = vmatpush2.bf16.msra.mxu0 0
        %407 = vmatprep.subr.bf16.mxu0 0
        %408 = vmatpush2.bf16.msra.mxu0 0
        %409 = vmatprep.subr.bf16.mxu0 0
        %410 = vmatpush2.bf16.msra.mxu0 0
        %411 = vmatprep.subr.bf16.mxu0 0
        %412 = vmatpush2.bf16.msra.mxu0 0
        %413 = vmatprep.mubr.bf16.mxu0 0
        %414 = vmatmul.mubr.bf16.gmra.mxu0 %v366
        %v415 = vpop.f32.mrf.mxu0
        %v416 = vadd.f32 0.0, %v415
        %v417 = vpop.f32.mrf.mxu0
        %v418 = vpop.f32.mrf.mxu0
        %v419 = vadd.f32 0.0, %v418
        %v420 = vpop.f32.mrf.mxu0
        %421 = vmatprep.mubr.bf16.mxu0 0
        %422 = vmatmul.mubr.bf16.gmra.mxu0 %v369
        %v423 = vpop.f32.mrf.mxu0
        %v424 = vadd.f32 0.0, %v423
        %v425 = vpop.f32.mrf.mxu0
        %v426 = vpop.f32.mrf.mxu0
        %v427 = vadd.f32 0.0, %v426
        %v428 = vpop.f32.mrf.mxu0
        %429 = vmatprep.mubr.bf16.mxu0 0
        %430 = vmatmul.mubr.bf16.gmra.mxu0 %v372
        %v431 = vpop.f32.mrf.mxu0
        %v432 = vadd.f32 0.0, %v431
        %v433 = vpop.f32.mrf.mxu0
        %v434 = vpop.f32.mrf.mxu0
        %v435 = vadd.f32 0.0, %v434
        %v436 = vpop.f32.mrf.mxu0
        %437 = vmatprep.mubr.bf16.mxu0 0
        %438 = vmatmul.mubr.bf16.gmra.mxu0 %v375
        %v439 = vpop.f32.mrf.mxu0
        %v440 = vadd.f32 0.0, %v439
        %v441 = vpop.f32.mrf.mxu0
        %v442 = vpop.f32.mrf.mxu0
        %v443 = vadd.f32 0.0, %v442
        %v444 = vpop.f32.mrf.mxu0
        %445 = vdwg.mxu0
        %v454 = vunpack.c.l.b16 %v218
        %v455 = vunpack.c.l.b16 %v219
        %v456 = vunpack.c.l.b16 %v220
        %v457 = vunpack.c.l.b16 %v221
        %v458 = vunpack.c.l.b16 %v222
        %v459 = vunpack.c.l.b16 %v223
        %v460 = vunpack.c.l.b16 %v224
        %v461 = vunpack.c.l.b16 %v225
        %v462 = vpack.c.b16 %v455, %v454
        %v463 = vpack.c.b16 %v457, %v456
        %v464 = vpack.c.b16 %v459, %v458
        %v465 = vpack.c.b16 %v461, %v460
        %v467 = vsel %vm364, %v462, 0
        %v470 = vsel %vm364, %v463, 0
        %v473 = vsel %vm364, %v464, 0
        %v476 = vsel %vm364, %v465, 0
        %v479 = vsel %vm377, %v226, 0
        %481 = vmatprep.subr.bf16.mxu0 0
        %482 = vmatpush1.bf16.msra.mxu0 0
        %483 = vmatprep.subr.bf16.mxu0 0
        %484 = vmatpush1.bf16.msra.mxu0 0
        %485 = vmatprep.subr.bf16.mxu0 0
        %486 = vmatpush1.bf16.msra.mxu0 0
        %487 = vmatprep.subr.bf16.mxu0 0
        %488 = vmatpush1.bf16.msra.mxu0 0
        %489 = vmatprep.subr.bf16.mxu0 0
        %490 = vmatpush1.bf16.msra.mxu0 0
        %491 = vmatprep.subr.bf16.mxu0 0
        %492 = vmatpush1.bf16.msra.mxu0 0
        %493 = vmatprep.subr.bf16.mxu0 0
        %494 = vmatpush1.bf16.msra.mxu0 0
        %495 = vmatprep.subr.bf16.mxu0 0
        %496 = vmatpush1.bf16.msra.mxu0 %v479
        %497 = vmatprep.subr.bf16.mxu0 0
        %498 = vmatpush2.bf16.msra.mxu0 0
        %499 = vmatprep.subr.bf16.mxu0 0
        %500 = vmatpush2.bf16.msra.mxu0 0
        %501 = vmatprep.subr.bf16.mxu0 0
        %502 = vmatpush2.bf16.msra.mxu0 0
        %503 = vmatprep.subr.bf16.mxu0 0
        %504 = vmatpush2.bf16.msra.mxu0 0
        %505 = vmatprep.subr.bf16.mxu0 0
        %506 = vmatpush2.bf16.msra.mxu0 0
        %507 = vmatprep.subr.bf16.mxu0 0
        %508 = vmatpush2.bf16.msra.mxu0 0
        %509 = vmatprep.subr.bf16.mxu0 0
        %510 = vmatpush2.bf16.msra.mxu0 0
        %511 = vmatprep.subr.bf16.mxu0 0
        %512 = vmatpush2.bf16.msra.mxu0 0
        %513 = vmatprep.mubr.bf16.mxu0 0
        %514 = vmatmul.mubr.bf16.gmra.mxu0 %v467
        %v515 = vpop.f32.mrf.mxu0
        %v516 = vadd.f32 %v416, %v515
        %v517 = vpop.f32.mrf.mxu0
        %v518 = vpop.f32.mrf.mxu0
        %v519 = vadd.f32 %v419, %v518
        %v520 = vpop.f32.mrf.mxu0
        %521 = vmatprep.mubr.bf16.mxu0 0
        %522 = vmatmul.mubr.bf16.gmra.mxu0 %v470
        %v523 = vpop.f32.mrf.mxu0
        %v524 = vadd.f32 %v424, %v523
        %v525 = vpop.f32.mrf.mxu0
        %v526 = vpop.f32.mrf.mxu0
        %v527 = vadd.f32 %v427, %v526
        %v528 = vpop.f32.mrf.mxu0
        %529 = vmatprep.mubr.bf16.mxu0 0
        %530 = vmatmul.mubr.bf16.gmra.mxu0 %v473
        %v531 = vpop.f32.mrf.mxu0
        %v532 = vadd.f32 %v432, %v531
        %v533 = vpop.f32.mrf.mxu0
        %v534 = vpop.f32.mrf.mxu0
        %v535 = vadd.f32 %v435, %v534
        %v536 = vpop.f32.mrf.mxu0
        %537 = vmatprep.mubr.bf16.mxu0 0
        %538 = vmatmul.mubr.bf16.gmra.mxu0 %v476
        %v539 = vpop.f32.mrf.mxu0
        %v540 = vadd.f32 %v440, %v539
        %v541 = vpop.f32.mrf.mxu0
        %v542 = vpop.f32.mrf.mxu0
        %v543 = vadd.f32 %v443, %v542
        %v544 = vpop.f32.mrf.mxu0
        %545 = vdwg.mxu0
        %s546 = scalar_lea.vmem %s211, 8
        %v547 = vld [vmem:[%s546] sm:$0xf]
        %v548 = vld [vmem:[%s546 + $0x8] sm:$0xf]
        %v549 = vld [vmem:[%s546 + $0x10] sm:$0xf]
        %v550 = vld [vmem:[%s546 + $0x18] sm:$0xf]
        %v551 = vld [vmem:[%s546 + $0x20] sm:$0xf]
        %v552 = vld [vmem:[%s546 + $0x28] sm:$0xf]
        %v553 = vld [vmem:[%s546 + $0x30] sm:$0xf]
        %v554 = vld [vmem:[%s546 + $0x38] sm:$0xf]
        %s555 = scalar_lea.vmem %s1, 8
        %v556 = vld [vmem:[%s555] sm:$0xf]
        %v565 = vunpack.c.l.b16 %v547
        %v566 = vunpack.c.l.b16 %v548
        %v567 = vunpack.c.l.b16 %v549
        %v568 = vunpack.c.l.b16 %v550
        %v569 = vunpack.c.l.b16 %v551
        %v570 = vunpack.c.l.b16 %v552
        %v571 = vunpack.c.l.b16 %v553
        %v572 = vunpack.c.l.b16 %v554
        %v573 = vpack.c.b16 %v566, %v565
        %v574 = vpack.c.b16 %v568, %v567
        %v575 = vpack.c.b16 %v570, %v569
        %v576 = vpack.c.b16 %v572, %v571
        %v578 = vsel %vm364, %v573, 0
        %v581 = vsel %vm364, %v574, 0
        %v584 = vsel %vm364, %v575, 0
        %v587 = vsel %vm364, %v576, 0
        %v590 = vsel %vm377, %v556, 0
        %592 = vmatprep.subr.bf16.mxu0 0
        %593 = vmatpush1.bf16.msra.mxu0 0
        %594 = vmatprep.subr.bf16.mxu0 0
        %595 = vmatpush1.bf16.msra.mxu0 0
        %596 = vmatprep.subr.bf16.mxu0 0
        %597 = vmatpush1.bf16.msra.mxu0 0
        %598 = vmatprep.subr.bf16.mxu0 0
        %599 = vmatpush1.bf16.msra.mxu0 0
        %600 = vmatprep.subr.bf16.mxu0 0
        %601 = vmatpush1.bf16.msra.mxu0 0
        %602 = vmatprep.subr.bf16.mxu0 0
        %603 = vmatpush1.bf16.msra.mxu0 0
        %604 = vmatprep.subr.bf16.mxu0 0
        %605 = vmatpush1.bf16.msra.mxu0 0
        %606 = vmatprep.subr.bf16.mxu0 0
        %607 = vmatpush1.bf16.msra.mxu0 %v590
        %608 = vmatprep.subr.bf16.mxu0 0
        %609 = vmatpush2.bf16.msra.mxu0 0
        %610 = vmatprep.subr.bf16.mxu0 0
        %611 = vmatpush2.bf16.msra.mxu0 0
        %612 = vmatprep.subr.bf16.mxu0 0
        %613 = vmatpush2.bf16.msra.mxu0 0
        %614 = vmatprep.subr.bf16.mxu0 0
        %615 = vmatpush2.bf16.msra.mxu0 0
        %616 = vmatprep.subr.bf16.mxu0 0
        %617 = vmatpush2.bf16.msra.mxu0 0
        %618 = vmatprep.subr.bf16.mxu0 0
        %619 = vmatpush2.bf16.msra.mxu0 0
        %620 = vmatprep.subr.bf16.mxu0 0
        %621 = vmatpush2.bf16.msra.mxu0 0
        %622 = vmatprep.subr.bf16.mxu0 0
        %623 = vmatpush2.bf16.msra.mxu0 0
        %624 = vmatprep.mubr.bf16.mxu0 0
        %625 = vmatmul.mubr.bf16.gmra.mxu0 %v578
        %v626 = vpop.f32.mrf.mxu0
        %v627 = vadd.f32 0.0, %v626
        %v628 = vpop.f32.mrf.mxu0
        %v629 = vpop.f32.mrf.mxu0
        %v630 = vadd.f32 0.0, %v629
        %v631 = vpop.f32.mrf.mxu0
        %632 = vmatprep.mubr.bf16.mxu0 0
        %633 = vmatmul.mubr.bf16.gmra.mxu0 %v581
        %v634 = vpop.f32.mrf.mxu0
        %v635 = vadd.f32 0.0, %v634
        %v636 = vpop.f32.mrf.mxu0
        %v637 = vpop.f32.mrf.mxu0
        %v638 = vadd.f32 0.0, %v637
        %v639 = vpop.f32.mrf.mxu0
        %640 = vmatprep.mubr.bf16.mxu0 0
        %641 = vmatmul.mubr.bf16.gmra.mxu0 %v584
        %v642 = vpop.f32.mrf.mxu0
        %v643 = vadd.f32 0.0, %v642
        %v644 = vpop.f32.mrf.mxu0
        %v645 = vpop.f32.mrf.mxu0
        %v646 = vadd.f32 0.0, %v645
        %v647 = vpop.f32.mrf.mxu0
        %648 = vmatprep.mubr.bf16.mxu0 0
        %649 = vmatmul.mubr.bf16.gmra.mxu0 %v587
        %v650 = vpop.f32.mrf.mxu0
        %v651 = vadd.f32 0.0, %v650
        %v652 = vpop.f32.mrf.mxu0
        %v653 = vpop.f32.mrf.mxu0
        %v654 = vadd.f32 0.0, %v653
        %v655 = vpop.f32.mrf.mxu0
        %656 = vdwg.mxu0
        %v657 = vadd.f32 %v516, %v627
        %v658 = vadd.f32 %v519, %v630
        %v659 = vadd.f32 %v524, %v635
        %v660 = vadd.f32 %v527, %v638
        %v661 = vadd.f32 %v532, %v643
        %v662 = vadd.f32 %v535, %v646
        %v663 = vadd.f32 %v540, %v651
        %v664 = vadd.f32 %v543, %v654
        %v665 = vld [vmem:[%s546] sm:$0xf]
        %v666 = vld [vmem:[%s546 + $0x4] sm:$0x1]
        %v667 = vld [vmem:[%s546 + $0x8] sm:$0xf]
        %v668 = vld [vmem:[%s546 + $0xc] sm:$0x1]
        %v669 = vld [vmem:[%s546 + $0x10] sm:$0xf]
        %v670 = vld [vmem:[%s546 + $0x14] sm:$0x1]
        %v671 = vld [vmem:[%s546 + $0x18] sm:$0xf]
        %v672 = vld [vmem:[%s546 + $0x1c] sm:$0x1]
        %v673 = vld [vmem:[%s546 + $0x20] sm:$0xf]
        %v674 = vld [vmem:[%s546 + $0x24] sm:$0x1]
        %v675 = vld [vmem:[%s546 + $0x28] sm:$0xf]
        %v676 = vld [vmem:[%s546 + $0x2c] sm:$0x1]
        %v677 = vld [vmem:[%s546 + $0x30] sm:$0xf]
        %v678 = vld [vmem:[%s546 + $0x34] sm:$0x1]
        %v679 = vld [vmem:[%s546 + $0x38] sm:$0xf]
        %v680 = vld [vmem:[%s546 + $0x3c] sm:$0x1]
        %v682 = vshrl.u32 %v665, 16
        %v684 = vrot.slane %v682, 4
        %v685 = vshll.u32 %v665, 16
        %v687 = vrot.slane %v685, 5
        %v688 = vor.u32 %v684, %v687
        %v689 = vrot.slane %v688, 4
        %v691 = vshll.u32 %v666, 16
        %v693 = vrot.slane %v691, 5
        %v694 = vsel %vm237, %v689, %v693
        %v696 = vshrl.u32 %v667, 16
        %v698 = vrot.slane %v696, 4
        %v699 = vshll.u32 %v667, 16
        %v701 = vrot.slane %v699, 5
        %v702 = vor.u32 %v698, %v701
        %v703 = vrot.slane %v702, 4
        %v705 = vshll.u32 %v668, 16
        %v707 = vrot.slane %v705, 5
        %v708 = vsel %vm237, %v703, %v707
        %v710 = vshrl.u32 %v669, 16
        %v712 = vrot.slane %v710, 4
        %v713 = vshll.u32 %v669, 16
        %v715 = vrot.slane %v713, 5
        %v716 = vor.u32 %v712, %v715
        %v717 = vrot.slane %v716, 4
        %v719 = vshll.u32 %v670, 16
        %v721 = vrot.slane %v719, 5
        %v722 = vsel %vm237, %v717, %v721
        %v724 = vshrl.u32 %v671, 16
        %v726 = vrot.slane %v724, 4
        %v727 = vshll.u32 %v671, 16
        %v729 = vrot.slane %v727, 5
        %v730 = vor.u32 %v726, %v729
        %v731 = vrot.slane %v730, 4
        %v733 = vshll.u32 %v672, 16
        %v735 = vrot.slane %v733, 5
        %v736 = vsel %vm237, %v731, %v735
        %v738 = vshrl.u32 %v673, 16
        %v740 = vrot.slane %v738, 4
        %v741 = vshll.u32 %v673, 16
        %v743 = vrot.slane %v741, 5
        %v744 = vor.u32 %v740, %v743
        %v745 = vrot.slane %v744, 4
        %v747 = vshll.u32 %v674, 16
        %v749 = vrot.slane %v747, 5
        %v750 = vsel %vm237, %v745, %v749
        %v752 = vshrl.u32 %v675, 16
        %v754 = vrot.slane %v752, 4
        %v755 = vshll.u32 %v675, 16
        %v757 = vrot.slane %v755, 5
        %v758 = vor.u32 %v754, %v757
        %v759 = vrot.slane %v758, 4
        %v761 = vshll.u32 %v676, 16
        %v763 = vrot.slane %v761, 5
        %v764 = vsel %vm237, %v759, %v763
        %v766 = vshrl.u32 %v677, 16
        %v768 = vrot.slane %v766, 4
        %v769 = vshll.u32 %v677, 16
        %v771 = vrot.slane %v769, 5
        %v772 = vor.u32 %v768, %v771
        %v773 = vrot.slane %v772, 4
        %v775 = vshll.u32 %v678, 16
        %v777 = vrot.slane %v775, 5
        %v778 = vsel %vm237, %v773, %v777
        %v780 = vshrl.u32 %v679, 16
        %v782 = vrot.slane %v780, 4
        %v783 = vshll.u32 %v679, 16
        %v785 = vrot.slane %v783, 5
        %v786 = vor.u32 %v782, %v785
        %v787 = vrot.slane %v786, 4
        %v789 = vshll.u32 %v680, 16
        %v791 = vrot.slane %v789, 5
        %v792 = vsel %vm237, %v787, %v791
        %s793 = scalar_lea.vmem %s1, 12
        %v794 = vld [vmem:[%s793] sm:$0xf]
        %v795 = vunpack.c.l.b16 %v694
        %v796 = vunpack.c.l.b16 %v708
        %v797 = vunpack.c.l.b16 %v722
        %v798 = vunpack.c.l.b16 %v736
        %v799 = vunpack.c.l.b16 %v750
        %v800 = vunpack.c.l.b16 %v764
        %v801 = vunpack.c.l.b16 %v778
        %v802 = vunpack.c.l.b16 %v792
        %v803 = vpack.c.b16 %v796, %v795
        %v804 = vpack.c.b16 %v798, %v797
        %v805 = vpack.c.b16 %v800, %v799
        %v806 = vpack.c.b16 %v802, %v801
        %v808 = vsel %vm364, %v803, 0
        %v811 = vsel %vm364, %v804, 0
        %v814 = vsel %vm364, %v805, 0
        %v817 = vsel %vm364, %v806, 0
        %v820 = vsel %vm377, %v794, 0
        %822 = vmatprep.subr.bf16.mxu0 0
        %823 = vmatpush1.bf16.msra.mxu0 0
        %824 = vmatprep.subr.bf16.mxu0 0
        %825 = vmatpush1.bf16.msra.mxu0 0
        %826 = vmatprep.subr.bf16.mxu0 0
        %827 = vmatpush1.bf16.msra.mxu0 0
        %828 = vmatprep.subr.bf16.mxu0 0
        %829 = vmatpush1.bf16.msra.mxu0 0
        %830 = vmatprep.subr.bf16.mxu0 0
        %831 = vmatpush1.bf16.msra.mxu0 0
        %832 = vmatprep.subr.bf16.mxu0 0
        %833 = vmatpush1.bf16.msra.mxu0 0
        %834 = vmatprep.subr.bf16.mxu0 0
        %835 = vmatpush1.bf16.msra.mxu0 0
        %836 = vmatprep.subr.bf16.mxu0 0
        %837 = vmatpush1.bf16.msra.mxu0 %v820
        %838 = vmatprep.subr.bf16.mxu0 0
        %839 = vmatpush2.bf16.msra.mxu0 0
        %840 = vmatprep.subr.bf16.mxu0 0
        %841 = vmatpush2.bf16.msra.mxu0 0
        %842 = vmatprep.subr.bf16.mxu0 0
        %843 = vmatpush2.bf16.msra.mxu0 0
        %844 = vmatprep.subr.bf16.mxu0 0
        %845 = vmatpush2.bf16.msra.mxu0 0
        %846 = vmatprep.subr.bf16.mxu0 0
        %847 = vmatpush2.bf16.msra.mxu0 0
        %848 = vmatprep.subr.bf16.mxu0 0
        %849 = vmatpush2.bf16.msra.mxu0 0
        %850 = vmatprep.subr.bf16.mxu0 0
        %851 = vmatpush2.bf16.msra.mxu0 0
        %852 = vmatprep.subr.bf16.mxu0 0
        %853 = vmatpush2.bf16.msra.mxu0 0
        %854 = vmatprep.mubr.bf16.mxu0 0
        %855 = vmatmul.mubr.bf16.gmra.mxu0 %v808
        %v856 = vpop.f32.mrf.mxu0
        %v857 = vadd.f32 0.0, %v856
        %v858 = vpop.f32.mrf.mxu0
        %v859 = vpop.f32.mrf.mxu0
        %v860 = vadd.f32 0.0, %v859
        %v861 = vpop.f32.mrf.mxu0
        %862 = vmatprep.mubr.bf16.mxu0 0
        %863 = vmatmul.mubr.bf16.gmra.mxu0 %v811
        %v864 = vpop.f32.mrf.mxu0
        %v865 = vadd.f32 0.0, %v864
        %v866 = vpop.f32.mrf.mxu0
        %v867 = vpop.f32.mrf.mxu0
        %v868 = vadd.f32 0.0, %v867
        %v869 = vpop.f32.mrf.mxu0
        %870 = vmatprep.mubr.bf16.mxu0 0
        %871 = vmatmul.mubr.bf16.gmra.mxu0 %v814
        %v872 = vpop.f32.mrf.mxu0
        %v873 = vadd.f32 0.0, %v872
        %v874 = vpop.f32.mrf.mxu0
        %v875 = vpop.f32.mrf.mxu0
        %v876 = vadd.f32 0.0, %v875
        %v877 = vpop.f32.mrf.mxu0
        %878 = vmatprep.mubr.bf16.mxu0 0
        %879 = vmatmul.mubr.bf16.gmra.mxu0 %v817
        %v880 = vpop.f32.mrf.mxu0
        %v881 = vadd.f32 0.0, %v880
        %v882 = vpop.f32.mrf.mxu0
        %v883 = vpop.f32.mrf.mxu0
        %v884 = vadd.f32 0.0, %v883
        %v885 = vpop.f32.mrf.mxu0
        %886 = vdwg.mxu0
        %v887 = vadd.f32 %v657, %v857
        %v888 = vadd.f32 %v658, %v860
        %v889 = vadd.f32 %v659, %v865
        %v890 = vadd.f32 %v660, %v868
        %v891 = vadd.f32 %v661, %v873
        %v892 = vadd.f32 %v662, %v876
        %v893 = vadd.f32 %v663, %v881
        %v894 = vadd.f32 %v664, %v884
        %s895 = scalar_lea.vmem %s1, 16
        %v896 = vld [vmem:[%s895] sm:$0xf]
        %v897 = vld [vmem:[%s211] sm:$0xe]
        %v898 = vld [vmem:[%s211 + $0x8] sm:$0xe]
        %v899 = vld [vmem:[%s211 + $0x10] sm:$0xe]
        %v900 = vld [vmem:[%s211 + $0x18] sm:$0xe]
        %v901 = vld [vmem:[%s211 + $0x20] sm:$0xe]
        %v902 = vld [vmem:[%s211 + $0x28] sm:$0xe]
        %v903 = vld [vmem:[%s211 + $0x30] sm:$0xe]
        %v904 = vld [vmem:[%s211 + $0x38] sm:$0xe]
        %vm921 = vcmask 1042432
        %vm922 = vcmask 1046532
        %vm923 = vmor %vm921, %vm922
        %v924 = vrot.slane %v897, 5
        %v925 = vrot.slane %v924, 4
        %v926 = vrot.slane %v227, 5
        %v927 = vsel %vm923, %v925, %v926
        %v928 = vrot.slane %v898, 5
        %v929 = vrot.slane %v928, 4
        %v930 = vrot.slane %v228, 5
        %v931 = vsel %vm923, %v929, %v930
        %v932 = vrot.slane %v899, 5
        %v933 = vrot.slane %v932, 4
        %v934 = vrot.slane %v229, 5
        %v935 = vsel %vm923, %v933, %v934
        %v936 = vrot.slane %v900, 5
        %v937 = vrot.slane %v936, 4
        %v938 = vrot.slane %v230, 5
        %v939 = vsel %vm923, %v937, %v938
        %v940 = vrot.slane %v901, 5
        %v941 = vrot.slane %v940, 4
        %v942 = vrot.slane %v231, 5
        %v943 = vsel %vm923, %v941, %v942
        %v944 = vrot.slane %v902, 5
        %v945 = vrot.slane %v944, 4
        %v946 = vrot.slane %v232, 5
        %v947 = vsel %vm923, %v945, %v946
        %v948 = vrot.slane %v903, 5
        %v949 = vrot.slane %v948, 4
        %v950 = vrot.slane %v233, 5
        %v951 = vsel %vm923, %v949, %v950
        %v952 = vrot.slane %v904, 5
        %v953 = vrot.slane %v952, 4
        %v954 = vrot.slane %v234, 5
        %v955 = vsel %vm923, %v953, %v954
        %s956 = scalar_lea.vmem %s1, 20
        %v957 = vld [vmem:[%s956] sm:$0xf]
        %v958 = vunpack.c.l.b16 %v927
        %v959 = vunpack.c.l.b16 %v931
        %v960 = vunpack.c.l.b16 %v935
        %v961 = vunpack.c.l.b16 %v939
        %v962 = vunpack.c.l.b16 %v943
        %v963 = vunpack.c.l.b16 %v947
        %v964 = vunpack.c.l.b16 %v951
        %v965 = vunpack.c.l.b16 %v955
        %v966 = vpack.c.b16 %v959, %v958
        %v967 = vpack.c.b16 %v961, %v960
        %v968 = vpack.c.b16 %v963, %v962
        %v969 = vpack.c.b16 %v965, %v964
        %v971 = vsel %vm364, %v966, 0
        %v974 = vsel %vm364, %v967, 0
        %v977 = vsel %vm364, %v968, 0
        %v980 = vsel %vm364, %v969, 0
        %v983 = vsel %vm377, %v957, 0
        %985 = vmatprep.subr.bf16.mxu0 0
        %986 = vmatpush1.bf16.msra.mxu0 0
        %987 = vmatprep.subr.bf16.mxu0 0
        %988 = vmatpush1.bf16.msra.mxu0 0
        %989 = vmatprep.subr.bf16.mxu0 0
        %990 = vmatpush1.bf16.msra.mxu0 0
        %991 = vmatprep.subr.bf16.mxu0 0
        %992 = vmatpush1.bf16.msra.mxu0 0
        %993 = vmatprep.subr.bf16.mxu0 0
        %994 = vmatpush1.bf16.msra.mxu0 0
        %995 = vmatprep.subr.bf16.mxu0 0
        %996 = vmatpush1.bf16.msra.mxu0 0
        %997 = vmatprep.subr.bf16.mxu0 0
        %998 = vmatpush1.bf16.msra.mxu0 0
        %999 = vmatprep.subr.bf16.mxu0 0
        %1000 = vmatpush1.bf16.msra.mxu0 %v983
        %1001 = vmatprep.subr.bf16.mxu0 0
        %1002 = vmatpush2.bf16.msra.mxu0 0
        %1003 = vmatprep.subr.bf16.mxu0 0
        %1004 = vmatpush2.bf16.msra.mxu0 0
        %1005 = vmatprep.subr.bf16.mxu0 0
        %1006 = vmatpush2.bf16.msra.mxu0 0
        %1007 = vmatprep.subr.bf16.mxu0 0
        %1008 = vmatpush2.bf16.msra.mxu0 0
        %1009 = vmatprep.subr.bf16.mxu0 0
        %1010 = vmatpush2.bf16.msra.mxu0 0
        %1011 = vmatprep.subr.bf16.mxu0 0
        %1012 = vmatpush2.bf16.msra.mxu0 0
        %1013 = vmatprep.subr.bf16.mxu0 0
        %1014 = vmatpush2.bf16.msra.mxu0 0
        %1015 = vmatprep.subr.bf16.mxu0 0
        %1016 = vmatpush2.bf16.msra.mxu0 0
        %1017 = vmatprep.mubr.bf16.mxu0 0
        %1018 = vmatmul.mubr.bf16.gmra.mxu0 %v971
        %v1019 = vpop.f32.mrf.mxu0
        %v1020 = vadd.f32 0.0, %v1019
        %v1021 = vpop.f32.mrf.mxu0
        %v1022 = vpop.f32.mrf.mxu0
        %v1023 = vadd.f32 0.0, %v1022
        %v1024 = vpop.f32.mrf.mxu0
        %1025 = vmatprep.mubr.bf16.mxu0 0
        %1026 = vmatmul.mubr.bf16.gmra.mxu0 %v974
        %v1027 = vpop.f32.mrf.mxu0
        %v1028 = vadd.f32 0.0, %v1027
        %v1029 = vpop.f32.mrf.mxu0
        %v1030 = vpop.f32.mrf.mxu0
        %v1031 = vadd.f32 0.0, %v1030
        %v1032 = vpop.f32.mrf.mxu0
        %1033 = vmatprep.mubr.bf16.mxu0 0
        %1034 = vmatmul.mubr.bf16.gmra.mxu0 %v977
        %v1035 = vpop.f32.mrf.mxu0
        %v1036 = vadd.f32 0.0, %v1035
        %v1037 = vpop.f32.mrf.mxu0
        %v1038 = vpop.f32.mrf.mxu0
        %v1039 = vadd.f32 0.0, %v1038
        %v1040 = vpop.f32.mrf.mxu0
        %1041 = vmatprep.mubr.bf16.mxu0 0
        %1042 = vmatmul.mubr.bf16.gmra.mxu0 %v980
        %v1043 = vpop.f32.mrf.mxu0
        %v1044 = vadd.f32 0.0, %v1043
        %v1045 = vpop.f32.mrf.mxu0
        %v1046 = vpop.f32.mrf.mxu0
        %v1047 = vadd.f32 0.0, %v1046
        %v1048 = vpop.f32.mrf.mxu0
        %1049 = vdwg.mxu0
        %v1051 = vsel %vm377, %v896, 0
        %1053 = vmatprep.subr.bf16.mxu0 0
        %1054 = vmatpush1.bf16.msra.mxu0 0
        %1055 = vmatprep.subr.bf16.mxu0 0
        %1056 = vmatpush1.bf16.msra.mxu0 0
        %1057 = vmatprep.subr.bf16.mxu0 0
        %1058 = vmatpush1.bf16.msra.mxu0 0
        %1059 = vmatprep.subr.bf16.mxu0 0
        %1060 = vmatpush1.bf16.msra.mxu0 0
        %1061 = vmatprep.subr.bf16.mxu0 0
        %1062 = vmatpush1.bf16.msra.mxu0 0
        %1063 = vmatprep.subr.bf16.mxu0 0
        %1064 = vmatpush1.bf16.msra.mxu0 0
        %1065 = vmatprep.subr.bf16.mxu0 0
        %1066 = vmatpush1.bf16.msra.mxu0 0
        %1067 = vmatprep.subr.bf16.mxu0 0
        %1068 = vmatpush1.bf16.msra.mxu0 %v1051
        %1069 = vmatprep.subr.bf16.mxu0 0
        %1070 = vmatpush2.bf16.msra.mxu0 0
        %1071 = vmatprep.subr.bf16.mxu0 0
        %1072 = vmatpush2.bf16.msra.mxu0 0
        %1073 = vmatprep.subr.bf16.mxu0 0
        %1074 = vmatpush2.bf16.msra.mxu0 0
        %1075 = vmatprep.subr.bf16.mxu0 0
        %1076 = vmatpush2.bf16.msra.mxu0 0
        %1077 = vmatprep.subr.bf16.mxu0 0
        %1078 = vmatpush2.bf16.msra.mxu0 0
        %1079 = vmatprep.subr.bf16.mxu0 0
        %1080 = vmatpush2.bf16.msra.mxu0 0
        %1081 = vmatprep.subr.bf16.mxu0 0
        %1082 = vmatpush2.bf16.msra.mxu0 0
        %1083 = vmatprep.subr.bf16.mxu0 0
        %1084 = vmatpush2.bf16.msra.mxu0 0
        %1085 = vmatprep.mubr.bf16.mxu0 0
        %1086 = vmatmul.mubr.bf16.gmra.mxu0 %v366
        %v1087 = vpop.f32.mrf.mxu0
        %v1088 = vadd.f32 %v1020, %v1087
        %v1089 = vpop.f32.mrf.mxu0
        %v1090 = vpop.f32.mrf.mxu0
        %v1091 = vadd.f32 %v1023, %v1090
        %v1092 = vpop.f32.mrf.mxu0
        %1093 = vmatprep.mubr.bf16.mxu0 0
        %1094 = vmatmul.mubr.bf16.gmra.mxu0 %v369
        %v1095 = vpop.f32.mrf.mxu0
        %v1096 = vadd.f32 %v1028, %v1095
        %v1097 = vpop.f32.mrf.mxu0
        %v1098 = vpop.f32.mrf.mxu0
        %v1099 = vadd.f32 %v1031, %v1098
        %v1100 = vpop.f32.mrf.mxu0
        %1101 = vmatprep.mubr.bf16.mxu0 0
        %1102 = vmatmul.mubr.bf16.gmra.mxu0 %v372
        %v1103 = vpop.f32.mrf.mxu0
        %v1104 = vadd.f32 %v1036, %v1103
        %v1105 = vpop.f32.mrf.mxu0
        %v1106 = vpop.f32.mrf.mxu0
        %v1107 = vadd.f32 %v1039, %v1106
        %v1108 = vpop.f32.mrf.mxu0
        %1109 = vmatprep.mubr.bf16.mxu0 0
        %1110 = vmatmul.mubr.bf16.gmra.mxu0 %v375
        %v1111 = vpop.f32.mrf.mxu0
        %v1112 = vadd.f32 %v1044, %v1111
        %v1113 = vpop.f32.mrf.mxu0
        %v1114 = vpop.f32.mrf.mxu0
        %v1115 = vadd.f32 %v1047, %v1114
        %v1116 = vpop.f32.mrf.mxu0
        %1117 = vdwg.mxu0
        %s1118 = scalar_lea.vmem %s1, 24
        %v1119 = vld [vmem:[%s1118] sm:$0xf]
        %v1121 = vsel %vm377, %v1119, 0
        %1123 = vmatprep.subr.bf16.mxu0 0
        %1124 = vmatpush1.bf16.msra.mxu0 0
        %1125 = vmatprep.subr.bf16.mxu0 0
        %1126 = vmatpush1.bf16.msra.mxu0 0
        %1127 = vmatprep.subr.bf16.mxu0 0
        %1128 = vmatpush1.bf16.msra.mxu0 0
        %1129 = vmatprep.subr.bf16.mxu0 0
        %1130 = vmatpush1.bf16.msra.mxu0 0
        %1131 = vmatprep.subr.bf16.mxu0 0
        %1132 = vmatpush1.bf16.msra.mxu0 0
        %1133 = vmatprep.subr.bf16.mxu0 0
        %1134 = vmatpush1.bf16.msra.mxu0 0
        %1135 = vmatprep.subr.bf16.mxu0 0
        %1136 = vmatpush1.bf16.msra.mxu0 0
        %1137 = vmatprep.subr.bf16.mxu0 0
        %1138 = vmatpush1.bf16.msra.mxu0 %v1121
        %1139 = vmatprep.subr.bf16.mxu0 0
        %1140 = vmatpush2.bf16.msra.mxu0 0
        %1141 = vmatprep.subr.bf16.mxu0 0
        %1142 = vmatpush2.bf16.msra.mxu0 0
        %1143 = vmatprep.subr.bf16.mxu0 0
        %1144 = vmatpush2.bf16.msra.mxu0 0
        %1145 = vmatprep.subr.bf16.mxu0 0
        %1146 = vmatpush2.bf16.msra.mxu0 0
        %1147 = vmatprep.subr.bf16.mxu0 0
        %1148 = vmatpush2.bf16.msra.mxu0 0
        %1149 = vmatprep.subr.bf16.mxu0 0
        %1150 = vmatpush2.bf16.msra.mxu0 0
        %1151 = vmatprep.subr.bf16.mxu0 0
        %1152 = vmatpush2.bf16.msra.mxu0 0
        %1153 = vmatprep.subr.bf16.mxu0 0
        %1154 = vmatpush2.bf16.msra.mxu0 0
        %1155 = vmatprep.mubr.bf16.mxu0 0
        %1156 = vmatmul.mubr.bf16.gmra.mxu0 %v808
        %v1157 = vpop.f32.mrf.mxu0
        %v1158 = vadd.f32 0.0, %v1157
        %v1159 = vpop.f32.mrf.mxu0
        %v1160 = vpop.f32.mrf.mxu0
        %v1161 = vadd.f32 0.0, %v1160
        %v1162 = vpop.f32.mrf.mxu0
        %1163 = vmatprep.mubr.bf16.mxu0 0
        %1164 = vmatmul.mubr.bf16.gmra.mxu0 %v811
        %v1165 = vpop.f32.mrf.mxu0
        %v1166 = vadd.f32 0.0, %v1165
        %v1167 = vpop.f32.mrf.mxu0
        %v1168 = vpop.f32.mrf.mxu0
        %v1169 = vadd.f32 0.0, %v1168
        %v1170 = vpop.f32.mrf.mxu0
        %1171 = vmatprep.mubr.bf16.mxu0 0
        %1172 = vmatmul.mubr.bf16.gmra.mxu0 %v814
        %v1173 = vpop.f32.mrf.mxu0
        %v1174 = vadd.f32 0.0, %v1173
        %v1175 = vpop.f32.mrf.mxu0
        %v1176 = vpop.f32.mrf.mxu0
        %v1177 = vadd.f32 0.0, %v1176
        %v1178 = vpop.f32.mrf.mxu0
        %1179 = vmatprep.mubr.bf16.mxu0 0
        %1180 = vmatmul.mubr.bf16.gmra.mxu0 %v817
        %v1181 = vpop.f32.mrf.mxu0
        %v1182 = vadd.f32 0.0, %v1181
        %v1183 = vpop.f32.mrf.mxu0
        %v1184 = vpop.f32.mrf.mxu0
        %v1185 = vadd.f32 0.0, %v1184
        %v1186 = vpop.f32.mrf.mxu0
        %1187 = vdwg.mxu0
        %v1188 = vadd.f32 %v1088, %v1158
        %v1189 = vadd.f32 %v1091, %v1161
        %v1190 = vadd.f32 %v1096, %v1166
        %v1191 = vadd.f32 %v1099, %v1169
        %v1192 = vadd.f32 %v1104, %v1174
        %v1193 = vadd.f32 %v1107, %v1177
        %v1194 = vadd.f32 %v1112, %v1182
        %v1195 = vadd.f32 %v1115, %v1185
        %v1196 = vld [vmem:[%s546] sm:$0xe]
        %v1197 = vld [vmem:[%s546 + $0x8] sm:$0xe]
        %v1198 = vld [vmem:[%s546 + $0x10] sm:$0xe]
        %v1199 = vld [vmem:[%s546 + $0x18] sm:$0xe]
        %v1200 = vld [vmem:[%s546 + $0x20] sm:$0xe]
        %v1201 = vld [vmem:[%s546 + $0x28] sm:$0xe]
        %v1202 = vld [vmem:[%s546 + $0x30] sm:$0xe]
        %v1203 = vld [vmem:[%s546 + $0x38] sm:$0xe]
        %v1220 = vrot.slane %v1196, 5
        %v1221 = vrot.slane %v1220, 4
        %v1222 = vrot.slane %v666, 5
        %v1223 = vsel %vm923, %v1221, %v1222
        %v1224 = vrot.slane %v1197, 5
        %v1225 = vrot.slane %v1224, 4
        %v1226 = vrot.slane %v668, 5
        %v1227 = vsel %vm923, %v1225, %v1226
        %v1228 = vrot.slane %v1198, 5
        %v1229 = vrot.slane %v1228, 4
        %v1230 = vrot.slane %v670, 5
        %v1231 = vsel %vm923, %v1229, %v1230
        %v1232 = vrot.slane %v1199, 5
        %v1233 = vrot.slane %v1232, 4
        %v1234 = vrot.slane %v672, 5
        %v1235 = vsel %vm923, %v1233, %v1234
        %v1236 = vrot.slane %v1200, 5
        %v1237 = vrot.slane %v1236, 4
        %v1238 = vrot.slane %v674, 5
        %v1239 = vsel %vm923, %v1237, %v1238
        %v1240 = vrot.slane %v1201, 5
        %v1241 = vrot.slane %v1240, 4
        %v1242 = vrot.slane %v676, 5
        %v1243 = vsel %vm923, %v1241, %v1242
        %v1244 = vrot.slane %v1202, 5
        %v1245 = vrot.slane %v1244, 4
        %v1246 = vrot.slane %v678, 5
        %v1247 = vsel %vm923, %v1245, %v1246
        %v1248 = vrot.slane %v1203, 5
        %v1249 = vrot.slane %v1248, 4
        %v1250 = vrot.slane %v680, 5
        %v1251 = vsel %vm923, %v1249, %v1250
        %s1252 = scalar_lea.vmem %s1, 28
        %v1253 = vld [vmem:[%s1252] sm:$0xf]
        %v1254 = vunpack.c.l.b16 %v1223
        %v1255 = vunpack.c.l.b16 %v1227
        %v1256 = vunpack.c.l.b16 %v1231
        %v1257 = vunpack.c.l.b16 %v1235
        %v1258 = vunpack.c.l.b16 %v1239
        %v1259 = vunpack.c.l.b16 %v1243
        %v1260 = vunpack.c.l.b16 %v1247
        %v1261 = vunpack.c.l.b16 %v1251
        %v1262 = vpack.c.b16 %v1255, %v1254
        %v1263 = vpack.c.b16 %v1257, %v1256
        %v1264 = vpack.c.b16 %v1259, %v1258
        %v1265 = vpack.c.b16 %v1261, %v1260
        %v1267 = vsel %vm364, %v1262, 0
        %v1270 = vsel %vm364, %v1263, 0
        %v1273 = vsel %vm364, %v1264, 0
        %v1276 = vsel %vm364, %v1265, 0
        %v1279 = vsel %vm377, %v1253, 0
        %1281 = vmatprep.subr.bf16.mxu0 0
        %1282 = vmatpush1.bf16.msra.mxu0 0
        %1283 = vmatprep.subr.bf16.mxu0 0
        %1284 = vmatpush1.bf16.msra.mxu0 0
        %1285 = vmatprep.subr.bf16.mxu0 0
        %1286 = vmatpush1.bf16.msra.mxu0 0
        %1287 = vmatprep.subr.bf16.mxu0 0
        %1288 = vmatpush1.bf16.msra.mxu0 0
        %1289 = vmatprep.subr.bf16.mxu0 0
        %1290 = vmatpush1.bf16.msra.mxu0 0
        %1291 = vmatprep.subr.bf16.mxu0 0
        %1292 = vmatpush1.bf16.msra.mxu0 0
        %1293 = vmatprep.subr.bf16.mxu0 0
        %1294 = vmatpush1.bf16.msra.mxu0 0
        %1295 = vmatprep.subr.bf16.mxu0 0
        %1296 = vmatpush1.bf16.msra.mxu0 %v1279
        %1297 = vmatprep.subr.bf16.mxu0 0
        %1298 = vmatpush2.bf16.msra.mxu0 0
        %1299 = vmatprep.subr.bf16.mxu0 0
        %1300 = vmatpush2.bf16.msra.mxu0 0
        %1301 = vmatprep.subr.bf16.mxu0 0
        %1302 = vmatpush2.bf16.msra.mxu0 0
        %1303 = vmatprep.subr.bf16.mxu0 0
        %1304 = vmatpush2.bf16.msra.mxu0 0
        %1305 = vmatprep.subr.bf16.mxu0 0
        %1306 = vmatpush2.bf16.msra.mxu0 0
        %1307 = vmatprep.subr.bf16.mxu0 0
        %1308 = vmatpush2.bf16.msra.mxu0 0
        %1309 = vmatprep.subr.bf16.mxu0 0
        %1310 = vmatpush2.bf16.msra.mxu0 0
        %1311 = vmatprep.subr.bf16.mxu0 0
        %1312 = vmatpush2.bf16.msra.mxu0 0
        %1313 = vmatprep.mubr.bf16.mxu0 0
        %1314 = vmatmul.mubr.bf16.gmra.mxu0 %v1267
        %v1315 = vpop.f32.mrf.mxu0
        %v1316 = vadd.f32 0.0, %v1315
        %v1317 = vpop.f32.mrf.mxu0
        %v1318 = vpop.f32.mrf.mxu0
        %v1319 = vadd.f32 0.0, %v1318
        %v1320 = vpop.f32.mrf.mxu0
        %1321 = vmatprep.mubr.bf16.mxu0 0
        %1322 = vmatmul.mubr.bf16.gmra.mxu0 %v1270
        %v1323 = vpop.f32.mrf.mxu0
        %v1324 = vadd.f32 0.0, %v1323
        %v1325 = vpop.f32.mrf.mxu0
        %v1326 = vpop.f32.mrf.mxu0
        %v1327 = vadd.f32 0.0, %v1326
        %v1328 = vpop.f32.mrf.mxu0
        %1329 = vmatprep.mubr.bf16.mxu0 0
        %1330 = vmatmul.mubr.bf16.gmra.mxu0 %v1273
        %v1331 = vpop.f32.mrf.mxu0
        %v1332 = vadd.f32 0.0, %v1331
        %v1333 = vpop.f32.mrf.mxu0
        %v1334 = vpop.f32.mrf.mxu0
        %v1335 = vadd.f32 0.0, %v1334
        %v1336 = vpop.f32.mrf.mxu0
        %1337 = vmatprep.mubr.bf16.mxu0 0
        %1338 = vmatmul.mubr.bf16.gmra.mxu0 %v1276
        %v1339 = vpop.f32.mrf.mxu0
        %v1340 = vadd.f32 0.0, %v1339
        %v1341 = vpop.f32.mrf.mxu0
        %v1342 = vpop.f32.mrf.mxu0
        %v1343 = vadd.f32 0.0, %v1342
        %v1344 = vpop.f32.mrf.mxu0
        %1345 = vdwg.mxu0
        %v1346 = vadd.f32 %v1188, %v1316
        %v1347 = vadd.f32 %v1189, %v1319
        %v1348 = vadd.f32 %v1190, %v1324
        %v1349 = vadd.f32 %v1191, %v1327
        %v1350 = vadd.f32 %v1192, %v1332
        %v1351 = vadd.f32 %v1193, %v1335
        %v1352 = vadd.f32 %v1194, %v1340
        %v1353 = vadd.f32 %v1195, %v1343
        %s1354 = scalar_lea.vmem %s1, 32
        %v1355 = vld [vmem:[%s1354] sm:$0xf]
        %s1356 = scalar_lea.vmem %s1, 36
        %v1357 = vld [vmem:[%s1356] sm:$0xf]
        %v1359 = vsel %vm377, %v1357, 0
        %1361 = vmatprep.subr.bf16.mxu0 0
        %1362 = vmatpush1.bf16.msra.mxu0 0
        %1363 = vmatprep.subr.bf16.mxu0 0
        %1364 = vmatpush1.bf16.msra.mxu0 0
        %1365 = vmatprep.subr.bf16.mxu0 0
        %1366 = vmatpush1.bf16.msra.mxu0 0
        %1367 = vmatprep.subr.bf16.mxu0 0
        %1368 = vmatpush1.bf16.msra.mxu0 0
        %1369 = vmatprep.subr.bf16.mxu0 0
        %1370 = vmatpush1.bf16.msra.mxu0 0
        %1371 = vmatprep.subr.bf16.mxu0 0
        %1372 = vmatpush1.bf16.msra.mxu0 0
        %1373 = vmatprep.subr.bf16.mxu0 0
        %1374 = vmatpush1.bf16.msra.mxu0 0
        %1375 = vmatprep.subr.bf16.mxu0 0
        %1376 = vmatpush1.bf16.msra.mxu0 %v1359
        %1377 = vmatprep.subr.bf16.mxu0 0
        %1378 = vmatpush2.bf16.msra.mxu0 0
        %1379 = vmatprep.subr.bf16.mxu0 0
        %1380 = vmatpush2.bf16.msra.mxu0 0
        %1381 = vmatprep.subr.bf16.mxu0 0
        %1382 = vmatpush2.bf16.msra.mxu0 0
        %1383 = vmatprep.subr.bf16.mxu0 0
        %1384 = vmatpush2.bf16.msra.mxu0 0
        %1385 = vmatprep.subr.bf16.mxu0 0
        %1386 = vmatpush2.bf16.msra.mxu0 0
        %1387 = vmatprep.subr.bf16.mxu0 0
        %1388 = vmatpush2.bf16.msra.mxu0 0
        %1389 = vmatprep.subr.bf16.mxu0 0
        %1390 = vmatpush2.bf16.msra.mxu0 0
        %1391 = vmatprep.subr.bf16.mxu0 0
        %1392 = vmatpush2.bf16.msra.mxu0 0
        %1393 = vmatprep.mubr.bf16.mxu0 0
        %1394 = vmatmul.mubr.bf16.gmra.mxu0 %v808
        %v1395 = vpop.f32.mrf.mxu0
        %v1396 = vadd.f32 0.0, %v1395
        %v1397 = vpop.f32.mrf.mxu0
        %v1398 = vpop.f32.mrf.mxu0
        %v1399 = vadd.f32 0.0, %v1398
        %v1400 = vpop.f32.mrf.mxu0
        %1401 = vmatprep.mubr.bf16.mxu0 0
        %1402 = vmatmul.mubr.bf16.gmra.mxu0 %v811
        %v1403 = vpop.f32.mrf.mxu0
        %v1404 = vadd.f32 0.0, %v1403
        %v1405 = vpop.f32.mrf.mxu0
        %v1406 = vpop.f32.mrf.mxu0
        %v1407 = vadd.f32 0.0, %v1406
        %v1408 = vpop.f32.mrf.mxu0
        %1409 = vmatprep.mubr.bf16.mxu0 0
        %1410 = vmatmul.mubr.bf16.gmra.mxu0 %v814
        %v1411 = vpop.f32.mrf.mxu0
        %v1412 = vadd.f32 0.0, %v1411
        %v1413 = vpop.f32.mrf.mxu0
        %v1414 = vpop.f32.mrf.mxu0
        %v1415 = vadd.f32 0.0, %v1414
        %v1416 = vpop.f32.mrf.mxu0
        %1417 = vmatprep.mubr.bf16.mxu0 0
        %1418 = vmatmul.mubr.bf16.gmra.mxu0 %v817
        %v1419 = vpop.f32.mrf.mxu0
        %v1420 = vadd.f32 0.0, %v1419
        %v1421 = vpop.f32.mrf.mxu0
        %v1422 = vpop.f32.mrf.mxu0
        %v1423 = vadd.f32 0.0, %v1422
        %v1424 = vpop.f32.mrf.mxu0
        %1425 = vdwg.mxu0
        %v1427 = vsel %vm377, %v1355, 0
        %1429 = vmatprep.subr.bf16.mxu0 0
        %1430 = vmatpush1.bf16.msra.mxu0 0
        %1431 = vmatprep.subr.bf16.mxu0 0
        %1432 = vmatpush1.bf16.msra.mxu0 0
        %1433 = vmatprep.subr.bf16.mxu0 0
        %1434 = vmatpush1.bf16.msra.mxu0 0
        %1435 = vmatprep.subr.bf16.mxu0 0
        %1436 = vmatpush1.bf16.msra.mxu0 0
        %1437 = vmatprep.subr.bf16.mxu0 0
        %1438 = vmatpush1.bf16.msra.mxu0 0
        %1439 = vmatprep.subr.bf16.mxu0 0
        %1440 = vmatpush1.bf16.msra.mxu0 0
        %1441 = vmatprep.subr.bf16.mxu0 0
        %1442 = vmatpush1.bf16.msra.mxu0 0
        %1443 = vmatprep.subr.bf16.mxu0 0
        %1444 = vmatpush1.bf16.msra.mxu0 %v1427
        %1445 = vmatprep.subr.bf16.mxu0 0
        %1446 = vmatpush2.bf16.msra.mxu0 0
        %1447 = vmatprep.subr.bf16.mxu0 0
        %1448 = vmatpush2.bf16.msra.mxu0 0
        %1449 = vmatprep.subr.bf16.mxu0 0
        %1450 = vmatpush2.bf16.msra.mxu0 0
        %1451 = vmatprep.subr.bf16.mxu0 0
        %1452 = vmatpush2.bf16.msra.mxu0 0
        %1453 = vmatprep.subr.bf16.mxu0 0
        %1454 = vmatpush2.bf16.msra.mxu0 0
        %1455 = vmatprep.subr.bf16.mxu0 0
        %1456 = vmatpush2.bf16.msra.mxu0 0
        %1457 = vmatprep.subr.bf16.mxu0 0
        %1458 = vmatpush2.bf16.msra.mxu0 0
        %1459 = vmatprep.subr.bf16.mxu0 0
        %1460 = vmatpush2.bf16.msra.mxu0 0
        %1461 = vmatprep.mubr.bf16.mxu0 0
        %1462 = vmatmul.mubr.bf16.gmra.mxu0 %v578
        %v1463 = vpop.f32.mrf.mxu0
        %v1464 = vadd.f32 %v1396, %v1463
        %v1465 = vpop.f32.mrf.mxu0
        %v1466 = vpop.f32.mrf.mxu0
        %v1467 = vadd.f32 %v1399, %v1466
        %v1468 = vpop.f32.mrf.mxu0
        %1469 = vmatprep.mubr.bf16.mxu0 0
        %1470 = vmatmul.mubr.bf16.gmra.mxu0 %v581
        %v1471 = vpop.f32.mrf.mxu0
        %v1472 = vadd.f32 %v1404, %v1471
        %v1473 = vpop.f32.mrf.mxu0
        %v1474 = vpop.f32.mrf.mxu0
        %v1475 = vadd.f32 %v1407, %v1474
        %v1476 = vpop.f32.mrf.mxu0
        %1477 = vmatprep.mubr.bf16.mxu0 0
        %1478 = vmatmul.mubr.bf16.gmra.mxu0 %v584
        %v1479 = vpop.f32.mrf.mxu0
        %v1480 = vadd.f32 %v1412, %v1479
        %v1481 = vpop.f32.mrf.mxu0
        %v1482 = vpop.f32.mrf.mxu0
        %v1483 = vadd.f32 %v1415, %v1482
        %v1484 = vpop.f32.mrf.mxu0
        %1485 = vmatprep.mubr.bf16.mxu0 0
        %1486 = vmatmul.mubr.bf16.gmra.mxu0 %v587
        %v1487 = vpop.f32.mrf.mxu0
        %v1488 = vadd.f32 %v1420, %v1487
        %v1489 = vpop.f32.mrf.mxu0
        %v1490 = vpop.f32.mrf.mxu0
        %v1491 = vadd.f32 %v1423, %v1490
        %v1492 = vpop.f32.mrf.mxu0
        %1493 = vdwg.mxu0
        %s1494 = scalar_lea.vmem %s211, 16
        %v1495 = vld [vmem:[%s1494] sm:$0xf]
        %v1496 = vld [vmem:[%s1494 + $0x8] sm:$0xf]
        %v1497 = vld [vmem:[%s1494 + $0x10] sm:$0xf]
        %v1498 = vld [vmem:[%s1494 + $0x18] sm:$0xf]
        %v1499 = vld [vmem:[%s1494 + $0x20] sm:$0xf]
        %v1500 = vld [vmem:[%s1494 + $0x28] sm:$0xf]
        %v1501 = vld [vmem:[%s1494 + $0x30] sm:$0xf]
        %v1502 = vld [vmem:[%s1494 + $0x38] sm:$0xf]
        %s1503 = scalar_lea.vmem %s1, 40
        %v1504 = vld [vmem:[%s1503] sm:$0xf]
        %v1513 = vunpack.c.l.b16 %v1495
        %v1514 = vunpack.c.l.b16 %v1496
        %v1515 = vunpack.c.l.b16 %v1497
        %v1516 = vunpack.c.l.b16 %v1498
        %v1517 = vunpack.c.l.b16 %v1499
        %v1518 = vunpack.c.l.b16 %v1500
        %v1519 = vunpack.c.l.b16 %v1501
        %v1520 = vunpack.c.l.b16 %v1502
        %v1521 = vpack.c.b16 %v1514, %v1513
        %v1522 = vpack.c.b16 %v1516, %v1515
        %v1523 = vpack.c.b16 %v1518, %v1517
        %v1524 = vpack.c.b16 %v1520, %v1519
        %v1526 = vsel %vm364, %v1521, 0
        %v1529 = vsel %vm364, %v1522, 0
        %v1532 = vsel %vm364, %v1523, 0
        %v1535 = vsel %vm364, %v1524, 0
        %v1538 = vsel %vm377, %v1504, 0
        %1540 = vmatprep.subr.bf16.mxu0 0
        %1541 = vmatpush1.bf16.msra.mxu0 0
        %1542 = vmatprep.subr.bf16.mxu0 0
        %1543 = vmatpush1.bf16.msra.mxu0 0
        %1544 = vmatprep.subr.bf16.mxu0 0
        %1545 = vmatpush1.bf16.msra.mxu0 0
        %1546 = vmatprep.subr.bf16.mxu0 0
        %1547 = vmatpush1.bf16.msra.mxu0 0
        %1548 = vmatprep.subr.bf16.mxu0 0
        %1549 = vmatpush1.bf16.msra.mxu0 0
        %1550 = vmatprep.subr.bf16.mxu0 0
        %1551 = vmatpush1.bf16.msra.mxu0 0
        %1552 = vmatprep.subr.bf16.mxu0 0
        %1553 = vmatpush1.bf16.msra.mxu0 0
        %1554 = vmatprep.subr.bf16.mxu0 0
        %1555 = vmatpush1.bf16.msra.mxu0 %v1538
        %1556 = vmatprep.subr.bf16.mxu0 0
        %1557 = vmatpush2.bf16.msra.mxu0 0
        %1558 = vmatprep.subr.bf16.mxu0 0
        %1559 = vmatpush2.bf16.msra.mxu0 0
        %1560 = vmatprep.subr.bf16.mxu0 0
        %1561 = vmatpush2.bf16.msra.mxu0 0
        %1562 = vmatprep.subr.bf16.mxu0 0
        %1563 = vmatpush2.bf16.msra.mxu0 0
        %1564 = vmatprep.subr.bf16.mxu0 0
        %1565 = vmatpush2.bf16.msra.mxu0 0
        %1566 = vmatprep.subr.bf16.mxu0 0
        %1567 = vmatpush2.bf16.msra.mxu0 0
        %1568 = vmatprep.subr.bf16.mxu0 0
        %1569 = vmatpush2.bf16.msra.mxu0 0
        %1570 = vmatprep.subr.bf16.mxu0 0
        %1571 = vmatpush2.bf16.msra.mxu0 0
        %1572 = vmatprep.mubr.bf16.mxu0 0
        %1573 = vmatmul.mubr.bf16.gmra.mxu0 %v1526
        %v1574 = vpop.f32.mrf.mxu0
        %v1575 = vadd.f32 0.0, %v1574
        %v1576 = vpop.f32.mrf.mxu0
        %v1577 = vpop.f32.mrf.mxu0
        %v1578 = vadd.f32 0.0, %v1577
        %v1579 = vpop.f32.mrf.mxu0
        %1580 = vmatprep.mubr.bf16.mxu0 0
        %1581 = vmatmul.mubr.bf16.gmra.mxu0 %v1529
        %v1582 = vpop.f32.mrf.mxu0
        %v1583 = vadd.f32 0.0, %v1582
        %v1584 = vpop.f32.mrf.mxu0
        %v1585 = vpop.f32.mrf.mxu0
        %v1586 = vadd.f32 0.0, %v1585
        %v1587 = vpop.f32.mrf.mxu0
        %1588 = vmatprep.mubr.bf16.mxu0 0
        %1589 = vmatmul.mubr.bf16.gmra.mxu0 %v1532
        %v1590 = vpop.f32.mrf.mxu0
        %v1591 = vadd.f32 0.0, %v1590
        %v1592 = vpop.f32.mrf.mxu0
        %v1593 = vpop.f32.mrf.mxu0
        %v1594 = vadd.f32 0.0, %v1593
        %v1595 = vpop.f32.mrf.mxu0
        %1596 = vmatprep.mubr.bf16.mxu0 0
        %1597 = vmatmul.mubr.bf16.gmra.mxu0 %v1535
        %v1598 = vpop.f32.mrf.mxu0
        %v1599 = vadd.f32 0.0, %v1598
        %v1600 = vpop.f32.mrf.mxu0
        %v1601 = vpop.f32.mrf.mxu0
        %v1602 = vadd.f32 0.0, %v1601
        %v1603 = vpop.f32.mrf.mxu0
        %1604 = vdwg.mxu0
        %v1605 = vadd.f32 %v1464, %v1575
        %v1606 = vadd.f32 %v1467, %v1578
        %v1607 = vadd.f32 %v1472, %v1583
        %v1608 = vadd.f32 %v1475, %v1586
        %v1609 = vadd.f32 %v1480, %v1591
        %v1610 = vadd.f32 %v1483, %v1594
        %v1611 = vadd.f32 %v1488, %v1599
        %v1612 = vadd.f32 %v1491, %v1602
        %v1613 = vld [vmem:[%s1494] sm:$0xf]
        %v1614 = vld [vmem:[%s1494 + $0x4] sm:$0x1]
        %v1615 = vld [vmem:[%s1494 + $0x8] sm:$0xf]
        %v1616 = vld [vmem:[%s1494 + $0xc] sm:$0x1]
        %v1617 = vld [vmem:[%s1494 + $0x10] sm:$0xf]
        %v1618 = vld [vmem:[%s1494 + $0x14] sm:$0x1]
        %v1619 = vld [vmem:[%s1494 + $0x18] sm:$0xf]
        %v1620 = vld [vmem:[%s1494 + $0x1c] sm:$0x1]
        %v1621 = vld [vmem:[%s1494 + $0x20] sm:$0xf]
        %v1622 = vld [vmem:[%s1494 + $0x24] sm:$0x1]
        %v1623 = vld [vmem:[%s1494 + $0x28] sm:$0xf]
        %v1624 = vld [vmem:[%s1494 + $0x2c] sm:$0x1]
        %v1625 = vld [vmem:[%s1494 + $0x30] sm:$0xf]
        %v1626 = vld [vmem:[%s1494 + $0x34] sm:$0x1]
        %v1627 = vld [vmem:[%s1494 + $0x38] sm:$0xf]
        %v1628 = vld [vmem:[%s1494 + $0x3c] sm:$0x1]
        %v1630 = vshrl.u32 %v1613, 16
        %v1632 = vrot.slane %v1630, 4
        %v1633 = vshll.u32 %v1613, 16
        %v1635 = vrot.slane %v1633, 5
        %v1636 = vor.u32 %v1632, %v1635
        %v1637 = vrot.slane %v1636, 4
        %v1639 = vshll.u32 %v1614, 16
        %v1641 = vrot.slane %v1639, 5
        %v1642 = vsel %vm237, %v1637, %v1641
        %v1644 = vshrl.u32 %v1615, 16
        %v1646 = vrot.slane %v1644, 4
        %v1647 = vshll.u32 %v1615, 16
        %v1649 = vrot.slane %v1647, 5
        %v1650 = vor.u32 %v1646, %v1649
        %v1651 = vrot.slane %v1650, 4
        %v1653 = vshll.u32 %v1616, 16
        %v1655 = vrot.slane %v1653, 5
        %v1656 = vsel %vm237, %v1651, %v1655
        %v1658 = vshrl.u32 %v1617, 16
        %v1660 = vrot.slane %v1658, 4
        %v1661 = vshll.u32 %v1617, 16
        %v1663 = vrot.slane %v1661, 5
        %v1664 = vor.u32 %v1660, %v1663
        %v1665 = vrot.slane %v1664, 4
        %v1667 = vshll.u32 %v1618, 16
        %v1669 = vrot.slane %v1667, 5
        %v1670 = vsel %vm237, %v1665, %v1669
        %v1672 = vshrl.u32 %v1619, 16
        %v1674 = vrot.slane %v1672, 4
        %v1675 = vshll.u32 %v1619, 16
        %v1677 = vrot.slane %v1675, 5
        %v1678 = vor.u32 %v1674, %v1677
        %v1679 = vrot.slane %v1678, 4
        %v1681 = vshll.u32 %v1620, 16
        %v1683 = vrot.slane %v1681, 5
        %v1684 = vsel %vm237, %v1679, %v1683
        %v1686 = vshrl.u32 %v1621, 16
        %v1688 = vrot.slane %v1686, 4
        %v1689 = vshll.u32 %v1621, 16
        %v1691 = vrot.slane %v1689, 5
        %v1692 = vor.u32 %v1688, %v1691
        %v1693 = vrot.slane %v1692, 4
        %v1695 = vshll.u32 %v1622, 16
        %v1697 = vrot.slane %v1695, 5
        %v1698 = vsel %vm237, %v1693, %v1697
        %v1700 = vshrl.u32 %v1623, 16
        %v1702 = vrot.slane %v1700, 4
        %v1703 = vshll.u32 %v1623, 16
        %v1705 = vrot.slane %v1703, 5
        %v1706 = vor.u32 %v1702, %v1705
        %v1707 = vrot.slane %v1706, 4
        %v1709 = vshll.u32 %v1624, 16
        %v1711 = vrot.slane %v1709, 5
        %v1712 = vsel %vm237, %v1707, %v1711
        %v1714 = vshrl.u32 %v1625, 16
        %v1716 = vrot.slane %v1714, 4
        %v1717 = vshll.u32 %v1625, 16
        %v1719 = vrot.slane %v1717, 5
        %v1720 = vor.u32 %v1716, %v1719
        %v1721 = vrot.slane %v1720, 4
        %v1723 = vshll.u32 %v1626, 16
        %v1725 = vrot.slane %v1723, 5
        %v1726 = vsel %vm237, %v1721, %v1725
        %v1728 = vshrl.u32 %v1627, 16
        %v1730 = vrot.slane %v1728, 4
        %v1731 = vshll.u32 %v1627, 16
        %v1733 = vrot.slane %v1731, 5
        %v1734 = vor.u32 %v1730, %v1733
        %v1735 = vrot.slane %v1734, 4
        %v1737 = vshll.u32 %v1628, 16
        %v1739 = vrot.slane %v1737, 5
        %v1740 = vsel %vm237, %v1735, %v1739
        %s1741 = scalar_lea.vmem %s1, 44
        %v1742 = vld [vmem:[%s1741] sm:$0xf]
        %v1743 = vunpack.c.l.b16 %v1642
        %v1744 = vunpack.c.l.b16 %v1656
        %v1745 = vunpack.c.l.b16 %v1670
        %v1746 = vunpack.c.l.b16 %v1684
        %v1747 = vunpack.c.l.b16 %v1698
        %v1748 = vunpack.c.l.b16 %v1712
        %v1749 = vunpack.c.l.b16 %v1726
        %v1750 = vunpack.c.l.b16 %v1740
        %v1751 = vpack.c.b16 %v1744, %v1743
        %v1752 = vpack.c.b16 %v1746, %v1745
        %v1753 = vpack.c.b16 %v1748, %v1747
        %v1754 = vpack.c.b16 %v1750, %v1749
        %v1756 = vsel %vm364, %v1751, 0
        %v1759 = vsel %vm364, %v1752, 0
        %v1762 = vsel %vm364, %v1753, 0
        %v1765 = vsel %vm364, %v1754, 0
        %v1768 = vsel %vm377, %v1742, 0
        %1770 = vmatprep.subr.bf16.mxu0 0
        %1771 = vmatpush1.bf16.msra.mxu0 0
        %1772 = vmatprep.subr.bf16.mxu0 0
        %1773 = vmatpush1.bf16.msra.mxu0 0
        %1774 = vmatprep.subr.bf16.mxu0 0
        %1775 = vmatpush1.bf16.msra.mxu0 0
        %1776 = vmatprep.subr.bf16.mxu0 0
        %1777 = vmatpush1.bf16.msra.mxu0 0
        %1778 = vmatprep.subr.bf16.mxu0 0
        %1779 = vmatpush1.bf16.msra.mxu0 0
        %1780 = vmatprep.subr.bf16.mxu0 0
        %1781 = vmatpush1.bf16.msra.mxu0 0
        %1782 = vmatprep.subr.bf16.mxu0 0
        %1783 = vmatpush1.bf16.msra.mxu0 0
        %1784 = vmatprep.subr.bf16.mxu0 0
        %1785 = vmatpush1.bf16.msra.mxu0 %v1768
        %1786 = vmatprep.subr.bf16.mxu0 0
        %1787 = vmatpush2.bf16.msra.mxu0 0
        %1788 = vmatprep.subr.bf16.mxu0 0
        %1789 = vmatpush2.bf16.msra.mxu0 0
        %1790 = vmatprep.subr.bf16.mxu0 0
        %1791 = vmatpush2.bf16.msra.mxu0 0
        %1792 = vmatprep.subr.bf16.mxu0 0
        %1793 = vmatpush2.bf16.msra.mxu0 0
        %1794 = vmatprep.subr.bf16.mxu0 0
        %1795 = vmatpush2.bf16.msra.mxu0 0
        %1796 = vmatprep.subr.bf16.mxu0 0
        %1797 = vmatpush2.bf16.msra.mxu0 0
        %1798 = vmatprep.subr.bf16.mxu0 0
        %1799 = vmatpush2.bf16.msra.mxu0 0
        %1800 = vmatprep.subr.bf16.mxu0 0
        %1801 = vmatpush2.bf16.msra.mxu0 0
        %1802 = vmatprep.mubr.bf16.mxu0 0
        %1803 = vmatmul.mubr.bf16.gmra.mxu0 %v1756
        %v1804 = vpop.f32.mrf.mxu0
        %v1805 = vadd.f32 0.0, %v1804
        %v1806 = vpop.f32.mrf.mxu0
        %v1807 = vpop.f32.mrf.mxu0
        %v1808 = vadd.f32 0.0, %v1807
        %v1809 = vpop.f32.mrf.mxu0
        %1810 = vmatprep.mubr.bf16.mxu0 0
        %1811 = vmatmul.mubr.bf16.gmra.mxu0 %v1759
        %v1812 = vpop.f32.mrf.mxu0
        %v1813 = vadd.f32 0.0, %v1812
        %v1814 = vpop.f32.mrf.mxu0
        %v1815 = vpop.f32.mrf.mxu0
        %v1816 = vadd.f32 0.0, %v1815
        %v1817 = vpop.f32.mrf.mxu0
        %1818 = vmatprep.mubr.bf16.mxu0 0
        %1819 = vmatmul.mubr.bf16.gmra.mxu0 %v1762
        %v1820 = vpop.f32.mrf.mxu0
        %v1821 = vadd.f32 0.0, %v1820
        %v1822 = vpop.f32.mrf.mxu0
        %v1823 = vpop.f32.mrf.mxu0
        %v1824 = vadd.f32 0.0, %v1823
        %v1825 = vpop.f32.mrf.mxu0
        %1826 = vmatprep.mubr.bf16.mxu0 0
        %1827 = vmatmul.mubr.bf16.gmra.mxu0 %v1765
        %v1828 = vpop.f32.mrf.mxu0
        %v1829 = vadd.f32 0.0, %v1828
        %v1830 = vpop.f32.mrf.mxu0
        %v1831 = vpop.f32.mrf.mxu0
        %v1832 = vadd.f32 0.0, %v1831
        %v1833 = vpop.f32.mrf.mxu0
        %1834 = vdwg.mxu0
        %v1835 = vadd.f32 %v1605, %v1805
        %v1836 = vadd.f32 %v1606, %v1808
        %v1837 = vadd.f32 %v1607, %v1813
        %v1838 = vadd.f32 %v1608, %v1816
        %v1839 = vadd.f32 %v1609, %v1821
        %v1840 = vadd.f32 %v1610, %v1824
        %v1841 = vadd.f32 %v1611, %v1829
        %v1842 = vadd.f32 %v1612, %v1832
        %s1843 = scalar_lea.vmem %s1, 48
        %v1844 = vld [vmem:[%s1843] sm:$0xf]
        %s1845 = scalar_lea.vmem %s1, 52
        %v1846 = vld [vmem:[%s1845] sm:$0xf]
        %v1848 = vsel %vm377, %v1846, 0
        %1850 = vmatprep.subr.bf16.mxu0 0
        %1851 = vmatpush1.bf16.msra.mxu0 0
        %1852 = vmatprep.subr.bf16.mxu0 0
        %1853 = vmatpush1.bf16.msra.mxu0 0
        %1854 = vmatprep.subr.bf16.mxu0 0
        %1855 = vmatpush1.bf16.msra.mxu0 0
        %1856 = vmatprep.subr.bf16.mxu0 0
        %1857 = vmatpush1.bf16.msra.mxu0 0
        %1858 = vmatprep.subr.bf16.mxu0 0
        %1859 = vmatpush1.bf16.msra.mxu0 0
        %1860 = vmatprep.subr.bf16.mxu0 0
        %1861 = vmatpush1.bf16.msra.mxu0 0
        %1862 = vmatprep.subr.bf16.mxu0 0
        %1863 = vmatpush1.bf16.msra.mxu0 0
        %1864 = vmatprep.subr.bf16.mxu0 0
        %1865 = vmatpush1.bf16.msra.mxu0 %v1848
        %1866 = vmatprep.subr.bf16.mxu0 0
        %1867 = vmatpush2.bf16.msra.mxu0 0
        %1868 = vmatprep.subr.bf16.mxu0 0
        %1869 = vmatpush2.bf16.msra.mxu0 0
        %1870 = vmatprep.subr.bf16.mxu0 0
        %1871 = vmatpush2.bf16.msra.mxu0 0
        %1872 = vmatprep.subr.bf16.mxu0 0
        %1873 = vmatpush2.bf16.msra.mxu0 0
        %1874 = vmatprep.subr.bf16.mxu0 0
        %1875 = vmatpush2.bf16.msra.mxu0 0
        %1876 = vmatprep.subr.bf16.mxu0 0
        %1877 = vmatpush2.bf16.msra.mxu0 0
        %1878 = vmatprep.subr.bf16.mxu0 0
        %1879 = vmatpush2.bf16.msra.mxu0 0
        %1880 = vmatprep.subr.bf16.mxu0 0
        %1881 = vmatpush2.bf16.msra.mxu0 0
        %1882 = vmatprep.mubr.bf16.mxu0 0
        %1883 = vmatmul.mubr.bf16.gmra.mxu0 %v1267
        %v1884 = vpop.f32.mrf.mxu0
        %v1885 = vadd.f32 0.0, %v1884
        %v1886 = vpop.f32.mrf.mxu0
        %v1887 = vpop.f32.mrf.mxu0
        %v1888 = vadd.f32 0.0, %v1887
        %v1889 = vpop.f32.mrf.mxu0
        %1890 = vmatprep.mubr.bf16.mxu0 0
        %1891 = vmatmul.mubr.bf16.gmra.mxu0 %v1270
        %v1892 = vpop.f32.mrf.mxu0
        %v1893 = vadd.f32 0.0, %v1892
        %v1894 = vpop.f32.mrf.mxu0
        %v1895 = vpop.f32.mrf.mxu0
        %v1896 = vadd.f32 0.0, %v1895
        %v1897 = vpop.f32.mrf.mxu0
        %1898 = vmatprep.mubr.bf16.mxu0 0
        %1899 = vmatmul.mubr.bf16.gmra.mxu0 %v1273
        %v1900 = vpop.f32.mrf.mxu0
        %v1901 = vadd.f32 0.0, %v1900
        %v1902 = vpop.f32.mrf.mxu0
        %v1903 = vpop.f32.mrf.mxu0
        %v1904 = vadd.f32 0.0, %v1903
        %v1905 = vpop.f32.mrf.mxu0
        %1906 = vmatprep.mubr.bf16.mxu0 0
        %1907 = vmatmul.mubr.bf16.gmra.mxu0 %v1276
        %v1908 = vpop.f32.mrf.mxu0
        %v1909 = vadd.f32 0.0, %v1908
        %v1910 = vpop.f32.mrf.mxu0
        %v1911 = vpop.f32.mrf.mxu0
        %v1912 = vadd.f32 0.0, %v1911
        %v1913 = vpop.f32.mrf.mxu0
        %1914 = vdwg.mxu0
        %v1916 = vsel %vm377, %v1844, 0
        %1918 = vmatprep.subr.bf16.mxu0 0
        %1919 = vmatpush1.bf16.msra.mxu0 0
        %1920 = vmatprep.subr.bf16.mxu0 0
        %1921 = vmatpush1.bf16.msra.mxu0 0
        %1922 = vmatprep.subr.bf16.mxu0 0
        %1923 = vmatpush1.bf16.msra.mxu0 0
        %1924 = vmatprep.subr.bf16.mxu0 0
        %1925 = vmatpush1.bf16.msra.mxu0 0
        %1926 = vmatprep.subr.bf16.mxu0 0
        %1927 = vmatpush1.bf16.msra.mxu0 0
        %1928 = vmatprep.subr.bf16.mxu0 0
        %1929 = vmatpush1.bf16.msra.mxu0 0
        %1930 = vmatprep.subr.bf16.mxu0 0
        %1931 = vmatpush1.bf16.msra.mxu0 0
        %1932 = vmatprep.subr.bf16.mxu0 0
        %1933 = vmatpush1.bf16.msra.mxu0 %v1916
        %1934 = vmatprep.subr.bf16.mxu0 0
        %1935 = vmatpush2.bf16.msra.mxu0 0
        %1936 = vmatprep.subr.bf16.mxu0 0
        %1937 = vmatpush2.bf16.msra.mxu0 0
        %1938 = vmatprep.subr.bf16.mxu0 0
        %1939 = vmatpush2.bf16.msra.mxu0 0
        %1940 = vmatprep.subr.bf16.mxu0 0
        %1941 = vmatpush2.bf16.msra.mxu0 0
        %1942 = vmatprep.subr.bf16.mxu0 0
        %1943 = vmatpush2.bf16.msra.mxu0 0
        %1944 = vmatprep.subr.bf16.mxu0 0
        %1945 = vmatpush2.bf16.msra.mxu0 0
        %1946 = vmatprep.subr.bf16.mxu0 0
        %1947 = vmatpush2.bf16.msra.mxu0 0
        %1948 = vmatprep.subr.bf16.mxu0 0
        %1949 = vmatpush2.bf16.msra.mxu0 0
        %1950 = vmatprep.mubr.bf16.mxu0 0
        %1951 = vmatmul.mubr.bf16.gmra.mxu0 %v808
        %v1952 = vpop.f32.mrf.mxu0
        %v1953 = vadd.f32 %v1885, %v1952
        %v1954 = vpop.f32.mrf.mxu0
        %v1955 = vpop.f32.mrf.mxu0
        %v1956 = vadd.f32 %v1888, %v1955
        %v1957 = vpop.f32.mrf.mxu0
        %1958 = vmatprep.mubr.bf16.mxu0 0
        %1959 = vmatmul.mubr.bf16.gmra.mxu0 %v811
        %v1960 = vpop.f32.mrf.mxu0
        %v1961 = vadd.f32 %v1893, %v1960
        %v1962 = vpop.f32.mrf.mxu0
        %v1963 = vpop.f32.mrf.mxu0
        %v1964 = vadd.f32 %v1896, %v1963
        %v1965 = vpop.f32.mrf.mxu0
        %1966 = vmatprep.mubr.bf16.mxu0 0
        %1967 = vmatmul.mubr.bf16.gmra.mxu0 %v814
        %v1968 = vpop.f32.mrf.mxu0
        %v1969 = vadd.f32 %v1901, %v1968
        %v1970 = vpop.f32.mrf.mxu0
        %v1971 = vpop.f32.mrf.mxu0
        %v1972 = vadd.f32 %v1904, %v1971
        %v1973 = vpop.f32.mrf.mxu0
        %1974 = vmatprep.mubr.bf16.mxu0 0
        %1975 = vmatmul.mubr.bf16.gmra.mxu0 %v817
        %v1976 = vpop.f32.mrf.mxu0
        %v1977 = vadd.f32 %v1909, %v1976
        %v1978 = vpop.f32.mrf.mxu0
        %v1979 = vpop.f32.mrf.mxu0
        %v1980 = vadd.f32 %v1912, %v1979
        %v1981 = vpop.f32.mrf.mxu0
        %1982 = vdwg.mxu0
        %s1983 = scalar_lea.vmem %s1, 56
        %v1984 = vld [vmem:[%s1983] sm:$0xf]
        %v1986 = vsel %vm377, %v1984, 0
        %1988 = vmatprep.subr.bf16.mxu0 0
        %1989 = vmatpush1.bf16.msra.mxu0 0
        %1990 = vmatprep.subr.bf16.mxu0 0
        %1991 = vmatpush1.bf16.msra.mxu0 0
        %1992 = vmatprep.subr.bf16.mxu0 0
        %1993 = vmatpush1.bf16.msra.mxu0 0
        %1994 = vmatprep.subr.bf16.mxu0 0
        %1995 = vmatpush1.bf16.msra.mxu0 0
        %1996 = vmatprep.subr.bf16.mxu0 0
        %1997 = vmatpush1.bf16.msra.mxu0 0
        %1998 = vmatprep.subr.bf16.mxu0 0
        %1999 = vmatpush1.bf16.msra.mxu0 0
        %2000 = vmatprep.subr.bf16.mxu0 0
        %2001 = vmatpush1.bf16.msra.mxu0 0
        %2002 = vmatprep.subr.bf16.mxu0 0
        %2003 = vmatpush1.bf16.msra.mxu0 %v1986
        %2004 = vmatprep.subr.bf16.mxu0 0
        %2005 = vmatpush2.bf16.msra.mxu0 0
        %2006 = vmatprep.subr.bf16.mxu0 0
        %2007 = vmatpush2.bf16.msra.mxu0 0
        %2008 = vmatprep.subr.bf16.mxu0 0
        %2009 = vmatpush2.bf16.msra.mxu0 0
        %2010 = vmatprep.subr.bf16.mxu0 0
        %2011 = vmatpush2.bf16.msra.mxu0 0
        %2012 = vmatprep.subr.bf16.mxu0 0
        %2013 = vmatpush2.bf16.msra.mxu0 0
        %2014 = vmatprep.subr.bf16.mxu0 0
        %2015 = vmatpush2.bf16.msra.mxu0 0
        %2016 = vmatprep.subr.bf16.mxu0 0
        %2017 = vmatpush2.bf16.msra.mxu0 0
        %2018 = vmatprep.subr.bf16.mxu0 0
        %2019 = vmatpush2.bf16.msra.mxu0 0
        %2020 = vmatprep.mubr.bf16.mxu0 0
        %2021 = vmatmul.mubr.bf16.gmra.mxu0 %v1756
        %v2022 = vpop.f32.mrf.mxu0
        %v2023 = vadd.f32 0.0, %v2022
        %v2024 = vpop.f32.mrf.mxu0
        %v2025 = vpop.f32.mrf.mxu0
        %v2026 = vadd.f32 0.0, %v2025
        %v2027 = vpop.f32.mrf.mxu0
        %2028 = vmatprep.mubr.bf16.mxu0 0
        %2029 = vmatmul.mubr.bf16.gmra.mxu0 %v1759
        %v2030 = vpop.f32.mrf.mxu0
        %v2031 = vadd.f32 0.0, %v2030
        %v2032 = vpop.f32.mrf.mxu0
        %v2033 = vpop.f32.mrf.mxu0
        %v2034 = vadd.f32 0.0, %v2033
        %v2035 = vpop.f32.mrf.mxu0
        %2036 = vmatprep.mubr.bf16.mxu0 0
        %2037 = vmatmul.mubr.bf16.gmra.mxu0 %v1762
        %v2038 = vpop.f32.mrf.mxu0
        %v2039 = vadd.f32 0.0, %v2038
        %v2040 = vpop.f32.mrf.mxu0
        %v2041 = vpop.f32.mrf.mxu0
        %v2042 = vadd.f32 0.0, %v2041
        %v2043 = vpop.f32.mrf.mxu0
        %2044 = vmatprep.mubr.bf16.mxu0 0
        %2045 = vmatmul.mubr.bf16.gmra.mxu0 %v1765
        %v2046 = vpop.f32.mrf.mxu0
        %v2047 = vadd.f32 0.0, %v2046
        %v2048 = vpop.f32.mrf.mxu0
        %v2049 = vpop.f32.mrf.mxu0
        %v2050 = vadd.f32 0.0, %v2049
        %v2051 = vpop.f32.mrf.mxu0
        %2052 = vdwg.mxu0
        %v2053 = vadd.f32 %v1953, %v2023
        %v2054 = vadd.f32 %v1956, %v2026
        %v2055 = vadd.f32 %v1961, %v2031
        %v2056 = vadd.f32 %v1964, %v2034
        %v2057 = vadd.f32 %v1969, %v2039
        %v2058 = vadd.f32 %v1972, %v2042
        %v2059 = vadd.f32 %v1977, %v2047
        %v2060 = vadd.f32 %v1980, %v2050
        %v2061 = vld [vmem:[%s1494] sm:$0xe]
        %v2062 = vld [vmem:[%s1494 + $0x8] sm:$0xe]
        %v2063 = vld [vmem:[%s1494 + $0x10] sm:$0xe]
        %v2064 = vld [vmem:[%s1494 + $0x18] sm:$0xe]
        %v2065 = vld [vmem:[%s1494 + $0x20] sm:$0xe]
        %v2066 = vld [vmem:[%s1494 + $0x28] sm:$0xe]
        %v2067 = vld [vmem:[%s1494 + $0x30] sm:$0xe]
        %v2068 = vld [vmem:[%s1494 + $0x38] sm:$0xe]
        %v2085 = vrot.slane %v2061, 5
        %v2086 = vrot.slane %v2085, 4
        %v2087 = vrot.slane %v1614, 5
        %v2088 = vsel %vm923, %v2086, %v2087
        %v2089 = vrot.slane %v2062, 5
        %v2090 = vrot.slane %v2089, 4
        %v2091 = vrot.slane %v1616, 5
        %v2092 = vsel %vm923, %v2090, %v2091
        %v2093 = vrot.slane %v2063, 5
        %v2094 = vrot.slane %v2093, 4
        %v2095 = vrot.slane %v1618, 5
        %v2096 = vsel %vm923, %v2094, %v2095
        %v2097 = vrot.slane %v2064, 5
        %v2098 = vrot.slane %v2097, 4
        %v2099 = vrot.slane %v1620, 5
        %v2100 = vsel %vm923, %v2098, %v2099
        %v2101 = vrot.slane %v2065, 5
        %v2102 = vrot.slane %v2101, 4
        %v2103 = vrot.slane %v1622, 5
        %v2104 = vsel %vm923, %v2102, %v2103
        %v2105 = vrot.slane %v2066, 5
        %v2106 = vrot.slane %v2105, 4
        %v2107 = vrot.slane %v1624, 5
        %v2108 = vsel %vm923, %v2106, %v2107
        %v2109 = vrot.slane %v2067, 5
        %v2110 = vrot.slane %v2109, 4
        %v2111 = vrot.slane %v1626, 5
        %v2112 = vsel %vm923, %v2110, %v2111
        %v2113 = vrot.slane %v2068, 5
        %v2114 = vrot.slane %v2113, 4
        %v2115 = vrot.slane %v1628, 5
        %v2116 = vsel %vm923, %v2114, %v2115
        %s2117 = scalar_lea.vmem %s1, 60
        %v2118 = vld [vmem:[%s2117] sm:$0xf]
        %v2119 = vunpack.c.l.b16 %v2088
        %v2120 = vunpack.c.l.b16 %v2092
        %v2121 = vunpack.c.l.b16 %v2096
        %v2122 = vunpack.c.l.b16 %v2100
        %v2123 = vunpack.c.l.b16 %v2104
        %v2124 = vunpack.c.l.b16 %v2108
        %v2125 = vunpack.c.l.b16 %v2112
        %v2126 = vunpack.c.l.b16 %v2116
        %v2127 = vpack.c.b16 %v2120, %v2119
        %v2128 = vpack.c.b16 %v2122, %v2121
        %v2129 = vpack.c.b16 %v2124, %v2123
        %v2130 = vpack.c.b16 %v2126, %v2125
        %v2132 = vsel %vm364, %v2127, 0
        %v2135 = vsel %vm364, %v2128, 0
        %v2138 = vsel %vm364, %v2129, 0
        %v2141 = vsel %vm364, %v2130, 0
        %v2144 = vsel %vm377, %v2118, 0
        %2146 = vmatprep.subr.bf16.mxu0 0
        %2147 = vmatpush1.bf16.msra.mxu0 0
        %2148 = vmatprep.subr.bf16.mxu0 0
        %2149 = vmatpush1.bf16.msra.mxu0 0
        %2150 = vmatprep.subr.bf16.mxu0 0
        %2151 = vmatpush1.bf16.msra.mxu0 0
        %2152 = vmatprep.subr.bf16.mxu0 0
        %2153 = vmatpush1.bf16.msra.mxu0 0
        %2154 = vmatprep.subr.bf16.mxu0 0
        %2155 = vmatpush1.bf16.msra.mxu0 0
        %2156 = vmatprep.subr.bf16.mxu0 0
        %2157 = vmatpush1.bf16.msra.mxu0 0
        %2158 = vmatprep.subr.bf16.mxu0 0
        %2159 = vmatpush1.bf16.msra.mxu0 0
        %2160 = vmatprep.subr.bf16.mxu0 0
        %2161 = vmatpush1.bf16.msra.mxu0 %v2144
        %2162 = vmatprep.subr.bf16.mxu0 0
        %2163 = vmatpush2.bf16.msra.mxu0 0
        %2164 = vmatprep.subr.bf16.mxu0 0
        %2165 = vmatpush2.bf16.msra.mxu0 0
        %2166 = vmatprep.subr.bf16.mxu0 0
        %2167 = vmatpush2.bf16.msra.mxu0 0
        %2168 = vmatprep.subr.bf16.mxu0 0
        %2169 = vmatpush2.bf16.msra.mxu0 0
        %2170 = vmatprep.subr.bf16.mxu0 0
        %2171 = vmatpush2.bf16.msra.mxu0 0
        %2172 = vmatprep.subr.bf16.mxu0 0
        %2173 = vmatpush2.bf16.msra.mxu0 0
        %2174 = vmatprep.subr.bf16.mxu0 0
        %2175 = vmatpush2.bf16.msra.mxu0 0
        %2176 = vmatprep.subr.bf16.mxu0 0
        %2177 = vmatpush2.bf16.msra.mxu0 0
        %2178 = vmatprep.mubr.bf16.mxu0 0
        %2179 = vmatmul.mubr.bf16.gmra.mxu0 %v2132
        %v2180 = vpop.f32.mrf.mxu0
        %v2181 = vadd.f32 0.0, %v2180
        %v2182 = vpop.f32.mrf.mxu0
        %v2183 = vpop.f32.mrf.mxu0
        %v2184 = vadd.f32 0.0, %v2183
        %v2185 = vpop.f32.mrf.mxu0
        %2186 = vmatprep.mubr.bf16.mxu0 0
        %2187 = vmatmul.mubr.bf16.gmra.mxu0 %v2135
        %v2188 = vpop.f32.mrf.mxu0
        %v2189 = vadd.f32 0.0, %v2188
        %v2190 = vpop.f32.mrf.mxu0
        %v2191 = vpop.f32.mrf.mxu0
        %v2192 = vadd.f32 0.0, %v2191
        %v2193 = vpop.f32.mrf.mxu0
        %2194 = vmatprep.mubr.bf16.mxu0 0
        %2195 = vmatmul.mubr.bf16.gmra.mxu0 %v2138
        %v2196 = vpop.f32.mrf.mxu0
        %v2197 = vadd.f32 0.0, %v2196
        %v2198 = vpop.f32.mrf.mxu0
        %v2199 = vpop.f32.mrf.mxu0
        %v2200 = vadd.f32 0.0, %v2199
        %v2201 = vpop.f32.mrf.mxu0
        %2202 = vmatprep.mubr.bf16.mxu0 0
        %2203 = vmatmul.mubr.bf16.gmra.mxu0 %v2141
        %v2204 = vpop.f32.mrf.mxu0
        %v2205 = vadd.f32 0.0, %v2204
        %v2206 = vpop.f32.mrf.mxu0
        %v2207 = vpop.f32.mrf.mxu0
        %v2208 = vadd.f32 0.0, %v2207
        %v2209 = vpop.f32.mrf.mxu0
        %2210 = vdwg.mxu0
        %v2211 = vadd.f32 %v2053, %v2181
        %v2212 = vadd.f32 %v2054, %v2184
        %v2213 = vadd.f32 %v2055, %v2189
        %v2214 = vadd.f32 %v2056, %v2192
        %v2215 = vadd.f32 %v2057, %v2197
        %v2216 = vadd.f32 %v2058, %v2200
        %v2217 = vadd.f32 %v2059, %v2205
        %v2218 = vadd.f32 %v2060, %v2208
        %2227 = vrot.lane.b32.xlu0 %v1346, 3
        %v2228 = vpop.permute.xlu0 %2227
        %2229 = vrot.lane.b32.xlu0 %v1347, 3
        %v2230 = vpop.permute.xlu0 %2229
        %2231 = vrot.lane.b32.xlu0 %v1348, 3
        %v2232 = vpop.permute.xlu0 %2231
        %2233 = vrot.lane.b32.xlu0 %v1349, 3
        %v2234 = vpop.permute.xlu0 %2233
        %2235 = vrot.lane.b32.xlu0 %v1350, 3
        %v2236 = vpop.permute.xlu0 %2235
        %2237 = vrot.lane.b32.xlu0 %v1351, 3
        %v2238 = vpop.permute.xlu0 %2237
        %2239 = vrot.lane.b32.xlu0 %v1352, 3
        %v2240 = vpop.permute.xlu0 %2239
        %2241 = vrot.lane.b32.xlu0 %v1353, 3
        %v2242 = vpop.permute.xlu0 %2241
        %2259 = vrot.lane.b32.xlu0 %v1835, 6
        %v2260 = vpop.permute.xlu0 %2259
        %2261 = vrot.lane.b32.xlu0 %v1836, 6
        %v2262 = vpop.permute.xlu0 %2261
        %2263 = vrot.lane.b32.xlu0 %v1837, 6
        %v2264 = vpop.permute.xlu0 %2263
        %2265 = vrot.lane.b32.xlu0 %v1838, 6
        %v2266 = vpop.permute.xlu0 %2265
        %2267 = vrot.lane.b32.xlu0 %v1839, 6
        %v2268 = vpop.permute.xlu0 %2267
        %2269 = vrot.lane.b32.xlu0 %v1840, 6
        %v2270 = vpop.permute.xlu0 %2269
        %2271 = vrot.lane.b32.xlu0 %v1841, 6
        %v2272 = vpop.permute.xlu0 %2271
        %2273 = vrot.lane.b32.xlu0 %v1842, 6
        %v2274 = vpop.permute.xlu0 %2273
        %2291 = vrot.lane.b32.xlu0 %v2211, 9
        %v2292 = vpop.permute.xlu0 %2291
        %2293 = vrot.lane.b32.xlu0 %v2212, 9
        %v2294 = vpop.permute.xlu0 %2293
        %2295 = vrot.lane.b32.xlu0 %v2213, 9
        %v2296 = vpop.permute.xlu0 %2295
        %2297 = vrot.lane.b32.xlu0 %v2214, 9
        %v2298 = vpop.permute.xlu0 %2297
        %2299 = vrot.lane.b32.xlu0 %v2215, 9
        %v2300 = vpop.permute.xlu0 %2299
        %2301 = vrot.lane.b32.xlu0 %v2216, 9
        %v2302 = vpop.permute.xlu0 %2301
        %2303 = vrot.lane.b32.xlu0 %v2217, 9
        %v2304 = vpop.permute.xlu0 %2303
        %2305 = vrot.lane.b32.xlu0 %v2218, 9
        %v2306 = vpop.permute.xlu0 %2305
        %vm2315 = vcmask 23552
        %v2316 = vsel %vm2315, %v887, %v2228
        %v2317 = vsel %vm2315, %v888, %v2230
        %v2318 = vsel %vm2315, %v889, %v2232
        %v2319 = vsel %vm2315, %v890, %v2234
        %v2320 = vsel %vm2315, %v891, %v2236
        %v2321 = vsel %vm2315, %v892, %v2238
        %v2322 = vsel %vm2315, %v893, %v2240
        %v2323 = vsel %vm2315, %v894, %v2242
        %vm2324 = vcmask 48128
        %v2325 = vsel %vm2324, %v2316, %v2260
        %v2326 = vsel %vm2324, %v2317, %v2262
        %v2327 = vsel %vm2324, %v2318, %v2264
        %v2328 = vsel %vm2324, %v2319, %v2266
        %v2329 = vsel %vm2324, %v2320, %v2268
        %v2330 = vsel %vm2324, %v2321, %v2270
        %v2331 = vsel %vm2324, %v2322, %v2272
        %v2332 = vsel %vm2324, %v2323, %v2274
        %vm2333 = vcmask 72704
        %v2334 = vsel %vm2333, %v2325, %v2292
        %v2335 = vsel %vm2333, %v2326, %v2294
        %v2336 = vsel %vm2333, %v2327, %v2296
        %v2337 = vsel %vm2333, %v2328, %v2298
        %v2338 = vsel %vm2333, %v2329, %v2300
        %v2339 = vsel %vm2333, %v2330, %v2302
        %v2340 = vsel %vm2333, %v2331, %v2304
        %v2341 = vsel %vm2333, %v2332, %v2306
        %vm2342 = vcmask 97280
        %v2343 = vsel %vm2342, %v2334, 0.0
        %v2344 = vsel %vm2342, %v2335, 0.0
        %v2345 = vadd.f32 %v2343, %v2344
        %v2346 = vsel %vm2342, %v2336, 0.0
        %v2347 = vadd.f32 %v2345, %v2346
        %v2348 = vsel %vm2342, %v2337, 0.0
        %v2349 = vadd.f32 %v2347, %v2348
        %v2350 = vsel %vm2342, %v2338, 0.0
        %v2351 = vadd.f32 %v2349, %v2350
        %v2352 = vsel %vm2342, %v2339, 0.0
        %v2353 = vadd.f32 %v2351, %v2352
        %v2354 = vsel %vm2342, %v2340, 0.0
        %v2355 = vadd.f32 %v2353, %v2354
        %v2356 = vsel %vm2342, %v2341, 0.0
        %v2357 = vadd.f32 %v2355, %v2356
        %v2358 = vrot.slane %v2357, 4
        %v2359 = vadd.f32 %v2357, %v2358
        %v2360 = vrot.slane %v2359, 2
        %v2361 = vadd.f32 %v2359, %v2360
        %v2362 = vrot.slane %v2361, 1
        %v2363 = vadd.f32 %v2361, %v2362
        %vm2364 = vcmask 90112
        %2365 = vst.msk [vmem:[%s200] sm:$0x1] %vm2364, %v2363
        %v2366 = vmul.f32 %v2334, %v2334
        %v2367 = vmul.f32 %v2335, %v2335
        %v2368 = vmul.f32 %v2336, %v2336
        %v2369 = vmul.f32 %v2337, %v2337
        %v2370 = vmul.f32 %v2338, %v2338
        %v2371 = vmul.f32 %v2339, %v2339
        %v2372 = vmul.f32 %v2340, %v2340
        %v2373 = vmul.f32 %v2341, %v2341
        %v2374 = vsel %vm2342, %v2366, 0.0
        %v2375 = vsel %vm2342, %v2367, 0.0
        %v2376 = vadd.f32 %v2374, %v2375
        %v2377 = vsel %vm2342, %v2368, 0.0
        %v2378 = vadd.f32 %v2376, %v2377
        %v2379 = vsel %vm2342, %v2369, 0.0
        %v2380 = vadd.f32 %v2378, %v2379
        %v2381 = vsel %vm2342, %v2370, 0.0
        %v2382 = vadd.f32 %v2380, %v2381
        %v2383 = vsel %vm2342, %v2371, 0.0
        %v2384 = vadd.f32 %v2382, %v2383
        %v2385 = vsel %vm2342, %v2372, 0.0
        %v2386 = vadd.f32 %v2384, %v2385
        %v2387 = vsel %vm2342, %v2373, 0.0
        %v2388 = vadd.f32 %v2386, %v2387
        %v2389 = vrot.slane %v2388, 4
        %v2390 = vadd.f32 %v2388, %v2389
        %v2391 = vrot.slane %v2390, 2
        %v2392 = vadd.f32 %v2390, %v2391
        %v2393 = vrot.slane %v2392, 1
        %v2394 = vadd.f32 %v2392, %v2393
        %2395 = vst.msk [vmem:[%s206] sm:$0x1] %vm2364, %v2394
        %v2396 = vmax.f32 %v2334, 0.0
        %v2397 = vmax.f32 %v2335, 0.0
        %v2398 = vmax.f32 %v2336, 0.0
        %v2399 = vmax.f32 %v2337, 0.0
        %v2400 = vmax.f32 %v2338, 0.0
        %v2401 = vmax.f32 %v2339, 0.0
        %v2402 = vmax.f32 %v2340, 0.0
        %v2403 = vmax.f32 %v2341, 0.0
        %v2404 = vpack.c.bf16 %v2397, %v2396
        %v2405 = vpack.c.bf16 %v2399, %v2398
        %v2406 = vpack.c.bf16 %v2401, %v2400
        %v2407 = vpack.c.bf16 %v2403, %v2402
        %v2412 = vunpack.c.l.b16 %v2404
        %v2413 = vunpack.c.h.b16 %v2404
        %v2414 = vunpack.c.l.b16 %v2405
        %v2415 = vunpack.c.h.b16 %v2405
        %v2416 = vunpack.c.l.b16 %v2406
        %v2417 = vunpack.c.h.b16 %v2406
        %v2418 = vunpack.c.l.b16 %v2407
        %v2419 = vunpack.c.h.b16 %v2407
        %v2420 = vpack.c.b16 %v2412, %v2412
        %v2421 = vpack.c.b16 %v2413, %v2413
        %v2422 = vpack.c.b16 %v2414, %v2414
        %v2423 = vpack.c.b16 %v2415, %v2415
        %v2424 = vpack.c.b16 %v2416, %v2416
        %v2425 = vpack.c.b16 %v2417, %v2417
        %v2426 = vpack.c.b16 %v2418, %v2418
        %v2427 = vpack.c.b16 %v2419, %v2419
        %vm2436 = vcmask 93184
        %2437 = vst.msk [vmem:[%s216] sm:$0xf] %vm2436, %v2420
        %2438 = vst.msk [vmem:[%s216 + $0x4] sm:$0xf] %vm2436, %v2421
        %2439 = vst.msk [vmem:[%s216 + $0x8] sm:$0xf] %vm2436, %v2422
        %2440 = vst.msk [vmem:[%s216 + $0xc] sm:$0xf] %vm2436, %v2423
        %2441 = vst.msk [vmem:[%s216 + $0x10] sm:$0xf] %vm2436, %v2424
        %2442 = vst.msk [vmem:[%s216 + $0x14] sm:$0xf] %vm2436, %v2425
        %2443 = vst.msk [vmem:[%s216 + $0x18] sm:$0xf] %vm2436, %v2426
        %2444 = vst.msk [vmem:[%s216 + $0x1c] sm:$0xf] %vm2436, %v2427
        %p2445 = scmp.lt.s32.totalorder %s22, 1
        %s2446 = scalar_select %p2445, %s22, 1
        %s2447 = smul.addr %s2446, 8
        %s2448 = smul.addr %s2447, 4
        %s2449 = scalar_lea.vmem %s2, %s2448
        %s2450 = sand.u32 %s103, 1
        %s2451 = scalar_lea.sflag [#allocation3], %s2450
        %s2452 = sand.u32 %s103, 1
        %s2453 = scalar_lea.vmem [#allocation2], %s2452
        %s2454 = sand.u32 %s129, 1
        %s2455 = scalar_lea.sflag [#allocation5], %s2454
        %s2456 = sand.u32 %s129, 1
        %s2457 = scalar_lea.vmem [#allocation4], %s2456
        // Predicated region
        $region29: #{_lambda_.13} parent=27 // pred_check
          %p2458 = pneg %p87
        $region30: #{_lambda_.13} parent=27 // pred_check_branch
          %2460 = sbr.rel (%p2458) target = $region32
        $region31: #{_lambda_.13} parent=27 // pred_region
          _
        $region32: #{_lambda_.13} parent=27 // pred_fallthru
          _
        // Predicated region
        $region33: #{_lambda_.13} parent=27 // pred_check
          %p2461 = pneg %p113
        $region34: #{_lambda_.13} parent=27 // pred_check_branch
          %2463 = sbr.rel (%p2461) target = $region36
        $region35: #{_lambda_.13} parent=27 // pred_region
          %s2465 = ssub.s32 16, 16
          %2466 = vsyncadd %s2451, %s2465
          %s2467 = smul.addr %s22, 16
          %s2468 = scalar_lea.hbm %s3, %s2467
          %s2470 = sshll.u32 %s2453, 4
          %s2471 = int_to_ptr.vmem [resolvable:$true] %s2470
          %2473 = dma.vmem_to_hbm [thread:$0]  %s2471, 16, %s2468, %s2451
        $region36: #{_lambda_.13} parent=27 // pred_fallthru
          _
        // Predicated region
        $region37: #{_lambda_.13} parent=27 // pred_check
          %p2474 = pneg %p139
        $region38: #{_lambda_.13} parent=27 // pred_check_branch
          %2476 = sbr.rel (%p2474) target = $region40
        $region39: #{_lambda_.13} parent=27 // pred_region
          %s2478 = ssub.s32 16, 16
          %2479 = vsyncadd %s2455, %s2478
          %s2480 = smul.addr %s22, 16
          %s2481 = scalar_lea.hbm %s4, %s2480
          %s2483 = sshll.u32 %s2457, 4
          %s2484 = int_to_ptr.vmem [resolvable:$true] %s2483
          %2486 = dma.vmem_to_hbm [thread:$0]  %s2484, 16, %s2481, %s2455
        $region40: #{_lambda_.13} parent=27 // pred_fallthru
          _
      $region28: #{_lambda_.13} parent=5 // pred_fallthru
        _
      %p2487 = scmp.le.s32.totalorder 2, %s17
      // Predicated region
      $region41: #{_lambda_.13} parent=5 // pred_check
        %p2488 = pneg %p2487
      $region42: #{_lambda_.13} parent=5 // pred_check_branch
        %2490 = sbr.rel (%p2488) target = $region44
      $region43: #{_lambda_.13} parent=5 // pred_region
        %s2491 = ssub.s32 %s17, 2
        // Predicated region
        $region45: #{_lambda_.13} parent=43 // pred_check
          %p2492 = pneg %p93
        $region46: #{_lambda_.13} parent=43 // pred_check_branch
          %2494 = sbr.rel (%p2492) target = $region48
        $region47: #{_lambda_.13} parent=43 // pred_region
          %p2495 = scmp.lt.s32.totalorder %s23, 1
          %s2496 = scalar_select %p2495, %s23, 1
          %s2497 = smul.addr %s2496, 8
          %s2498 = smul.addr %s2497, 4
          %s2499 = scalar_lea.vmem %s2, %s2498
        $region48: #{_lambda_.13} parent=43 // pred_fallthru
          _
        // Predicated region
        $region49: #{_lambda_.13} parent=43 // pred_check
          %p2500 = pneg %p119
        $region50: #{_lambda_.13} parent=43 // pred_check_branch
          %2502 = sbr.rel (%p2500) target = $region52
        $region51: #{_lambda_.13} parent=43 // pred_region
          %s2503 = sand.u32 %s104, 1
          %s2504 = scalar_lea.sflag [#allocation3], %s2503
          %s2505 = sand.u32 %s104, 1
          %s2506 = scalar_lea.vmem [#allocation2], %s2505
          %2507 = dma.done %s2504, 16
        $region52: #{_lambda_.13} parent=43 // pred_fallthru
          _
        // Predicated region
        $region53: #{_lambda_.13} parent=43 // pred_check
          %p2508 = pneg %p145
        $region54: #{_lambda_.13} parent=43 // pred_check_branch
          %2510 = sbr.rel (%p2508) target = $region56
        $region55: #{_lambda_.13} parent=43 // pred_region
          %s2511 = sand.u32 %s130, 1
          %s2512 = scalar_lea.sflag [#allocation5], %s2511
          %s2513 = sand.u32 %s130, 1
          %s2514 = scalar_lea.vmem [#allocation4], %s2513
          %2515 = dma.done %s2512, 16
        $region56: #{_lambda_.13} parent=43 // pred_fallthru
          _
      $region44: #{_lambda_.13} parent=5 // pred_fallthru
        _
    $region6: #{_lambda_.13} parent=1 // loop_footer
      %s21 = sadd.s32 1, %s17
    $region7: #{_lambda_.13} parent=1 // loop_footer_branch
      %16 = sbr.rel target = $region3
    $region8: #{_lambda_.13} parent=1 // loop_exit
      _
    %2516 = vsyncpa [#allocation3], 1
    %s2517 = scalar_lea.sflag [#allocation3], 1
    %2518 = vsyncpa %s2517, 1
    %2519 = vsyncpa [#allocation5], 1
    %s2520 = scalar_lea.sflag [#allocation5], 1
    %2521 = vsyncpa %s2520, 1

</llo_original>
